<compile_context>
chip_gen: v5e
topology: v5e:2x2
jax: 0.10.0
libtpu: 0.0.40
codegen_flags: <defaults>
</compile_context>

<pallas_src>
import jax
import jax.numpy as jnp
from jax.experimental import pallas as pl
from jax.experimental.pallas import tpu as pltpu

# ---- FBMSNet hyper-parameters (defaults, small spatial sizes) ----
N = 2                      # batch
C_IN = 9                   # in_channels (frequency bands)
E = 8                      # num_electrodes
T = 128                    # chunk_size
SF = 4                     # stride_factor
T4 = T // SF               # samples per temporal segment
F1 = 36                    # num_feature
DIL = 8                    # dilatability
F2 = F1 * DIL              # 288
NUM_CLASSES = 4
KS = [15, 31, 63, 125]     # MixedConv2d temporal kernel widths
BN_EPS = 1e-5


def _split_channels(num_chan, num_groups):
    split = [num_chan // num_groups for _ in range(num_groups)]
    split[0] += num_chan - sum(split)
    return split


IN_SPLITS = _split_channels(C_IN, len(KS))      # [3, 2, 2, 2]
OUT_SPLITS = _split_channels(F1, len(KS))       # [9, 9, 9, 9]
PAD = (max(KS) - 1) // 2                        # 62 (TF-SAME pad for widest kernel)
R = sum(K * c for K, c in zip(KS, IN_SPLITS))   # 483 im2col columns
R_PAD = 512                                     # pad to a lane-tile multiple (zeros)


# ---------------------------------------------------------------------------
# Fused kernel: grid=(N,) — one batch element per step, everything in VMEM.
# ---------------------------------------------------------------------------
def fused_kernel(x_ref, wmix_ref, w2_ref, bscb_ref, pavg_ref, avar_ref,
                 wfc_ref, bfc_ref, o_ref):
    # --- MixedConv: one block-diagonal MXU matmul over all electrodes at once ---
    # x_ref block: [1, E*T, R_PAD]; wmix already has BN1 scale folded in.
    ye_all = jnp.dot(x_ref[0], wmix_ref[...],
                     preferred_element_type=jnp.float32)        # [E*T, F1]

    # --- SCB grouped conv (sum over electrodes), BN2 scale folded into w2 ---
    z = jnp.zeros((T, F2), jnp.float32)                         # time-major: [T, F2]
    for e in range(E):                                          # static unroll (8)
        ye = ye_all[e * T:(e + 1) * T, :]                       # 128-aligned sublane slice
        z = z + jnp.dot(ye, w2_ref[e], preferred_element_type=jnp.float32)  # [T, F2]

    # BN1 shift (through SCB), SCB bias and BN2 shift are folded into one bias vector.
    z = z + bscb_ref[...]                                       # [1, F2] broadcast over time
    z = z * jax.nn.sigmoid(z)                                   # swish

    # --- LogVar over SF temporal segments (unbiased), via segment-averaging matmuls ---
    mu = jnp.dot(pavg_ref[...], z, preferred_element_type=jnp.float32)        # [T, F2]
    dev = z - mu
    var = jnp.dot(avar_ref[...], dev * dev, preferred_element_type=jnp.float32)  # [SF, F2]
    lv = jnp.log(jnp.clip(var, 1e-6, 1e6))                      # [SF, F2]

    # --- Linear (torch flatten order oc*SF + s) + LogSoftmax ---
    logits = bfc_ref[...]                                       # [1, NUM_CLASSES]
    for s in range(SF):                                         # static unroll (4)
        logits = logits + jnp.dot(lv[s:s + 1, :], wfc_ref[s],
                                  preferred_element_type=jnp.float32)
    m = jnp.max(logits, axis=1, keepdims=True)
    lse = jnp.log(jnp.sum(jnp.exp(logits - m), axis=1, keepdims=True)) + m
    o_ref[0] = logits - lse


# ---------------------------------------------------------------------------
# Wrapper: layout glue (im2col gather) + single pallas_call
# ---------------------------------------------------------------------------
def build_im2col(x):
    """x: [n, C_IN, E, T] -> [n, E*T, R_PAD]  (row = e*T + t, col = goff[g] + k*in_g + ic)."""
    n = x.shape[0]
    xp = jnp.pad(x, ((0, 0), (0, 0), (0, 0), (PAD, PAD)))       # [n, C_IN, E, T_PAD]
    t_idx = jnp.arange(T)
    pieces = []
    ch = 0
    for K, in_g in zip(KS, IN_SPLITS):
        off = PAD - K // 2                                      # per-group SAME offset (>= 0)
        idx = off + t_idx[:, None] + jnp.arange(K)[None, :]     # [T, K]
        xg = xp[:, ch:ch + in_g]                                 # [n, in_g, E, T_PAD]
        patches = xg[:, :, :, idx]                               # [n, in_g, E, T, K]
        patches = jnp.transpose(patches, (0, 2, 3, 4, 1))        # [n, E, T, K, in_g]
        pieces.append(patches.reshape(n, E * T, K * in_g))
        ch += in_g
    xc = jnp.concatenate(pieces, axis=2)                          # [n, E*T, R]
    return jnp.pad(xc, ((0, 0), (0, 0), (0, R_PAD - R)))          # zero-pad cols to R_PAD


def fbmsnet_forward(x, p):
    n = x.shape[0]
    x_im2col = build_im2col(x)                                    # [n, E*T, R_PAD]

    out = pl.pallas_call(
        fused_kernel,
        out_shape=jax.ShapeDtypeStruct((n, 1, NUM_CLASSES), jnp.float32),
        grid=(n,),
        in_specs=[
            pl.BlockSpec((1, E * T, R_PAD), lambda b: (b, 0, 0)),
            pl.BlockSpec((R_PAD, F1), lambda b: (0, 0)),
            pl.BlockSpec((E, F1, F2), lambda b: (0, 0, 0)),
            pl.BlockSpec((1, F2), lambda b: (0, 0)),
            pl.BlockSpec((T, T), lambda b: (0, 0)),
            pl.BlockSpec((SF, T), lambda b: (0, 0)),
            pl.BlockSpec((SF, F2, NUM_CLASSES), lambda b: (0, 0, 0)),
            pl.BlockSpec((1, NUM_CLASSES), lambda b: (0, 0)),
        ],
        out_specs=pl.BlockSpec((1, 1, NUM_CLASSES), lambda b: (b, 0, 0)),
        compiler_params=pltpu.CompilerParams(
            dimension_semantics=("parallel",)),
    )(x_im2col, p["wmix_t"], p["w2_diag"], p["bias_scb"],
      p["seg_avg"], p["seg_var"], p["fc_w_seg"], p["fc_b_row"])
    return out.reshape(n, NUM_CLASSES)


# ---------------------------------------------------------------------------
# Deterministic synthetic parameters (+ BN-folded kernel operands)
# ---------------------------------------------------------------------------
def init_params(key):
    ks = jax.random.split(key, 16)
    p = {}

    # MixedConv2d weights (per group, no bias)
    mix_w = []
    for g, (K, in_g, out_g) in enumerate(zip(KS, IN_SPLITS, OUT_SPLITS)):
        mix_w.append(jax.random.normal(ks[g], (out_g, in_g, K), jnp.float32) * 0.1)
    p["mix_w"] = mix_w

    # BatchNorm2d(F1) inference params
    g1 = 1.0 + 0.1 * jax.random.normal(ks[4], (F1,), jnp.float32)
    b1 = 0.1 * jax.random.normal(ks[5], (F1,), jnp.float32)
    m1 = 0.1 * jax.random.normal(ks[6], (F1,), jnp.float32)
    v1 = 0.5 + 0.5 * jnp.abs(jax.random.normal(ks[7], (F1,), jnp.float32))
    p["bn1"] = (g1, b1, m1, v1)
    scale1 = g1 / jnp.sqrt(v1 + BN_EPS)
    shift1 = b1 - m1 * scale1

    # SCB: Conv2dWithConstraint(F1, F2, (E,1), groups=F1, max_norm=2) + bias
    w2 = jax.random.normal(ks[8], (F2, E), jnp.float32) * 0.2
    nrm = jnp.linalg.norm(w2, axis=1, keepdims=True)
    w2 = w2 * jnp.minimum(1.0, 2.0 / jnp.maximum(nrm, 1e-12))          # max_norm = 2
    b2 = 0.05 * jax.random.normal(ks[9], (F2,), jnp.float32)
    p["w2"] = w2
    p["b2"] = b2

    # BatchNorm2d(F2) inference params
    g2 = 1.0 + 0.1 * jax.random.normal(ks[10], (F2,), jnp.float32)
    be2 = 0.1 * jax.random.normal(ks[11], (F2,), jnp.float32)
    m2 = 0.1 * jax.random.normal(ks[12], (F2,), jnp.float32)
    v2 = 0.5 + 0.5 * jnp.abs(jax.random.normal(ks[13], (F2,), jnp.float32))
    p["bn2"] = (g2, be2, m2, v2)
    scale2 = g2 / jnp.sqrt(v2 + BN_EPS)
    shift2 = be2 - m2 * scale2

    # LinearWithConstraint(F2*SF, num_classes, max_norm=0.5)
    wfc = jax.random.normal(ks[14], (NUM_CLASSES, F2 * SF), jnp.float32) * 0.05
    nrm = jnp.linalg.norm(wfc, axis=1, keepdims=True)
    wfc = wfc * jnp.minimum(1.0, 0.5 / jnp.maximum(nrm, 1e-12))        # max_norm = 0.5
    bfc = 0.05 * jax.random.normal(ks[15], (NUM_CLASSES,), jnp.float32)
    p["fc_w"] = wfc
    p["fc_b"] = bfc

    # ---- folded / kernel-layout operands ----
    # Block-diagonal MixedConv weight [R_PAD, F1], row = goff + k*in_g + ic, BN1 scale folded.
    wmix = jnp.zeros((R_PAD, F1), jnp.float32)
    roff, coff = 0, 0
    for g, (K, in_g, out_g) in enumerate(zip(KS, IN_SPLITS, OUT_SPLITS)):
        wt = jnp.transpose(mix_w[g], (2, 1, 0)).reshape(K * in_g, out_g)   # k-major, ic-minor
        wmix = wmix.at[roff:roff + K * in_g, coff:coff + out_g].set(wt)
        roff += K * in_g
        coff += out_g
    p["wmix_t"] = wmix * scale1[None, :]

    # SCB grouped conv as per-electrode [F1, F2] diagonal-expanded matrices, BN2 scale folded.
    grp = jnp.arange(F2) // DIL
    w2s = w2 * scale2[:, None]                                          # [F2, E]
    onehot = (jnp.arange(F1)[:, None] == grp[None, :]).astype(jnp.float32)  # [F1, F2]
    p["w2_diag"] = onehot[None, :, :] * jnp.transpose(w2s)[:, None, :]  # [E, F1, F2]

    # Single folded bias: BN1 shift through SCB + SCB bias + BN2 shift.
    p["bias_scb"] = (scale2 * (shift1[grp] * jnp.sum(w2, axis=1) + b2)
                     + shift2).reshape(1, F2)

    # Segment averaging matrices for LogVar (unbiased, ddof=1).
    seg = jnp.arange(T) // T4
    p["seg_avg"] = ((seg[:, None] == seg[None, :]).astype(jnp.float32) / T4)           # [T, T]
    p["seg_var"] = ((jnp.arange(SF)[:, None] == seg[None, :]).astype(jnp.float32)
                    / (T4 - 1))                                                          # [SF, T]

    # FC weight regrouped per segment: fc_w_seg[s, c, oc] = wfc[oc, c*SF + s]
    p["fc_w_seg"] = jnp.transpose(wfc.reshape(NUM_CLASSES, F2, SF), (2, 1, 0))
    p["fc_b_row"] = bfc.reshape(1, NUM_CLASSES)
    return p


# ---------------------------------------------------------------------------
# Pure-JAX reference (mirrors the PyTorch forward semantics)
# ---------------------------------------------------------------------------
def reference_forward(x_nchw, p):
    n = x_nchw.shape[0]
    outs, ch = [], 0
    for g, (K, in_g) in enumerate(zip(KS, IN_SPLITS)):
        xg = x_nchw[:, ch:ch + in_g]                              # [n, in_g, E, T]
        w = p["mix_w"][g][:, :, None, :]                          # [out_g, in_g, 1, K]
        pad = K // 2
        outs.append(jax.lax.conv_general_dilated(
            xg, w, window_strides=(1, 1),
            padding=((0, 0), (pad, pad)),
            dimension_numbers=("NCHW", "OIHW", "NCHW")))
        ch += in_g
    y = jnp.concatenate(outs, axis=1)                              # [n, F1, E, T]
    g1, b1, m1, v1 = p["bn1"]
    y = (y - m1[None, :, None, None]) / jnp.sqrt(v1[None, :, None, None] + BN_EPS) \
        * g1[None, :, None, None] + b1[None, :, None, None]
    grp = jnp.arange(F2) // DIL
    yg = y[:, grp]                                                 # [n, F2, E, T]
    z = jnp.einsum("noet,oe->not", yg, p["w2"]) + p["b2"][None, :, None]
    g2, b2_, m2, v2 = p["bn2"]
    z = (z - m2[None, :, None]) / jnp.sqrt(v2[None, :, None] + BN_EPS) \
        * g2[None, :, None] + b2_[None, :, None]
    z = z * jax.nn.sigmoid(z)
    zr = z.reshape(n, F2, SF, T4)
    var = jnp.var(zr, axis=3, ddof=1)                              # unbiased, like torch
    feats = jnp.log(jnp.clip(var, 1e-6, 1e6)).reshape(n, F2 * SF)
    logits = feats @ p["fc_w"].T + p["fc_b"][None, :]
    return jax.nn.log_softmax(logits, axis=1)


if __name__ == "__main__":
    key = jax.random.PRNGKey(0)
    k_x, k_p = jax.random.split(key)
    # torch ideal input: [n, in_channels, num_electrodes, chunk_size]
    x = jax.random.normal(k_x, (N, C_IN, E, T), jnp.float32)
    params = init_params(k_p)

    out = jax.block_until_ready(jax.jit(fbmsnet_forward)(x, params))
    ref = jax.block_until_ready(reference_forward(x, params))

    assert out.shape == (N, NUM_CLASSES)
    assert bool(jnp.all(jnp.isfinite(out)))
    max_err = float(jnp.max(jnp.abs(out - ref)))
    assert max_err < 1e-2, f"mismatch vs reference: {max_err}"
    print("KERNEL_OK")
</pallas_src>

<mosaic_0001>
module attributes {stable_mosaic.version = 11 : i64} {
  func.func @fused_kernel(%arg0: i32, %arg1: memref<1x1024x512xf32, #tpu.memory_space<vmem>>, %arg2: memref<512x36xf32, #tpu.memory_space<vmem>>, %arg3: memref<8x36x288xf32, #tpu.memory_space<vmem>>, %arg4: memref<1x288xf32, #tpu.memory_space<vmem>>, %arg5: memref<128x128xf32, #tpu.memory_space<vmem>>, %arg6: memref<4x128xf32, #tpu.memory_space<vmem>>, %arg7: memref<4x288x4xf32, #tpu.memory_space<vmem>>, %arg8: memref<1x4xf32, #tpu.memory_space<vmem>>, %arg9: memref<1x1x4xf32, #tpu.memory_space<vmem>>) attributes {dimension_semantics = [#tpu.dimension_semantics<parallel>], iteration_bounds = array<i64: 2>, scalar_prefetch = 0 : i64, scratch_operands = 0 : i64, tpu.core_type = #tpu.core_type<tc>, window_params = [{transform_indices = @transform_0, window_bounds = array<i64: 1, 1024, 512>}, {pipeline_mode = #tpu.pipeline_mode<synchronous>, transform_indices = @transform_1, window_bounds = array<i64: 512, 36>}, {pipeline_mode = #tpu.pipeline_mode<synchronous>, transform_indices = @transform_2, window_bounds = array<i64: 8, 36, 288>}, {pipeline_mode = #tpu.pipeline_mode<synchronous>, transform_indices = @transform_3, window_bounds = array<i64: 1, 288>}, {pipeline_mode = #tpu.pipeline_mode<synchronous>, transform_indices = @transform_4, window_bounds = array<i64: 128, 128>}, {pipeline_mode = #tpu.pipeline_mode<synchronous>, transform_indices = @transform_5, window_bounds = array<i64: 4, 128>}, {pipeline_mode = #tpu.pipeline_mode<synchronous>, transform_indices = @transform_6, window_bounds = array<i64: 4, 288, 4>}, {pipeline_mode = #tpu.pipeline_mode<synchronous>, transform_indices = @transform_7, window_bounds = array<i64: 1, 4>}, {transform_indices = @transform_8, window_bounds = array<i64: 1, 1, 4>}]} {
    %c0 = arith.constant 0 : index
    %c0_0 = arith.constant 0 : index
    %c0_1 = arith.constant 0 : index
    %0 = vector.load %arg1[%c0, %c0_0, %c0_1] : memref<1x1024x512xf32, #tpu.memory_space<vmem>>, vector<1x1024x512xf32>
    %1 = vector.shape_cast %0 : vector<1x1024x512xf32> to vector<1024x512xf32>
    %c0_2 = arith.constant 0 : index
    %c0_3 = arith.constant 0 : index
    %2 = vector.load %arg2[%c0_2, %c0_3] : memref<512x36xf32, #tpu.memory_space<vmem>>, vector<512x36xf32>
    %cst = arith.constant dense<0.000000e+00> : vector<1024x36xf32>
    %3 = tpu.matmul %1, %2, %cst {dimension_numbers = #tpu.dot_dimension_numbers<[1], [0], [0], [1], [0, 0, 1, 1], [], []>} : vector<1024x512xf32>, vector<512x36xf32>, vector<1024x36xf32> -> vector<1024x36xf32>
    %cst_4 = arith.constant 0.000000e+00 : f32
    %4 = vector.broadcast %cst_4 : f32 to vector<128x288xf32>
    %5 = vector.extract_strided_slice %3 {offsets = [0, 0], sizes = [128, 36], strides = [1, 1]} : vector<1024x36xf32> to vector<128x36xf32>
    %c0_5 = arith.constant 0 : index
    %c0_6 = arith.constant 0 : index
    %c0_7 = arith.constant 0 : index
    %6 = vector.load %arg3[%c0_5, %c0_6, %c0_7] : memref<8x36x288xf32, #tpu.memory_space<vmem>>, vector<1x36x288xf32>
    %7 = vector.shape_cast %6 : vector<1x36x288xf32> to vector<36x288xf32>
    %cst_8 = arith.constant dense<0.000000e+00> : vector<128x288xf32>
    %8 = tpu.matmul %5, %7, %cst_8 {dimension_numbers = #tpu.dot_dimension_numbers<[1], [0], [0], [1], [0, 0, 1, 1], [], []>} : vector<128x36xf32>, vector<36x288xf32>, vector<128x288xf32> -> vector<128x288xf32>
    %9 = arith.addf %4, %8 : vector<128x288xf32>
    %10 = vector.extract_strided_slice %3 {offsets = [128, 0], sizes = [128, 36], strides = [1, 1]} : vector<1024x36xf32> to vector<128x36xf32>
    %c1 = arith.constant 1 : index
    %c0_9 = arith.constant 0 : index
    %c0_10 = arith.constant 0 : index
    %11 = vector.load %arg3[%c1, %c0_9, %c0_10] : memref<8x36x288xf32, #tpu.memory_space<vmem>>, vector<1x36x288xf32>
    %12 = vector.shape_cast %11 : vector<1x36x288xf32> to vector<36x288xf32>
    %cst_11 = arith.constant dense<0.000000e+00> : vector<128x288xf32>
    %13 = tpu.matmul %10, %12, %cst_11 {dimension_numbers = #tpu.dot_dimension_numbers<[1], [0], [0], [1], [0, 0, 1, 1], [], []>} : vector<128x36xf32>, vector<36x288xf32>, vector<128x288xf32> -> vector<128x288xf32>
    %14 = arith.addf %9, %13 : vector<128x288xf32>
    %15 = vector.extract_strided_slice %3 {offsets = [256, 0], sizes = [128, 36], strides = [1, 1]} : vector<1024x36xf32> to vector<128x36xf32>
    %c2 = arith.constant 2 : index
    %c0_12 = arith.constant 0 : index
    %c0_13 = arith.constant 0 : index
    %16 = vector.load %arg3[%c2, %c0_12, %c0_13] : memref<8x36x288xf32, #tpu.memory_space<vmem>>, vector<1x36x288xf32>
    %17 = vector.shape_cast %16 : vector<1x36x288xf32> to vector<36x288xf32>
    %cst_14 = arith.constant dense<0.000000e+00> : vector<128x288xf32>
    %18 = tpu.matmul %15, %17, %cst_14 {dimension_numbers = #tpu.dot_dimension_numbers<[1], [0], [0], [1], [0, 0, 1, 1], [], []>} : vector<128x36xf32>, vector<36x288xf32>, vector<128x288xf32> -> vector<128x288xf32>
    %19 = arith.addf %14, %18 : vector<128x288xf32>
    %20 = vector.extract_strided_slice %3 {offsets = [384, 0], sizes = [128, 36], strides = [1, 1]} : vector<1024x36xf32> to vector<128x36xf32>
    %c3 = arith.constant 3 : index
    %c0_15 = arith.constant 0 : index
    %c0_16 = arith.constant 0 : index
    %21 = vector.load %arg3[%c3, %c0_15, %c0_16] : memref<8x36x288xf32, #tpu.memory_space<vmem>>, vector<1x36x288xf32>
    %22 = vector.shape_cast %21 : vector<1x36x288xf32> to vector<36x288xf32>
    %cst_17 = arith.constant dense<0.000000e+00> : vector<128x288xf32>
    %23 = tpu.matmul %20, %22, %cst_17 {dimension_numbers = #tpu.dot_dimension_numbers<[1], [0], [0], [1], [0, 0, 1, 1], [], []>} : vector<128x36xf32>, vector<36x288xf32>, vector<128x288xf32> -> vector<128x288xf32>
    %24 = arith.addf %19, %23 : vector<128x288xf32>
    %25 = vector.extract_strided_slice %3 {offsets = [512, 0], sizes = [128, 36], strides = [1, 1]} : vector<1024x36xf32> to vector<128x36xf32>
    %c4 = arith.constant 4 : index
    %c0_18 = arith.constant 0 : index
    %c0_19 = arith.constant 0 : index
    %26 = vector.load %arg3[%c4, %c0_18, %c0_19] : memref<8x36x288xf32, #tpu.memory_space<vmem>>, vector<1x36x288xf32>
    %27 = vector.shape_cast %26 : vector<1x36x288xf32> to vector<36x288xf32>
    %cst_20 = arith.constant dense<0.000000e+00> : vector<128x288xf32>
    %28 = tpu.matmul %25, %27, %cst_20 {dimension_numbers = #tpu.dot_dimension_numbers<[1], [0], [0], [1], [0, 0, 1, 1], [], []>} : vector<128x36xf32>, vector<36x288xf32>, vector<128x288xf32> -> vector<128x288xf32>
    %29 = arith.addf %24, %28 : vector<128x288xf32>
    %30 = vector.extract_strided_slice %3 {offsets = [640, 0], sizes = [128, 36], strides = [1, 1]} : vector<1024x36xf32> to vector<128x36xf32>
    %c5 = arith.constant 5 : index
    %c0_21 = arith.constant 0 : index
    %c0_22 = arith.constant 0 : index
    %31 = vector.load %arg3[%c5, %c0_21, %c0_22] : memref<8x36x288xf32, #tpu.memory_space<vmem>>, vector<1x36x288xf32>
    %32 = vector.shape_cast %31 : vector<1x36x288xf32> to vector<36x288xf32>
    %cst_23 = arith.constant dense<0.000000e+00> : vector<128x288xf32>
    %33 = tpu.matmul %30, %32, %cst_23 {dimension_numbers = #tpu.dot_dimension_numbers<[1], [0], [0], [1], [0, 0, 1, 1], [], []>} : vector<128x36xf32>, vector<36x288xf32>, vector<128x288xf32> -> vector<128x288xf32>
    %34 = arith.addf %29, %33 : vector<128x288xf32>
    %35 = vector.extract_strided_slice %3 {offsets = [768, 0], sizes = [128, 36], strides = [1, 1]} : vector<1024x36xf32> to vector<128x36xf32>
    %c6 = arith.constant 6 : index
    %c0_24 = arith.constant 0 : index
    %c0_25 = arith.constant 0 : index
    %36 = vector.load %arg3[%c6, %c0_24, %c0_25] : memref<8x36x288xf32, #tpu.memory_space<vmem>>, vector<1x36x288xf32>
    %37 = vector.shape_cast %36 : vector<1x36x288xf32> to vector<36x288xf32>
    %cst_26 = arith.constant dense<0.000000e+00> : vector<128x288xf32>
    %38 = tpu.matmul %35, %37, %cst_26 {dimension_numbers = #tpu.dot_dimension_numbers<[1], [0], [0], [1], [0, 0, 1, 1], [], []>} : vector<128x36xf32>, vector<36x288xf32>, vector<128x288xf32> -> vector<128x288xf32>
    %39 = arith.addf %34, %38 : vector<128x288xf32>
    %40 = vector.extract_strided_slice %3 {offsets = [896, 0], sizes = [128, 36], strides = [1, 1]} : vector<1024x36xf32> to vector<128x36xf32>
    %c7 = arith.constant 7 : index
    %c0_27 = arith.constant 0 : index
    %c0_28 = arith.constant 0 : index
    %41 = vector.load %arg3[%c7, %c0_27, %c0_28] : memref<8x36x288xf32, #tpu.memory_space<vmem>>, vector<1x36x288xf32>
    %42 = vector.shape_cast %41 : vector<1x36x288xf32> to vector<36x288xf32>
    %cst_29 = arith.constant dense<0.000000e+00> : vector<128x288xf32>
    %43 = tpu.matmul %40, %42, %cst_29 {dimension_numbers = #tpu.dot_dimension_numbers<[1], [0], [0], [1], [0, 0, 1, 1], [], []>} : vector<128x36xf32>, vector<36x288xf32>, vector<128x288xf32> -> vector<128x288xf32>
    %44 = arith.addf %39, %43 : vector<128x288xf32>
    %c0_30 = arith.constant 0 : index
    %c0_31 = arith.constant 0 : index
    %45 = vector.load %arg4[%c0_30, %c0_31] : memref<1x288xf32, #tpu.memory_space<vmem>>, vector<1x288xf32>
    %46 = vector.broadcast %45 : vector<1x288xf32> to vector<128x288xf32>
    %47 = arith.addf %44, %46 : vector<128x288xf32>
    %48 = arith.negf %47 : vector<128x288xf32>
    %49 = math.exp %48 : vector<128x288xf32>
    %cst_32 = arith.constant 1.000000e+00 : f32
    %50 = vector.broadcast %cst_32 : f32 to vector<128x288xf32>
    %51 = arith.addf %50, %49 : vector<128x288xf32>
    %52 = arith.divf %50, %51 : vector<128x288xf32>
    %53 = arith.mulf %47, %52 : vector<128x288xf32>
    %c0_33 = arith.constant 0 : index
    %c0_34 = arith.constant 0 : index
    %54 = vector.load %arg5[%c0_33, %c0_34] : memref<128x128xf32, #tpu.memory_space<vmem>>, vector<128x128xf32>
    %cst_35 = arith.constant dense<0.000000e+00> : vector<128x288xf32>
    %55 = tpu.matmul %54, %53, %cst_35 {dimension_numbers = #tpu.dot_dimension_numbers<[1], [0], [0], [1], [0, 0, 1, 1], [], []>} : vector<128x128xf32>, vector<128x288xf32>, vector<128x288xf32> -> vector<128x288xf32>
    %56 = arith.subf %53, %55 : vector<128x288xf32>
    %c0_36 = arith.constant 0 : index
    %c0_37 = arith.constant 0 : index
    %57 = vector.load %arg6[%c0_36, %c0_37] : memref<4x128xf32, #tpu.memory_space<vmem>>, vector<4x128xf32>
    %58 = arith.mulf %56, %56 : vector<128x288xf32>
    %cst_38 = arith.constant dense<0.000000e+00> : vector<4x288xf32>
    %59 = tpu.matmul %57, %58, %cst_38 {dimension_numbers = #tpu.dot_dimension_numbers<[1], [0], [0], [1], [0, 0, 1, 1], [], []>} : vector<4x128xf32>, vector<128x288xf32>, vector<4x288xf32> -> vector<4x288xf32>
    %cst_39 = arith.constant 9.99999997E-7 : f32
    %cst_40 = arith.constant 1.000000e+06 : f32
    %60 = vector.broadcast %cst_39 : f32 to vector<4x288xf32>
    %61 = arith.maximumf %60, %59 : vector<4x288xf32>
    %62 = vector.broadcast %cst_40 : f32 to vector<4x288xf32>
    %63 = arith.minimumf %62, %61 : vector<4x288xf32>
    %64 = math.log %63 : vector<4x288xf32>
    %c0_41 = arith.constant 0 : index
    %c0_42 = arith.constant 0 : index
    %65 = vector.load %arg8[%c0_41, %c0_42] : memref<1x4xf32, #tpu.memory_space<vmem>>, vector<1x4xf32>
    %66 = vector.extract_strided_slice %64 {offsets = [0, 0], sizes = [1, 288], strides = [1, 1]} : vector<4x288xf32> to vector<1x288xf32>
    %c0_43 = arith.constant 0 : index
    %c0_44 = arith.constant 0 : index
    %c0_45 = arith.constant 0 : index
    %67 = vector.load %arg7[%c0_43, %c0_44, %c0_45] : memref<4x288x4xf32, #tpu.memory_space<vmem>>, vector<1x288x4xf32>
    %68 = vector.shape_cast %67 : vector<1x288x4xf32> to vector<288x4xf32>
    %cst_46 = arith.constant dense<0.000000e+00> : vector<1x4xf32>
    %69 = tpu.matmul %66, %68, %cst_46 {dimension_numbers = #tpu.dot_dimension_numbers<[1], [0], [0], [1], [0, 0, 1, 1], [], []>} : vector<1x288xf32>, vector<288x4xf32>, vector<1x4xf32> -> vector<1x4xf32>
    %70 = arith.addf %65, %69 : vector<1x4xf32>
    %71 = vector.extract_strided_slice %64 {offsets = [1, 0], sizes = [1, 288], strides = [1, 1]} : vector<4x288xf32> to vector<1x288xf32>
    %c1_47 = arith.constant 1 : index
    %c0_48 = arith.constant 0 : index
    %c0_49 = arith.constant 0 : index
    %72 = vector.load %arg7[%c1_47, %c0_48, %c0_49] : memref<4x288x4xf32, #tpu.memory_space<vmem>>, vector<1x288x4xf32>
    %73 = vector.shape_cast %72 : vector<1x288x4xf32> to vector<288x4xf32>
    %cst_50 = arith.constant dense<0.000000e+00> : vector<1x4xf32>
    %74 = tpu.matmul %71, %73, %cst_50 {dimension_numbers = #tpu.dot_dimension_numbers<[1], [0], [0], [1], [0, 0, 1, 1], [], []>} : vector<1x288xf32>, vector<288x4xf32>, vector<1x4xf32> -> vector<1x4xf32>
    %75 = arith.addf %70, %74 : vector<1x4xf32>
    %76 = vector.extract_strided_slice %64 {offsets = [2, 0], sizes = [1, 288], strides = [1, 1]} : vector<4x288xf32> to vector<1x288xf32>
    %c2_51 = arith.constant 2 : index
    %c0_52 = arith.constant 0 : index
    %c0_53 = arith.constant 0 : index
    %77 = vector.load %arg7[%c2_51, %c0_52, %c0_53] : memref<4x288x4xf32, #tpu.memory_space<vmem>>, vector<1x288x4xf32>
    %78 = vector.shape_cast %77 : vector<1x288x4xf32> to vector<288x4xf32>
    %cst_54 = arith.constant dense<0.000000e+00> : vector<1x4xf32>
    %79 = tpu.matmul %76, %78, %cst_54 {dimension_numbers = #tpu.dot_dimension_numbers<[1], [0], [0], [1], [0, 0, 1, 1], [], []>} : vector<1x288xf32>, vector<288x4xf32>, vector<1x4xf32> -> vector<1x4xf32>
    %80 = arith.addf %75, %79 : vector<1x4xf32>
    %81 = vector.extract_strided_slice %64 {offsets = [3, 0], sizes = [1, 288], strides = [1, 1]} : vector<4x288xf32> to vector<1x288xf32>
    %c3_55 = arith.constant 3 : index
    %c0_56 = arith.constant 0 : index
    %c0_57 = arith.constant 0 : index
    %82 = vector.load %arg7[%c3_55, %c0_56, %c0_57] : memref<4x288x4xf32, #tpu.memory_space<vmem>>, vector<1x288x4xf32>
    %83 = vector.shape_cast %82 : vector<1x288x4xf32> to vector<288x4xf32>
    %cst_58 = arith.constant dense<0.000000e+00> : vector<1x4xf32>
    %84 = tpu.matmul %81, %83, %cst_58 {dimension_numbers = #tpu.dot_dimension_numbers<[1], [0], [0], [1], [0, 0, 1, 1], [], []>} : vector<1x288xf32>, vector<288x4xf32>, vector<1x4xf32> -> vector<1x4xf32>
    %85 = arith.addf %80, %84 : vector<1x4xf32>
    %cst_59 = arith.constant dense<0xFF800000> : vector<1xf32>
    %86 = vector.multi_reduction <maximumf>, %85, %cst_59 [1] : vector<1x4xf32> to vector<1xf32>
    %87 = vector.shape_cast %86 : vector<1xf32> to vector<1x1xf32>
    %88 = vector.broadcast %87 : vector<1x1xf32> to vector<1x4xf32>
    %89 = arith.subf %85, %88 : vector<1x4xf32>
    %90 = math.exp %89 : vector<1x4xf32>
    %cst_60 = arith.constant dense<0.000000e+00> : vector<1xf32>
    %91 = vector.multi_reduction <add>, %90, %cst_60 [1] : vector<1x4xf32> to vector<1xf32>
    %92 = vector.shape_cast %91 : vector<1xf32> to vector<1x1xf32>
    %93 = math.log %92 : vector<1x1xf32>
    %94 = arith.addf %93, %87 : vector<1x1xf32>
    %95 = vector.broadcast %94 : vector<1x1xf32> to vector<1x4xf32>
    %96 = arith.subf %85, %95 : vector<1x4xf32>
    %c0_61 = arith.constant 0 : index
    %c0_62 = arith.constant 0 : index
    %c0_63 = arith.constant 0 : index
    %97 = vector.load %arg9[%c0_61, %c0_62, %c0_63] : memref<1x1x4xf32, #tpu.memory_space<vmem>>, vector<1x1x4xf32>
    %98 = vector.shape_cast %97 : vector<1x1x4xf32> to vector<1x4xf32>
    %99 = vector.shape_cast %96 : vector<1x4xf32> to vector<1x1x4xf32>
    tpu.vector_store %arg9[%c0_61, %c0_62, %c0_63], %99 {strides = array<i32>} : memref<1x1x4xf32, #tpu.memory_space<vmem>>, vector<1x1x4xf32>,
    return
  }
  func.func @transform_0(%arg0: i32) -> (i32, i32, i32) {
    %c0_i32 = arith.constant 0 : i32
    %c0_i32_0 = arith.constant 0 : i32
    %c0_i32_1 = arith.constant 0 : i32
    return %arg0, %c0_i32, %c0_i32_0 : i32, i32, i32
  }
  func.func @transform_1(%arg0: i32) -> (i32, i32) {
    %c0_i32 = arith.constant 0 : i32
    %c0_i32_0 = arith.constant 0 : i32
    %c0_i32_1 = arith.constant 0 : i32
    return %c0_i32, %c0_i32_0 : i32, i32
  }
  func.func @transform_2(%arg0: i32) -> (i32, i32, i32) {
    %c0_i32 = arith.constant 0 : i32
    %c0_i32_0 = arith.constant 0 : i32
    %c0_i32_1 = arith.constant 0 : i32
    %c0_i32_2 = arith.constant 0 : i32
    return %c0_i32, %c0_i32_0, %c0_i32_1 : i32, i32, i32
  }
  func.func @transform_3(%arg0: i32) -> (i32, i32) {
    %c0_i32 = arith.constant 0 : i32
    %c0_i32_0 = arith.constant 0 : i32
    %c0_i32_1 = arith.constant 0 : i32
    return %c0_i32, %c0_i32_0 : i32, i32
  }
  func.func @transform_4(%arg0: i32) -> (i32, i32) {
    %c0_i32 = arith.constant 0 : i32
    %c0_i32_0 = arith.constant 0 : i32
    %c0_i32_1 = arith.constant 0 : i32
    return %c0_i32, %c0_i32_0 : i32, i32
  }
  func.func @transform_5(%arg0: i32) -> (i32, i32) {
    %c0_i32 = arith.constant 0 : i32
    %c0_i32_0 = arith.constant 0 : i32
    %c0_i32_1 = arith.constant 0 : i32
    return %c0_i32, %c0_i32_0 : i32, i32
  }
  func.func @transform_6(%arg0: i32) -> (i32, i32, i32) {
    %c0_i32 = arith.constant 0 : i32
    %c0_i32_0 = arith.constant 0 : i32
    %c0_i32_1 = arith.constant 0 : i32
    %c0_i32_2 = arith.constant 0 : i32
    return %c0_i32, %c0_i32_0, %c0_i32_1 : i32, i32, i32
  }
  func.func @transform_7(%arg0: i32) -> (i32, i32) {
    %c0_i32 = arith.constant 0 : i32
    %c0_i32_0 = arith.constant 0 : i32
    %c0_i32_1 = arith.constant 0 : i32
    return %c0_i32, %c0_i32_0 : i32, i32
  }
  func.func @transform_8(%arg0: i32) -> (i32, i32, i32) {
    %c0_i32 = arith.constant 0 : i32
    %c0_i32_0 = arith.constant 0 : i32
    %c0_i32_1 = arith.constant 0 : i32
    return %arg0, %c0_i32, %c0_i32_0 : i32, i32, i32
  }
}

</mosaic_0001>

<llo_original>
// kernel: fbmsnet_forward.1
$region0: #{fbmsnet_forward.1}
  #allocation0 [shape = 'u32[]', space=smem, size = 0x4, offset = 0x4, fixed_abs, tag = 'smem constant byte address 0x4 - core index']
  #allocation1 [shape = 'u32[72,128]{1,0:T(1,128)}', space=vmem, size = 0x9000, scoped, tag = 'internal scratch']
  %s0 = inlined_call_operand.vmem [shape: f32[2,1024,512], index: 0, kind: input, shape index: {}]
  %s1 = inlined_call_operand.vmem [shape: f32[512,36], index: 1, kind: input, shape index: {}]
  %s2 = inlined_call_operand.vmem [shape: f32[8,36,288], index: 2, kind: input, shape index: {}]
  %s3 = inlined_call_operand.vmem [shape: f32[1,288], index: 3, kind: input, shape index: {}]
  %s4 = inlined_call_operand.vmem [shape: f32[128,128], index: 4, kind: input, shape index: {}]
  %s5 = inlined_call_operand.vmem [shape: f32[4,128], index: 5, kind: input, shape index: {}]
  %s6 = inlined_call_operand.vmem [shape: f32[4,288,4], index: 6, kind: input, shape index: {}]
  %s7 = inlined_call_operand.vmem [shape: f32[1,4], index: 7, kind: input, shape index: {}]
  %s8 = inlined_call_operand.hbm [shape: f32[2,1,4], index: 8, kind: output, shape index: {}]
  %s9 = sld [smem:[#allocation0]]
  $region65: #{fbmsnet_forward.1} parent=0
    _
  %s11 = ssub.s32 1, %s9
  %s12 = scalar_select 0, %s11, %s9
  $region1: #{fbmsnet_forward.1} parent=0
    #allocation2 [shape = 'u8[1024]{0}', space=vmem, size = 0x400, scoped, tag = 'output window, operand 0']
    #allocation3 [shape = 's32[2]{0}', space=sflag, size = 0x8, scoped, tag = 'scoped memory for fbmsnet_forward.1']
    %13 = vsyncpa [#allocation3], 0
    %s14 = scalar_lea.sflag [#allocation3], 1
    %15 = vsyncpa %s14, 0
    loop: start=0, step=1, limit=4
    $region2: #{fbmsnet_forward.1} parent=1 // loop_pre_header
      _
    $region3: #{fbmsnet_forward.1} parent=1 // loop_header
      %s17 = sphi 0, %s21
      %p18 = scmp.ge.s32.totalorder %s17, 4
      %s27 = sphi 0, %s29
      %s30 = sphi 0, %s27
      %s31 = sphi 0, %s30
      %s47 = sphi 0, %s31
      %s51 = sphi 0, %s51
      %s53 = sphi 0, %s51
      %s54 = sphi 0, %s53
      %s68 = sphi 0, %s54
      %s72 = sphi 0, %s72
      %s74 = sphi 0, %s72
      %s75 = sphi 0, %s74
      %s89 = sphi 0, %s75
      %s93 = sphi 0, %s93
      %s95 = sphi 0, %s93
      %s96 = sphi 0, %s95
      %s110 = sphi 0, %s96
      %s114 = sphi 0, %s114
      %s116 = sphi 0, %s114
      %s117 = sphi 0, %s116
      %s131 = sphi 0, %s117
      %s135 = sphi 0, %s135
      %s137 = sphi 0, %s135
      %s138 = sphi 0, %s137
      %s152 = sphi 0, %s138
      %s156 = sphi 0, %s156
      %s158 = sphi 0, %s156
      %s159 = sphi 0, %s158
      %s173 = sphi 0, %s159
      %s177 = sphi 0, %s177
      %s179 = sphi 0, %s177
      %s180 = sphi 0, %s179
      %s194 = sphi 0, %s180
      %s200 = sphi 0, %s202
      %s203 = sphi 0, %s200
      %s204 = sphi 0, %s203
      %s220 = sphi 0, %s204
    $region4: #{fbmsnet_forward.1} parent=1 // loop_header_branch
      %20 = sbr.rel (%p18) target = $region8
    $region5: #{fbmsnet_forward.1} parent=1 // loop_body
      %s22 = ssub.s32 %s17, 1
      %s23 = ssub.s32 %s17, 2
      %s24 = sadd.s32 %s17, 1
      %s25 = ssub.s32 %s17, %s24
      %p26 = scmp.eq.s32.totalorder %s25, 0
      %s28 = sadd.s32 %s27, 1
      %s29 = scalar_select %p26, %s27, %s28
      %p32 = pneg %p26
      %p33 = scmp.eq.s32.totalorder %s17, 1
      %p34 = por %p32, %p33
      %p35 = scmp.ne.s32.totalorder %s27, %s30
      %p36 = scmp.eq.s32.totalorder %s17, 0
      %p37 = por %p35, %p36
      %p38 = scmp.ne.s32.totalorder %s27, %s30
      %p39 = scmp.eq.s32.totalorder %s22, 1
      %p40 = por %p38, %p39
      %p41 = scmp.ne.s32.totalorder %s30, %s31
      %p42 = scmp.eq.s32.totalorder %s22, 0
      %p43 = por %p41, %p42
      %p44 = scmp.ne.s32.totalorder %s30, %s31
      %p45 = scmp.eq.s32.totalorder %s23, 1
      %p46 = por %p44, %p45
      %p48 = scmp.ne.s32.totalorder %s31, %s47
      %p49 = scmp.eq.s32.totalorder %s23, 0
      %p50 = por %p48, %p49
      %s52 = sadd.s32 %s51, 1
      %p55 = scmp.eq.s32.totalorder %s17, 1
      %p56 = scmp.ne.s32.totalorder %s51, %s53
      %p57 = scmp.eq.s32.totalorder %s17, 0
      %p58 = por %p56, %p57
      %p59 = scmp.ne.s32.totalorder %s51, %s53
      %p60 = scmp.eq.s32.totalorder %s22, 1
      %p61 = por %p59, %p60
      %p62 = scmp.ne.s32.totalorder %s53, %s54
      %p63 = scmp.eq.s32.totalorder %s22, 0
      %p64 = por %p62, %p63
      %p65 = scmp.ne.s32.totalorder %s53, %s54
      %p66 = scmp.eq.s32.totalorder %s23, 1
      %p67 = por %p65, %p66
      %p69 = scmp.ne.s32.totalorder %s54, %s68
      %p70 = scmp.eq.s32.totalorder %s23, 0
      %p71 = por %p69, %p70
      %s73 = sadd.s32 %s72, 1
      %p76 = scmp.eq.s32.totalorder %s17, 1
      %p77 = scmp.ne.s32.totalorder %s72, %s74
      %p78 = scmp.eq.s32.totalorder %s17, 0
      %p79 = por %p77, %p78
      %p80 = scmp.ne.s32.totalorder %s72, %s74
      %p81 = scmp.eq.s32.totalorder %s22, 1
      %p82 = por %p80, %p81
      %p83 = scmp.ne.s32.totalorder %s74, %s75
      %p84 = scmp.eq.s32.totalorder %s22, 0
      %p85 = por %p83, %p84
      %p86 = scmp.ne.s32.totalorder %s74, %s75
      %p87 = scmp.eq.s32.totalorder %s23, 1
      %p88 = por %p86, %p87
      %p90 = scmp.ne.s32.totalorder %s75, %s89
      %p91 = scmp.eq.s32.totalorder %s23, 0
      %p92 = por %p90, %p91
      %s94 = sadd.s32 %s93, 1
      %p97 = scmp.eq.s32.totalorder %s17, 1
      %p98 = scmp.ne.s32.totalorder %s93, %s95
      %p99 = scmp.eq.s32.totalorder %s17, 0
      %p100 = por %p98, %p99
      %p101 = scmp.ne.s32.totalorder %s93, %s95
      %p102 = scmp.eq.s32.totalorder %s22, 1
      %p103 = por %p101, %p102
      %p104 = scmp.ne.s32.totalorder %s95, %s96
      %p105 = scmp.eq.s32.totalorder %s22, 0
      %p106 = por %p104, %p105
      %p107 = scmp.ne.s32.totalorder %s95, %s96
      %p108 = scmp.eq.s32.totalorder %s23, 1
      %p109 = por %p107, %p108
      %p111 = scmp.ne.s32.totalorder %s96, %s110
      %p112 = scmp.eq.s32.totalorder %s23, 0
      %p113 = por %p111, %p112
      %s115 = sadd.s32 %s114, 1
      %p118 = scmp.eq.s32.totalorder %s17, 1
      %p119 = scmp.ne.s32.totalorder %s114, %s116
      %p120 = scmp.eq.s32.totalorder %s17, 0
      %p121 = por %p119, %p120
      %p122 = scmp.ne.s32.totalorder %s114, %s116
      %p123 = scmp.eq.s32.totalorder %s22, 1
      %p124 = por %p122, %p123
      %p125 = scmp.ne.s32.totalorder %s116, %s117
      %p126 = scmp.eq.s32.totalorder %s22, 0
      %p127 = por %p125, %p126
      %p128 = scmp.ne.s32.totalorder %s116, %s117
      %p129 = scmp.eq.s32.totalorder %s23, 1
      %p130 = por %p128, %p129
      %p132 = scmp.ne.s32.totalorder %s117, %s131
      %p133 = scmp.eq.s32.totalorder %s23, 0
      %p134 = por %p132, %p133
      %s136 = sadd.s32 %s135, 1
      %p139 = scmp.eq.s32.totalorder %s17, 1
      %p140 = scmp.ne.s32.totalorder %s135, %s137
      %p141 = scmp.eq.s32.totalorder %s17, 0
      %p142 = por %p140, %p141
      %p143 = scmp.ne.s32.totalorder %s135, %s137
      %p144 = scmp.eq.s32.totalorder %s22, 1
      %p145 = por %p143, %p144
      %p146 = scmp.ne.s32.totalorder %s137, %s138
      %p147 = scmp.eq.s32.totalorder %s22, 0
      %p148 = por %p146, %p147
      %p149 = scmp.ne.s32.totalorder %s137, %s138
      %p150 = scmp.eq.s32.totalorder %s23, 1
      %p151 = por %p149, %p150
      %p153 = scmp.ne.s32.totalorder %s138, %s152
      %p154 = scmp.eq.s32.totalorder %s23, 0
      %p155 = por %p153, %p154
      %s157 = sadd.s32 %s156, 1
      %p160 = scmp.eq.s32.totalorder %s17, 1
      %p161 = scmp.ne.s32.totalorder %s156, %s158
      %p162 = scmp.eq.s32.totalorder %s17, 0
      %p163 = por %p161, %p162
      %p164 = scmp.ne.s32.totalorder %s156, %s158
      %p165 = scmp.eq.s32.totalorder %s22, 1
      %p166 = por %p164, %p165
      %p167 = scmp.ne.s32.totalorder %s158, %s159
      %p168 = scmp.eq.s32.totalorder %s22, 0
      %p169 = por %p167, %p168
      %p170 = scmp.ne.s32.totalorder %s158, %s159
      %p171 = scmp.eq.s32.totalorder %s23, 1
      %p172 = por %p170, %p171
      %p174 = scmp.ne.s32.totalorder %s159, %s173
      %p175 = scmp.eq.s32.totalorder %s23, 0
      %p176 = por %p174, %p175
      %s178 = sadd.s32 %s177, 1
      %p181 = scmp.eq.s32.totalorder %s17, 1
      %p182 = scmp.ne.s32.totalorder %s177, %s179
      %p183 = scmp.eq.s32.totalorder %s17, 0
      %p184 = por %p182, %p183
      %p185 = scmp.ne.s32.totalorder %s177, %s179
      %p186 = scmp.eq.s32.totalorder %s22, 1
      %p187 = por %p185, %p186
      %p188 = scmp.ne.s32.totalorder %s179, %s180
      %p189 = scmp.eq.s32.totalorder %s22, 0
      %p190 = por %p188, %p189
      %p191 = scmp.ne.s32.totalorder %s179, %s180
      %p192 = scmp.eq.s32.totalorder %s23, 1
      %p193 = por %p191, %p192
      %p195 = scmp.ne.s32.totalorder %s180, %s194
      %p196 = scmp.eq.s32.totalorder %s23, 0
      %p197 = por %p195, %p196
      %s198 = ssub.s32 %s17, %s24
      %p199 = scmp.eq.s32.totalorder %s198, 0
      %s201 = sadd.s32 %s200, 1
      %s202 = scalar_select %p199, %s200, %s201
      %p205 = pneg %p199
      %p206 = scmp.eq.s32.totalorder %s17, 1
      %p207 = por %p205, %p206
      %p208 = scmp.ne.s32.totalorder %s200, %s203
      %p209 = scmp.eq.s32.totalorder %s17, 0
      %p210 = por %p208, %p209
      %p211 = scmp.ne.s32.totalorder %s200, %s203
      %p212 = scmp.eq.s32.totalorder %s22, 1
      %p213 = por %p211, %p212
      %p214 = scmp.ne.s32.totalorder %s203, %s204
      %p215 = scmp.eq.s32.totalorder %s22, 0
      %p216 = por %p214, %p215
      %p217 = scmp.ne.s32.totalorder %s203, %s204
      %p218 = scmp.eq.s32.totalorder %s23, 1
      %p219 = por %p217, %p218
      %p221 = scmp.ne.s32.totalorder %s204, %s220
      %p222 = scmp.eq.s32.totalorder %s23, 0
      %p223 = por %p221, %p222
      %p224 = scmp.le.s32.totalorder 1, %s17
      %p225 = scmp.lt.s32.totalorder %s17, 3
      %p226 = pnand %p224, %p225
      %p227 = pneg %p226
      // Predicated region
      $region9: #{fbmsnet_forward.1} parent=5 // pred_check
        _
      $region10: #{fbmsnet_forward.1} parent=5 // pred_check_branch
        %229 = sbr.rel (%p226) target = $region12
      $region11: #{fbmsnet_forward.1} parent=5 // pred_region
        %s230 = ssub.s32 %s17, 1
        // Predicated region
        $region13: #{fbmsnet_forward.1} parent=11 // pred_check
          %p231 = pneg %p64
        $region14: #{fbmsnet_forward.1} parent=11 // pred_check_branch
          %233 = sbr.rel (%p231) target = $region16
        $region15: #{fbmsnet_forward.1} parent=11 // pred_region
          _
        $region16: #{fbmsnet_forward.1} parent=11 // pred_fallthru
          _
        // Predicated region
        $region17: #{fbmsnet_forward.1} parent=11 // pred_check
          %p234 = pneg %p85
        $region18: #{fbmsnet_forward.1} parent=11 // pred_check_branch
          %236 = sbr.rel (%p234) target = $region20
        $region19: #{fbmsnet_forward.1} parent=11 // pred_region
          _
        $region20: #{fbmsnet_forward.1} parent=11 // pred_fallthru
          _
        // Predicated region
        $region21: #{fbmsnet_forward.1} parent=11 // pred_check
          %p237 = pneg %p106
        $region22: #{fbmsnet_forward.1} parent=11 // pred_check_branch
          %239 = sbr.rel (%p237) target = $region24
        $region23: #{fbmsnet_forward.1} parent=11 // pred_region
          _
        $region24: #{fbmsnet_forward.1} parent=11 // pred_fallthru
          _
        // Predicated region
        $region25: #{fbmsnet_forward.1} parent=11 // pred_check
          %p240 = pneg %p127
        $region26: #{fbmsnet_forward.1} parent=11 // pred_check_branch
          %242 = sbr.rel (%p240) target = $region28
        $region27: #{fbmsnet_forward.1} parent=11 // pred_region
          _
        $region28: #{fbmsnet_forward.1} parent=11 // pred_fallthru
          _
        // Predicated region
        $region29: #{fbmsnet_forward.1} parent=11 // pred_check
          %p243 = pneg %p148
        $region30: #{fbmsnet_forward.1} parent=11 // pred_check_branch
          %245 = sbr.rel (%p243) target = $region32
        $region31: #{fbmsnet_forward.1} parent=11 // pred_region
          _
        $region32: #{fbmsnet_forward.1} parent=11 // pred_fallthru
          _
        // Predicated region
        $region33: #{fbmsnet_forward.1} parent=11 // pred_check
          %p246 = pneg %p169
        $region34: #{fbmsnet_forward.1} parent=11 // pred_check_branch
          %248 = sbr.rel (%p246) target = $region36
        $region35: #{fbmsnet_forward.1} parent=11 // pred_region
          _
        $region36: #{fbmsnet_forward.1} parent=11 // pred_fallthru
          _
        // Predicated region
        $region37: #{fbmsnet_forward.1} parent=11 // pred_check
          %p249 = pneg %p190
        $region38: #{fbmsnet_forward.1} parent=11 // pred_check_branch
          %251 = sbr.rel (%p249) target = $region40
        $region39: #{fbmsnet_forward.1} parent=11 // pred_region
          _
        $region40: #{fbmsnet_forward.1} parent=11 // pred_fallthru
          _
      $region12: #{fbmsnet_forward.1} parent=5 // pred_fallthru
        _
      %p252 = scmp.lt.s32.totalorder %s17, 2
      // Predicated region
      $region41: #{fbmsnet_forward.1} parent=5 // pred_check
        %p253 = pneg %p252
      $region42: #{fbmsnet_forward.1} parent=5 // pred_check_branch
        %255 = sbr.rel (%p253) target = $region44
      $region43: #{fbmsnet_forward.1} parent=5 // pred_region
        // Predicated region
        $region45: #{fbmsnet_forward.1} parent=43 // pred_check
          %p256 = pneg %p37
        $region46: #{fbmsnet_forward.1} parent=43 // pred_check_branch
          %258 = sbr.rel (%p256) target = $region48
        $region47: #{fbmsnet_forward.1} parent=43 // pred_region
          %p259 = scmp.lt.s32.totalorder %s17, 1
          %s260 = scalar_select %p259, %s17, 1
          %s261 = smul.addr %s260, 512
          %s262 = smul.addr %s261, 8
          %s263 = scalar_lea.vmem %s0, %s262
        $region48: #{fbmsnet_forward.1} parent=43 // pred_fallthru
          _
      $region44: #{fbmsnet_forward.1} parent=5 // pred_fallthru
        _
      %p264 = scmp.le.s32.totalorder 1, %s17
      %p265 = scmp.lt.s32.totalorder %s17, 3
      %p266 = pnand %p264, %p265
      %p267 = pneg %p266
      // Predicated region
      $region49: #{fbmsnet_forward.1} parent=5 // pred_check
        _
      $region50: #{fbmsnet_forward.1} parent=5 // pred_check_branch
        %269 = sbr.rel (%p266) target = $region52
      $region51: #{fbmsnet_forward.1} parent=5 // pred_region
        %s270 = ssub.s32 %s17, 1
        %p271 = scmp.lt.s32.totalorder %s22, 1
        %s272 = scalar_select %p271, %s22, 1
        %s273 = smul.addr %s272, 512
        %s274 = smul.addr %s273, 8
        %s275 = scalar_lea.vmem %s0, %s274
        %p276 = pneg %p43
        %p277 = pneg %p40
        %p278 = pneg %p64
        %p279 = pneg %p61
        %p280 = pneg %p85
        %p281 = pneg %p82
        %p282 = pneg %p106
        %p283 = pneg %p103
        %p284 = pneg %p127
        %p285 = pneg %p124
        %p286 = pneg %p148
        %p287 = pneg %p145
        %p288 = pneg %p169
        %p289 = pneg %p166
        %p290 = pneg %p190
        %p291 = pneg %p187
        %p292 = pneg %p216
        %p293 = pneg %p213
        %s294 = sand.u32 %s203, 1
        %s295 = scalar_lea.sflag [#allocation3], %s294
        %s296 = sand.u32 %s203, 1
        %s297 = scalar_lea.vmem [#allocation2], %s296
        %p298 = scmp.lt.s32.totalorder %s22, 1
        %s299 = scalar_select %p298, %s22, 1
        %s300 = smul.addr %s299, 512
        %s301 = smul.addr %s300, 8
        %s302 = scalar_lea.vmem %s0, %s301
        %v303 = vld [vmem:[%s302] sm:$0xff]
        %v304 = vld [vmem:[%s302 + $0x8] sm:$0xff]
        %v305 = vld [vmem:[%s302 + $0x10] sm:$0xff]
        %v306 = vld [vmem:[%s302 + $0x18] sm:$0xff]
        %v307 = vld [vmem:[%s302 + $0x20] sm:$0xff]
        %v308 = vld [vmem:[%s302 + $0x28] sm:$0xff]
        %v309 = vld [vmem:[%s302 + $0x30] sm:$0xff]
        %v310 = vld [vmem:[%s302 + $0x38] sm:$0xff]
        %v311 = vld [vmem:[%s302 + $0x40] sm:$0xff]
        %v312 = vld [vmem:[%s302 + $0x48] sm:$0xff]
        %v313 = vld [vmem:[%s302 + $0x50] sm:$0xff]
        %v314 = vld [vmem:[%s302 + $0x58] sm:$0xff]
        %v315 = vld [vmem:[%s302 + $0x60] sm:$0xff]
        %v316 = vld [vmem:[%s302 + $0x68] sm:$0xff]
        %v317 = vld [vmem:[%s302 + $0x70] sm:$0xff]
        %v318 = vld [vmem:[%s302 + $0x78] sm:$0xff]
        %v319 = vld [vmem:[%s302 + $0x80] sm:$0xff]
        %v320 = vld [vmem:[%s302 + $0x88] sm:$0xff]
        %v321 = vld [vmem:[%s302 + $0x90] sm:$0xff]
        %v322 = vld [vmem:[%s302 + $0x98] sm:$0xff]
        %v323 = vld [vmem:[%s302 + $0xa0] sm:$0xff]
        %v324 = vld [vmem:[%s302 + $0xa8] sm:$0xff]
        %v325 = vld [vmem:[%s302 + $0xb0] sm:$0xff]
        %v326 = vld [vmem:[%s302 + $0xb8] sm:$0xff]
        %v327 = vld [vmem:[%s302 + $0xc0] sm:$0xff]
        %v328 = vld [vmem:[%s302 + $0xc8] sm:$0xff]
        %v329 = vld [vmem:[%s302 + $0xd0] sm:$0xff]
        %v330 = vld [vmem:[%s302 + $0xd8] sm:$0xff]
        %v331 = vld [vmem:[%s302 + $0xe0] sm:$0xff]
        %v332 = vld [vmem:[%s302 + $0xe8] sm:$0xff]
        %v333 = vld [vmem:[%s302 + $0xf0] sm:$0xff]
        %v334 = vld [vmem:[%s302 + $0xf8] sm:$0xff]
        %v335 = vld [vmem:[%s302 + $0x100] sm:$0xff]
        %v336 = vld [vmem:[%s302 + $0x108] sm:$0xff]
        %v337 = vld [vmem:[%s302 + $0x110] sm:$0xff]
        %v338 = vld [vmem:[%s302 + $0x118] sm:$0xff]
        %v339 = vld [vmem:[%s302 + $0x120] sm:$0xff]
        %v340 = vld [vmem:[%s302 + $0x128] sm:$0xff]
        %v341 = vld [vmem:[%s302 + $0x130] sm:$0xff]
        %v342 = vld [vmem:[%s302 + $0x138] sm:$0xff]
        %v343 = vld [vmem:[%s302 + $0x140] sm:$0xff]
        %v344 = vld [vmem:[%s302 + $0x148] sm:$0xff]
        %v345 = vld [vmem:[%s302 + $0x150] sm:$0xff]
        %v346 = vld [vmem:[%s302 + $0x158] sm:$0xff]
        %v347 = vld [vmem:[%s302 + $0x160] sm:$0xff]
        %v348 = vld [vmem:[%s302 + $0x168] sm:$0xff]
        %v349 = vld [vmem:[%s302 + $0x170] sm:$0xff]
        %v350 = vld [vmem:[%s302 + $0x178] sm:$0xff]
        %v351 = vld [vmem:[%s302 + $0x180] sm:$0xff]
        %v352 = vld [vmem:[%s302 + $0x188] sm:$0xff]
        %v353 = vld [vmem:[%s302 + $0x190] sm:$0xff]
        %v354 = vld [vmem:[%s302 + $0x198] sm:$0xff]
        %v355 = vld [vmem:[%s302 + $0x1a0] sm:$0xff]
        %v356 = vld [vmem:[%s302 + $0x1a8] sm:$0xff]
        %v357 = vld [vmem:[%s302 + $0x1b0] sm:$0xff]
        %v358 = vld [vmem:[%s302 + $0x1b8] sm:$0xff]
        %v359 = vld [vmem:[%s302 + $0x1c0] sm:$0xff]
        %v360 = vld [vmem:[%s302 + $0x1c8] sm:$0xff]
        %v361 = vld [vmem:[%s302 + $0x1d0] sm:$0xff]
        %v362 = vld [vmem:[%s302 + $0x1d8] sm:$0xff]
        %v363 = vld [vmem:[%s302 + $0x1e0] sm:$0xff]
        %v364 = vld [vmem:[%s302 + $0x1e8] sm:$0xff]
        %v365 = vld [vmem:[%s302 + $0x1f0] sm:$0xff]
        %v366 = vld [vmem:[%s302 + $0x1f8] sm:$0xff]
        %v367 = vld [vmem:[%s302 + $0x200] sm:$0xff]
        %v368 = vld [vmem:[%s302 + $0x208] sm:$0xff]
        %v369 = vld [vmem:[%s302 + $0x210] sm:$0xff]
        %v370 = vld [vmem:[%s302 + $0x218] sm:$0xff]
        %v371 = vld [vmem:[%s302 + $0x220] sm:$0xff]
        %v372 = vld [vmem:[%s302 + $0x228] sm:$0xff]
        %v373 = vld [vmem:[%s302 + $0x230] sm:$0xff]
        %v374 = vld [vmem:[%s302 + $0x238] sm:$0xff]
        %v375 = vld [vmem:[%s302 + $0x240] sm:$0xff]
        %v376 = vld [vmem:[%s302 + $0x248] sm:$0xff]
        %v377 = vld [vmem:[%s302 + $0x250] sm:$0xff]
        %v378 = vld [vmem:[%s302 + $0x258] sm:$0xff]
        %v379 = vld [vmem:[%s302 + $0x260] sm:$0xff]
        %v380 = vld [vmem:[%s302 + $0x268] sm:$0xff]
        %v381 = vld [vmem:[%s302 + $0x270] sm:$0xff]
        %v382 = vld [vmem:[%s302 + $0x278] sm:$0xff]
        %v383 = vld [vmem:[%s302 + $0x280] sm:$0xff]
        %v384 = vld [vmem:[%s302 + $0x288] sm:$0xff]
        %v385 = vld [vmem:[%s302 + $0x290] sm:$0xff]
        %v386 = vld [vmem:[%s302 + $0x298] sm:$0xff]
        %v387 = vld [vmem:[%s302 + $0x2a0] sm:$0xff]
        %v388 = vld [vmem:[%s302 + $0x2a8] sm:$0xff]
        %v389 = vld [vmem:[%s302 + $0x2b0] sm:$0xff]
        %v390 = vld [vmem:[%s302 + $0x2b8] sm:$0xff]
        %v391 = vld [vmem:[%s302 + $0x2c0] sm:$0xff]
        %v392 = vld [vmem:[%s302 + $0x2c8] sm:$0xff]
        %v393 = vld [vmem:[%s302 + $0x2d0] sm:$0xff]
        %v394 = vld [vmem:[%s302 + $0x2d8] sm:$0xff]
        %v395 = vld [vmem:[%s302 + $0x2e0] sm:$0xff]
        %v396 = vld [vmem:[%s302 + $0x2e8] sm:$0xff]
        %v397 = vld [vmem:[%s302 + $0x2f0] sm:$0xff]
        %v398 = vld [vmem:[%s302 + $0x2f8] sm:$0xff]
        %v399 = vld [vmem:[%s302 + $0x300] sm:$0xff]
        %v400 = vld [vmem:[%s302 + $0x308] sm:$0xff]
        %v401 = vld [vmem:[%s302 + $0x310] sm:$0xff]
        %v402 = vld [vmem:[%s302 + $0x318] sm:$0xff]
        %v403 = vld [vmem:[%s302 + $0x320] sm:$0xff]
        %v404 = vld [vmem:[%s302 + $0x328] sm:$0xff]
        %v405 = vld [vmem:[%s302 + $0x330] sm:$0xff]
        %v406 = vld [vmem:[%s302 + $0x338] sm:$0xff]
        %v407 = vld [vmem:[%s302 + $0x340] sm:$0xff]
        %v408 = vld [vmem:[%s302 + $0x348] sm:$0xff]
        %v409 = vld [vmem:[%s302 + $0x350] sm:$0xff]
        %v410 = vld [vmem:[%s302 + $0x358] sm:$0xff]
        %v411 = vld [vmem:[%s302 + $0x360] sm:$0xff]
        %v412 = vld [vmem:[%s302 + $0x368] sm:$0xff]
        %v413 = vld [vmem:[%s302 + $0x370] sm:$0xff]
        %v414 = vld [vmem:[%s302 + $0x378] sm:$0xff]
        %v415 = vld [vmem:[%s302 + $0x380] sm:$0xff]
        %v416 = vld [vmem:[%s302 + $0x388] sm:$0xff]
        %v417 = vld [vmem:[%s302 + $0x390] sm:$0xff]
        %v418 = vld [vmem:[%s302 + $0x398] sm:$0xff]
        %v419 = vld [vmem:[%s302 + $0x3a0] sm:$0xff]
        %v420 = vld [vmem:[%s302 + $0x3a8] sm:$0xff]
        %v421 = vld [vmem:[%s302 + $0x3b0] sm:$0xff]
        %v422 = vld [vmem:[%s302 + $0x3b8] sm:$0xff]
        %v423 = vld [vmem:[%s302 + $0x3c0] sm:$0xff]
        %v424 = vld [vmem:[%s302 + $0x3c8] sm:$0xff]
        %v425 = vld [vmem:[%s302 + $0x3d0] sm:$0xff]
        %v426 = vld [vmem:[%s302 + $0x3d8] sm:$0xff]
        %v427 = vld [vmem:[%s302 + $0x3e0] sm:$0xff]
        %v428 = vld [vmem:[%s302 + $0x3e8] sm:$0xff]
        %v429 = vld [vmem:[%s302 + $0x3f0] sm:$0xff]
        %v430 = vld [vmem:[%s302 + $0x3f8] sm:$0xff]
        %v431 = vld [vmem:[%s302 + $0x400] sm:$0xff]
        %v432 = vld [vmem:[%s302 + $0x408] sm:$0xff]
        %v433 = vld [vmem:[%s302 + $0x410] sm:$0xff]
        %v434 = vld [vmem:[%s302 + $0x418] sm:$0xff]
        %v435 = vld [vmem:[%s302 + $0x420] sm:$0xff]
        %v436 = vld [vmem:[%s302 + $0x428] sm:$0xff]
        %v437 = vld [vmem:[%s302 + $0x430] sm:$0xff]
        %v438 = vld [vmem:[%s302 + $0x438] sm:$0xff]
        %v439 = vld [vmem:[%s302 + $0x440] sm:$0xff]
        %v440 = vld [vmem:[%s302 + $0x448] sm:$0xff]
        %v441 = vld [vmem:[%s302 + $0x450] sm:$0xff]
        %v442 = vld [vmem:[%s302 + $0x458] sm:$0xff]
        %v443 = vld [vmem:[%s302 + $0x460] sm:$0xff]
        %v444 = vld [vmem:[%s302 + $0x468] sm:$0xff]
        %v445 = vld [vmem:[%s302 + $0x470] sm:$0xff]
        %v446 = vld [vmem:[%s302 + $0x478] sm:$0xff]
        %v447 = vld [vmem:[%s302 + $0x480] sm:$0xff]
        %v448 = vld [vmem:[%s302 + $0x488] sm:$0xff]
        %v449 = vld [vmem:[%s302 + $0x490] sm:$0xff]
        %v450 = vld [vmem:[%s302 + $0x498] sm:$0xff]
        %v451 = vld [vmem:[%s302 + $0x4a0] sm:$0xff]
        %v452 = vld [vmem:[%s302 + $0x4a8] sm:$0xff]
        %v453 = vld [vmem:[%s302 + $0x4b0] sm:$0xff]
        %v454 = vld [vmem:[%s302 + $0x4b8] sm:$0xff]
        %v455 = vld [vmem:[%s302 + $0x4c0] sm:$0xff]
        %v456 = vld [vmem:[%s302 + $0x4c8] sm:$0xff]
        %v457 = vld [vmem:[%s302 + $0x4d0] sm:$0xff]
        %v458 = vld [vmem:[%s302 + $0x4d8] sm:$0xff]
        %v459 = vld [vmem:[%s302 + $0x4e0] sm:$0xff]
        %v460 = vld [vmem:[%s302 + $0x4e8] sm:$0xff]
        %v461 = vld [vmem:[%s302 + $0x4f0] sm:$0xff]
        %v462 = vld [vmem:[%s302 + $0x4f8] sm:$0xff]
        %v463 = vld [vmem:[%s302 + $0x500] sm:$0xff]
        %v464 = vld [vmem:[%s302 + $0x508] sm:$0xff]
        %v465 = vld [vmem:[%s302 + $0x510] sm:$0xff]
        %v466 = vld [vmem:[%s302 + $0x518] sm:$0xff]
        %v467 = vld [vmem:[%s302 + $0x520] sm:$0xff]
        %v468 = vld [vmem:[%s302 + $0x528] sm:$0xff]
        %v469 = vld [vmem:[%s302 + $0x530] sm:$0xff]
        %v470 = vld [vmem:[%s302 + $0x538] sm:$0xff]
        %v471 = vld [vmem:[%s302 + $0x540] sm:$0xff]
        %v472 = vld [vmem:[%s302 + $0x548] sm:$0xff]
        %v473 = vld [vmem:[%s302 + $0x550] sm:$0xff]
        %v474 = vld [vmem:[%s302 + $0x558] sm:$0xff]
        %v475 = vld [vmem:[%s302 + $0x560] sm:$0xff]
        %v476 = vld [vmem:[%s302 + $0x568] sm:$0xff]
        %v477 = vld [vmem:[%s302 + $0x570] sm:$0xff]
        %v478 = vld [vmem:[%s302 + $0x578] sm:$0xff]
        %v479 = vld [vmem:[%s302 + $0x580] sm:$0xff]
        %v480 = vld [vmem:[%s302 + $0x588] sm:$0xff]
        %v481 = vld [vmem:[%s302 + $0x590] sm:$0xff]
        %v482 = vld [vmem:[%s302 + $0x598] sm:$0xff]
        %v483 = vld [vmem:[%s302 + $0x5a0] sm:$0xff]
        %v484 = vld [vmem:[%s302 + $0x5a8] sm:$0xff]
        %v485 = vld [vmem:[%s302 + $0x5b0] sm:$0xff]
        %v486 = vld [vmem:[%s302 + $0x5b8] sm:$0xff]
        %v487 = vld [vmem:[%s302 + $0x5c0] sm:$0xff]
        %v488 = vld [vmem:[%s302 + $0x5c8] sm:$0xff]
        %v489 = vld [vmem:[%s302 + $0x5d0] sm:$0xff]
        %v490 = vld [vmem:[%s302 + $0x5d8] sm:$0xff]
        %v491 = vld [vmem:[%s302 + $0x5e0] sm:$0xff]
        %v492 = vld [vmem:[%s302 + $0x5e8] sm:$0xff]
        %v493 = vld [vmem:[%s302 + $0x5f0] sm:$0xff]
        %v494 = vld [vmem:[%s302 + $0x5f8] sm:$0xff]
        %v495 = vld [vmem:[%s302 + $0x600] sm:$0xff]
        %v496 = vld [vmem:[%s302 + $0x608] sm:$0xff]
        %v497 = vld [vmem:[%s302 + $0x610] sm:$0xff]
        %v498 = vld [vmem:[%s302 + $0x618] sm:$0xff]
        %v499 = vld [vmem:[%s302 + $0x620] sm:$0xff]
        %v500 = vld [vmem:[%s302 + $0x628] sm:$0xff]
        %v501 = vld [vmem:[%s302 + $0x630] sm:$0xff]
        %v502 = vld [vmem:[%s302 + $0x638] sm:$0xff]
        %v503 = vld [vmem:[%s302 + $0x640] sm:$0xff]
        %v504 = vld [vmem:[%s302 + $0x648] sm:$0xff]
        %v505 = vld [vmem:[%s302 + $0x650] sm:$0xff]
        %v506 = vld [vmem:[%s302 + $0x658] sm:$0xff]
        %v507 = vld [vmem:[%s302 + $0x660] sm:$0xff]
        %v508 = vld [vmem:[%s302 + $0x668] sm:$0xff]
        %v509 = vld [vmem:[%s302 + $0x670] sm:$0xff]
        %v510 = vld [vmem:[%s302 + $0x678] sm:$0xff]
        %v511 = vld [vmem:[%s302 + $0x680] sm:$0xff]
        %v512 = vld [vmem:[%s302 + $0x688] sm:$0xff]
        %v513 = vld [vmem:[%s302 + $0x690] sm:$0xff]
        %v514 = vld [vmem:[%s302 + $0x698] sm:$0xff]
        %v515 = vld [vmem:[%s302 + $0x6a0] sm:$0xff]
        %v516 = vld [vmem:[%s302 + $0x6a8] sm:$0xff]
        %v517 = vld [vmem:[%s302 + $0x6b0] sm:$0xff]
        %v518 = vld [vmem:[%s302 + $0x6b8] sm:$0xff]
        %v519 = vld [vmem:[%s302 + $0x6c0] sm:$0xff]
        %v520 = vld [vmem:[%s302 + $0x6c8] sm:$0xff]
        %v521 = vld [vmem:[%s302 + $0x6d0] sm:$0xff]
        %v522 = vld [vmem:[%s302 + $0x6d8] sm:$0xff]
        %v523 = vld [vmem:[%s302 + $0x6e0] sm:$0xff]
        %v524 = vld [vmem:[%s302 + $0x6e8] sm:$0xff]
        %v525 = vld [vmem:[%s302 + $0x6f0] sm:$0xff]
        %v526 = vld [vmem:[%s302 + $0x6f8] sm:$0xff]
        %v527 = vld [vmem:[%s302 + $0x700] sm:$0xff]
        %v528 = vld [vmem:[%s302 + $0x708] sm:$0xff]
        %v529 = vld [vmem:[%s302 + $0x710] sm:$0xff]
        %v530 = vld [vmem:[%s302 + $0x718] sm:$0xff]
        %v531 = vld [vmem:[%s302 + $0x720] sm:$0xff]
        %v532 = vld [vmem:[%s302 + $0x728] sm:$0xff]
        %v533 = vld [vmem:[%s302 + $0x730] sm:$0xff]
        %v534 = vld [vmem:[%s302 + $0x738] sm:$0xff]
        %v535 = vld [vmem:[%s302 + $0x740] sm:$0xff]
        %v536 = vld [vmem:[%s302 + $0x748] sm:$0xff]
        %v537 = vld [vmem:[%s302 + $0x750] sm:$0xff]
        %v538 = vld [vmem:[%s302 + $0x758] sm:$0xff]
        %v539 = vld [vmem:[%s302 + $0x760] sm:$0xff]
        %v540 = vld [vmem:[%s302 + $0x768] sm:$0xff]
        %v541 = vld [vmem:[%s302 + $0x770] sm:$0xff]
        %v542 = vld [vmem:[%s302 + $0x778] sm:$0xff]
        %v543 = vld [vmem:[%s302 + $0x780] sm:$0xff]
        %v544 = vld [vmem:[%s302 + $0x788] sm:$0xff]
        %v545 = vld [vmem:[%s302 + $0x790] sm:$0xff]
        %v546 = vld [vmem:[%s302 + $0x798] sm:$0xff]
        %v547 = vld [vmem:[%s302 + $0x7a0] sm:$0xff]
        %v548 = vld [vmem:[%s302 + $0x7a8] sm:$0xff]
        %v549 = vld [vmem:[%s302 + $0x7b0] sm:$0xff]
        %v550 = vld [vmem:[%s302 + $0x7b8] sm:$0xff]
        %v551 = vld [vmem:[%s302 + $0x7c0] sm:$0xff]
        %v552 = vld [vmem:[%s302 + $0x7c8] sm:$0xff]
        %v553 = vld [vmem:[%s302 + $0x7d0] sm:$0xff]
        %v554 = vld [vmem:[%s302 + $0x7d8] sm:$0xff]
        %v555 = vld [vmem:[%s302 + $0x7e0] sm:$0xff]
        %v556 = vld [vmem:[%s302 + $0x7e8] sm:$0xff]
        %v557 = vld [vmem:[%s302 + $0x7f0] sm:$0xff]
        %v558 = vld [vmem:[%s302 + $0x7f8] sm:$0xff]
        %v559 = vld [vmem:[%s302 + $0x800] sm:$0xff]
        %v560 = vld [vmem:[%s302 + $0x808] sm:$0xff]
        %v561 = vld [vmem:[%s302 + $0x810] sm:$0xff]
        %v562 = vld [vmem:[%s302 + $0x818] sm:$0xff]
        %v563 = vld [vmem:[%s302 + $0x820] sm:$0xff]
        %v564 = vld [vmem:[%s302 + $0x828] sm:$0xff]
        %v565 = vld [vmem:[%s302 + $0x830] sm:$0xff]
        %v566 = vld [vmem:[%s302 + $0x838] sm:$0xff]
        %v567 = vld [vmem:[%s302 + $0x840] sm:$0xff]
        %v568 = vld [vmem:[%s302 + $0x848] sm:$0xff]
        %v569 = vld [vmem:[%s302 + $0x850] sm:$0xff]
        %v570 = vld [vmem:[%s302 + $0x858] sm:$0xff]
        %v571 = vld [vmem:[%s302 + $0x860] sm:$0xff]
        %v572 = vld [vmem:[%s302 + $0x868] sm:$0xff]
        %v573 = vld [vmem:[%s302 + $0x870] sm:$0xff]
        %v574 = vld [vmem:[%s302 + $0x878] sm:$0xff]
        %v575 = vld [vmem:[%s302 + $0x880] sm:$0xff]
        %v576 = vld [vmem:[%s302 + $0x888] sm:$0xff]
        %v577 = vld [vmem:[%s302 + $0x890] sm:$0xff]
        %v578 = vld [vmem:[%s302 + $0x898] sm:$0xff]
        %v579 = vld [vmem:[%s302 + $0x8a0] sm:$0xff]
        %v580 = vld [vmem:[%s302 + $0x8a8] sm:$0xff]
        %v581 = vld [vmem:[%s302 + $0x8b0] sm:$0xff]
        %v582 = vld [vmem:[%s302 + $0x8b8] sm:$0xff]
        %v583 = vld [vmem:[%s302 + $0x8c0] sm:$0xff]
        %v584 = vld [vmem:[%s302 + $0x8c8] sm:$0xff]
        %v585 = vld [vmem:[%s302 + $0x8d0] sm:$0xff]
        %v586 = vld [vmem:[%s302 + $0x8d8] sm:$0xff]
        %v587 = vld [vmem:[%s302 + $0x8e0] sm:$0xff]
        %v588 = vld [vmem:[%s302 + $0x8e8] sm:$0xff]
        %v589 = vld [vmem:[%s302 + $0x8f0] sm:$0xff]
        %v590 = vld [vmem:[%s302 + $0x8f8] sm:$0xff]
        %v591 = vld [vmem:[%s302 + $0x900] sm:$0xff]
        %v592 = vld [vmem:[%s302 + $0x908] sm:$0xff]
        %v593 = vld [vmem:[%s302 + $0x910] sm:$0xff]
        %v594 = vld [vmem:[%s302 + $0x918] sm:$0xff]
        %v595 = vld [vmem:[%s302 + $0x920] sm:$0xff]
        %v596 = vld [vmem:[%s302 + $0x928] sm:$0xff]
        %v597 = vld [vmem:[%s302 + $0x930] sm:$0xff]
        %v598 = vld [vmem:[%s302 + $0x938] sm:$0xff]
        %v599 = vld [vmem:[%s302 + $0x940] sm:$0xff]
        %v600 = vld [vmem:[%s302 + $0x948] sm:$0xff]
        %v601 = vld [vmem:[%s302 + $0x950] sm:$0xff]
        %v602 = vld [vmem:[%s302 + $0x958] sm:$0xff]
        %v603 = vld [vmem:[%s302 + $0x960] sm:$0xff]
        %v604 = vld [vmem:[%s302 + $0x968] sm:$0xff]
        %v605 = vld [vmem:[%s302 + $0x970] sm:$0xff]
        %v606 = vld [vmem:[%s302 + $0x978] sm:$0xff]
        %v607 = vld [vmem:[%s302 + $0x980] sm:$0xff]
        %v608 = vld [vmem:[%s302 + $0x988] sm:$0xff]
        %v609 = vld [vmem:[%s302 + $0x990] sm:$0xff]
        %v610 = vld [vmem:[%s302 + $0x998] sm:$0xff]
        %v611 = vld [vmem:[%s302 + $0x9a0] sm:$0xff]
        %v612 = vld [vmem:[%s302 + $0x9a8] sm:$0xff]
        %v613 = vld [vmem:[%s302 + $0x9b0] sm:$0xff]
        %v614 = vld [vmem:[%s302 + $0x9b8] sm:$0xff]
        %v615 = vld [vmem:[%s302 + $0x9c0] sm:$0xff]
        %v616 = vld [vmem:[%s302 + $0x9c8] sm:$0xff]
        %v617 = vld [vmem:[%s302 + $0x9d0] sm:$0xff]
        %v618 = vld [vmem:[%s302 + $0x9d8] sm:$0xff]
        %v619 = vld [vmem:[%s302 + $0x9e0] sm:$0xff]
        %v620 = vld [vmem:[%s302 + $0x9e8] sm:$0xff]
        %v621 = vld [vmem:[%s302 + $0x9f0] sm:$0xff]
        %v622 = vld [vmem:[%s302 + $0x9f8] sm:$0xff]
        %v623 = vld [vmem:[%s302 + $0xa00] sm:$0xff]
        %v624 = vld [vmem:[%s302 + $0xa08] sm:$0xff]
        %v625 = vld [vmem:[%s302 + $0xa10] sm:$0xff]
        %v626 = vld [vmem:[%s302 + $0xa18] sm:$0xff]
        %v627 = vld [vmem:[%s302 + $0xa20] sm:$0xff]
        %v628 = vld [vmem:[%s302 + $0xa28] sm:$0xff]
        %v629 = vld [vmem:[%s302 + $0xa30] sm:$0xff]
        %v630 = vld [vmem:[%s302 + $0xa38] sm:$0xff]
        %v631 = vld [vmem:[%s302 + $0xa40] sm:$0xff]
        %v632 = vld [vmem:[%s302 + $0xa48] sm:$0xff]
        %v633 = vld [vmem:[%s302 + $0xa50] sm:$0xff]
        %v634 = vld [vmem:[%s302 + $0xa58] sm:$0xff]
        %v635 = vld [vmem:[%s302 + $0xa60] sm:$0xff]
        %v636 = vld [vmem:[%s302 + $0xa68] sm:$0xff]
        %v637 = vld [vmem:[%s302 + $0xa70] sm:$0xff]
        %v638 = vld [vmem:[%s302 + $0xa78] sm:$0xff]
        %v639 = vld [vmem:[%s302 + $0xa80] sm:$0xff]
        %v640 = vld [vmem:[%s302 + $0xa88] sm:$0xff]
        %v641 = vld [vmem:[%s302 + $0xa90] sm:$0xff]
        %v642 = vld [vmem:[%s302 + $0xa98] sm:$0xff]
        %v643 = vld [vmem:[%s302 + $0xaa0] sm:$0xff]
        %v644 = vld [vmem:[%s302 + $0xaa8] sm:$0xff]
        %v645 = vld [vmem:[%s302 + $0xab0] sm:$0xff]
        %v646 = vld [vmem:[%s302 + $0xab8] sm:$0xff]
        %v647 = vld [vmem:[%s302 + $0xac0] sm:$0xff]
        %v648 = vld [vmem:[%s302 + $0xac8] sm:$0xff]
        %v649 = vld [vmem:[%s302 + $0xad0] sm:$0xff]
        %v650 = vld [vmem:[%s302 + $0xad8] sm:$0xff]
        %v651 = vld [vmem:[%s302 + $0xae0] sm:$0xff]
        %v652 = vld [vmem:[%s302 + $0xae8] sm:$0xff]
        %v653 = vld [vmem:[%s302 + $0xaf0] sm:$0xff]
        %v654 = vld [vmem:[%s302 + $0xaf8] sm:$0xff]
        %v655 = vld [vmem:[%s302 + $0xb00] sm:$0xff]
        %v656 = vld [vmem:[%s302 + $0xb08] sm:$0xff]
        %v657 = vld [vmem:[%s302 + $0xb10] sm:$0xff]
        %v658 = vld [vmem:[%s302 + $0xb18] sm:$0xff]
        %v659 = vld [vmem:[%s302 + $0xb20] sm:$0xff]
        %v660 = vld [vmem:[%s302 + $0xb28] sm:$0xff]
        %v661 = vld [vmem:[%s302 + $0xb30] sm:$0xff]
        %v662 = vld [vmem:[%s302 + $0xb38] sm:$0xff]
        %v663 = vld [vmem:[%s302 + $0xb40] sm:$0xff]
        %v664 = vld [vmem:[%s302 + $0xb48] sm:$0xff]
        %v665 = vld [vmem:[%s302 + $0xb50] sm:$0xff]
        %v666 = vld [vmem:[%s302 + $0xb58] sm:$0xff]
        %v667 = vld [vmem:[%s302 + $0xb60] sm:$0xff]
        %v668 = vld [vmem:[%s302 + $0xb68] sm:$0xff]
        %v669 = vld [vmem:[%s302 + $0xb70] sm:$0xff]
        %v670 = vld [vmem:[%s302 + $0xb78] sm:$0xff]
        %v671 = vld [vmem:[%s302 + $0xb80] sm:$0xff]
        %v672 = vld [vmem:[%s302 + $0xb88] sm:$0xff]
        %v673 = vld [vmem:[%s302 + $0xb90] sm:$0xff]
        %v674 = vld [vmem:[%s302 + $0xb98] sm:$0xff]
        %v675 = vld [vmem:[%s302 + $0xba0] sm:$0xff]
        %v676 = vld [vmem:[%s302 + $0xba8] sm:$0xff]
        %v677 = vld [vmem:[%s302 + $0xbb0] sm:$0xff]
        %v678 = vld [vmem:[%s302 + $0xbb8] sm:$0xff]
        %v679 = vld [vmem:[%s302 + $0xbc0] sm:$0xff]
        %v680 = vld [vmem:[%s302 + $0xbc8] sm:$0xff]
        %v681 = vld [vmem:[%s302 + $0xbd0] sm:$0xff]
        %v682 = vld [vmem:[%s302 + $0xbd8] sm:$0xff]
        %v683 = vld [vmem:[%s302 + $0xbe0] sm:$0xff]
        %v684 = vld [vmem:[%s302 + $0xbe8] sm:$0xff]
        %v685 = vld [vmem:[%s302 + $0xbf0] sm:$0xff]
        %v686 = vld [vmem:[%s302 + $0xbf8] sm:$0xff]
        %v687 = vld [vmem:[%s302 + $0xc00] sm:$0xff]
        %v688 = vld [vmem:[%s302 + $0xc08] sm:$0xff]
        %v689 = vld [vmem:[%s302 + $0xc10] sm:$0xff]
        %v690 = vld [vmem:[%s302 + $0xc18] sm:$0xff]
        %v691 = vld [vmem:[%s302 + $0xc20] sm:$0xff]
        %v692 = vld [vmem:[%s302 + $0xc28] sm:$0xff]
        %v693 = vld [vmem:[%s302 + $0xc30] sm:$0xff]
        %v694 = vld [vmem:[%s302 + $0xc38] sm:$0xff]
        %v695 = vld [vmem:[%s302 + $0xc40] sm:$0xff]
        %v696 = vld [vmem:[%s302 + $0xc48] sm:$0xff]
        %v697 = vld [vmem:[%s302 + $0xc50] sm:$0xff]
        %v698 = vld [vmem:[%s302 + $0xc58] sm:$0xff]
        %v699 = vld [vmem:[%s302 + $0xc60] sm:$0xff]
        %v700 = vld [vmem:[%s302 + $0xc68] sm:$0xff]
        %v701 = vld [vmem:[%s302 + $0xc70] sm:$0xff]
        %v702 = vld [vmem:[%s302 + $0xc78] sm:$0xff]
        %v703 = vld [vmem:[%s302 + $0xc80] sm:$0xff]
        %v704 = vld [vmem:[%s302 + $0xc88] sm:$0xff]
        %v705 = vld [vmem:[%s302 + $0xc90] sm:$0xff]
        %v706 = vld [vmem:[%s302 + $0xc98] sm:$0xff]
        %v707 = vld [vmem:[%s302 + $0xca0] sm:$0xff]
        %v708 = vld [vmem:[%s302 + $0xca8] sm:$0xff]
        %v709 = vld [vmem:[%s302 + $0xcb0] sm:$0xff]
        %v710 = vld [vmem:[%s302 + $0xcb8] sm:$0xff]
        %v711 = vld [vmem:[%s302 + $0xcc0] sm:$0xff]
        %v712 = vld [vmem:[%s302 + $0xcc8] sm:$0xff]
        %v713 = vld [vmem:[%s302 + $0xcd0] sm:$0xff]
        %v714 = vld [vmem:[%s302 + $0xcd8] sm:$0xff]
        %v715 = vld [vmem:[%s302 + $0xce0] sm:$0xff]
        %v716 = vld [vmem:[%s302 + $0xce8] sm:$0xff]
        %v717 = vld [vmem:[%s302 + $0xcf0] sm:$0xff]
        %v718 = vld [vmem:[%s302 + $0xcf8] sm:$0xff]
        %v719 = vld [vmem:[%s302 + $0xd00] sm:$0xff]
        %v720 = vld [vmem:[%s302 + $0xd08] sm:$0xff]
        %v721 = vld [vmem:[%s302 + $0xd10] sm:$0xff]
        %v722 = vld [vmem:[%s302 + $0xd18] sm:$0xff]
        %v723 = vld [vmem:[%s302 + $0xd20] sm:$0xff]
        %v724 = vld [vmem:[%s302 + $0xd28] sm:$0xff]
        %v725 = vld [vmem:[%s302 + $0xd30] sm:$0xff]
        %v726 = vld [vmem:[%s302 + $0xd38] sm:$0xff]
        %v727 = vld [vmem:[%s302 + $0xd40] sm:$0xff]
        %v728 = vld [vmem:[%s302 + $0xd48] sm:$0xff]
        %v729 = vld [vmem:[%s302 + $0xd50] sm:$0xff]
        %v730 = vld [vmem:[%s302 + $0xd58] sm:$0xff]
        %v731 = vld [vmem:[%s302 + $0xd60] sm:$0xff]
        %v732 = vld [vmem:[%s302 + $0xd68] sm:$0xff]
        %v733 = vld [vmem:[%s302 + $0xd70] sm:$0xff]
        %v734 = vld [vmem:[%s302 + $0xd78] sm:$0xff]
        %v735 = vld [vmem:[%s302 + $0xd80] sm:$0xff]
        %v736 = vld [vmem:[%s302 + $0xd88] sm:$0xff]
        %v737 = vld [vmem:[%s302 + $0xd90] sm:$0xff]
        %v738 = vld [vmem:[%s302 + $0xd98] sm:$0xff]
        %v739 = vld [vmem:[%s302 + $0xda0] sm:$0xff]
        %v740 = vld [vmem:[%s302 + $0xda8] sm:$0xff]
        %v741 = vld [vmem:[%s302 + $0xdb0] sm:$0xff]
        %v742 = vld [vmem:[%s302 + $0xdb8] sm:$0xff]
        %v743 = vld [vmem:[%s302 + $0xdc0] sm:$0xff]
        %v744 = vld [vmem:[%s302 + $0xdc8] sm:$0xff]
        %v745 = vld [vmem:[%s302 + $0xdd0] sm:$0xff]
        %v746 = vld [vmem:[%s302 + $0xdd8] sm:$0xff]
        %v747 = vld [vmem:[%s302 + $0xde0] sm:$0xff]
        %v748 = vld [vmem:[%s302 + $0xde8] sm:$0xff]
        %v749 = vld [vmem:[%s302 + $0xdf0] sm:$0xff]
        %v750 = vld [vmem:[%s302 + $0xdf8] sm:$0xff]
        %v751 = vld [vmem:[%s302 + $0xe00] sm:$0xff]
        %v752 = vld [vmem:[%s302 + $0xe08] sm:$0xff]
        %v753 = vld [vmem:[%s302 + $0xe10] sm:$0xff]
        %v754 = vld [vmem:[%s302 + $0xe18] sm:$0xff]
        %v755 = vld [vmem:[%s302 + $0xe20] sm:$0xff]
        %v756 = vld [vmem:[%s302 + $0xe28] sm:$0xff]
        %v757 = vld [vmem:[%s302 + $0xe30] sm:$0xff]
        %v758 = vld [vmem:[%s302 + $0xe38] sm:$0xff]
        %v759 = vld [vmem:[%s302 + $0xe40] sm:$0xff]
        %v760 = vld [vmem:[%s302 + $0xe48] sm:$0xff]
        %v761 = vld [vmem:[%s302 + $0xe50] sm:$0xff]
        %v762 = vld [vmem:[%s302 + $0xe58] sm:$0xff]
        %v763 = vld [vmem:[%s302 + $0xe60] sm:$0xff]
        %v764 = vld [vmem:[%s302 + $0xe68] sm:$0xff]
        %v765 = vld [vmem:[%s302 + $0xe70] sm:$0xff]
        %v766 = vld [vmem:[%s302 + $0xe78] sm:$0xff]
        %v767 = vld [vmem:[%s302 + $0xe80] sm:$0xff]
        %v768 = vld [vmem:[%s302 + $0xe88] sm:$0xff]
        %v769 = vld [vmem:[%s302 + $0xe90] sm:$0xff]
        %v770 = vld [vmem:[%s302 + $0xe98] sm:$0xff]
        %v771 = vld [vmem:[%s302 + $0xea0] sm:$0xff]
        %v772 = vld [vmem:[%s302 + $0xea8] sm:$0xff]
        %v773 = vld [vmem:[%s302 + $0xeb0] sm:$0xff]
        %v774 = vld [vmem:[%s302 + $0xeb8] sm:$0xff]
        %v775 = vld [vmem:[%s302 + $0xec0] sm:$0xff]
        %v776 = vld [vmem:[%s302 + $0xec8] sm:$0xff]
        %v777 = vld [vmem:[%s302 + $0xed0] sm:$0xff]
        %v778 = vld [vmem:[%s302 + $0xed8] sm:$0xff]
        %v779 = vld [vmem:[%s302 + $0xee0] sm:$0xff]
        %v780 = vld [vmem:[%s302 + $0xee8] sm:$0xff]
        %v781 = vld [vmem:[%s302 + $0xef0] sm:$0xff]
        %v782 = vld [vmem:[%s302 + $0xef8] sm:$0xff]
        %v783 = vld [vmem:[%s302 + $0xf00] sm:$0xff]
        %v784 = vld [vmem:[%s302 + $0xf08] sm:$0xff]
        %v785 = vld [vmem:[%s302 + $0xf10] sm:$0xff]
        %v786 = vld [vmem:[%s302 + $0xf18] sm:$0xff]
        %v787 = vld [vmem:[%s302 + $0xf20] sm:$0xff]
        %v788 = vld [vmem:[%s302 + $0xf28] sm:$0xff]
        %v789 = vld [vmem:[%s302 + $0xf30] sm:$0xff]
        %v790 = vld [vmem:[%s302 + $0xf38] sm:$0xff]
        %v791 = vld [vmem:[%s302 + $0xf40] sm:$0xff]
        %v792 = vld [vmem:[%s302 + $0xf48] sm:$0xff]
        %v793 = vld [vmem:[%s302 + $0xf50] sm:$0xff]
        %v794 = vld [vmem:[%s302 + $0xf58] sm:$0xff]
        %v795 = vld [vmem:[%s302 + $0xf60] sm:$0xff]
        %v796 = vld [vmem:[%s302 + $0xf68] sm:$0xff]
        %v797 = vld [vmem:[%s302 + $0xf70] sm:$0xff]
        %v798 = vld [vmem:[%s302 + $0xf78] sm:$0xff]
        %v799 = vld [vmem:[%s302 + $0xf80] sm:$0xff]
        %v800 = vld [vmem:[%s302 + $0xf88] sm:$0xff]
        %v801 = vld [vmem:[%s302 + $0xf90] sm:$0xff]
        %v802 = vld [vmem:[%s302 + $0xf98] sm:$0xff]
        %v803 = vld [vmem:[%s302 + $0xfa0] sm:$0xff]
        %v804 = vld [vmem:[%s302 + $0xfa8] sm:$0xff]
        %v805 = vld [vmem:[%s302 + $0xfb0] sm:$0xff]
        %v806 = vld [vmem:[%s302 + $0xfb8] sm:$0xff]
        %v807 = vld [vmem:[%s302 + $0xfc0] sm:$0xff]
        %v808 = vld [vmem:[%s302 + $0xfc8] sm:$0xff]
        %v809 = vld [vmem:[%s302 + $0xfd0] sm:$0xff]
        %v810 = vld [vmem:[%s302 + $0xfd8] sm:$0xff]
        %v811 = vld [vmem:[%s302 + $0xfe0] sm:$0xff]
        %v812 = vld [vmem:[%s302 + $0xfe8] sm:$0xff]
        %v813 = vld [vmem:[%s302 + $0xff0] sm:$0xff]
        %v814 = vld [vmem:[%s302 + $0xff8] sm:$0xff]
        %v815 = vld [vmem:[%s1] sm:$0xff]
        %v816 = vld [vmem:[%s1 + $0x8] sm:$0xff]
        %v817 = vld [vmem:[%s1 + $0x10] sm:$0xff]
        %v818 = vld [vmem:[%s1 + $0x18] sm:$0xff]
        %v819 = vld [vmem:[%s1 + $0x20] sm:$0xff]
        %v820 = vld [vmem:[%s1 + $0x28] sm:$0xff]
        %v821 = vld [vmem:[%s1 + $0x30] sm:$0xff]
        %v822 = vld [vmem:[%s1 + $0x38] sm:$0xff]
        %v823 = vld [vmem:[%s1 + $0x40] sm:$0xff]
        %v824 = vld [vmem:[%s1 + $0x48] sm:$0xff]
        %v825 = vld [vmem:[%s1 + $0x50] sm:$0xff]
        %v826 = vld [vmem:[%s1 + $0x58] sm:$0xff]
        %v827 = vld [vmem:[%s1 + $0x60] sm:$0xff]
        %v828 = vld [vmem:[%s1 + $0x68] sm:$0xff]
        %v829 = vld [vmem:[%s1 + $0x70] sm:$0xff]
        %v830 = vld [vmem:[%s1 + $0x78] sm:$0xff]
        %v831 = vld [vmem:[%s1 + $0x80] sm:$0xff]
        %v832 = vld [vmem:[%s1 + $0x88] sm:$0xff]
        %v833 = vld [vmem:[%s1 + $0x90] sm:$0xff]
        %v834 = vld [vmem:[%s1 + $0x98] sm:$0xff]
        %v835 = vld [vmem:[%s1 + $0xa0] sm:$0xff]
        %v836 = vld [vmem:[%s1 + $0xa8] sm:$0xff]
        %v837 = vld [vmem:[%s1 + $0xb0] sm:$0xff]
        %v838 = vld [vmem:[%s1 + $0xb8] sm:$0xff]
        %v839 = vld [vmem:[%s1 + $0xc0] sm:$0xff]
        %v840 = vld [vmem:[%s1 + $0xc8] sm:$0xff]
        %v841 = vld [vmem:[%s1 + $0xd0] sm:$0xff]
        %v842 = vld [vmem:[%s1 + $0xd8] sm:$0xff]
        %v843 = vld [vmem:[%s1 + $0xe0] sm:$0xff]
        %v844 = vld [vmem:[%s1 + $0xe8] sm:$0xff]
        %v845 = vld [vmem:[%s1 + $0xf0] sm:$0xff]
        %v846 = vld [vmem:[%s1 + $0xf8] sm:$0xff]
        %v847 = vld [vmem:[%s1 + $0x100] sm:$0xff]
        %v848 = vld [vmem:[%s1 + $0x108] sm:$0xff]
        %v849 = vld [vmem:[%s1 + $0x110] sm:$0xff]
        %v850 = vld [vmem:[%s1 + $0x118] sm:$0xff]
        %v851 = vld [vmem:[%s1 + $0x120] sm:$0xff]
        %v852 = vld [vmem:[%s1 + $0x128] sm:$0xff]
        %v853 = vld [vmem:[%s1 + $0x130] sm:$0xff]
        %v854 = vld [vmem:[%s1 + $0x138] sm:$0xff]
        %v855 = vld [vmem:[%s1 + $0x140] sm:$0xff]
        %v856 = vld [vmem:[%s1 + $0x148] sm:$0xff]
        %v857 = vld [vmem:[%s1 + $0x150] sm:$0xff]
        %v858 = vld [vmem:[%s1 + $0x158] sm:$0xff]
        %v859 = vld [vmem:[%s1 + $0x160] sm:$0xff]
        %v860 = vld [vmem:[%s1 + $0x168] sm:$0xff]
        %v861 = vld [vmem:[%s1 + $0x170] sm:$0xff]
        %v862 = vld [vmem:[%s1 + $0x178] sm:$0xff]
        %v863 = vld [vmem:[%s1 + $0x180] sm:$0xff]
        %v864 = vld [vmem:[%s1 + $0x188] sm:$0xff]
        %v865 = vld [vmem:[%s1 + $0x190] sm:$0xff]
        %v866 = vld [vmem:[%s1 + $0x198] sm:$0xff]
        %v867 = vld [vmem:[%s1 + $0x1a0] sm:$0xff]
        %v868 = vld [vmem:[%s1 + $0x1a8] sm:$0xff]
        %v869 = vld [vmem:[%s1 + $0x1b0] sm:$0xff]
        %v870 = vld [vmem:[%s1 + $0x1b8] sm:$0xff]
        %v871 = vld [vmem:[%s1 + $0x1c0] sm:$0xff]
        %v872 = vld [vmem:[%s1 + $0x1c8] sm:$0xff]
        %v873 = vld [vmem:[%s1 + $0x1d0] sm:$0xff]
        %v874 = vld [vmem:[%s1 + $0x1d8] sm:$0xff]
        %v875 = vld [vmem:[%s1 + $0x1e0] sm:$0xff]
        %v876 = vld [vmem:[%s1 + $0x1e8] sm:$0xff]
        %v877 = vld [vmem:[%s1 + $0x1f0] sm:$0xff]
        %v878 = vld [vmem:[%s1 + $0x1f8] sm:$0xff]
        %879 = vmatpush.msra.mxu0 %v830
        %880 = vmatpush.msra.mxu0 %v829
        %881 = vmatpush.msra.mxu0 %v828
        %882 = vmatpush.msra.mxu0 %v827
        %883 = vmatpush.msra.mxu0 %v826
        %884 = vmatpush.msra.mxu0 %v825
        %885 = vmatpush.msra.mxu0 %v824
        %886 = vmatpush.msra.mxu0 %v823
        %887 = vmatpush.msra.mxu0 %v822
        %888 = vmatpush.msra.mxu0 %v821
        %889 = vmatpush.msra.mxu0 %v820
        %890 = vmatpush.msra.mxu0 %v819
        %891 = vmatpush.msra.mxu0 %v818
        %892 = vmatpush.msra.mxu0 %v817
        %893 = vmatpush.msra.mxu0 %v816
        %894 = vmatpush.msra.mxu0 %v815
        %895 = vmatmul.f32.gmra.mxu0 %v303
        %v896 = vpop.f32.mrf.mxu0
        %v897 = vadd.f32 0.0, %v896
        %898 = vmatmul.f32.gmra.mxu0 %v307
        %v899 = vpop.f32.mrf.mxu0
        %v900 = vadd.f32 0.0, %v899
        %901 = vmatmul.f32.gmra.mxu0 %v311
        %v902 = vpop.f32.mrf.mxu0
        %v903 = vadd.f32 0.0, %v902
        %904 = vmatmul.f32.gmra.mxu0 %v315
        %v905 = vpop.f32.mrf.mxu0
        %v906 = vadd.f32 0.0, %v905
        %907 = vmatmul.f32.gmra.mxu0 %v319
        %v908 = vpop.f32.mrf.mxu0
        %v909 = vadd.f32 0.0, %v908
        %910 = vmatmul.f32.gmra.mxu0 %v323
        %v911 = vpop.f32.mrf.mxu0
        %v912 = vadd.f32 0.0, %v911
        %913 = vmatmul.f32.gmra.mxu0 %v327
        %v914 = vpop.f32.mrf.mxu0
        %v915 = vadd.f32 0.0, %v914
        %916 = vmatmul.f32.gmra.mxu0 %v331
        %v917 = vpop.f32.mrf.mxu0
        %v918 = vadd.f32 0.0, %v917
        %919 = vmatmul.f32.gmra.mxu0 %v335
        %v920 = vpop.f32.mrf.mxu0
        %v921 = vadd.f32 0.0, %v920
        %922 = vmatmul.f32.gmra.mxu0 %v339
        %v923 = vpop.f32.mrf.mxu0
        %v924 = vadd.f32 0.0, %v923
        %925 = vmatmul.f32.gmra.mxu0 %v343
        %v926 = vpop.f32.mrf.mxu0
        %v927 = vadd.f32 0.0, %v926
        %928 = vmatmul.f32.gmra.mxu0 %v347
        %v929 = vpop.f32.mrf.mxu0
        %v930 = vadd.f32 0.0, %v929
        %931 = vmatmul.f32.gmra.mxu0 %v351
        %v932 = vpop.f32.mrf.mxu0
        %v933 = vadd.f32 0.0, %v932
        %934 = vmatmul.f32.gmra.mxu0 %v355
        %v935 = vpop.f32.mrf.mxu0
        %v936 = vadd.f32 0.0, %v935
        %937 = vmatmul.f32.gmra.mxu0 %v359
        %v938 = vpop.f32.mrf.mxu0
        %v939 = vadd.f32 0.0, %v938
        %940 = vmatmul.f32.gmra.mxu0 %v363
        %v941 = vpop.f32.mrf.mxu0
        %v942 = vadd.f32 0.0, %v941
        %943 = vmatmul.f32.gmra.mxu0 %v367
        %v944 = vpop.f32.mrf.mxu0
        %v945 = vadd.f32 0.0, %v944
        %946 = vmatmul.f32.gmra.mxu0 %v371
        %v947 = vpop.f32.mrf.mxu0
        %v948 = vadd.f32 0.0, %v947
        %949 = vmatmul.f32.gmra.mxu0 %v375
        %v950 = vpop.f32.mrf.mxu0
        %v951 = vadd.f32 0.0, %v950
        %952 = vmatmul.f32.gmra.mxu0 %v379
        %v953 = vpop.f32.mrf.mxu0
        %v954 = vadd.f32 0.0, %v953
        %955 = vmatmul.f32.gmra.mxu0 %v383
        %v956 = vpop.f32.mrf.mxu0
        %v957 = vadd.f32 0.0, %v956
        %958 = vmatmul.f32.gmra.mxu0 %v387
        %v959 = vpop.f32.mrf.mxu0
        %v960 = vadd.f32 0.0, %v959
        %961 = vmatmul.f32.gmra.mxu0 %v391
        %v962 = vpop.f32.mrf.mxu0
        %v963 = vadd.f32 0.0, %v962
        %964 = vmatmul.f32.gmra.mxu0 %v395
        %v965 = vpop.f32.mrf.mxu0
        %v966 = vadd.f32 0.0, %v965
        %967 = vmatmul.f32.gmra.mxu0 %v399
        %v968 = vpop.f32.mrf.mxu0
        %v969 = vadd.f32 0.0, %v968
        %970 = vmatmul.f32.gmra.mxu0 %v403
        %v971 = vpop.f32.mrf.mxu0
        %v972 = vadd.f32 0.0, %v971
        %973 = vmatmul.f32.gmra.mxu0 %v407
        %v974 = vpop.f32.mrf.mxu0
        %v975 = vadd.f32 0.0, %v974
        %976 = vmatmul.f32.gmra.mxu0 %v411
        %v977 = vpop.f32.mrf.mxu0
        %v978 = vadd.f32 0.0, %v977
        %979 = vmatmul.f32.gmra.mxu0 %v415
        %v980 = vpop.f32.mrf.mxu0
        %v981 = vadd.f32 0.0, %v980
        %982 = vmatmul.f32.gmra.mxu0 %v419
        %v983 = vpop.f32.mrf.mxu0
        %v984 = vadd.f32 0.0, %v983
        %985 = vmatmul.f32.gmra.mxu0 %v423
        %v986 = vpop.f32.mrf.mxu0
        %v987 = vadd.f32 0.0, %v986
        %988 = vmatmul.f32.gmra.mxu0 %v427
        %v989 = vpop.f32.mrf.mxu0
        %v990 = vadd.f32 0.0, %v989
        %991 = vmatmul.f32.gmra.mxu0 %v431
        %v992 = vpop.f32.mrf.mxu0
        %v993 = vadd.f32 0.0, %v992
        %994 = vmatmul.f32.gmra.mxu0 %v435
        %v995 = vpop.f32.mrf.mxu0
        %v996 = vadd.f32 0.0, %v995
        %997 = vmatmul.f32.gmra.mxu0 %v439
        %v998 = vpop.f32.mrf.mxu0
        %v999 = vadd.f32 0.0, %v998
        %1000 = vmatmul.f32.gmra.mxu0 %v443
        %v1001 = vpop.f32.mrf.mxu0
        %v1002 = vadd.f32 0.0, %v1001
        %1003 = vmatmul.f32.gmra.mxu0 %v447
        %v1004 = vpop.f32.mrf.mxu0
        %v1005 = vadd.f32 0.0, %v1004
        %1006 = vmatmul.f32.gmra.mxu0 %v451
        %v1007 = vpop.f32.mrf.mxu0
        %v1008 = vadd.f32 0.0, %v1007
        %1009 = vmatmul.f32.gmra.mxu0 %v455
        %v1010 = vpop.f32.mrf.mxu0
        %v1011 = vadd.f32 0.0, %v1010
        %1012 = vmatmul.f32.gmra.mxu0 %v459
        %v1013 = vpop.f32.mrf.mxu0
        %v1014 = vadd.f32 0.0, %v1013
        %1015 = vmatmul.f32.gmra.mxu0 %v463
        %v1016 = vpop.f32.mrf.mxu0
        %v1017 = vadd.f32 0.0, %v1016
        %1018 = vmatmul.f32.gmra.mxu0 %v467
        %v1019 = vpop.f32.mrf.mxu0
        %v1020 = vadd.f32 0.0, %v1019
        %1021 = vmatmul.f32.gmra.mxu0 %v471
        %v1022 = vpop.f32.mrf.mxu0
        %v1023 = vadd.f32 0.0, %v1022
        %1024 = vmatmul.f32.gmra.mxu0 %v475
        %v1025 = vpop.f32.mrf.mxu0
        %v1026 = vadd.f32 0.0, %v1025
        %1027 = vmatmul.f32.gmra.mxu0 %v479
        %v1028 = vpop.f32.mrf.mxu0
        %v1029 = vadd.f32 0.0, %v1028
        %1030 = vmatmul.f32.gmra.mxu0 %v483
        %v1031 = vpop.f32.mrf.mxu0
        %v1032 = vadd.f32 0.0, %v1031
        %1033 = vmatmul.f32.gmra.mxu0 %v487
        %v1034 = vpop.f32.mrf.mxu0
        %v1035 = vadd.f32 0.0, %v1034
        %1036 = vmatmul.f32.gmra.mxu0 %v491
        %v1037 = vpop.f32.mrf.mxu0
        %v1038 = vadd.f32 0.0, %v1037
        %1039 = vmatmul.f32.gmra.mxu0 %v495
        %v1040 = vpop.f32.mrf.mxu0
        %v1041 = vadd.f32 0.0, %v1040
        %1042 = vmatmul.f32.gmra.mxu0 %v499
        %v1043 = vpop.f32.mrf.mxu0
        %v1044 = vadd.f32 0.0, %v1043
        %1045 = vmatmul.f32.gmra.mxu0 %v503
        %v1046 = vpop.f32.mrf.mxu0
        %v1047 = vadd.f32 0.0, %v1046
        %1048 = vmatmul.f32.gmra.mxu0 %v507
        %v1049 = vpop.f32.mrf.mxu0
        %v1050 = vadd.f32 0.0, %v1049
        %1051 = vmatmul.f32.gmra.mxu0 %v511
        %v1052 = vpop.f32.mrf.mxu0
        %v1053 = vadd.f32 0.0, %v1052
        %1054 = vmatmul.f32.gmra.mxu0 %v515
        %v1055 = vpop.f32.mrf.mxu0
        %v1056 = vadd.f32 0.0, %v1055
        %1057 = vmatmul.f32.gmra.mxu0 %v519
        %v1058 = vpop.f32.mrf.mxu0
        %v1059 = vadd.f32 0.0, %v1058
        %1060 = vmatmul.f32.gmra.mxu0 %v523
        %v1061 = vpop.f32.mrf.mxu0
        %v1062 = vadd.f32 0.0, %v1061
        %1063 = vmatmul.f32.gmra.mxu0 %v527
        %v1064 = vpop.f32.mrf.mxu0
        %v1065 = vadd.f32 0.0, %v1064
        %1066 = vmatmul.f32.gmra.mxu0 %v531
        %v1067 = vpop.f32.mrf.mxu0
        %v1068 = vadd.f32 0.0, %v1067
        %1069 = vmatmul.f32.gmra.mxu0 %v535
        %v1070 = vpop.f32.mrf.mxu0
        %v1071 = vadd.f32 0.0, %v1070
        %1072 = vmatmul.f32.gmra.mxu0 %v539
        %v1073 = vpop.f32.mrf.mxu0
        %v1074 = vadd.f32 0.0, %v1073
        %1075 = vmatmul.f32.gmra.mxu0 %v543
        %v1076 = vpop.f32.mrf.mxu0
        %v1077 = vadd.f32 0.0, %v1076
        %1078 = vmatmul.f32.gmra.mxu0 %v547
        %v1079 = vpop.f32.mrf.mxu0
        %v1080 = vadd.f32 0.0, %v1079
        %1081 = vmatmul.f32.gmra.mxu0 %v551
        %v1082 = vpop.f32.mrf.mxu0
        %v1083 = vadd.f32 0.0, %v1082
        %1084 = vmatmul.f32.gmra.mxu0 %v555
        %v1085 = vpop.f32.mrf.mxu0
        %v1086 = vadd.f32 0.0, %v1085
        %1087 = vmatmul.f32.gmra.mxu0 %v559
        %v1088 = vpop.f32.mrf.mxu0
        %v1089 = vadd.f32 0.0, %v1088
        %1090 = vmatmul.f32.gmra.mxu0 %v563
        %v1091 = vpop.f32.mrf.mxu0
        %v1092 = vadd.f32 0.0, %v1091
        %1093 = vmatmul.f32.gmra.mxu0 %v567
        %v1094 = vpop.f32.mrf.mxu0
        %v1095 = vadd.f32 0.0, %v1094
        %1096 = vmatmul.f32.gmra.mxu0 %v571
        %v1097 = vpop.f32.mrf.mxu0
        %v1098 = vadd.f32 0.0, %v1097
        %1099 = vmatmul.f32.gmra.mxu0 %v575
        %v1100 = vpop.f32.mrf.mxu0
        %v1101 = vadd.f32 0.0, %v1100
        %1102 = vmatmul.f32.gmra.mxu0 %v579
        %v1103 = vpop.f32.mrf.mxu0
        %v1104 = vadd.f32 0.0, %v1103
        %1105 = vmatmul.f32.gmra.mxu0 %v583
        %v1106 = vpop.f32.mrf.mxu0
        %v1107 = vadd.f32 0.0, %v1106
        %1108 = vmatmul.f32.gmra.mxu0 %v587
        %v1109 = vpop.f32.mrf.mxu0
        %v1110 = vadd.f32 0.0, %v1109
        %1111 = vmatmul.f32.gmra.mxu0 %v591
        %v1112 = vpop.f32.mrf.mxu0
        %v1113 = vadd.f32 0.0, %v1112
        %1114 = vmatmul.f32.gmra.mxu0 %v595
        %v1115 = vpop.f32.mrf.mxu0
        %v1116 = vadd.f32 0.0, %v1115
        %1117 = vmatmul.f32.gmra.mxu0 %v599
        %v1118 = vpop.f32.mrf.mxu0
        %v1119 = vadd.f32 0.0, %v1118
        %1120 = vmatmul.f32.gmra.mxu0 %v603
        %v1121 = vpop.f32.mrf.mxu0
        %v1122 = vadd.f32 0.0, %v1121
        %1123 = vmatmul.f32.gmra.mxu0 %v607
        %v1124 = vpop.f32.mrf.mxu0
        %v1125 = vadd.f32 0.0, %v1124
        %1126 = vmatmul.f32.gmra.mxu0 %v611
        %v1127 = vpop.f32.mrf.mxu0
        %v1128 = vadd.f32 0.0, %v1127
        %1129 = vmatmul.f32.gmra.mxu0 %v615
        %v1130 = vpop.f32.mrf.mxu0
        %v1131 = vadd.f32 0.0, %v1130
        %1132 = vmatmul.f32.gmra.mxu0 %v619
        %v1133 = vpop.f32.mrf.mxu0
        %v1134 = vadd.f32 0.0, %v1133
        %1135 = vmatmul.f32.gmra.mxu0 %v623
        %v1136 = vpop.f32.mrf.mxu0
        %v1137 = vadd.f32 0.0, %v1136
        %1138 = vmatmul.f32.gmra.mxu0 %v627
        %v1139 = vpop.f32.mrf.mxu0
        %v1140 = vadd.f32 0.0, %v1139
        %1141 = vmatmul.f32.gmra.mxu0 %v631
        %v1142 = vpop.f32.mrf.mxu0
        %v1143 = vadd.f32 0.0, %v1142
        %1144 = vmatmul.f32.gmra.mxu0 %v635
        %v1145 = vpop.f32.mrf.mxu0
        %v1146 = vadd.f32 0.0, %v1145
        %1147 = vmatmul.f32.gmra.mxu0 %v639
        %v1148 = vpop.f32.mrf.mxu0
        %v1149 = vadd.f32 0.0, %v1148
        %1150 = vmatmul.f32.gmra.mxu0 %v643
        %v1151 = vpop.f32.mrf.mxu0
        %v1152 = vadd.f32 0.0, %v1151
        %1153 = vmatmul.f32.gmra.mxu0 %v647
        %v1154 = vpop.f32.mrf.mxu0
        %v1155 = vadd.f32 0.0, %v1154
        %1156 = vmatmul.f32.gmra.mxu0 %v651
        %v1157 = vpop.f32.mrf.mxu0
        %v1158 = vadd.f32 0.0, %v1157
        %1159 = vmatmul.f32.gmra.mxu0 %v655
        %v1160 = vpop.f32.mrf.mxu0
        %v1161 = vadd.f32 0.0, %v1160
        %1162 = vmatmul.f32.gmra.mxu0 %v659
        %v1163 = vpop.f32.mrf.mxu0
        %v1164 = vadd.f32 0.0, %v1163
        %1165 = vmatmul.f32.gmra.mxu0 %v663
        %v1166 = vpop.f32.mrf.mxu0
        %v1167 = vadd.f32 0.0, %v1166
        %1168 = vmatmul.f32.gmra.mxu0 %v667
        %v1169 = vpop.f32.mrf.mxu0
        %v1170 = vadd.f32 0.0, %v1169
        %1171 = vmatmul.f32.gmra.mxu0 %v671
        %v1172 = vpop.f32.mrf.mxu0
        %v1173 = vadd.f32 0.0, %v1172
        %1174 = vmatmul.f32.gmra.mxu0 %v675
        %v1175 = vpop.f32.mrf.mxu0
        %v1176 = vadd.f32 0.0, %v1175
        %1177 = vmatmul.f32.gmra.mxu0 %v679
        %v1178 = vpop.f32.mrf.mxu0
        %v1179 = vadd.f32 0.0, %v1178
        %1180 = vmatmul.f32.gmra.mxu0 %v683
        %v1181 = vpop.f32.mrf.mxu0
        %v1182 = vadd.f32 0.0, %v1181
        %1183 = vmatmul.f32.gmra.mxu0 %v687
        %v1184 = vpop.f32.mrf.mxu0
        %v1185 = vadd.f32 0.0, %v1184
        %1186 = vmatmul.f32.gmra.mxu0 %v691
        %v1187 = vpop.f32.mrf.mxu0
        %v1188 = vadd.f32 0.0, %v1187
        %1189 = vmatmul.f32.gmra.mxu0 %v695
        %v1190 = vpop.f32.mrf.mxu0
        %v1191 = vadd.f32 0.0, %v1190
        %1192 = vmatmul.f32.gmra.mxu0 %v699
        %v1193 = vpop.f32.mrf.mxu0
        %v1194 = vadd.f32 0.0, %v1193
        %1195 = vmatmul.f32.gmra.mxu0 %v703
        %v1196 = vpop.f32.mrf.mxu0
        %v1197 = vadd.f32 0.0, %v1196
        %1198 = vmatmul.f32.gmra.mxu0 %v707
        %v1199 = vpop.f32.mrf.mxu0
        %v1200 = vadd.f32 0.0, %v1199
        %1201 = vmatmul.f32.gmra.mxu0 %v711
        %v1202 = vpop.f32.mrf.mxu0
        %v1203 = vadd.f32 0.0, %v1202
        %1204 = vmatmul.f32.gmra.mxu0 %v715
        %v1205 = vpop.f32.mrf.mxu0
        %v1206 = vadd.f32 0.0, %v1205
        %1207 = vmatmul.f32.gmra.mxu0 %v719
        %v1208 = vpop.f32.mrf.mxu0
        %v1209 = vadd.f32 0.0, %v1208
        %1210 = vmatmul.f32.gmra.mxu0 %v723
        %v1211 = vpop.f32.mrf.mxu0
        %v1212 = vadd.f32 0.0, %v1211
        %1213 = vmatmul.f32.gmra.mxu0 %v727
        %v1214 = vpop.f32.mrf.mxu0
        %v1215 = vadd.f32 0.0, %v1214
        %1216 = vmatmul.f32.gmra.mxu0 %v731
        %v1217 = vpop.f32.mrf.mxu0
        %v1218 = vadd.f32 0.0, %v1217
        %1219 = vmatmul.f32.gmra.mxu0 %v735
        %v1220 = vpop.f32.mrf.mxu0
        %v1221 = vadd.f32 0.0, %v1220
        %1222 = vmatmul.f32.gmra.mxu0 %v739
        %v1223 = vpop.f32.mrf.mxu0
        %v1224 = vadd.f32 0.0, %v1223
        %1225 = vmatmul.f32.gmra.mxu0 %v743
        %v1226 = vpop.f32.mrf.mxu0
        %v1227 = vadd.f32 0.0, %v1226
        %1228 = vmatmul.f32.gmra.mxu0 %v747
        %v1229 = vpop.f32.mrf.mxu0
        %v1230 = vadd.f32 0.0, %v1229
        %1231 = vmatmul.f32.gmra.mxu0 %v751
        %v1232 = vpop.f32.mrf.mxu0
        %v1233 = vadd.f32 0.0, %v1232
        %1234 = vmatmul.f32.gmra.mxu0 %v755
        %v1235 = vpop.f32.mrf.mxu0
        %v1236 = vadd.f32 0.0, %v1235
        %1237 = vmatmul.f32.gmra.mxu0 %v759
        %v1238 = vpop.f32.mrf.mxu0
        %v1239 = vadd.f32 0.0, %v1238
        %1240 = vmatmul.f32.gmra.mxu0 %v763
        %v1241 = vpop.f32.mrf.mxu0
        %v1242 = vadd.f32 0.0, %v1241
        %1243 = vmatmul.f32.gmra.mxu0 %v767
        %v1244 = vpop.f32.mrf.mxu0
        %v1245 = vadd.f32 0.0, %v1244
        %1246 = vmatmul.f32.gmra.mxu0 %v771
        %v1247 = vpop.f32.mrf.mxu0
        %v1248 = vadd.f32 0.0, %v1247
        %1249 = vmatmul.f32.gmra.mxu0 %v775
        %v1250 = vpop.f32.mrf.mxu0
        %v1251 = vadd.f32 0.0, %v1250
        %1252 = vmatmul.f32.gmra.mxu0 %v779
        %v1253 = vpop.f32.mrf.mxu0
        %v1254 = vadd.f32 0.0, %v1253
        %1255 = vmatmul.f32.gmra.mxu0 %v783
        %v1256 = vpop.f32.mrf.mxu0
        %v1257 = vadd.f32 0.0, %v1256
        %1258 = vmatmul.f32.gmra.mxu0 %v787
        %v1259 = vpop.f32.mrf.mxu0
        %v1260 = vadd.f32 0.0, %v1259
        %1261 = vmatmul.f32.gmra.mxu0 %v791
        %v1262 = vpop.f32.mrf.mxu0
        %v1263 = vadd.f32 0.0, %v1262
        %1264 = vmatmul.f32.gmra.mxu0 %v795
        %v1265 = vpop.f32.mrf.mxu0
        %v1266 = vadd.f32 0.0, %v1265
        %1267 = vmatmul.f32.gmra.mxu0 %v799
        %v1268 = vpop.f32.mrf.mxu0
        %v1269 = vadd.f32 0.0, %v1268
        %1270 = vmatmul.f32.gmra.mxu0 %v803
        %v1271 = vpop.f32.mrf.mxu0
        %v1272 = vadd.f32 0.0, %v1271
        %1273 = vmatmul.f32.gmra.mxu0 %v807
        %v1274 = vpop.f32.mrf.mxu0
        %v1275 = vadd.f32 0.0, %v1274
        %1276 = vmatmul.f32.gmra.mxu0 %v811
        %v1277 = vpop.f32.mrf.mxu0
        %v1278 = vadd.f32 0.0, %v1277
        %1279 = vdwg.mxu0
        %1280 = vmatpush.msra.mxu0 %v846
        %1281 = vmatpush.msra.mxu0 %v845
        %1282 = vmatpush.msra.mxu0 %v844
        %1283 = vmatpush.msra.mxu0 %v843
        %1284 = vmatpush.msra.mxu0 %v842
        %1285 = vmatpush.msra.mxu0 %v841
        %1286 = vmatpush.msra.mxu0 %v840
        %1287 = vmatpush.msra.mxu0 %v839
        %1288 = vmatpush.msra.mxu0 %v838
        %1289 = vmatpush.msra.mxu0 %v837
        %1290 = vmatpush.msra.mxu0 %v836
        %1291 = vmatpush.msra.mxu0 %v835
        %1292 = vmatpush.msra.mxu0 %v834
        %1293 = vmatpush.msra.mxu0 %v833
        %1294 = vmatpush.msra.mxu0 %v832
        %1295 = vmatpush.msra.mxu0 %v831
        %1296 = vmatmul.f32.gmra.mxu0 %v304
        %v1297 = vpop.f32.mrf.mxu0
        %v1298 = vadd.f32 %v897, %v1297
        %1299 = vmatmul.f32.gmra.mxu0 %v308
        %v1300 = vpop.f32.mrf.mxu0
        %v1301 = vadd.f32 %v900, %v1300
        %1302 = vmatmul.f32.gmra.mxu0 %v312
        %v1303 = vpop.f32.mrf.mxu0
        %v1304 = vadd.f32 %v903, %v1303
        %1305 = vmatmul.f32.gmra.mxu0 %v316
        %v1306 = vpop.f32.mrf.mxu0
        %v1307 = vadd.f32 %v906, %v1306
        %1308 = vmatmul.f32.gmra.mxu0 %v320
        %v1309 = vpop.f32.mrf.mxu0
        %v1310 = vadd.f32 %v909, %v1309
        %1311 = vmatmul.f32.gmra.mxu0 %v324
        %v1312 = vpop.f32.mrf.mxu0
        %v1313 = vadd.f32 %v912, %v1312
        %1314 = vmatmul.f32.gmra.mxu0 %v328
        %v1315 = vpop.f32.mrf.mxu0
        %v1316 = vadd.f32 %v915, %v1315
        %1317 = vmatmul.f32.gmra.mxu0 %v332
        %v1318 = vpop.f32.mrf.mxu0
        %v1319 = vadd.f32 %v918, %v1318
        %1320 = vmatmul.f32.gmra.mxu0 %v336
        %v1321 = vpop.f32.mrf.mxu0
        %v1322 = vadd.f32 %v921, %v1321
        %1323 = vmatmul.f32.gmra.mxu0 %v340
        %v1324 = vpop.f32.mrf.mxu0
        %v1325 = vadd.f32 %v924, %v1324
        %1326 = vmatmul.f32.gmra.mxu0 %v344
        %v1327 = vpop.f32.mrf.mxu0
        %v1328 = vadd.f32 %v927, %v1327
        %1329 = vmatmul.f32.gmra.mxu0 %v348
        %v1330 = vpop.f32.mrf.mxu0
        %v1331 = vadd.f32 %v930, %v1330
        %1332 = vmatmul.f32.gmra.mxu0 %v352
        %v1333 = vpop.f32.mrf.mxu0
        %v1334 = vadd.f32 %v933, %v1333
        %1335 = vmatmul.f32.gmra.mxu0 %v356
        %v1336 = vpop.f32.mrf.mxu0
        %v1337 = vadd.f32 %v936, %v1336
        %1338 = vmatmul.f32.gmra.mxu0 %v360
        %v1339 = vpop.f32.mrf.mxu0
        %v1340 = vadd.f32 %v939, %v1339
        %1341 = vmatmul.f32.gmra.mxu0 %v364
        %v1342 = vpop.f32.mrf.mxu0
        %v1343 = vadd.f32 %v942, %v1342
        %1344 = vmatmul.f32.gmra.mxu0 %v368
        %v1345 = vpop.f32.mrf.mxu0
        %v1346 = vadd.f32 %v945, %v1345
        %1347 = vmatmul.f32.gmra.mxu0 %v372
        %v1348 = vpop.f32.mrf.mxu0
        %v1349 = vadd.f32 %v948, %v1348
        %1350 = vmatmul.f32.gmra.mxu0 %v376
        %v1351 = vpop.f32.mrf.mxu0
        %v1352 = vadd.f32 %v951, %v1351
        %1353 = vmatmul.f32.gmra.mxu0 %v380
        %v1354 = vpop.f32.mrf.mxu0
        %v1355 = vadd.f32 %v954, %v1354
        %1356 = vmatmul.f32.gmra.mxu0 %v384
        %v1357 = vpop.f32.mrf.mxu0
        %v1358 = vadd.f32 %v957, %v1357
        %1359 = vmatmul.f32.gmra.mxu0 %v388
        %v1360 = vpop.f32.mrf.mxu0
        %v1361 = vadd.f32 %v960, %v1360
        %1362 = vmatmul.f32.gmra.mxu0 %v392
        %v1363 = vpop.f32.mrf.mxu0
        %v1364 = vadd.f32 %v963, %v1363
        %1365 = vmatmul.f32.gmra.mxu0 %v396
        %v1366 = vpop.f32.mrf.mxu0
        %v1367 = vadd.f32 %v966, %v1366
        %1368 = vmatmul.f32.gmra.mxu0 %v400
        %v1369 = vpop.f32.mrf.mxu0
        %v1370 = vadd.f32 %v969, %v1369
        %1371 = vmatmul.f32.gmra.mxu0 %v404
        %v1372 = vpop.f32.mrf.mxu0
        %v1373 = vadd.f32 %v972, %v1372
        %1374 = vmatmul.f32.gmra.mxu0 %v408
        %v1375 = vpop.f32.mrf.mxu0
        %v1376 = vadd.f32 %v975, %v1375
        %1377 = vmatmul.f32.gmra.mxu0 %v412
        %v1378 = vpop.f32.mrf.mxu0
        %v1379 = vadd.f32 %v978, %v1378
        %1380 = vmatmul.f32.gmra.mxu0 %v416
        %v1381 = vpop.f32.mrf.mxu0
        %v1382 = vadd.f32 %v981, %v1381
        %1383 = vmatmul.f32.gmra.mxu0 %v420
        %v1384 = vpop.f32.mrf.mxu0
        %v1385 = vadd.f32 %v984, %v1384
        %1386 = vmatmul.f32.gmra.mxu0 %v424
        %v1387 = vpop.f32.mrf.mxu0
        %v1388 = vadd.f32 %v987, %v1387
        %1389 = vmatmul.f32.gmra.mxu0 %v428
        %v1390 = vpop.f32.mrf.mxu0
        %v1391 = vadd.f32 %v990, %v1390
        %1392 = vmatmul.f32.gmra.mxu0 %v432
        %v1393 = vpop.f32.mrf.mxu0
        %v1394 = vadd.f32 %v993, %v1393
        %1395 = vmatmul.f32.gmra.mxu0 %v436
        %v1396 = vpop.f32.mrf.mxu0
        %v1397 = vadd.f32 %v996, %v1396
        %1398 = vmatmul.f32.gmra.mxu0 %v440
        %v1399 = vpop.f32.mrf.mxu0
        %v1400 = vadd.f32 %v999, %v1399
        %1401 = vmatmul.f32.gmra.mxu0 %v444
        %v1402 = vpop.f32.mrf.mxu0
        %v1403 = vadd.f32 %v1002, %v1402
        %1404 = vmatmul.f32.gmra.mxu0 %v448
        %v1405 = vpop.f32.mrf.mxu0
        %v1406 = vadd.f32 %v1005, %v1405
        %1407 = vmatmul.f32.gmra.mxu0 %v452
        %v1408 = vpop.f32.mrf.mxu0
        %v1409 = vadd.f32 %v1008, %v1408
        %1410 = vmatmul.f32.gmra.mxu0 %v456
        %v1411 = vpop.f32.mrf.mxu0
        %v1412 = vadd.f32 %v1011, %v1411
        %1413 = vmatmul.f32.gmra.mxu0 %v460
        %v1414 = vpop.f32.mrf.mxu0
        %v1415 = vadd.f32 %v1014, %v1414
        %1416 = vmatmul.f32.gmra.mxu0 %v464
        %v1417 = vpop.f32.mrf.mxu0
        %v1418 = vadd.f32 %v1017, %v1417
        %1419 = vmatmul.f32.gmra.mxu0 %v468
        %v1420 = vpop.f32.mrf.mxu0
        %v1421 = vadd.f32 %v1020, %v1420
        %1422 = vmatmul.f32.gmra.mxu0 %v472
        %v1423 = vpop.f32.mrf.mxu0
        %v1424 = vadd.f32 %v1023, %v1423
        %1425 = vmatmul.f32.gmra.mxu0 %v476
        %v1426 = vpop.f32.mrf.mxu0
        %v1427 = vadd.f32 %v1026, %v1426
        %1428 = vmatmul.f32.gmra.mxu0 %v480
        %v1429 = vpop.f32.mrf.mxu0
        %v1430 = vadd.f32 %v1029, %v1429
        %1431 = vmatmul.f32.gmra.mxu0 %v484
        %v1432 = vpop.f32.mrf.mxu0
        %v1433 = vadd.f32 %v1032, %v1432
        %1434 = vmatmul.f32.gmra.mxu0 %v488
        %v1435 = vpop.f32.mrf.mxu0
        %v1436 = vadd.f32 %v1035, %v1435
        %1437 = vmatmul.f32.gmra.mxu0 %v492
        %v1438 = vpop.f32.mrf.mxu0
        %v1439 = vadd.f32 %v1038, %v1438
        %1440 = vmatmul.f32.gmra.mxu0 %v496
        %v1441 = vpop.f32.mrf.mxu0
        %v1442 = vadd.f32 %v1041, %v1441
        %1443 = vmatmul.f32.gmra.mxu0 %v500
        %v1444 = vpop.f32.mrf.mxu0
        %v1445 = vadd.f32 %v1044, %v1444
        %1446 = vmatmul.f32.gmra.mxu0 %v504
        %v1447 = vpop.f32.mrf.mxu0
        %v1448 = vadd.f32 %v1047, %v1447
        %1449 = vmatmul.f32.gmra.mxu0 %v508
        %v1450 = vpop.f32.mrf.mxu0
        %v1451 = vadd.f32 %v1050, %v1450
        %1452 = vmatmul.f32.gmra.mxu0 %v512
        %v1453 = vpop.f32.mrf.mxu0
        %v1454 = vadd.f32 %v1053, %v1453
        %1455 = vmatmul.f32.gmra.mxu0 %v516
        %v1456 = vpop.f32.mrf.mxu0
        %v1457 = vadd.f32 %v1056, %v1456
        %1458 = vmatmul.f32.gmra.mxu0 %v520
        %v1459 = vpop.f32.mrf.mxu0
        %v1460 = vadd.f32 %v1059, %v1459
        %1461 = vmatmul.f32.gmra.mxu0 %v524
        %v1462 = vpop.f32.mrf.mxu0
        %v1463 = vadd.f32 %v1062, %v1462
        %1464 = vmatmul.f32.gmra.mxu0 %v528
        %v1465 = vpop.f32.mrf.mxu0
        %v1466 = vadd.f32 %v1065, %v1465
        %1467 = vmatmul.f32.gmra.mxu0 %v532
        %v1468 = vpop.f32.mrf.mxu0
        %v1469 = vadd.f32 %v1068, %v1468
        %1470 = vmatmul.f32.gmra.mxu0 %v536
        %v1471 = vpop.f32.mrf.mxu0
        %v1472 = vadd.f32 %v1071, %v1471
        %1473 = vmatmul.f32.gmra.mxu0 %v540
        %v1474 = vpop.f32.mrf.mxu0
        %v1475 = vadd.f32 %v1074, %v1474
        %1476 = vmatmul.f32.gmra.mxu0 %v544
        %v1477 = vpop.f32.mrf.mxu0
        %v1478 = vadd.f32 %v1077, %v1477
        %1479 = vmatmul.f32.gmra.mxu0 %v548
        %v1480 = vpop.f32.mrf.mxu0
        %v1481 = vadd.f32 %v1080, %v1480
        %1482 = vmatmul.f32.gmra.mxu0 %v552
        %v1483 = vpop.f32.mrf.mxu0
        %v1484 = vadd.f32 %v1083, %v1483
        %1485 = vmatmul.f32.gmra.mxu0 %v556
        %v1486 = vpop.f32.mrf.mxu0
        %v1487 = vadd.f32 %v1086, %v1486
        %1488 = vmatmul.f32.gmra.mxu0 %v560
        %v1489 = vpop.f32.mrf.mxu0
        %v1490 = vadd.f32 %v1089, %v1489
        %1491 = vmatmul.f32.gmra.mxu0 %v564
        %v1492 = vpop.f32.mrf.mxu0
        %v1493 = vadd.f32 %v1092, %v1492
        %1494 = vmatmul.f32.gmra.mxu0 %v568
        %v1495 = vpop.f32.mrf.mxu0
        %v1496 = vadd.f32 %v1095, %v1495
        %1497 = vmatmul.f32.gmra.mxu0 %v572
        %v1498 = vpop.f32.mrf.mxu0
        %v1499 = vadd.f32 %v1098, %v1498
        %1500 = vmatmul.f32.gmra.mxu0 %v576
        %v1501 = vpop.f32.mrf.mxu0
        %v1502 = vadd.f32 %v1101, %v1501
        %1503 = vmatmul.f32.gmra.mxu0 %v580
        %v1504 = vpop.f32.mrf.mxu0
        %v1505 = vadd.f32 %v1104, %v1504
        %1506 = vmatmul.f32.gmra.mxu0 %v584
        %v1507 = vpop.f32.mrf.mxu0
        %v1508 = vadd.f32 %v1107, %v1507
        %1509 = vmatmul.f32.gmra.mxu0 %v588
        %v1510 = vpop.f32.mrf.mxu0
        %v1511 = vadd.f32 %v1110, %v1510
        %1512 = vmatmul.f32.gmra.mxu0 %v592
        %v1513 = vpop.f32.mrf.mxu0
        %v1514 = vadd.f32 %v1113, %v1513
        %1515 = vmatmul.f32.gmra.mxu0 %v596
        %v1516 = vpop.f32.mrf.mxu0
        %v1517 = vadd.f32 %v1116, %v1516
        %1518 = vmatmul.f32.gmra.mxu0 %v600
        %v1519 = vpop.f32.mrf.mxu0
        %v1520 = vadd.f32 %v1119, %v1519
        %1521 = vmatmul.f32.gmra.mxu0 %v604
        %v1522 = vpop.f32.mrf.mxu0
        %v1523 = vadd.f32 %v1122, %v1522
        %1524 = vmatmul.f32.gmra.mxu0 %v608
        %v1525 = vpop.f32.mrf.mxu0
        %v1526 = vadd.f32 %v1125, %v1525
        %1527 = vmatmul.f32.gmra.mxu0 %v612
        %v1528 = vpop.f32.mrf.mxu0
        %v1529 = vadd.f32 %v1128, %v1528
        %1530 = vmatmul.f32.gmra.mxu0 %v616
        %v1531 = vpop.f32.mrf.mxu0
        %v1532 = vadd.f32 %v1131, %v1531
        %1533 = vmatmul.f32.gmra.mxu0 %v620
        %v1534 = vpop.f32.mrf.mxu0
        %v1535 = vadd.f32 %v1134, %v1534
        %1536 = vmatmul.f32.gmra.mxu0 %v624
        %v1537 = vpop.f32.mrf.mxu0
        %v1538 = vadd.f32 %v1137, %v1537
        %1539 = vmatmul.f32.gmra.mxu0 %v628
        %v1540 = vpop.f32.mrf.mxu0
        %v1541 = vadd.f32 %v1140, %v1540
        %1542 = vmatmul.f32.gmra.mxu0 %v632
        %v1543 = vpop.f32.mrf.mxu0
        %v1544 = vadd.f32 %v1143, %v1543
        %1545 = vmatmul.f32.gmra.mxu0 %v636
        %v1546 = vpop.f32.mrf.mxu0
        %v1547 = vadd.f32 %v1146, %v1546
        %1548 = vmatmul.f32.gmra.mxu0 %v640
        %v1549 = vpop.f32.mrf.mxu0
        %v1550 = vadd.f32 %v1149, %v1549
        %1551 = vmatmul.f32.gmra.mxu0 %v644
        %v1552 = vpop.f32.mrf.mxu0
        %v1553 = vadd.f32 %v1152, %v1552
        %1554 = vmatmul.f32.gmra.mxu0 %v648
        %v1555 = vpop.f32.mrf.mxu0
        %v1556 = vadd.f32 %v1155, %v1555
        %1557 = vmatmul.f32.gmra.mxu0 %v652
        %v1558 = vpop.f32.mrf.mxu0
        %v1559 = vadd.f32 %v1158, %v1558
        %1560 = vmatmul.f32.gmra.mxu0 %v656
        %v1561 = vpop.f32.mrf.mxu0
        %v1562 = vadd.f32 %v1161, %v1561
        %1563 = vmatmul.f32.gmra.mxu0 %v660
        %v1564 = vpop.f32.mrf.mxu0
        %v1565 = vadd.f32 %v1164, %v1564
        %1566 = vmatmul.f32.gmra.mxu0 %v664
        %v1567 = vpop.f32.mrf.mxu0
        %v1568 = vadd.f32 %v1167, %v1567
        %1569 = vmatmul.f32.gmra.mxu0 %v668
        %v1570 = vpop.f32.mrf.mxu0
        %v1571 = vadd.f32 %v1170, %v1570
        %1572 = vmatmul.f32.gmra.mxu0 %v672
        %v1573 = vpop.f32.mrf.mxu0
        %v1574 = vadd.f32 %v1173, %v1573
        %1575 = vmatmul.f32.gmra.mxu0 %v676
        %v1576 = vpop.f32.mrf.mxu0
        %v1577 = vadd.f32 %v1176, %v1576
        %1578 = vmatmul.f32.gmra.mxu0 %v680
        %v1579 = vpop.f32.mrf.mxu0
        %v1580 = vadd.f32 %v1179, %v1579
        %1581 = vmatmul.f32.gmra.mxu0 %v684
        %v1582 = vpop.f32.mrf.mxu0
        %v1583 = vadd.f32 %v1182, %v1582
        %1584 = vmatmul.f32.gmra.mxu0 %v688
        %v1585 = vpop.f32.mrf.mxu0
        %v1586 = vadd.f32 %v1185, %v1585
        %1587 = vmatmul.f32.gmra.mxu0 %v692
        %v1588 = vpop.f32.mrf.mxu0
        %v1589 = vadd.f32 %v1188, %v1588
        %1590 = vmatmul.f32.gmra.mxu0 %v696
        %v1591 = vpop.f32.mrf.mxu0
        %v1592 = vadd.f32 %v1191, %v1591
        %1593 = vmatmul.f32.gmra.mxu0 %v700
        %v1594 = vpop.f32.mrf.mxu0
        %v1595 = vadd.f32 %v1194, %v1594
        %1596 = vmatmul.f32.gmra.mxu0 %v704
        %v1597 = vpop.f32.mrf.mxu0
        %v1598 = vadd.f32 %v1197, %v1597
        %1599 = vmatmul.f32.gmra.mxu0 %v708
        %v1600 = vpop.f32.mrf.mxu0
        %v1601 = vadd.f32 %v1200, %v1600
        %1602 = vmatmul.f32.gmra.mxu0 %v712
        %v1603 = vpop.f32.mrf.mxu0
        %v1604 = vadd.f32 %v1203, %v1603
        %1605 = vmatmul.f32.gmra.mxu0 %v716
        %v1606 = vpop.f32.mrf.mxu0
        %v1607 = vadd.f32 %v1206, %v1606
        %1608 = vmatmul.f32.gmra.mxu0 %v720
        %v1609 = vpop.f32.mrf.mxu0
        %v1610 = vadd.f32 %v1209, %v1609
        %1611 = vmatmul.f32.gmra.mxu0 %v724
        %v1612 = vpop.f32.mrf.mxu0
        %v1613 = vadd.f32 %v1212, %v1612
        %1614 = vmatmul.f32.gmra.mxu0 %v728
        %v1615 = vpop.f32.mrf.mxu0
        %v1616 = vadd.f32 %v1215, %v1615
        %1617 = vmatmul.f32.gmra.mxu0 %v732
        %v1618 = vpop.f32.mrf.mxu0
        %v1619 = vadd.f32 %v1218, %v1618
        %1620 = vmatmul.f32.gmra.mxu0 %v736
        %v1621 = vpop.f32.mrf.mxu0
        %v1622 = vadd.f32 %v1221, %v1621
        %1623 = vmatmul.f32.gmra.mxu0 %v740
        %v1624 = vpop.f32.mrf.mxu0
        %v1625 = vadd.f32 %v1224, %v1624
        %1626 = vmatmul.f32.gmra.mxu0 %v744
        %v1627 = vpop.f32.mrf.mxu0
        %v1628 = vadd.f32 %v1227, %v1627
        %1629 = vmatmul.f32.gmra.mxu0 %v748
        %v1630 = vpop.f32.mrf.mxu0
        %v1631 = vadd.f32 %v1230, %v1630
        %1632 = vmatmul.f32.gmra.mxu0 %v752
        %v1633 = vpop.f32.mrf.mxu0
        %v1634 = vadd.f32 %v1233, %v1633
        %1635 = vmatmul.f32.gmra.mxu0 %v756
        %v1636 = vpop.f32.mrf.mxu0
        %v1637 = vadd.f32 %v1236, %v1636
        %1638 = vmatmul.f32.gmra.mxu0 %v760
        %v1639 = vpop.f32.mrf.mxu0
        %v1640 = vadd.f32 %v1239, %v1639
        %1641 = vmatmul.f32.gmra.mxu0 %v764
        %v1642 = vpop.f32.mrf.mxu0
        %v1643 = vadd.f32 %v1242, %v1642
        %1644 = vmatmul.f32.gmra.mxu0 %v768
        %v1645 = vpop.f32.mrf.mxu0
        %v1646 = vadd.f32 %v1245, %v1645
        %1647 = vmatmul.f32.gmra.mxu0 %v772
        %v1648 = vpop.f32.mrf.mxu0
        %v1649 = vadd.f32 %v1248, %v1648
        %1650 = vmatmul.f32.gmra.mxu0 %v776
        %v1651 = vpop.f32.mrf.mxu0
        %v1652 = vadd.f32 %v1251, %v1651
        %1653 = vmatmul.f32.gmra.mxu0 %v780
        %v1654 = vpop.f32.mrf.mxu0
        %v1655 = vadd.f32 %v1254, %v1654
        %1656 = vmatmul.f32.gmra.mxu0 %v784
        %v1657 = vpop.f32.mrf.mxu0
        %v1658 = vadd.f32 %v1257, %v1657
        %1659 = vmatmul.f32.gmra.mxu0 %v788
        %v1660 = vpop.f32.mrf.mxu0
        %v1661 = vadd.f32 %v1260, %v1660
        %1662 = vmatmul.f32.gmra.mxu0 %v792
        %v1663 = vpop.f32.mrf.mxu0
        %v1664 = vadd.f32 %v1263, %v1663
        %1665 = vmatmul.f32.gmra.mxu0 %v796
        %v1666 = vpop.f32.mrf.mxu0
        %v1667 = vadd.f32 %v1266, %v1666
        %1668 = vmatmul.f32.gmra.mxu0 %v800
        %v1669 = vpop.f32.mrf.mxu0
        %v1670 = vadd.f32 %v1269, %v1669
        %1671 = vmatmul.f32.gmra.mxu0 %v804
        %v1672 = vpop.f32.mrf.mxu0
        %v1673 = vadd.f32 %v1272, %v1672
        %1674 = vmatmul.f32.gmra.mxu0 %v808
        %v1675 = vpop.f32.mrf.mxu0
        %v1676 = vadd.f32 %v1275, %v1675
        %1677 = vmatmul.f32.gmra.mxu0 %v812
        %v1678 = vpop.f32.mrf.mxu0
        %v1679 = vadd.f32 %v1278, %v1678
        %1680 = vdwg.mxu0
        %1681 = vmatpush.msra.mxu0 %v862
        %1682 = vmatpush.msra.mxu0 %v861
        %1683 = vmatpush.msra.mxu0 %v860
        %1684 = vmatpush.msra.mxu0 %v859
        %1685 = vmatpush.msra.mxu0 %v858
        %1686 = vmatpush.msra.mxu0 %v857
        %1687 = vmatpush.msra.mxu0 %v856
        %1688 = vmatpush.msra.mxu0 %v855
        %1689 = vmatpush.msra.mxu0 %v854
        %1690 = vmatpush.msra.mxu0 %v853
        %1691 = vmatpush.msra.mxu0 %v852
        %1692 = vmatpush.msra.mxu0 %v851
        %1693 = vmatpush.msra.mxu0 %v850
        %1694 = vmatpush.msra.mxu0 %v849
        %1695 = vmatpush.msra.mxu0 %v848
        %1696 = vmatpush.msra.mxu0 %v847
        %1697 = vmatmul.f32.gmra.mxu0 %v305
        %v1698 = vpop.f32.mrf.mxu0
        %v1699 = vadd.f32 %v1298, %v1698
        %1700 = vmatmul.f32.gmra.mxu0 %v309
        %v1701 = vpop.f32.mrf.mxu0
        %v1702 = vadd.f32 %v1301, %v1701
        %1703 = vmatmul.f32.gmra.mxu0 %v313
        %v1704 = vpop.f32.mrf.mxu0
        %v1705 = vadd.f32 %v1304, %v1704
        %1706 = vmatmul.f32.gmra.mxu0 %v317
        %v1707 = vpop.f32.mrf.mxu0
        %v1708 = vadd.f32 %v1307, %v1707
        %1709 = vmatmul.f32.gmra.mxu0 %v321
        %v1710 = vpop.f32.mrf.mxu0
        %v1711 = vadd.f32 %v1310, %v1710
        %1712 = vmatmul.f32.gmra.mxu0 %v325
        %v1713 = vpop.f32.mrf.mxu0
        %v1714 = vadd.f32 %v1313, %v1713
        %1715 = vmatmul.f32.gmra.mxu0 %v329
        %v1716 = vpop.f32.mrf.mxu0
        %v1717 = vadd.f32 %v1316, %v1716
        %1718 = vmatmul.f32.gmra.mxu0 %v333
        %v1719 = vpop.f32.mrf.mxu0
        %v1720 = vadd.f32 %v1319, %v1719
        %1721 = vmatmul.f32.gmra.mxu0 %v337
        %v1722 = vpop.f32.mrf.mxu0
        %v1723 = vadd.f32 %v1322, %v1722
        %1724 = vmatmul.f32.gmra.mxu0 %v341
        %v1725 = vpop.f32.mrf.mxu0
        %v1726 = vadd.f32 %v1325, %v1725
        %1727 = vmatmul.f32.gmra.mxu0 %v345
        %v1728 = vpop.f32.mrf.mxu0
        %v1729 = vadd.f32 %v1328, %v1728
        %1730 = vmatmul.f32.gmra.mxu0 %v349
        %v1731 = vpop.f32.mrf.mxu0
        %v1732 = vadd.f32 %v1331, %v1731
        %1733 = vmatmul.f32.gmra.mxu0 %v353
        %v1734 = vpop.f32.mrf.mxu0
        %v1735 = vadd.f32 %v1334, %v1734
        %1736 = vmatmul.f32.gmra.mxu0 %v357
        %v1737 = vpop.f32.mrf.mxu0
        %v1738 = vadd.f32 %v1337, %v1737
        %1739 = vmatmul.f32.gmra.mxu0 %v361
        %v1740 = vpop.f32.mrf.mxu0
        %v1741 = vadd.f32 %v1340, %v1740
        %1742 = vmatmul.f32.gmra.mxu0 %v365
        %v1743 = vpop.f32.mrf.mxu0
        %v1744 = vadd.f32 %v1343, %v1743
        %1745 = vmatmul.f32.gmra.mxu0 %v369
        %v1746 = vpop.f32.mrf.mxu0
        %v1747 = vadd.f32 %v1346, %v1746
        %1748 = vmatmul.f32.gmra.mxu0 %v373
        %v1749 = vpop.f32.mrf.mxu0
        %v1750 = vadd.f32 %v1349, %v1749
        %1751 = vmatmul.f32.gmra.mxu0 %v377
        %v1752 = vpop.f32.mrf.mxu0
        %v1753 = vadd.f32 %v1352, %v1752
        %1754 = vmatmul.f32.gmra.mxu0 %v381
        %v1755 = vpop.f32.mrf.mxu0
        %v1756 = vadd.f32 %v1355, %v1755
        %1757 = vmatmul.f32.gmra.mxu0 %v385
        %v1758 = vpop.f32.mrf.mxu0
        %v1759 = vadd.f32 %v1358, %v1758
        %1760 = vmatmul.f32.gmra.mxu0 %v389
        %v1761 = vpop.f32.mrf.mxu0
        %v1762 = vadd.f32 %v1361, %v1761
        %1763 = vmatmul.f32.gmra.mxu0 %v393
        %v1764 = vpop.f32.mrf.mxu0
        %v1765 = vadd.f32 %v1364, %v1764
        %1766 = vmatmul.f32.gmra.mxu0 %v397
        %v1767 = vpop.f32.mrf.mxu0
        %v1768 = vadd.f32 %v1367, %v1767
        %1769 = vmatmul.f32.gmra.mxu0 %v401
        %v1770 = vpop.f32.mrf.mxu0
        %v1771 = vadd.f32 %v1370, %v1770
        %1772 = vmatmul.f32.gmra.mxu0 %v405
        %v1773 = vpop.f32.mrf.mxu0
        %v1774 = vadd.f32 %v1373, %v1773
        %1775 = vmatmul.f32.gmra.mxu0 %v409
        %v1776 = vpop.f32.mrf.mxu0
        %v1777 = vadd.f32 %v1376, %v1776
        %1778 = vmatmul.f32.gmra.mxu0 %v413
        %v1779 = vpop.f32.mrf.mxu0
        %v1780 = vadd.f32 %v1379, %v1779
        %1781 = vmatmul.f32.gmra.mxu0 %v417
        %v1782 = vpop.f32.mrf.mxu0
        %v1783 = vadd.f32 %v1382, %v1782
        %1784 = vmatmul.f32.gmra.mxu0 %v421
        %v1785 = vpop.f32.mrf.mxu0
        %v1786 = vadd.f32 %v1385, %v1785
        %1787 = vmatmul.f32.gmra.mxu0 %v425
        %v1788 = vpop.f32.mrf.mxu0
        %v1789 = vadd.f32 %v1388, %v1788
        %1790 = vmatmul.f32.gmra.mxu0 %v429
        %v1791 = vpop.f32.mrf.mxu0
        %v1792 = vadd.f32 %v1391, %v1791
        %1793 = vmatmul.f32.gmra.mxu0 %v433
        %v1794 = vpop.f32.mrf.mxu0
        %v1795 = vadd.f32 %v1394, %v1794
        %1796 = vmatmul.f32.gmra.mxu0 %v437
        %v1797 = vpop.f32.mrf.mxu0
        %v1798 = vadd.f32 %v1397, %v1797
        %1799 = vmatmul.f32.gmra.mxu0 %v441
        %v1800 = vpop.f32.mrf.mxu0
        %v1801 = vadd.f32 %v1400, %v1800
        %1802 = vmatmul.f32.gmra.mxu0 %v445
        %v1803 = vpop.f32.mrf.mxu0
        %v1804 = vadd.f32 %v1403, %v1803
        %1805 = vmatmul.f32.gmra.mxu0 %v449
        %v1806 = vpop.f32.mrf.mxu0
        %v1807 = vadd.f32 %v1406, %v1806
        %1808 = vmatmul.f32.gmra.mxu0 %v453
        %v1809 = vpop.f32.mrf.mxu0
        %v1810 = vadd.f32 %v1409, %v1809
        %1811 = vmatmul.f32.gmra.mxu0 %v457
        %v1812 = vpop.f32.mrf.mxu0
        %v1813 = vadd.f32 %v1412, %v1812
        %1814 = vmatmul.f32.gmra.mxu0 %v461
        %v1815 = vpop.f32.mrf.mxu0
        %v1816 = vadd.f32 %v1415, %v1815
        %1817 = vmatmul.f32.gmra.mxu0 %v465
        %v1818 = vpop.f32.mrf.mxu0
        %v1819 = vadd.f32 %v1418, %v1818
        %1820 = vmatmul.f32.gmra.mxu0 %v469
        %v1821 = vpop.f32.mrf.mxu0
        %v1822 = vadd.f32 %v1421, %v1821
        %1823 = vmatmul.f32.gmra.mxu0 %v473
        %v1824 = vpop.f32.mrf.mxu0
        %v1825 = vadd.f32 %v1424, %v1824
        %1826 = vmatmul.f32.gmra.mxu0 %v477
        %v1827 = vpop.f32.mrf.mxu0
        %v1828 = vadd.f32 %v1427, %v1827
        %1829 = vmatmul.f32.gmra.mxu0 %v481
        %v1830 = vpop.f32.mrf.mxu0
        %v1831 = vadd.f32 %v1430, %v1830
        %1832 = vmatmul.f32.gmra.mxu0 %v485
        %v1833 = vpop.f32.mrf.mxu0
        %v1834 = vadd.f32 %v1433, %v1833
        %1835 = vmatmul.f32.gmra.mxu0 %v489
        %v1836 = vpop.f32.mrf.mxu0
        %v1837 = vadd.f32 %v1436, %v1836
        %1838 = vmatmul.f32.gmra.mxu0 %v493
        %v1839 = vpop.f32.mrf.mxu0
        %v1840 = vadd.f32 %v1439, %v1839
        %1841 = vmatmul.f32.gmra.mxu0 %v497
        %v1842 = vpop.f32.mrf.mxu0
        %v1843 = vadd.f32 %v1442, %v1842
        %1844 = vmatmul.f32.gmra.mxu0 %v501
        %v1845 = vpop.f32.mrf.mxu0
        %v1846 = vadd.f32 %v1445, %v1845
        %1847 = vmatmul.f32.gmra.mxu0 %v505
        %v1848 = vpop.f32.mrf.mxu0
        %v1849 = vadd.f32 %v1448, %v1848
        %1850 = vmatmul.f32.gmra.mxu0 %v509
        %v1851 = vpop.f32.mrf.mxu0
        %v1852 = vadd.f32 %v1451, %v1851
        %1853 = vmatmul.f32.gmra.mxu0 %v513
        %v1854 = vpop.f32.mrf.mxu0
        %v1855 = vadd.f32 %v1454, %v1854
        %1856 = vmatmul.f32.gmra.mxu0 %v517
        %v1857 = vpop.f32.mrf.mxu0
        %v1858 = vadd.f32 %v1457, %v1857
        %1859 = vmatmul.f32.gmra.mxu0 %v521
        %v1860 = vpop.f32.mrf.mxu0
        %v1861 = vadd.f32 %v1460, %v1860
        %1862 = vmatmul.f32.gmra.mxu0 %v525
        %v1863 = vpop.f32.mrf.mxu0
        %v1864 = vadd.f32 %v1463, %v1863
        %1865 = vmatmul.f32.gmra.mxu0 %v529
        %v1866 = vpop.f32.mrf.mxu0
        %v1867 = vadd.f32 %v1466, %v1866
        %1868 = vmatmul.f32.gmra.mxu0 %v533
        %v1869 = vpop.f32.mrf.mxu0
        %v1870 = vadd.f32 %v1469, %v1869
        %1871 = vmatmul.f32.gmra.mxu0 %v537
        %v1872 = vpop.f32.mrf.mxu0
        %v1873 = vadd.f32 %v1472, %v1872
        %1874 = vmatmul.f32.gmra.mxu0 %v541
        %v1875 = vpop.f32.mrf.mxu0
        %v1876 = vadd.f32 %v1475, %v1875
        %1877 = vmatmul.f32.gmra.mxu0 %v545
        %v1878 = vpop.f32.mrf.mxu0
        %v1879 = vadd.f32 %v1478, %v1878
        %1880 = vmatmul.f32.gmra.mxu0 %v549
        %v1881 = vpop.f32.mrf.mxu0
        %v1882 = vadd.f32 %v1481, %v1881
        %1883 = vmatmul.f32.gmra.mxu0 %v553
        %v1884 = vpop.f32.mrf.mxu0
        %v1885 = vadd.f32 %v1484, %v1884
        %1886 = vmatmul.f32.gmra.mxu0 %v557
        %v1887 = vpop.f32.mrf.mxu0
        %v1888 = vadd.f32 %v1487, %v1887
        %1889 = vmatmul.f32.gmra.mxu0 %v561
        %v1890 = vpop.f32.mrf.mxu0
        %v1891 = vadd.f32 %v1490, %v1890
        %1892 = vmatmul.f32.gmra.mxu0 %v565
        %v1893 = vpop.f32.mrf.mxu0
        %v1894 = vadd.f32 %v1493, %v1893
        %1895 = vmatmul.f32.gmra.mxu0 %v569
        %v1896 = vpop.f32.mrf.mxu0
        %v1897 = vadd.f32 %v1496, %v1896
        %1898 = vmatmul.f32.gmra.mxu0 %v573
        %v1899 = vpop.f32.mrf.mxu0
        %v1900 = vadd.f32 %v1499, %v1899
        %1901 = vmatmul.f32.gmra.mxu0 %v577
        %v1902 = vpop.f32.mrf.mxu0
        %v1903 = vadd.f32 %v1502, %v1902
        %1904 = vmatmul.f32.gmra.mxu0 %v581
        %v1905 = vpop.f32.mrf.mxu0
        %v1906 = vadd.f32 %v1505, %v1905
        %1907 = vmatmul.f32.gmra.mxu0 %v585
        %v1908 = vpop.f32.mrf.mxu0
        %v1909 = vadd.f32 %v1508, %v1908
        %1910 = vmatmul.f32.gmra.mxu0 %v589
        %v1911 = vpop.f32.mrf.mxu0
        %v1912 = vadd.f32 %v1511, %v1911
        %1913 = vmatmul.f32.gmra.mxu0 %v593
        %v1914 = vpop.f32.mrf.mxu0
        %v1915 = vadd.f32 %v1514, %v1914
        %1916 = vmatmul.f32.gmra.mxu0 %v597
        %v1917 = vpop.f32.mrf.mxu0
        %v1918 = vadd.f32 %v1517, %v1917
        %1919 = vmatmul.f32.gmra.mxu0 %v601
        %v1920 = vpop.f32.mrf.mxu0
        %v1921 = vadd.f32 %v1520, %v1920
        %1922 = vmatmul.f32.gmra.mxu0 %v605
        %v1923 = vpop.f32.mrf.mxu0
        %v1924 = vadd.f32 %v1523, %v1923
        %1925 = vmatmul.f32.gmra.mxu0 %v609
        %v1926 = vpop.f32.mrf.mxu0
        %v1927 = vadd.f32 %v1526, %v1926
        %1928 = vmatmul.f32.gmra.mxu0 %v613
        %v1929 = vpop.f32.mrf.mxu0
        %v1930 = vadd.f32 %v1529, %v1929
        %1931 = vmatmul.f32.gmra.mxu0 %v617
        %v1932 = vpop.f32.mrf.mxu0
        %v1933 = vadd.f32 %v1532, %v1932
        %1934 = vmatmul.f32.gmra.mxu0 %v621
        %v1935 = vpop.f32.mrf.mxu0
        %v1936 = vadd.f32 %v1535, %v1935
        %1937 = vmatmul.f32.gmra.mxu0 %v625
        %v1938 = vpop.f32.mrf.mxu0
        %v1939 = vadd.f32 %v1538, %v1938
        %1940 = vmatmul.f32.gmra.mxu0 %v629
        %v1941 = vpop.f32.mrf.mxu0
        %v1942 = vadd.f32 %v1541, %v1941
        %1943 = vmatmul.f32.gmra.mxu0 %v633
        %v1944 = vpop.f32.mrf.mxu0
        %v1945 = vadd.f32 %v1544, %v1944
        %1946 = vmatmul.f32.gmra.mxu0 %v637
        %v1947 = vpop.f32.mrf.mxu0
        %v1948 = vadd.f32 %v1547, %v1947
        %1949 = vmatmul.f32.gmra.mxu0 %v641
        %v1950 = vpop.f32.mrf.mxu0
        %v1951 = vadd.f32 %v1550, %v1950
        %1952 = vmatmul.f32.gmra.mxu0 %v645
        %v1953 = vpop.f32.mrf.mxu0
        %v1954 = vadd.f32 %v1553, %v1953
        %1955 = vmatmul.f32.gmra.mxu0 %v649
        %v1956 = vpop.f32.mrf.mxu0
        %v1957 = vadd.f32 %v1556, %v1956
        %1958 = vmatmul.f32.gmra.mxu0 %v653
        %v1959 = vpop.f32.mrf.mxu0
        %v1960 = vadd.f32 %v1559, %v1959
        %1961 = vmatmul.f32.gmra.mxu0 %v657
        %v1962 = vpop.f32.mrf.mxu0
        %v1963 = vadd.f32 %v1562, %v1962
        %1964 = vmatmul.f32.gmra.mxu0 %v661
        %v1965 = vpop.f32.mrf.mxu0
        %v1966 = vadd.f32 %v1565, %v1965
        %1967 = vmatmul.f32.gmra.mxu0 %v665
        %v1968 = vpop.f32.mrf.mxu0
        %v1969 = vadd.f32 %v1568, %v1968
        %1970 = vmatmul.f32.gmra.mxu0 %v669
        %v1971 = vpop.f32.mrf.mxu0
        %v1972 = vadd.f32 %v1571, %v1971
        %1973 = vmatmul.f32.gmra.mxu0 %v673
        %v1974 = vpop.f32.mrf.mxu0
        %v1975 = vadd.f32 %v1574, %v1974
        %1976 = vmatmul.f32.gmra.mxu0 %v677
        %v1977 = vpop.f32.mrf.mxu0
        %v1978 = vadd.f32 %v1577, %v1977
        %1979 = vmatmul.f32.gmra.mxu0 %v681
        %v1980 = vpop.f32.mrf.mxu0
        %v1981 = vadd.f32 %v1580, %v1980
        %1982 = vmatmul.f32.gmra.mxu0 %v685
        %v1983 = vpop.f32.mrf.mxu0
        %v1984 = vadd.f32 %v1583, %v1983
        %1985 = vmatmul.f32.gmra.mxu0 %v689
        %v1986 = vpop.f32.mrf.mxu0
        %v1987 = vadd.f32 %v1586, %v1986
        %1988 = vmatmul.f32.gmra.mxu0 %v693
        %v1989 = vpop.f32.mrf.mxu0
        %v1990 = vadd.f32 %v1589, %v1989
        %1991 = vmatmul.f32.gmra.mxu0 %v697
        %v1992 = vpop.f32.mrf.mxu0
        %v1993 = vadd.f32 %v1592, %v1992
        %1994 = vmatmul.f32.gmra.mxu0 %v701
        %v1995 = vpop.f32.mrf.mxu0
        %v1996 = vadd.f32 %v1595, %v1995
        %1997 = vmatmul.f32.gmra.mxu0 %v705
        %v1998 = vpop.f32.mrf.mxu0
        %v1999 = vadd.f32 %v1598, %v1998
        %2000 = vmatmul.f32.gmra.mxu0 %v709
        %v2001 = vpop.f32.mrf.mxu0
        %v2002 = vadd.f32 %v1601, %v2001
        %2003 = vmatmul.f32.gmra.mxu0 %v713
        %v2004 = vpop.f32.mrf.mxu0
        %v2005 = vadd.f32 %v1604, %v2004
        %2006 = vmatmul.f32.gmra.mxu0 %v717
        %v2007 = vpop.f32.mrf.mxu0
        %v2008 = vadd.f32 %v1607, %v2007
        %2009 = vmatmul.f32.gmra.mxu0 %v721
        %v2010 = vpop.f32.mrf.mxu0
        %v2011 = vadd.f32 %v1610, %v2010
        %2012 = vmatmul.f32.gmra.mxu0 %v725
        %v2013 = vpop.f32.mrf.mxu0
        %v2014 = vadd.f32 %v1613, %v2013
        %2015 = vmatmul.f32.gmra.mxu0 %v729
        %v2016 = vpop.f32.mrf.mxu0
        %v2017 = vadd.f32 %v1616, %v2016
        %2018 = vmatmul.f32.gmra.mxu0 %v733
        %v2019 = vpop.f32.mrf.mxu0
        %v2020 = vadd.f32 %v1619, %v2019
        %2021 = vmatmul.f32.gmra.mxu0 %v737
        %v2022 = vpop.f32.mrf.mxu0
        %v2023 = vadd.f32 %v1622, %v2022
        %2024 = vmatmul.f32.gmra.mxu0 %v741
        %v2025 = vpop.f32.mrf.mxu0
        %v2026 = vadd.f32 %v1625, %v2025
        %2027 = vmatmul.f32.gmra.mxu0 %v745
        %v2028 = vpop.f32.mrf.mxu0
        %v2029 = vadd.f32 %v1628, %v2028
        %2030 = vmatmul.f32.gmra.mxu0 %v749
        %v2031 = vpop.f32.mrf.mxu0
        %v2032 = vadd.f32 %v1631, %v2031
        %2033 = vmatmul.f32.gmra.mxu0 %v753
        %v2034 = vpop.f32.mrf.mxu0
        %v2035 = vadd.f32 %v1634, %v2034
        %2036 = vmatmul.f32.gmra.mxu0 %v757
        %v2037 = vpop.f32.mrf.mxu0
        %v2038 = vadd.f32 %v1637, %v2037
        %2039 = vmatmul.f32.gmra.mxu0 %v761
        %v2040 = vpop.f32.mrf.mxu0
        %v2041 = vadd.f32 %v1640, %v2040
        %2042 = vmatmul.f32.gmra.mxu0 %v765
        %v2043 = vpop.f32.mrf.mxu0
        %v2044 = vadd.f32 %v1643, %v2043
        %2045 = vmatmul.f32.gmra.mxu0 %v769
        %v2046 = vpop.f32.mrf.mxu0
        %v2047 = vadd.f32 %v1646, %v2046
        %2048 = vmatmul.f32.gmra.mxu0 %v773
        %v2049 = vpop.f32.mrf.mxu0
        %v2050 = vadd.f32 %v1649, %v2049
        %2051 = vmatmul.f32.gmra.mxu0 %v777
        %v2052 = vpop.f32.mrf.mxu0
        %v2053 = vadd.f32 %v1652, %v2052
        %2054 = vmatmul.f32.gmra.mxu0 %v781
        %v2055 = vpop.f32.mrf.mxu0
        %v2056 = vadd.f32 %v1655, %v2055
        %2057 = vmatmul.f32.gmra.mxu0 %v785
        %v2058 = vpop.f32.mrf.mxu0
        %v2059 = vadd.f32 %v1658, %v2058
        %2060 = vmatmul.f32.gmra.mxu0 %v789
        %v2061 = vpop.f32.mrf.mxu0
        %v2062 = vadd.f32 %v1661, %v2061
        %2063 = vmatmul.f32.gmra.mxu0 %v793
        %v2064 = vpop.f32.mrf.mxu0
        %v2065 = vadd.f32 %v1664, %v2064
        %2066 = vmatmul.f32.gmra.mxu0 %v797
        %v2067 = vpop.f32.mrf.mxu0
        %v2068 = vadd.f32 %v1667, %v2067
        %2069 = vmatmul.f32.gmra.mxu0 %v801
        %v2070 = vpop.f32.mrf.mxu0
        %v2071 = vadd.f32 %v1670, %v2070
        %2072 = vmatmul.f32.gmra.mxu0 %v805
        %v2073 = vpop.f32.mrf.mxu0
        %v2074 = vadd.f32 %v1673, %v2073
        %2075 = vmatmul.f32.gmra.mxu0 %v809
        %v2076 = vpop.f32.mrf.mxu0
        %v2077 = vadd.f32 %v1676, %v2076
        %2078 = vmatmul.f32.gmra.mxu0 %v813
        %v2079 = vpop.f32.mrf.mxu0
        %v2080 = vadd.f32 %v1679, %v2079
        %2081 = vdwg.mxu0
        %2082 = vmatpush.msra.mxu0 %v878
        %2083 = vmatpush.msra.mxu0 %v877
        %2084 = vmatpush.msra.mxu0 %v876
        %2085 = vmatpush.msra.mxu0 %v875
        %2086 = vmatpush.msra.mxu0 %v874
        %2087 = vmatpush.msra.mxu0 %v873
        %2088 = vmatpush.msra.mxu0 %v872
        %2089 = vmatpush.msra.mxu0 %v871
        %2090 = vmatpush.msra.mxu0 %v870
        %2091 = vmatpush.msra.mxu0 %v869
        %2092 = vmatpush.msra.mxu0 %v868
        %2093 = vmatpush.msra.mxu0 %v867
        %2094 = vmatpush.msra.mxu0 %v866
        %2095 = vmatpush.msra.mxu0 %v865
        %2096 = vmatpush.msra.mxu0 %v864
        %2097 = vmatpush.msra.mxu0 %v863
        %2098 = vmatmul.f32.gmra.mxu0 %v306
        %v2099 = vpop.f32.mrf.mxu0
        %v2100 = vadd.f32 %v1699, %v2099
        %2101 = vmatmul.f32.gmra.mxu0 %v310
        %v2102 = vpop.f32.mrf.mxu0
        %v2103 = vadd.f32 %v1702, %v2102
        %2104 = vmatmul.f32.gmra.mxu0 %v314
        %v2105 = vpop.f32.mrf.mxu0
        %v2106 = vadd.f32 %v1705, %v2105
        %2107 = vmatmul.f32.gmra.mxu0 %v318
        %v2108 = vpop.f32.mrf.mxu0
        %v2109 = vadd.f32 %v1708, %v2108
        %2110 = vmatmul.f32.gmra.mxu0 %v322
        %v2111 = vpop.f32.mrf.mxu0
        %v2112 = vadd.f32 %v1711, %v2111
        %2113 = vmatmul.f32.gmra.mxu0 %v326
        %v2114 = vpop.f32.mrf.mxu0
        %v2115 = vadd.f32 %v1714, %v2114
        %2116 = vmatmul.f32.gmra.mxu0 %v330
        %v2117 = vpop.f32.mrf.mxu0
        %v2118 = vadd.f32 %v1717, %v2117
        %2119 = vmatmul.f32.gmra.mxu0 %v334
        %v2120 = vpop.f32.mrf.mxu0
        %v2121 = vadd.f32 %v1720, %v2120
        %2122 = vmatmul.f32.gmra.mxu0 %v338
        %v2123 = vpop.f32.mrf.mxu0
        %v2124 = vadd.f32 %v1723, %v2123
        %2125 = vmatmul.f32.gmra.mxu0 %v342
        %v2126 = vpop.f32.mrf.mxu0
        %v2127 = vadd.f32 %v1726, %v2126
        %2128 = vmatmul.f32.gmra.mxu0 %v346
        %v2129 = vpop.f32.mrf.mxu0
        %v2130 = vadd.f32 %v1729, %v2129
        %2131 = vmatmul.f32.gmra.mxu0 %v350
        %v2132 = vpop.f32.mrf.mxu0
        %v2133 = vadd.f32 %v1732, %v2132
        %2134 = vmatmul.f32.gmra.mxu0 %v354
        %v2135 = vpop.f32.mrf.mxu0
        %v2136 = vadd.f32 %v1735, %v2135
        %2137 = vmatmul.f32.gmra.mxu0 %v358
        %v2138 = vpop.f32.mrf.mxu0
        %v2139 = vadd.f32 %v1738, %v2138
        %2140 = vmatmul.f32.gmra.mxu0 %v362
        %v2141 = vpop.f32.mrf.mxu0
        %v2142 = vadd.f32 %v1741, %v2141
        %2143 = vmatmul.f32.gmra.mxu0 %v366
        %v2144 = vpop.f32.mrf.mxu0
        %v2145 = vadd.f32 %v1744, %v2144
        %2146 = vmatmul.f32.gmra.mxu0 %v370
        %v2147 = vpop.f32.mrf.mxu0
        %v2148 = vadd.f32 %v1747, %v2147
        %2149 = vmatmul.f32.gmra.mxu0 %v374
        %v2150 = vpop.f32.mrf.mxu0
        %v2151 = vadd.f32 %v1750, %v2150
        %2152 = vmatmul.f32.gmra.mxu0 %v378
        %v2153 = vpop.f32.mrf.mxu0
        %v2154 = vadd.f32 %v1753, %v2153
        %2155 = vmatmul.f32.gmra.mxu0 %v382
        %v2156 = vpop.f32.mrf.mxu0
        %v2157 = vadd.f32 %v1756, %v2156
        %2158 = vmatmul.f32.gmra.mxu0 %v386
        %v2159 = vpop.f32.mrf.mxu0
        %v2160 = vadd.f32 %v1759, %v2159
        %2161 = vmatmul.f32.gmra.mxu0 %v390
        %v2162 = vpop.f32.mrf.mxu0
        %v2163 = vadd.f32 %v1762, %v2162
        %2164 = vmatmul.f32.gmra.mxu0 %v394
        %v2165 = vpop.f32.mrf.mxu0
        %v2166 = vadd.f32 %v1765, %v2165
        %2167 = vmatmul.f32.gmra.mxu0 %v398
        %v2168 = vpop.f32.mrf.mxu0
        %v2169 = vadd.f32 %v1768, %v2168
        %2170 = vmatmul.f32.gmra.mxu0 %v402
        %v2171 = vpop.f32.mrf.mxu0
        %v2172 = vadd.f32 %v1771, %v2171
        %2173 = vmatmul.f32.gmra.mxu0 %v406
        %v2174 = vpop.f32.mrf.mxu0
        %v2175 = vadd.f32 %v1774, %v2174
        %2176 = vmatmul.f32.gmra.mxu0 %v410
        %v2177 = vpop.f32.mrf.mxu0
        %v2178 = vadd.f32 %v1777, %v2177
        %2179 = vmatmul.f32.gmra.mxu0 %v414
        %v2180 = vpop.f32.mrf.mxu0
        %v2181 = vadd.f32 %v1780, %v2180
        %2182 = vmatmul.f32.gmra.mxu0 %v418
        %v2183 = vpop.f32.mrf.mxu0
        %v2184 = vadd.f32 %v1783, %v2183
        %2185 = vmatmul.f32.gmra.mxu0 %v422
        %v2186 = vpop.f32.mrf.mxu0
        %v2187 = vadd.f32 %v1786, %v2186
        %2188 = vmatmul.f32.gmra.mxu0 %v426
        %v2189 = vpop.f32.mrf.mxu0
        %v2190 = vadd.f32 %v1789, %v2189
        %2191 = vmatmul.f32.gmra.mxu0 %v430
        %v2192 = vpop.f32.mrf.mxu0
        %v2193 = vadd.f32 %v1792, %v2192
        %2194 = vmatmul.f32.gmra.mxu0 %v434
        %v2195 = vpop.f32.mrf.mxu0
        %v2196 = vadd.f32 %v1795, %v2195
        %2197 = vmatmul.f32.gmra.mxu0 %v438
        %v2198 = vpop.f32.mrf.mxu0
        %v2199 = vadd.f32 %v1798, %v2198
        %2200 = vmatmul.f32.gmra.mxu0 %v442
        %v2201 = vpop.f32.mrf.mxu0
        %v2202 = vadd.f32 %v1801, %v2201
        %2203 = vmatmul.f32.gmra.mxu0 %v446
        %v2204 = vpop.f32.mrf.mxu0
        %v2205 = vadd.f32 %v1804, %v2204
        %2206 = vmatmul.f32.gmra.mxu0 %v450
        %v2207 = vpop.f32.mrf.mxu0
        %v2208 = vadd.f32 %v1807, %v2207
        %2209 = vmatmul.f32.gmra.mxu0 %v454
        %v2210 = vpop.f32.mrf.mxu0
        %v2211 = vadd.f32 %v1810, %v2210
        %2212 = vmatmul.f32.gmra.mxu0 %v458
        %v2213 = vpop.f32.mrf.mxu0
        %v2214 = vadd.f32 %v1813, %v2213
        %2215 = vmatmul.f32.gmra.mxu0 %v462
        %v2216 = vpop.f32.mrf.mxu0
        %v2217 = vadd.f32 %v1816, %v2216
        %2218 = vmatmul.f32.gmra.mxu0 %v466
        %v2219 = vpop.f32.mrf.mxu0
        %v2220 = vadd.f32 %v1819, %v2219
        %2221 = vmatmul.f32.gmra.mxu0 %v470
        %v2222 = vpop.f32.mrf.mxu0
        %v2223 = vadd.f32 %v1822, %v2222
        %2224 = vmatmul.f32.gmra.mxu0 %v474
        %v2225 = vpop.f32.mrf.mxu0
        %v2226 = vadd.f32 %v1825, %v2225
        %2227 = vmatmul.f32.gmra.mxu0 %v478
        %v2228 = vpop.f32.mrf.mxu0
        %v2229 = vadd.f32 %v1828, %v2228
        %2230 = vmatmul.f32.gmra.mxu0 %v482
        %v2231 = vpop.f32.mrf.mxu0
        %v2232 = vadd.f32 %v1831, %v2231
        %2233 = vmatmul.f32.gmra.mxu0 %v486
        %v2234 = vpop.f32.mrf.mxu0
        %v2235 = vadd.f32 %v1834, %v2234
        %2236 = vmatmul.f32.gmra.mxu0 %v490
        %v2237 = vpop.f32.mrf.mxu0
        %v2238 = vadd.f32 %v1837, %v2237
        %2239 = vmatmul.f32.gmra.mxu0 %v494
        %v2240 = vpop.f32.mrf.mxu0
        %v2241 = vadd.f32 %v1840, %v2240
        %2242 = vmatmul.f32.gmra.mxu0 %v498
        %v2243 = vpop.f32.mrf.mxu0
        %v2244 = vadd.f32 %v1843, %v2243
        %2245 = vmatmul.f32.gmra.mxu0 %v502
        %v2246 = vpop.f32.mrf.mxu0
        %v2247 = vadd.f32 %v1846, %v2246
        %2248 = vmatmul.f32.gmra.mxu0 %v506
        %v2249 = vpop.f32.mrf.mxu0
        %v2250 = vadd.f32 %v1849, %v2249
        %2251 = vmatmul.f32.gmra.mxu0 %v510
        %v2252 = vpop.f32.mrf.mxu0
        %v2253 = vadd.f32 %v1852, %v2252
        %2254 = vmatmul.f32.gmra.mxu0 %v514
        %v2255 = vpop.f32.mrf.mxu0
        %v2256 = vadd.f32 %v1855, %v2255
        %2257 = vmatmul.f32.gmra.mxu0 %v518
        %v2258 = vpop.f32.mrf.mxu0
        %v2259 = vadd.f32 %v1858, %v2258
        %2260 = vmatmul.f32.gmra.mxu0 %v522
        %v2261 = vpop.f32.mrf.mxu0
        %v2262 = vadd.f32 %v1861, %v2261
        %2263 = vmatmul.f32.gmra.mxu0 %v526
        %v2264 = vpop.f32.mrf.mxu0
        %v2265 = vadd.f32 %v1864, %v2264
        %2266 = vmatmul.f32.gmra.mxu0 %v530
        %v2267 = vpop.f32.mrf.mxu0
        %v2268 = vadd.f32 %v1867, %v2267
        %2269 = vmatmul.f32.gmra.mxu0 %v534
        %v2270 = vpop.f32.mrf.mxu0
        %v2271 = vadd.f32 %v1870, %v2270
        %2272 = vmatmul.f32.gmra.mxu0 %v538
        %v2273 = vpop.f32.mrf.mxu0
        %v2274 = vadd.f32 %v1873, %v2273
        %2275 = vmatmul.f32.gmra.mxu0 %v542
        %v2276 = vpop.f32.mrf.mxu0
        %v2277 = vadd.f32 %v1876, %v2276
        %2278 = vmatmul.f32.gmra.mxu0 %v546
        %v2279 = vpop.f32.mrf.mxu0
        %v2280 = vadd.f32 %v1879, %v2279
        %2281 = vmatmul.f32.gmra.mxu0 %v550
        %v2282 = vpop.f32.mrf.mxu0
        %v2283 = vadd.f32 %v1882, %v2282
        %2284 = vmatmul.f32.gmra.mxu0 %v554
        %v2285 = vpop.f32.mrf.mxu0
        %v2286 = vadd.f32 %v1885, %v2285
        %2287 = vmatmul.f32.gmra.mxu0 %v558
        %v2288 = vpop.f32.mrf.mxu0
        %v2289 = vadd.f32 %v1888, %v2288
        %2290 = vmatmul.f32.gmra.mxu0 %v562
        %v2291 = vpop.f32.mrf.mxu0
        %v2292 = vadd.f32 %v1891, %v2291
        %2293 = vmatmul.f32.gmra.mxu0 %v566
        %v2294 = vpop.f32.mrf.mxu0
        %v2295 = vadd.f32 %v1894, %v2294
        %2296 = vmatmul.f32.gmra.mxu0 %v570
        %v2297 = vpop.f32.mrf.mxu0
        %v2298 = vadd.f32 %v1897, %v2297
        %2299 = vmatmul.f32.gmra.mxu0 %v574
        %v2300 = vpop.f32.mrf.mxu0
        %v2301 = vadd.f32 %v1900, %v2300
        %2302 = vmatmul.f32.gmra.mxu0 %v578
        %v2303 = vpop.f32.mrf.mxu0
        %v2304 = vadd.f32 %v1903, %v2303
        %2305 = vmatmul.f32.gmra.mxu0 %v582
        %v2306 = vpop.f32.mrf.mxu0
        %v2307 = vadd.f32 %v1906, %v2306
        %2308 = vmatmul.f32.gmra.mxu0 %v586
        %v2309 = vpop.f32.mrf.mxu0
        %v2310 = vadd.f32 %v1909, %v2309
        %2311 = vmatmul.f32.gmra.mxu0 %v590
        %v2312 = vpop.f32.mrf.mxu0
        %v2313 = vadd.f32 %v1912, %v2312
        %2314 = vmatmul.f32.gmra.mxu0 %v594
        %v2315 = vpop.f32.mrf.mxu0
        %v2316 = vadd.f32 %v1915, %v2315
        %2317 = vmatmul.f32.gmra.mxu0 %v598
        %v2318 = vpop.f32.mrf.mxu0
        %v2319 = vadd.f32 %v1918, %v2318
        %2320 = vmatmul.f32.gmra.mxu0 %v602
        %v2321 = vpop.f32.mrf.mxu0
        %v2322 = vadd.f32 %v1921, %v2321
        %2323 = vmatmul.f32.gmra.mxu0 %v606
        %v2324 = vpop.f32.mrf.mxu0
        %v2325 = vadd.f32 %v1924, %v2324
        %2326 = vmatmul.f32.gmra.mxu0 %v610
        %v2327 = vpop.f32.mrf.mxu0
        %v2328 = vadd.f32 %v1927, %v2327
        %2329 = vmatmul.f32.gmra.mxu0 %v614
        %v2330 = vpop.f32.mrf.mxu0
        %v2331 = vadd.f32 %v1930, %v2330
        %2332 = vmatmul.f32.gmra.mxu0 %v618
        %v2333 = vpop.f32.mrf.mxu0
        %v2334 = vadd.f32 %v1933, %v2333
        %2335 = vmatmul.f32.gmra.mxu0 %v622
        %v2336 = vpop.f32.mrf.mxu0
        %v2337 = vadd.f32 %v1936, %v2336
        %2338 = vmatmul.f32.gmra.mxu0 %v626
        %v2339 = vpop.f32.mrf.mxu0
        %v2340 = vadd.f32 %v1939, %v2339
        %2341 = vmatmul.f32.gmra.mxu0 %v630
        %v2342 = vpop.f32.mrf.mxu0
        %v2343 = vadd.f32 %v1942, %v2342
        %2344 = vmatmul.f32.gmra.mxu0 %v634
        %v2345 = vpop.f32.mrf.mxu0
        %v2346 = vadd.f32 %v1945, %v2345
        %2347 = vmatmul.f32.gmra.mxu0 %v638
        %v2348 = vpop.f32.mrf.mxu0
        %v2349 = vadd.f32 %v1948, %v2348
        %2350 = vmatmul.f32.gmra.mxu0 %v642
        %v2351 = vpop.f32.mrf.mxu0
        %v2352 = vadd.f32 %v1951, %v2351
        %2353 = vmatmul.f32.gmra.mxu0 %v646
        %v2354 = vpop.f32.mrf.mxu0
        %v2355 = vadd.f32 %v1954, %v2354
        %2356 = vmatmul.f32.gmra.mxu0 %v650
        %v2357 = vpop.f32.mrf.mxu0
        %v2358 = vadd.f32 %v1957, %v2357
        %2359 = vmatmul.f32.gmra.mxu0 %v654
        %v2360 = vpop.f32.mrf.mxu0
        %v2361 = vadd.f32 %v1960, %v2360
        %2362 = vmatmul.f32.gmra.mxu0 %v658
        %v2363 = vpop.f32.mrf.mxu0
        %v2364 = vadd.f32 %v1963, %v2363
        %2365 = vmatmul.f32.gmra.mxu0 %v662
        %v2366 = vpop.f32.mrf.mxu0
        %v2367 = vadd.f32 %v1966, %v2366
        %2368 = vmatmul.f32.gmra.mxu0 %v666
        %v2369 = vpop.f32.mrf.mxu0
        %v2370 = vadd.f32 %v1969, %v2369
        %2371 = vmatmul.f32.gmra.mxu0 %v670
        %v2372 = vpop.f32.mrf.mxu0
        %v2373 = vadd.f32 %v1972, %v2372
        %2374 = vmatmul.f32.gmra.mxu0 %v674
        %v2375 = vpop.f32.mrf.mxu0
        %v2376 = vadd.f32 %v1975, %v2375
        %2377 = vmatmul.f32.gmra.mxu0 %v678
        %v2378 = vpop.f32.mrf.mxu0
        %v2379 = vadd.f32 %v1978, %v2378
        %2380 = vmatmul.f32.gmra.mxu0 %v682
        %v2381 = vpop.f32.mrf.mxu0
        %v2382 = vadd.f32 %v1981, %v2381
        %2383 = vmatmul.f32.gmra.mxu0 %v686
        %v2384 = vpop.f32.mrf.mxu0
        %v2385 = vadd.f32 %v1984, %v2384
        %2386 = vmatmul.f32.gmra.mxu0 %v690
        %v2387 = vpop.f32.mrf.mxu0
        %v2388 = vadd.f32 %v1987, %v2387
        %2389 = vmatmul.f32.gmra.mxu0 %v694
        %v2390 = vpop.f32.mrf.mxu0
        %v2391 = vadd.f32 %v1990, %v2390
        %2392 = vmatmul.f32.gmra.mxu0 %v698
        %v2393 = vpop.f32.mrf.mxu0
        %v2394 = vadd.f32 %v1993, %v2393
        %2395 = vmatmul.f32.gmra.mxu0 %v702
        %v2396 = vpop.f32.mrf.mxu0
        %v2397 = vadd.f32 %v1996, %v2396
        %2398 = vmatmul.f32.gmra.mxu0 %v706
        %v2399 = vpop.f32.mrf.mxu0
        %v2400 = vadd.f32 %v1999, %v2399
        %2401 = vmatmul.f32.gmra.mxu0 %v710
        %v2402 = vpop.f32.mrf.mxu0
        %v2403 = vadd.f32 %v2002, %v2402
        %2404 = vmatmul.f32.gmra.mxu0 %v714
        %v2405 = vpop.f32.mrf.mxu0
        %v2406 = vadd.f32 %v2005, %v2405
        %2407 = vmatmul.f32.gmra.mxu0 %v718
        %v2408 = vpop.f32.mrf.mxu0
        %v2409 = vadd.f32 %v2008, %v2408
        %2410 = vmatmul.f32.gmra.mxu0 %v722
        %v2411 = vpop.f32.mrf.mxu0
        %v2412 = vadd.f32 %v2011, %v2411
        %2413 = vmatmul.f32.gmra.mxu0 %v726
        %v2414 = vpop.f32.mrf.mxu0
        %v2415 = vadd.f32 %v2014, %v2414
        %2416 = vmatmul.f32.gmra.mxu0 %v730
        %v2417 = vpop.f32.mrf.mxu0
        %v2418 = vadd.f32 %v2017, %v2417
        %2419 = vmatmul.f32.gmra.mxu0 %v734
        %v2420 = vpop.f32.mrf.mxu0
        %v2421 = vadd.f32 %v2020, %v2420
        %2422 = vmatmul.f32.gmra.mxu0 %v738
        %v2423 = vpop.f32.mrf.mxu0
        %v2424 = vadd.f32 %v2023, %v2423
        %2425 = vmatmul.f32.gmra.mxu0 %v742
        %v2426 = vpop.f32.mrf.mxu0
        %v2427 = vadd.f32 %v2026, %v2426
        %2428 = vmatmul.f32.gmra.mxu0 %v746
        %v2429 = vpop.f32.mrf.mxu0
        %v2430 = vadd.f32 %v2029, %v2429
        %2431 = vmatmul.f32.gmra.mxu0 %v750
        %v2432 = vpop.f32.mrf.mxu0
        %v2433 = vadd.f32 %v2032, %v2432
        %2434 = vmatmul.f32.gmra.mxu0 %v754
        %v2435 = vpop.f32.mrf.mxu0
        %v2436 = vadd.f32 %v2035, %v2435
        %2437 = vmatmul.f32.gmra.mxu0 %v758
        %v2438 = vpop.f32.mrf.mxu0
        %v2439 = vadd.f32 %v2038, %v2438
        %2440 = vmatmul.f32.gmra.mxu0 %v762
        %v2441 = vpop.f32.mrf.mxu0
        %v2442 = vadd.f32 %v2041, %v2441
        %2443 = vmatmul.f32.gmra.mxu0 %v766
        %v2444 = vpop.f32.mrf.mxu0
        %v2445 = vadd.f32 %v2044, %v2444
        %2446 = vmatmul.f32.gmra.mxu0 %v770
        %v2447 = vpop.f32.mrf.mxu0
        %v2448 = vadd.f32 %v2047, %v2447
        %2449 = vmatmul.f32.gmra.mxu0 %v774
        %v2450 = vpop.f32.mrf.mxu0
        %v2451 = vadd.f32 %v2050, %v2450
        %2452 = vmatmul.f32.gmra.mxu0 %v778
        %v2453 = vpop.f32.mrf.mxu0
        %v2454 = vadd.f32 %v2053, %v2453
        %2455 = vmatmul.f32.gmra.mxu0 %v782
        %v2456 = vpop.f32.mrf.mxu0
        %v2457 = vadd.f32 %v2056, %v2456
        %2458 = vmatmul.f32.gmra.mxu0 %v786
        %v2459 = vpop.f32.mrf.mxu0
        %v2460 = vadd.f32 %v2059, %v2459
        %2461 = vmatmul.f32.gmra.mxu0 %v790
        %v2462 = vpop.f32.mrf.mxu0
        %v2463 = vadd.f32 %v2062, %v2462
        %2464 = vmatmul.f32.gmra.mxu0 %v794
        %v2465 = vpop.f32.mrf.mxu0
        %v2466 = vadd.f32 %v2065, %v2465
        %2467 = vmatmul.f32.gmra.mxu0 %v798
        %v2468 = vpop.f32.mrf.mxu0
        %v2469 = vadd.f32 %v2068, %v2468
        %2470 = vmatmul.f32.gmra.mxu0 %v802
        %v2471 = vpop.f32.mrf.mxu0
        %v2472 = vadd.f32 %v2071, %v2471
        %2473 = vmatmul.f32.gmra.mxu0 %v806
        %v2474 = vpop.f32.mrf.mxu0
        %v2475 = vadd.f32 %v2074, %v2474
        %2476 = vmatmul.f32.gmra.mxu0 %v810
        %v2477 = vpop.f32.mrf.mxu0
        %v2478 = vadd.f32 %v2077, %v2477
        %2479 = vmatmul.f32.gmra.mxu0 %v814
        %v2480 = vpop.f32.mrf.mxu0
        %v2481 = vadd.f32 %v2080, %v2480
        %2482 = vdwg.mxu0
        %v2483 = vld [vmem:[%s2] sm:$0xff]
        %v2484 = vld [vmem:[%s2 + $0x8] sm:$0xff]
        %v2485 = vld [vmem:[%s2 + $0x10] sm:$0xff]
        %v2486 = vld [vmem:[%s2 + $0x18] sm:$0xff]
        %v2487 = vld [vmem:[%s2 + $0x20] sm:$0xff]
        %v2488 = vld [vmem:[%s2 + $0x28] sm:$0xff]
        %v2489 = vld [vmem:[%s2 + $0x30] sm:$0xff]
        %v2490 = vld [vmem:[%s2 + $0x38] sm:$0xff]
        %v2491 = vld [vmem:[%s2 + $0x40] sm:$0xff]
        %v2492 = vld [vmem:[%s2 + $0x48] sm:$0xff]
        %v2493 = vld [vmem:[%s2 + $0x50] sm:$0xff]
        %v2494 = vld [vmem:[%s2 + $0x58] sm:$0xff]
        %v2495 = vld [vmem:[%s2 + $0x60] sm:$0xf]
        %v2496 = vld [vmem:[%s2 + $0x68] sm:$0xf]
        %v2497 = vld [vmem:[%s2 + $0x70] sm:$0xf]
        %s2498 = scalar_lea.vmem %s2, 120
        %v2499 = vld [vmem:[%s2498] sm:$0xff]
        %v2500 = vld [vmem:[%s2498 + $0x8] sm:$0xff]
        %v2501 = vld [vmem:[%s2498 + $0x10] sm:$0xff]
        %v2502 = vld [vmem:[%s2498 + $0x18] sm:$0xff]
        %v2503 = vld [vmem:[%s2498 + $0x20] sm:$0xff]
        %v2504 = vld [vmem:[%s2498 + $0x28] sm:$0xff]
        %v2505 = vld [vmem:[%s2498 + $0x30] sm:$0xff]
        %v2506 = vld [vmem:[%s2498 + $0x38] sm:$0xff]
        %v2507 = vld [vmem:[%s2498 + $0x40] sm:$0xff]
        %v2508 = vld [vmem:[%s2498 + $0x48] sm:$0xff]
        %v2509 = vld [vmem:[%s2498 + $0x50] sm:$0xff]
        %v2510 = vld [vmem:[%s2498 + $0x58] sm:$0xff]
        %v2511 = vld [vmem:[%s2498 + $0x60] sm:$0xf]
        %v2512 = vld [vmem:[%s2498 + $0x68] sm:$0xf]
        %v2513 = vld [vmem:[%s2498 + $0x70] sm:$0xf]
        %vm2514 = vcmask 293888
        %v2516 = vsel %vm2514, %v2148, 0
        %v2519 = vsel %vm2514, %v2151, 0
        %v2522 = vsel %vm2514, %v2154, 0
        %v2525 = vsel %vm2514, %v2157, 0
        %v2528 = vsel %vm2514, %v2160, 0
        %v2531 = vsel %vm2514, %v2163, 0
        %v2534 = vsel %vm2514, %v2166, 0
        %v2537 = vsel %vm2514, %v2169, 0
        %v2540 = vsel %vm2514, %v2172, 0
        %v2543 = vsel %vm2514, %v2175, 0
        %v2546 = vsel %vm2514, %v2178, 0
        %v2549 = vsel %vm2514, %v2181, 0
        %v2552 = vsel %vm2514, %v2184, 0
        %v2555 = vsel %vm2514, %v2187, 0
        %v2558 = vsel %vm2514, %v2190, 0
        %v2561 = vsel %vm2514, %v2193, 0
        %vm2563 = vcmask 1043456
        %v2565 = vsel %vm2563, %v2511, 0
        %v2568 = vsel %vm2563, %v2512, 0
        %v2571 = vsel %vm2563, %v2513, 0
        %2573 = vmatpush.msra.mxu0 0.0
        %2574 = vmatpush.msra.mxu0 0.0
        %2575 = vmatpush.msra.mxu0 0.0
        %2576 = vmatpush.msra.mxu0 0.0
        %2577 = vmatpush.msra.mxu0 0.0
        %2578 = vmatpush.msra.mxu0 0.0
        %2579 = vmatpush.msra.mxu0 0.0
        %2580 = vmatpush.msra.mxu0 0.0
        %2581 = vmatpush.msra.mxu0 0.0
        %2582 = vmatpush.msra.mxu0 0.0
        %2583 = vmatpush.msra.mxu0 0.0
        %2584 = vmatpush.msra.mxu0 %v2565
        %2585 = vmatpush.msra.mxu0 %v2508
        %2586 = vmatpush.msra.mxu0 %v2505
        %2587 = vmatpush.msra.mxu0 %v2502
        %2588 = vmatpush.msra.mxu0 %v2499
        %2589 = vmatmul.f32.gmra.mxu0 %v2516
        %v2590 = vpop.f32.mrf.mxu0
        %v2591 = vadd.f32 0.0, %v2590
        %2592 = vmatmul.f32.gmra.mxu0 %v2519
        %v2593 = vpop.f32.mrf.mxu0
        %v2594 = vadd.f32 0.0, %v2593
        %2595 = vmatmul.f32.gmra.mxu0 %v2522
        %v2596 = vpop.f32.mrf.mxu0
        %v2597 = vadd.f32 0.0, %v2596
        %2598 = vmatmul.f32.gmra.mxu0 %v2525
        %v2599 = vpop.f32.mrf.mxu0
        %v2600 = vadd.f32 0.0, %v2599
        %2601 = vmatmul.f32.gmra.mxu0 %v2528
        %v2602 = vpop.f32.mrf.mxu0
        %v2603 = vadd.f32 0.0, %v2602
        %2604 = vmatmul.f32.gmra.mxu0 %v2531
        %v2605 = vpop.f32.mrf.mxu0
        %v2606 = vadd.f32 0.0, %v2605
        %2607 = vmatmul.f32.gmra.mxu0 %v2534
        %v2608 = vpop.f32.mrf.mxu0
        %v2609 = vadd.f32 0.0, %v2608
        %2610 = vmatmul.f32.gmra.mxu0 %v2537
        %v2611 = vpop.f32.mrf.mxu0
        %v2612 = vadd.f32 0.0, %v2611
        %2613 = vmatmul.f32.gmra.mxu0 %v2540
        %v2614 = vpop.f32.mrf.mxu0
        %v2615 = vadd.f32 0.0, %v2614
        %2616 = vmatmul.f32.gmra.mxu0 %v2543
        %v2617 = vpop.f32.mrf.mxu0
        %v2618 = vadd.f32 0.0, %v2617
        %2619 = vmatmul.f32.gmra.mxu0 %v2546
        %v2620 = vpop.f32.mrf.mxu0
        %v2621 = vadd.f32 0.0, %v2620
        %2622 = vmatmul.f32.gmra.mxu0 %v2549
        %v2623 = vpop.f32.mrf.mxu0
        %v2624 = vadd.f32 0.0, %v2623
        %2625 = vmatmul.f32.gmra.mxu0 %v2552
        %v2626 = vpop.f32.mrf.mxu0
        %v2627 = vadd.f32 0.0, %v2626
        %2628 = vmatmul.f32.gmra.mxu0 %v2555
        %v2629 = vpop.f32.mrf.mxu0
        %v2630 = vadd.f32 0.0, %v2629
        %2631 = vmatmul.f32.gmra.mxu0 %v2558
        %v2632 = vpop.f32.mrf.mxu0
        %v2633 = vadd.f32 0.0, %v2632
        %2634 = vmatmul.f32.gmra.mxu0 %v2561
        %v2635 = vpop.f32.mrf.mxu0
        %v2636 = vadd.f32 0.0, %v2635
        %2637 = vdwg.mxu0
        %2638 = vmatpush.msra.mxu0 0.0
        %2639 = vmatpush.msra.mxu0 0.0
        %2640 = vmatpush.msra.mxu0 0.0
        %2641 = vmatpush.msra.mxu0 0.0
        %2642 = vmatpush.msra.mxu0 0.0
        %2643 = vmatpush.msra.mxu0 0.0
        %2644 = vmatpush.msra.mxu0 0.0
        %2645 = vmatpush.msra.mxu0 0.0
        %2646 = vmatpush.msra.mxu0 0.0
        %2647 = vmatpush.msra.mxu0 0.0
        %2648 = vmatpush.msra.mxu0 0.0
        %2649 = vmatpush.msra.mxu0 %v2568
        %2650 = vmatpush.msra.mxu0 %v2509
        %2651 = vmatpush.msra.mxu0 %v2506
        %2652 = vmatpush.msra.mxu0 %v2503
        %2653 = vmatpush.msra.mxu0 %v2500
        %2654 = vmatmul.f32.gmra.mxu0 %v2516
        %v2655 = vpop.f32.mrf.mxu0
        %v2656 = vadd.f32 0.0, %v2655
        %2657 = vmatmul.f32.gmra.mxu0 %v2519
        %v2658 = vpop.f32.mrf.mxu0
        %v2659 = vadd.f32 0.0, %v2658
        %2660 = vmatmul.f32.gmra.mxu0 %v2522
        %v2661 = vpop.f32.mrf.mxu0
        %v2662 = vadd.f32 0.0, %v2661
        %2663 = vmatmul.f32.gmra.mxu0 %v2525
        %v2664 = vpop.f32.mrf.mxu0
        %v2665 = vadd.f32 0.0, %v2664
        %2666 = vmatmul.f32.gmra.mxu0 %v2528
        %v2667 = vpop.f32.mrf.mxu0
        %v2668 = vadd.f32 0.0, %v2667
        %2669 = vmatmul.f32.gmra.mxu0 %v2531
        %v2670 = vpop.f32.mrf.mxu0
        %v2671 = vadd.f32 0.0, %v2670
        %2672 = vmatmul.f32.gmra.mxu0 %v2534
        %v2673 = vpop.f32.mrf.mxu0
        %v2674 = vadd.f32 0.0, %v2673
        %2675 = vmatmul.f32.gmra.mxu0 %v2537
        %v2676 = vpop.f32.mrf.mxu0
        %v2677 = vadd.f32 0.0, %v2676
        %2678 = vmatmul.f32.gmra.mxu0 %v2540
        %v2679 = vpop.f32.mrf.mxu0
        %v2680 = vadd.f32 0.0, %v2679
        %2681 = vmatmul.f32.gmra.mxu0 %v2543
        %v2682 = vpop.f32.mrf.mxu0
        %v2683 = vadd.f32 0.0, %v2682
        %2684 = vmatmul.f32.gmra.mxu0 %v2546
        %v2685 = vpop.f32.mrf.mxu0
        %v2686 = vadd.f32 0.0, %v2685
        %2687 = vmatmul.f32.gmra.mxu0 %v2549
        %v2688 = vpop.f32.mrf.mxu0
        %v2689 = vadd.f32 0.0, %v2688
        %2690 = vmatmul.f32.gmra.mxu0 %v2552
        %v2691 = vpop.f32.mrf.mxu0
        %v2692 = vadd.f32 0.0, %v2691
        %2693 = vmatmul.f32.gmra.mxu0 %v2555
        %v2694 = vpop.f32.mrf.mxu0
        %v2695 = vadd.f32 0.0, %v2694
        %2696 = vmatmul.f32.gmra.mxu0 %v2558
        %v2697 = vpop.f32.mrf.mxu0
        %v2698 = vadd.f32 0.0, %v2697
        %2699 = vmatmul.f32.gmra.mxu0 %v2561
        %v2700 = vpop.f32.mrf.mxu0
        %v2701 = vadd.f32 0.0, %v2700
        %2702 = vdwg.mxu0
        %2703 = vmatpush.msra.mxu0 0.0
        %2704 = vmatpush.msra.mxu0 0.0
        %2705 = vmatpush.msra.mxu0 0.0
        %2706 = vmatpush.msra.mxu0 0.0
        %2707 = vmatpush.msra.mxu0 0.0
        %2708 = vmatpush.msra.mxu0 0.0
        %2709 = vmatpush.msra.mxu0 0.0
        %2710 = vmatpush.msra.mxu0 0.0
        %2711 = vmatpush.msra.mxu0 0.0
        %2712 = vmatpush.msra.mxu0 0.0
        %2713 = vmatpush.msra.mxu0 0.0
        %2714 = vmatpush.msra.mxu0 %v2571
        %2715 = vmatpush.msra.mxu0 %v2510
        %2716 = vmatpush.msra.mxu0 %v2507
        %2717 = vmatpush.msra.mxu0 %v2504
        %2718 = vmatpush.msra.mxu0 %v2501
        %2719 = vmatmul.f32.gmra.mxu0 %v2516
        %v2720 = vpop.f32.mrf.mxu0
        %v2721 = vadd.f32 0.0, %v2720
        %2722 = vmatmul.f32.gmra.mxu0 %v2519
        %v2723 = vpop.f32.mrf.mxu0
        %v2724 = vadd.f32 0.0, %v2723
        %2725 = vmatmul.f32.gmra.mxu0 %v2522
        %v2726 = vpop.f32.mrf.mxu0
        %v2727 = vadd.f32 0.0, %v2726
        %2728 = vmatmul.f32.gmra.mxu0 %v2525
        %v2729 = vpop.f32.mrf.mxu0
        %v2730 = vadd.f32 0.0, %v2729
        %2731 = vmatmul.f32.gmra.mxu0 %v2528
        %v2732 = vpop.f32.mrf.mxu0
        %v2733 = vadd.f32 0.0, %v2732
        %2734 = vmatmul.f32.gmra.mxu0 %v2531
        %v2735 = vpop.f32.mrf.mxu0
        %v2736 = vadd.f32 0.0, %v2735
        %2737 = vmatmul.f32.gmra.mxu0 %v2534
        %v2738 = vpop.f32.mrf.mxu0
        %v2739 = vadd.f32 0.0, %v2738
        %2740 = vmatmul.f32.gmra.mxu0 %v2537
        %v2741 = vpop.f32.mrf.mxu0
        %v2742 = vadd.f32 0.0, %v2741
        %2743 = vmatmul.f32.gmra.mxu0 %v2540
        %v2744 = vpop.f32.mrf.mxu0
        %v2745 = vadd.f32 0.0, %v2744
        %2746 = vmatmul.f32.gmra.mxu0 %v2543
        %v2747 = vpop.f32.mrf.mxu0
        %v2748 = vadd.f32 0.0, %v2747
        %2749 = vmatmul.f32.gmra.mxu0 %v2546
        %v2750 = vpop.f32.mrf.mxu0
        %v2751 = vadd.f32 0.0, %v2750
        %2752 = vmatmul.f32.gmra.mxu0 %v2549
        %v2753 = vpop.f32.mrf.mxu0
        %v2754 = vadd.f32 0.0, %v2753
        %2755 = vmatmul.f32.gmra.mxu0 %v2552
        %v2756 = vpop.f32.mrf.mxu0
        %v2757 = vadd.f32 0.0, %v2756
        %2758 = vmatmul.f32.gmra.mxu0 %v2555
        %v2759 = vpop.f32.mrf.mxu0
        %v2760 = vadd.f32 0.0, %v2759
        %2761 = vmatmul.f32.gmra.mxu0 %v2558
        %v2762 = vpop.f32.mrf.mxu0
        %v2763 = vadd.f32 0.0, %v2762
        %2764 = vmatmul.f32.gmra.mxu0 %v2561
        %v2765 = vpop.f32.mrf.mxu0
        %v2766 = vadd.f32 0.0, %v2765
        %2767 = vdwg.mxu0
        %v2769 = vsel %vm2514, %v2100, 0
        %v2772 = vsel %vm2514, %v2103, 0
        %v2775 = vsel %vm2514, %v2106, 0
        %v2778 = vsel %vm2514, %v2109, 0
        %v2781 = vsel %vm2514, %v2112, 0
        %v2784 = vsel %vm2514, %v2115, 0
        %v2787 = vsel %vm2514, %v2118, 0
        %v2790 = vsel %vm2514, %v2121, 0
        %v2793 = vsel %vm2514, %v2124, 0
        %v2796 = vsel %vm2514, %v2127, 0
        %v2799 = vsel %vm2514, %v2130, 0
        %v2802 = vsel %vm2514, %v2133, 0
        %v2805 = vsel %vm2514, %v2136, 0
        %v2808 = vsel %vm2514, %v2139, 0
        %v2811 = vsel %vm2514, %v2142, 0
        %v2814 = vsel %vm2514, %v2145, 0
        %v2817 = vsel %vm2563, %v2495, 0
        %v2820 = vsel %vm2563, %v2496, 0
        %v2823 = vsel %vm2563, %v2497, 0
        %2825 = vmatpush.msra.mxu0 0.0
        %2826 = vmatpush.msra.mxu0 0.0
        %2827 = vmatpush.msra.mxu0 0.0
        %2828 = vmatpush.msra.mxu0 0.0
        %2829 = vmatpush.msra.mxu0 0.0
        %2830 = vmatpush.msra.mxu0 0.0
        %2831 = vmatpush.msra.mxu0 0.0
        %2832 = vmatpush.msra.mxu0 0.0
        %2833 = vmatpush.msra.mxu0 0.0
        %2834 = vmatpush.msra.mxu0 0.0
        %2835 = vmatpush.msra.mxu0 0.0
        %2836 = vmatpush.msra.mxu0 %v2817
        %2837 = vmatpush.msra.mxu0 %v2492
        %2838 = vmatpush.msra.mxu0 %v2489
        %2839 = vmatpush.msra.mxu0 %v2486
        %2840 = vmatpush.msra.mxu0 %v2483
        %2841 = vmatmul.f32.gmra.mxu0 %v2769
        %v2842 = vpop.f32.mrf.mxu0
        %v2843 = vadd.f32 %v2591, %v2842
        %2844 = vmatmul.f32.gmra.mxu0 %v2772
        %v2845 = vpop.f32.mrf.mxu0
        %v2846 = vadd.f32 %v2594, %v2845
        %2847 = vmatmul.f32.gmra.mxu0 %v2775
        %v2848 = vpop.f32.mrf.mxu0
        %v2849 = vadd.f32 %v2597, %v2848
        %2850 = vmatmul.f32.gmra.mxu0 %v2778
        %v2851 = vpop.f32.mrf.mxu0
        %v2852 = vadd.f32 %v2600, %v2851
        %2853 = vmatmul.f32.gmra.mxu0 %v2781
        %v2854 = vpop.f32.mrf.mxu0
        %v2855 = vadd.f32 %v2603, %v2854
        %2856 = vmatmul.f32.gmra.mxu0 %v2784
        %v2857 = vpop.f32.mrf.mxu0
        %v2858 = vadd.f32 %v2606, %v2857
        %2859 = vmatmul.f32.gmra.mxu0 %v2787
        %v2860 = vpop.f32.mrf.mxu0
        %v2861 = vadd.f32 %v2609, %v2860
        %2862 = vmatmul.f32.gmra.mxu0 %v2790
        %v2863 = vpop.f32.mrf.mxu0
        %v2864 = vadd.f32 %v2612, %v2863
        %2865 = vmatmul.f32.gmra.mxu0 %v2793
        %v2866 = vpop.f32.mrf.mxu0
        %v2867 = vadd.f32 %v2615, %v2866
        %2868 = vmatmul.f32.gmra.mxu0 %v2796
        %v2869 = vpop.f32.mrf.mxu0
        %v2870 = vadd.f32 %v2618, %v2869
        %2871 = vmatmul.f32.gmra.mxu0 %v2799
        %v2872 = vpop.f32.mrf.mxu0
        %v2873 = vadd.f32 %v2621, %v2872
        %2874 = vmatmul.f32.gmra.mxu0 %v2802
        %v2875 = vpop.f32.mrf.mxu0
        %v2876 = vadd.f32 %v2624, %v2875
        %2877 = vmatmul.f32.gmra.mxu0 %v2805
        %v2878 = vpop.f32.mrf.mxu0
        %v2879 = vadd.f32 %v2627, %v2878
        %2880 = vmatmul.f32.gmra.mxu0 %v2808
        %v2881 = vpop.f32.mrf.mxu0
        %v2882 = vadd.f32 %v2630, %v2881
        %2883 = vmatmul.f32.gmra.mxu0 %v2811
        %v2884 = vpop.f32.mrf.mxu0
        %v2885 = vadd.f32 %v2633, %v2884
        %2886 = vmatmul.f32.gmra.mxu0 %v2814
        %v2887 = vpop.f32.mrf.mxu0
        %v2888 = vadd.f32 %v2636, %v2887
        %2889 = vdwg.mxu0
        %2890 = vmatpush.msra.mxu0 0.0
        %2891 = vmatpush.msra.mxu0 0.0
        %2892 = vmatpush.msra.mxu0 0.0
        %2893 = vmatpush.msra.mxu0 0.0
        %2894 = vmatpush.msra.mxu0 0.0
        %2895 = vmatpush.msra.mxu0 0.0
        %2896 = vmatpush.msra.mxu0 0.0
        %2897 = vmatpush.msra.mxu0 0.0
        %2898 = vmatpush.msra.mxu0 0.0
        %2899 = vmatpush.msra.mxu0 0.0
        %2900 = vmatpush.msra.mxu0 0.0
        %2901 = vmatpush.msra.mxu0 %v2820
        %2902 = vmatpush.msra.mxu0 %v2493
        %2903 = vmatpush.msra.mxu0 %v2490
        %2904 = vmatpush.msra.mxu0 %v2487
        %2905 = vmatpush.msra.mxu0 %v2484
        %2906 = vmatmul.f32.gmra.mxu0 %v2769
        %v2907 = vpop.f32.mrf.mxu0
        %v2908 = vadd.f32 %v2656, %v2907
        %2909 = vmatmul.f32.gmra.mxu0 %v2772
        %v2910 = vpop.f32.mrf.mxu0
        %v2911 = vadd.f32 %v2659, %v2910
        %2912 = vmatmul.f32.gmra.mxu0 %v2775
        %v2913 = vpop.f32.mrf.mxu0
        %v2914 = vadd.f32 %v2662, %v2913
        %2915 = vmatmul.f32.gmra.mxu0 %v2778
        %v2916 = vpop.f32.mrf.mxu0
        %v2917 = vadd.f32 %v2665, %v2916
        %2918 = vmatmul.f32.gmra.mxu0 %v2781
        %v2919 = vpop.f32.mrf.mxu0
        %v2920 = vadd.f32 %v2668, %v2919
        %2921 = vmatmul.f32.gmra.mxu0 %v2784
        %v2922 = vpop.f32.mrf.mxu0
        %v2923 = vadd.f32 %v2671, %v2922
        %2924 = vmatmul.f32.gmra.mxu0 %v2787
        %v2925 = vpop.f32.mrf.mxu0
        %v2926 = vadd.f32 %v2674, %v2925
        %2927 = vmatmul.f32.gmra.mxu0 %v2790
        %v2928 = vpop.f32.mrf.mxu0
        %v2929 = vadd.f32 %v2677, %v2928
        %2930 = vmatmul.f32.gmra.mxu0 %v2793
        %v2931 = vpop.f32.mrf.mxu0
        %v2932 = vadd.f32 %v2680, %v2931
        %2933 = vmatmul.f32.gmra.mxu0 %v2796
        %v2934 = vpop.f32.mrf.mxu0
        %v2935 = vadd.f32 %v2683, %v2934
        %2936 = vmatmul.f32.gmra.mxu0 %v2799
        %v2937 = vpop.f32.mrf.mxu0
        %v2938 = vadd.f32 %v2686, %v2937
        %2939 = vmatmul.f32.gmra.mxu0 %v2802
        %v2940 = vpop.f32.mrf.mxu0
        %v2941 = vadd.f32 %v2689, %v2940
        %2942 = vmatmul.f32.gmra.mxu0 %v2805
        %v2943 = vpop.f32.mrf.mxu0
        %v2944 = vadd.f32 %v2692, %v2943
        %2945 = vmatmul.f32.gmra.mxu0 %v2808
        %v2946 = vpop.f32.mrf.mxu0
        %v2947 = vadd.f32 %v2695, %v2946
        %2948 = vmatmul.f32.gmra.mxu0 %v2811
        %v2949 = vpop.f32.mrf.mxu0
        %v2950 = vadd.f32 %v2698, %v2949
        %2951 = vmatmul.f32.gmra.mxu0 %v2814
        %v2952 = vpop.f32.mrf.mxu0
        %v2953 = vadd.f32 %v2701, %v2952
        %2954 = vdwg.mxu0
        %2955 = vmatpush.msra.mxu0 0.0
        %2956 = vmatpush.msra.mxu0 0.0
        %2957 = vmatpush.msra.mxu0 0.0
        %2958 = vmatpush.msra.mxu0 0.0
        %2959 = vmatpush.msra.mxu0 0.0
        %2960 = vmatpush.msra.mxu0 0.0
        %2961 = vmatpush.msra.mxu0 0.0
        %2962 = vmatpush.msra.mxu0 0.0
        %2963 = vmatpush.msra.mxu0 0.0
        %2964 = vmatpush.msra.mxu0 0.0
        %2965 = vmatpush.msra.mxu0 0.0
        %2966 = vmatpush.msra.mxu0 %v2823
        %2967 = vmatpush.msra.mxu0 %v2494
        %2968 = vmatpush.msra.mxu0 %v2491
        %2969 = vmatpush.msra.mxu0 %v2488
        %2970 = vmatpush.msra.mxu0 %v2485
        %2971 = vmatmul.f32.gmra.mxu0 %v2769
        %v2972 = vpop.f32.mrf.mxu0
        %v2973 = vadd.f32 %v2721, %v2972
        %2974 = vmatmul.f32.gmra.mxu0 %v2772
        %v2975 = vpop.f32.mrf.mxu0
        %v2976 = vadd.f32 %v2724, %v2975
        %2977 = vmatmul.f32.gmra.mxu0 %v2775
        %v2978 = vpop.f32.mrf.mxu0
        %v2979 = vadd.f32 %v2727, %v2978
        %2980 = vmatmul.f32.gmra.mxu0 %v2778
        %v2981 = vpop.f32.mrf.mxu0
        %v2982 = vadd.f32 %v2730, %v2981
        %2983 = vmatmul.f32.gmra.mxu0 %v2781
        %v2984 = vpop.f32.mrf.mxu0
        %v2985 = vadd.f32 %v2733, %v2984
        %2986 = vmatmul.f32.gmra.mxu0 %v2784
        %v2987 = vpop.f32.mrf.mxu0
        %v2988 = vadd.f32 %v2736, %v2987
        %2989 = vmatmul.f32.gmra.mxu0 %v2787
        %v2990 = vpop.f32.mrf.mxu0
        %v2991 = vadd.f32 %v2739, %v2990
        %2992 = vmatmul.f32.gmra.mxu0 %v2790
        %v2993 = vpop.f32.mrf.mxu0
        %v2994 = vadd.f32 %v2742, %v2993
        %2995 = vmatmul.f32.gmra.mxu0 %v2793
        %v2996 = vpop.f32.mrf.mxu0
        %v2997 = vadd.f32 %v2745, %v2996
        %2998 = vmatmul.f32.gmra.mxu0 %v2796
        %v2999 = vpop.f32.mrf.mxu0
        %v3000 = vadd.f32 %v2748, %v2999
        %3001 = vmatmul.f32.gmra.mxu0 %v2799
        %v3002 = vpop.f32.mrf.mxu0
        %v3003 = vadd.f32 %v2751, %v3002
        %3004 = vmatmul.f32.gmra.mxu0 %v2802
        %v3005 = vpop.f32.mrf.mxu0
        %v3006 = vadd.f32 %v2754, %v3005
        %3007 = vmatmul.f32.gmra.mxu0 %v2805
        %v3008 = vpop.f32.mrf.mxu0
        %v3009 = vadd.f32 %v2757, %v3008
        %3010 = vmatmul.f32.gmra.mxu0 %v2808
        %v3011 = vpop.f32.mrf.mxu0
        %v3012 = vadd.f32 %v2760, %v3011
        %3013 = vmatmul.f32.gmra.mxu0 %v2811
        %v3014 = vpop.f32.mrf.mxu0
        %v3015 = vadd.f32 %v2763, %v3014
        %3016 = vmatmul.f32.gmra.mxu0 %v2814
        %v3017 = vpop.f32.mrf.mxu0
        %v3018 = vadd.f32 %v2766, %v3017
        %3019 = vdwg.mxu0
        %s3020 = scalar_lea.vmem %s2, 240
        %v3021 = vld [vmem:[%s3020] sm:$0xff]
        %v3022 = vld [vmem:[%s3020 + $0x8] sm:$0xff]
        %v3023 = vld [vmem:[%s3020 + $0x10] sm:$0xff]
        %v3024 = vld [vmem:[%s3020 + $0x18] sm:$0xff]
        %v3025 = vld [vmem:[%s3020 + $0x20] sm:$0xff]
        %v3026 = vld [vmem:[%s3020 + $0x28] sm:$0xff]
        %v3027 = vld [vmem:[%s3020 + $0x30] sm:$0xff]
        %v3028 = vld [vmem:[%s3020 + $0x38] sm:$0xff]
        %v3029 = vld [vmem:[%s3020 + $0x40] sm:$0xff]
        %v3030 = vld [vmem:[%s3020 + $0x48] sm:$0xff]
        %v3031 = vld [vmem:[%s3020 + $0x50] sm:$0xff]
        %v3032 = vld [vmem:[%s3020 + $0x58] sm:$0xff]
        %v3033 = vld [vmem:[%s3020 + $0x60] sm:$0xf]
        %v3034 = vld [vmem:[%s3020 + $0x68] sm:$0xf]
        %v3035 = vld [vmem:[%s3020 + $0x70] sm:$0xf]
        %v3037 = vsel %vm2514, %v2196, 0
        %v3040 = vsel %vm2514, %v2199, 0
        %v3043 = vsel %vm2514, %v2202, 0
        %v3046 = vsel %vm2514, %v2205, 0
        %v3049 = vsel %vm2514, %v2208, 0
        %v3052 = vsel %vm2514, %v2211, 0
        %v3055 = vsel %vm2514, %v2214, 0
        %v3058 = vsel %vm2514, %v2217, 0
        %v3061 = vsel %vm2514, %v2220, 0
        %v3064 = vsel %vm2514, %v2223, 0
        %v3067 = vsel %vm2514, %v2226, 0
        %v3070 = vsel %vm2514, %v2229, 0
        %v3073 = vsel %vm2514, %v2232, 0
        %v3076 = vsel %vm2514, %v2235, 0
        %v3079 = vsel %vm2514, %v2238, 0
        %v3082 = vsel %vm2514, %v2241, 0
        %v3085 = vsel %vm2563, %v3033, 0
        %v3088 = vsel %vm2563, %v3034, 0
        %v3091 = vsel %vm2563, %v3035, 0
        %3093 = vmatpush.msra.mxu0 0.0
        %3094 = vmatpush.msra.mxu0 0.0
        %3095 = vmatpush.msra.mxu0 0.0
        %3096 = vmatpush.msra.mxu0 0.0
        %3097 = vmatpush.msra.mxu0 0.0
        %3098 = vmatpush.msra.mxu0 0.0
        %3099 = vmatpush.msra.mxu0 0.0
        %3100 = vmatpush.msra.mxu0 0.0
        %3101 = vmatpush.msra.mxu0 0.0
        %3102 = vmatpush.msra.mxu0 0.0
        %3103 = vmatpush.msra.mxu0 0.0
        %3104 = vmatpush.msra.mxu0 %v3085
        %3105 = vmatpush.msra.mxu0 %v3030
        %3106 = vmatpush.msra.mxu0 %v3027
        %3107 = vmatpush.msra.mxu0 %v3024
        %3108 = vmatpush.msra.mxu0 %v3021
        %3109 = vmatmul.f32.gmra.mxu0 %v3037
        %v3110 = vpop.f32.mrf.mxu0
        %v3111 = vadd.f32 0.0, %v3110
        %3112 = vmatmul.f32.gmra.mxu0 %v3040
        %v3113 = vpop.f32.mrf.mxu0
        %v3114 = vadd.f32 0.0, %v3113
        %3115 = vmatmul.f32.gmra.mxu0 %v3043
        %v3116 = vpop.f32.mrf.mxu0
        %v3117 = vadd.f32 0.0, %v3116
        %3118 = vmatmul.f32.gmra.mxu0 %v3046
        %v3119 = vpop.f32.mrf.mxu0
        %v3120 = vadd.f32 0.0, %v3119
        %3121 = vmatmul.f32.gmra.mxu0 %v3049
        %v3122 = vpop.f32.mrf.mxu0
        %v3123 = vadd.f32 0.0, %v3122
        %3124 = vmatmul.f32.gmra.mxu0 %v3052
        %v3125 = vpop.f32.mrf.mxu0
        %v3126 = vadd.f32 0.0, %v3125
        %3127 = vmatmul.f32.gmra.mxu0 %v3055
        %v3128 = vpop.f32.mrf.mxu0
        %v3129 = vadd.f32 0.0, %v3128
        %3130 = vmatmul.f32.gmra.mxu0 %v3058
        %v3131 = vpop.f32.mrf.mxu0
        %v3132 = vadd.f32 0.0, %v3131
        %3133 = vmatmul.f32.gmra.mxu0 %v3061
        %v3134 = vpop.f32.mrf.mxu0
        %v3135 = vadd.f32 0.0, %v3134
        %3136 = vmatmul.f32.gmra.mxu0 %v3064
        %v3137 = vpop.f32.mrf.mxu0
        %v3138 = vadd.f32 0.0, %v3137
        %3139 = vmatmul.f32.gmra.mxu0 %v3067
        %v3140 = vpop.f32.mrf.mxu0
        %v3141 = vadd.f32 0.0, %v3140
        %3142 = vmatmul.f32.gmra.mxu0 %v3070
        %v3143 = vpop.f32.mrf.mxu0
        %v3144 = vadd.f32 0.0, %v3143
        %3145 = vmatmul.f32.gmra.mxu0 %v3073
        %v3146 = vpop.f32.mrf.mxu0
        %v3147 = vadd.f32 0.0, %v3146
        %3148 = vmatmul.f32.gmra.mxu0 %v3076
        %v3149 = vpop.f32.mrf.mxu0
        %v3150 = vadd.f32 0.0, %v3149
        %3151 = vmatmul.f32.gmra.mxu0 %v3079
        %v3152 = vpop.f32.mrf.mxu0
        %v3153 = vadd.f32 0.0, %v3152
        %3154 = vmatmul.f32.gmra.mxu0 %v3082
        %v3155 = vpop.f32.mrf.mxu0
        %v3156 = vadd.f32 0.0, %v3155
        %3157 = vdwg.mxu0
        %3158 = vmatpush.msra.mxu0 0.0
        %3159 = vmatpush.msra.mxu0 0.0
        %3160 = vmatpush.msra.mxu0 0.0
        %3161 = vmatpush.msra.mxu0 0.0
        %3162 = vmatpush.msra.mxu0 0.0
        %3163 = vmatpush.msra.mxu0 0.0
        %3164 = vmatpush.msra.mxu0 0.0
        %3165 = vmatpush.msra.mxu0 0.0
        %3166 = vmatpush.msra.mxu0 0.0
        %3167 = vmatpush.msra.mxu0 0.0
        %3168 = vmatpush.msra.mxu0 0.0
        %3169 = vmatpush.msra.mxu0 %v3088
        %3170 = vmatpush.msra.mxu0 %v3031
        %3171 = vmatpush.msra.mxu0 %v3028
        %3172 = vmatpush.msra.mxu0 %v3025
        %3173 = vmatpush.msra.mxu0 %v3022
        %3174 = vmatmul.f32.gmra.mxu0 %v3037
        %v3175 = vpop.f32.mrf.mxu0
        %v3176 = vadd.f32 0.0, %v3175
        %3177 = vmatmul.f32.gmra.mxu0 %v3040
        %v3178 = vpop.f32.mrf.mxu0
        %v3179 = vadd.f32 0.0, %v3178
        %3180 = vmatmul.f32.gmra.mxu0 %v3043
        %v3181 = vpop.f32.mrf.mxu0
        %v3182 = vadd.f32 0.0, %v3181
        %3183 = vmatmul.f32.gmra.mxu0 %v3046
        %v3184 = vpop.f32.mrf.mxu0
        %v3185 = vadd.f32 0.0, %v3184
        %3186 = vmatmul.f32.gmra.mxu0 %v3049
        %v3187 = vpop.f32.mrf.mxu0
        %v3188 = vadd.f32 0.0, %v3187
        %3189 = vmatmul.f32.gmra.mxu0 %v3052
        %v3190 = vpop.f32.mrf.mxu0
        %v3191 = vadd.f32 0.0, %v3190
        %3192 = vmatmul.f32.gmra.mxu0 %v3055
        %v3193 = vpop.f32.mrf.mxu0
        %v3194 = vadd.f32 0.0, %v3193
        %3195 = vmatmul.f32.gmra.mxu0 %v3058
        %v3196 = vpop.f32.mrf.mxu0
        %v3197 = vadd.f32 0.0, %v3196
        %3198 = vmatmul.f32.gmra.mxu0 %v3061
        %v3199 = vpop.f32.mrf.mxu0
        %v3200 = vadd.f32 0.0, %v3199
        %3201 = vmatmul.f32.gmra.mxu0 %v3064
        %v3202 = vpop.f32.mrf.mxu0
        %v3203 = vadd.f32 0.0, %v3202
        %3204 = vmatmul.f32.gmra.mxu0 %v3067
        %v3205 = vpop.f32.mrf.mxu0
        %v3206 = vadd.f32 0.0, %v3205
        %3207 = vmatmul.f32.gmra.mxu0 %v3070
        %v3208 = vpop.f32.mrf.mxu0
        %v3209 = vadd.f32 0.0, %v3208
        %3210 = vmatmul.f32.gmra.mxu0 %v3073
        %v3211 = vpop.f32.mrf.mxu0
        %v3212 = vadd.f32 0.0, %v3211
        %3213 = vmatmul.f32.gmra.mxu0 %v3076
        %v3214 = vpop.f32.mrf.mxu0
        %v3215 = vadd.f32 0.0, %v3214
        %3216 = vmatmul.f32.gmra.mxu0 %v3079
        %v3217 = vpop.f32.mrf.mxu0
        %v3218 = vadd.f32 0.0, %v3217
        %3219 = vmatmul.f32.gmra.mxu0 %v3082
        %v3220 = vpop.f32.mrf.mxu0
        %v3221 = vadd.f32 0.0, %v3220
        %3222 = vdwg.mxu0
        %3223 = vmatpush.msra.mxu0 0.0
        %3224 = vmatpush.msra.mxu0 0.0
        %3225 = vmatpush.msra.mxu0 0.0
        %3226 = vmatpush.msra.mxu0 0.0
        %3227 = vmatpush.msra.mxu0 0.0
        %3228 = vmatpush.msra.mxu0 0.0
        %3229 = vmatpush.msra.mxu0 0.0
        %3230 = vmatpush.msra.mxu0 0.0
        %3231 = vmatpush.msra.mxu0 0.0
        %3232 = vmatpush.msra.mxu0 0.0
        %3233 = vmatpush.msra.mxu0 0.0
        %3234 = vmatpush.msra.mxu0 %v3091
        %3235 = vmatpush.msra.mxu0 %v3032
        %3236 = vmatpush.msra.mxu0 %v3029
        %3237 = vmatpush.msra.mxu0 %v3026
        %3238 = vmatpush.msra.mxu0 %v3023
        %3239 = vmatmul.f32.gmra.mxu0 %v3037
        %v3240 = vpop.f32.mrf.mxu0
        %v3241 = vadd.f32 0.0, %v3240
        %3242 = vmatmul.f32.gmra.mxu0 %v3040
        %v3243 = vpop.f32.mrf.mxu0
        %v3244 = vadd.f32 0.0, %v3243
        %3245 = vmatmul.f32.gmra.mxu0 %v3043
        %v3246 = vpop.f32.mrf.mxu0
        %v3247 = vadd.f32 0.0, %v3246
        %3248 = vmatmul.f32.gmra.mxu0 %v3046
        %v3249 = vpop.f32.mrf.mxu0
        %v3250 = vadd.f32 0.0, %v3249
        %3251 = vmatmul.f32.gmra.mxu0 %v3049
        %v3252 = vpop.f32.mrf.mxu0
        %v3253 = vadd.f32 0.0, %v3252
        %3254 = vmatmul.f32.gmra.mxu0 %v3052
        %v3255 = vpop.f32.mrf.mxu0
        %v3256 = vadd.f32 0.0, %v3255
        %3257 = vmatmul.f32.gmra.mxu0 %v3055
        %v3258 = vpop.f32.mrf.mxu0
        %v3259 = vadd.f32 0.0, %v3258
        %3260 = vmatmul.f32.gmra.mxu0 %v3058
        %v3261 = vpop.f32.mrf.mxu0
        %v3262 = vadd.f32 0.0, %v3261
        %3263 = vmatmul.f32.gmra.mxu0 %v3061
        %v3264 = vpop.f32.mrf.mxu0
        %v3265 = vadd.f32 0.0, %v3264
        %3266 = vmatmul.f32.gmra.mxu0 %v3064
        %v3267 = vpop.f32.mrf.mxu0
        %v3268 = vadd.f32 0.0, %v3267
        %3269 = vmatmul.f32.gmra.mxu0 %v3067
        %v3270 = vpop.f32.mrf.mxu0
        %v3271 = vadd.f32 0.0, %v3270
        %3272 = vmatmul.f32.gmra.mxu0 %v3070
        %v3273 = vpop.f32.mrf.mxu0
        %v3274 = vadd.f32 0.0, %v3273
        %3275 = vmatmul.f32.gmra.mxu0 %v3073
        %v3276 = vpop.f32.mrf.mxu0
        %v3277 = vadd.f32 0.0, %v3276
        %3278 = vmatmul.f32.gmra.mxu0 %v3076
        %v3279 = vpop.f32.mrf.mxu0
        %v3280 = vadd.f32 0.0, %v3279
        %3281 = vmatmul.f32.gmra.mxu0 %v3079
        %v3282 = vpop.f32.mrf.mxu0
        %v3283 = vadd.f32 0.0, %v3282
        %3284 = vmatmul.f32.gmra.mxu0 %v3082
        %v3285 = vpop.f32.mrf.mxu0
        %v3286 = vadd.f32 0.0, %v3285
        %3287 = vdwg.mxu0
        %v3288 = vadd.f32 %v2843, %v3111
        %v3289 = vadd.f32 %v2908, %v3176
        %v3290 = vadd.f32 %v2973, %v3241
        %v3291 = vadd.f32 %v2846, %v3114
        %v3292 = vadd.f32 %v2911, %v3179
        %v3293 = vadd.f32 %v2976, %v3244
        %v3294 = vadd.f32 %v2849, %v3117
        %v3295 = vadd.f32 %v2914, %v3182
        %v3296 = vadd.f32 %v2979, %v3247
        %v3297 = vadd.f32 %v2852, %v3120
        %v3298 = vadd.f32 %v2917, %v3185
        %v3299 = vadd.f32 %v2982, %v3250
        %v3300 = vadd.f32 %v2855, %v3123
        %v3301 = vadd.f32 %v2920, %v3188
        %v3302 = vadd.f32 %v2985, %v3253
        %v3303 = vadd.f32 %v2858, %v3126
        %v3304 = vadd.f32 %v2923, %v3191
        %v3305 = vadd.f32 %v2988, %v3256
        %v3306 = vadd.f32 %v2861, %v3129
        %v3307 = vadd.f32 %v2926, %v3194
        %v3308 = vadd.f32 %v2991, %v3259
        %v3309 = vadd.f32 %v2864, %v3132
        %v3310 = vadd.f32 %v2929, %v3197
        %v3311 = vadd.f32 %v2994, %v3262
        %v3312 = vadd.f32 %v2867, %v3135
        %v3313 = vadd.f32 %v2932, %v3200
        %v3314 = vadd.f32 %v2997, %v3265
        %v3315 = vadd.f32 %v2870, %v3138
        %v3316 = vadd.f32 %v2935, %v3203
        %v3317 = vadd.f32 %v3000, %v3268
        %v3318 = vadd.f32 %v2873, %v3141
        %v3319 = vadd.f32 %v2938, %v3206
        %v3320 = vadd.f32 %v3003, %v3271
        %v3321 = vadd.f32 %v2876, %v3144
        %v3322 = vadd.f32 %v2941, %v3209
        %v3323 = vadd.f32 %v3006, %v3274
        %v3324 = vadd.f32 %v2879, %v3147
        %v3325 = vadd.f32 %v2944, %v3212
        %v3326 = vadd.f32 %v3009, %v3277
        %v3327 = vadd.f32 %v2882, %v3150
        %v3328 = vadd.f32 %v2947, %v3215
        %v3329 = vadd.f32 %v3012, %v3280
        %v3330 = vadd.f32 %v2885, %v3153
        %v3331 = vadd.f32 %v2950, %v3218
        %v3332 = vadd.f32 %v3015, %v3283
        %v3333 = vadd.f32 %v2888, %v3156
        %v3334 = vadd.f32 %v2953, %v3221
        %v3335 = vadd.f32 %v3018, %v3286
        %s3336 = scalar_lea.vmem %s2, 360
        %v3337 = vld [vmem:[%s3336] sm:$0xff]
        %v3338 = vld [vmem:[%s3336 + $0x8] sm:$0xff]
        %v3339 = vld [vmem:[%s3336 + $0x10] sm:$0xff]
        %v3340 = vld [vmem:[%s3336 + $0x18] sm:$0xff]
        %v3341 = vld [vmem:[%s3336 + $0x20] sm:$0xff]
        %v3342 = vld [vmem:[%s3336 + $0x28] sm:$0xff]
        %v3343 = vld [vmem:[%s3336 + $0x30] sm:$0xff]
        %v3344 = vld [vmem:[%s3336 + $0x38] sm:$0xff]
        %v3345 = vld [vmem:[%s3336 + $0x40] sm:$0xff]
        %v3346 = vld [vmem:[%s3336 + $0x48] sm:$0xff]
        %v3347 = vld [vmem:[%s3336 + $0x50] sm:$0xff]
        %v3348 = vld [vmem:[%s3336 + $0x58] sm:$0xff]
        %v3349 = vld [vmem:[%s3336 + $0x60] sm:$0xf]
        %v3350 = vld [vmem:[%s3336 + $0x68] sm:$0xf]
        %v3351 = vld [vmem:[%s3336 + $0x70] sm:$0xf]
        %v3353 = vsel %vm2514, %v2244, 0
        %v3356 = vsel %vm2514, %v2247, 0
        %v3359 = vsel %vm2514, %v2250, 0
        %v3362 = vsel %vm2514, %v2253, 0
        %v3365 = vsel %vm2514, %v2256, 0
        %v3368 = vsel %vm2514, %v2259, 0
        %v3371 = vsel %vm2514, %v2262, 0
        %v3374 = vsel %vm2514, %v2265, 0
        %v3377 = vsel %vm2514, %v2268, 0
        %v3380 = vsel %vm2514, %v2271, 0
        %v3383 = vsel %vm2514, %v2274, 0
        %v3386 = vsel %vm2514, %v2277, 0
        %v3389 = vsel %vm2514, %v2280, 0
        %v3392 = vsel %vm2514, %v2283, 0
        %v3395 = vsel %vm2514, %v2286, 0
        %v3398 = vsel %vm2514, %v2289, 0
        %v3401 = vsel %vm2563, %v3349, 0
        %v3404 = vsel %vm2563, %v3350, 0
        %v3407 = vsel %vm2563, %v3351, 0
        %3409 = vmatpush.msra.mxu0 0.0
        %3410 = vmatpush.msra.mxu0 0.0
        %3411 = vmatpush.msra.mxu0 0.0
        %3412 = vmatpush.msra.mxu0 0.0
        %3413 = vmatpush.msra.mxu0 0.0
        %3414 = vmatpush.msra.mxu0 0.0
        %3415 = vmatpush.msra.mxu0 0.0
        %3416 = vmatpush.msra.mxu0 0.0
        %3417 = vmatpush.msra.mxu0 0.0
        %3418 = vmatpush.msra.mxu0 0.0
        %3419 = vmatpush.msra.mxu0 0.0
        %3420 = vmatpush.msra.mxu0 %v3401
        %3421 = vmatpush.msra.mxu0 %v3346
        %3422 = vmatpush.msra.mxu0 %v3343
        %3423 = vmatpush.msra.mxu0 %v3340
        %3424 = vmatpush.msra.mxu0 %v3337
        %3425 = vmatmul.f32.gmra.mxu0 %v3353
        %v3426 = vpop.f32.mrf.mxu0
        %v3427 = vadd.f32 0.0, %v3426
        %3428 = vmatmul.f32.gmra.mxu0 %v3356
        %v3429 = vpop.f32.mrf.mxu0
        %v3430 = vadd.f32 0.0, %v3429
        %3431 = vmatmul.f32.gmra.mxu0 %v3359
        %v3432 = vpop.f32.mrf.mxu0
        %v3433 = vadd.f32 0.0, %v3432
        %3434 = vmatmul.f32.gmra.mxu0 %v3362
        %v3435 = vpop.f32.mrf.mxu0
        %v3436 = vadd.f32 0.0, %v3435
        %3437 = vmatmul.f32.gmra.mxu0 %v3365
        %v3438 = vpop.f32.mrf.mxu0
        %v3439 = vadd.f32 0.0, %v3438
        %3440 = vmatmul.f32.gmra.mxu0 %v3368
        %v3441 = vpop.f32.mrf.mxu0
        %v3442 = vadd.f32 0.0, %v3441
        %3443 = vmatmul.f32.gmra.mxu0 %v3371
        %v3444 = vpop.f32.mrf.mxu0
        %v3445 = vadd.f32 0.0, %v3444
        %3446 = vmatmul.f32.gmra.mxu0 %v3374
        %v3447 = vpop.f32.mrf.mxu0
        %v3448 = vadd.f32 0.0, %v3447
        %3449 = vmatmul.f32.gmra.mxu0 %v3377
        %v3450 = vpop.f32.mrf.mxu0
        %v3451 = vadd.f32 0.0, %v3450
        %3452 = vmatmul.f32.gmra.mxu0 %v3380
        %v3453 = vpop.f32.mrf.mxu0
        %v3454 = vadd.f32 0.0, %v3453
        %3455 = vmatmul.f32.gmra.mxu0 %v3383
        %v3456 = vpop.f32.mrf.mxu0
        %v3457 = vadd.f32 0.0, %v3456
        %3458 = vmatmul.f32.gmra.mxu0 %v3386
        %v3459 = vpop.f32.mrf.mxu0
        %v3460 = vadd.f32 0.0, %v3459
        %3461 = vmatmul.f32.gmra.mxu0 %v3389
        %v3462 = vpop.f32.mrf.mxu0
        %v3463 = vadd.f32 0.0, %v3462
        %3464 = vmatmul.f32.gmra.mxu0 %v3392
        %v3465 = vpop.f32.mrf.mxu0
        %v3466 = vadd.f32 0.0, %v3465
        %3467 = vmatmul.f32.gmra.mxu0 %v3395
        %v3468 = vpop.f32.mrf.mxu0
        %v3469 = vadd.f32 0.0, %v3468
        %3470 = vmatmul.f32.gmra.mxu0 %v3398
        %v3471 = vpop.f32.mrf.mxu0
        %v3472 = vadd.f32 0.0, %v3471
        %3473 = vdwg.mxu0
        %3474 = vmatpush.msra.mxu0 0.0
        %3475 = vmatpush.msra.mxu0 0.0
        %3476 = vmatpush.msra.mxu0 0.0
        %3477 = vmatpush.msra.mxu0 0.0
        %3478 = vmatpush.msra.mxu0 0.0
        %3479 = vmatpush.msra.mxu0 0.0
        %3480 = vmatpush.msra.mxu0 0.0
        %3481 = vmatpush.msra.mxu0 0.0
        %3482 = vmatpush.msra.mxu0 0.0
        %3483 = vmatpush.msra.mxu0 0.0
        %3484 = vmatpush.msra.mxu0 0.0
        %3485 = vmatpush.msra.mxu0 %v3404
        %3486 = vmatpush.msra.mxu0 %v3347
        %3487 = vmatpush.msra.mxu0 %v3344
        %3488 = vmatpush.msra.mxu0 %v3341
        %3489 = vmatpush.msra.mxu0 %v3338
        %3490 = vmatmul.f32.gmra.mxu0 %v3353
        %v3491 = vpop.f32.mrf.mxu0
        %v3492 = vadd.f32 0.0, %v3491
        %3493 = vmatmul.f32.gmra.mxu0 %v3356
        %v3494 = vpop.f32.mrf.mxu0
        %v3495 = vadd.f32 0.0, %v3494
        %3496 = vmatmul.f32.gmra.mxu0 %v3359
        %v3497 = vpop.f32.mrf.mxu0
        %v3498 = vadd.f32 0.0, %v3497
        %3499 = vmatmul.f32.gmra.mxu0 %v3362
        %v3500 = vpop.f32.mrf.mxu0
        %v3501 = vadd.f32 0.0, %v3500
        %3502 = vmatmul.f32.gmra.mxu0 %v3365
        %v3503 = vpop.f32.mrf.mxu0
        %v3504 = vadd.f32 0.0, %v3503
        %3505 = vmatmul.f32.gmra.mxu0 %v3368
        %v3506 = vpop.f32.mrf.mxu0
        %v3507 = vadd.f32 0.0, %v3506
        %3508 = vmatmul.f32.gmra.mxu0 %v3371
        %v3509 = vpop.f32.mrf.mxu0
        %v3510 = vadd.f32 0.0, %v3509
        %3511 = vmatmul.f32.gmra.mxu0 %v3374
        %v3512 = vpop.f32.mrf.mxu0
        %v3513 = vadd.f32 0.0, %v3512
        %3514 = vmatmul.f32.gmra.mxu0 %v3377
        %v3515 = vpop.f32.mrf.mxu0
        %v3516 = vadd.f32 0.0, %v3515
        %3517 = vmatmul.f32.gmra.mxu0 %v3380
        %v3518 = vpop.f32.mrf.mxu0
        %v3519 = vadd.f32 0.0, %v3518
        %3520 = vmatmul.f32.gmra.mxu0 %v3383
        %v3521 = vpop.f32.mrf.mxu0
        %v3522 = vadd.f32 0.0, %v3521
        %3523 = vmatmul.f32.gmra.mxu0 %v3386
        %v3524 = vpop.f32.mrf.mxu0
        %v3525 = vadd.f32 0.0, %v3524
        %3526 = vmatmul.f32.gmra.mxu0 %v3389
        %v3527 = vpop.f32.mrf.mxu0
        %v3528 = vadd.f32 0.0, %v3527
        %3529 = vmatmul.f32.gmra.mxu0 %v3392
        %v3530 = vpop.f32.mrf.mxu0
        %v3531 = vadd.f32 0.0, %v3530
        %3532 = vmatmul.f32.gmra.mxu0 %v3395
        %v3533 = vpop.f32.mrf.mxu0
        %v3534 = vadd.f32 0.0, %v3533
        %3535 = vmatmul.f32.gmra.mxu0 %v3398
        %v3536 = vpop.f32.mrf.mxu0
        %v3537 = vadd.f32 0.0, %v3536
        %3538 = vdwg.mxu0
        %3539 = vmatpush.msra.mxu0 0.0
        %3540 = vmatpush.msra.mxu0 0.0
        %3541 = vmatpush.msra.mxu0 0.0
        %3542 = vmatpush.msra.mxu0 0.0
        %3543 = vmatpush.msra.mxu0 0.0
        %3544 = vmatpush.msra.mxu0 0.0
        %3545 = vmatpush.msra.mxu0 0.0
        %3546 = vmatpush.msra.mxu0 0.0
        %3547 = vmatpush.msra.mxu0 0.0
        %3548 = vmatpush.msra.mxu0 0.0
        %3549 = vmatpush.msra.mxu0 0.0
        %3550 = vmatpush.msra.mxu0 %v3407
        %3551 = vmatpush.msra.mxu0 %v3348
        %3552 = vmatpush.msra.mxu0 %v3345
        %3553 = vmatpush.msra.mxu0 %v3342
        %3554 = vmatpush.msra.mxu0 %v3339
        %3555 = vmatmul.f32.gmra.mxu0 %v3353
        %v3556 = vpop.f32.mrf.mxu0
        %v3557 = vadd.f32 0.0, %v3556
        %3558 = vmatmul.f32.gmra.mxu0 %v3356
        %v3559 = vpop.f32.mrf.mxu0
        %v3560 = vadd.f32 0.0, %v3559
        %3561 = vmatmul.f32.gmra.mxu0 %v3359
        %v3562 = vpop.f32.mrf.mxu0
        %v3563 = vadd.f32 0.0, %v3562
        %3564 = vmatmul.f32.gmra.mxu0 %v3362
        %v3565 = vpop.f32.mrf.mxu0
        %v3566 = vadd.f32 0.0, %v3565
        %3567 = vmatmul.f32.gmra.mxu0 %v3365
        %v3568 = vpop.f32.mrf.mxu0
        %v3569 = vadd.f32 0.0, %v3568
        %3570 = vmatmul.f32.gmra.mxu0 %v3368
        %v3571 = vpop.f32.mrf.mxu0
        %v3572 = vadd.f32 0.0, %v3571
        %3573 = vmatmul.f32.gmra.mxu0 %v3371
        %v3574 = vpop.f32.mrf.mxu0
        %v3575 = vadd.f32 0.0, %v3574
        %3576 = vmatmul.f32.gmra.mxu0 %v3374
        %v3577 = vpop.f32.mrf.mxu0
        %v3578 = vadd.f32 0.0, %v3577
        %3579 = vmatmul.f32.gmra.mxu0 %v3377
        %v3580 = vpop.f32.mrf.mxu0
        %v3581 = vadd.f32 0.0, %v3580
        %3582 = vmatmul.f32.gmra.mxu0 %v3380
        %v3583 = vpop.f32.mrf.mxu0
        %v3584 = vadd.f32 0.0, %v3583
        %3585 = vmatmul.f32.gmra.mxu0 %v3383
        %v3586 = vpop.f32.mrf.mxu0
        %v3587 = vadd.f32 0.0, %v3586
        %3588 = vmatmul.f32.gmra.mxu0 %v3386
        %v3589 = vpop.f32.mrf.mxu0
        %v3590 = vadd.f32 0.0, %v3589
        %3591 = vmatmul.f32.gmra.mxu0 %v3389
        %v3592 = vpop.f32.mrf.mxu0
        %v3593 = vadd.f32 0.0, %v3592
        %3594 = vmatmul.f32.gmra.mxu0 %v3392
        %v3595 = vpop.f32.mrf.mxu0
        %v3596 = vadd.f32 0.0, %v3595
        %3597 = vmatmul.f32.gmra.mxu0 %v3395
        %v3598 = vpop.f32.mrf.mxu0
        %v3599 = vadd.f32 0.0, %v3598
        %3600 = vmatmul.f32.gmra.mxu0 %v3398
        %v3601 = vpop.f32.mrf.mxu0
        %v3602 = vadd.f32 0.0, %v3601
        %3603 = vdwg.mxu0
        %v3604 = vadd.f32 %v3288, %v3427
        %v3605 = vadd.f32 %v3289, %v3492
        %v3606 = vadd.f32 %v3290, %v3557
        %v3607 = vadd.f32 %v3291, %v3430
        %v3608 = vadd.f32 %v3292, %v3495
        %v3609 = vadd.f32 %v3293, %v3560
        %v3610 = vadd.f32 %v3294, %v3433
        %v3611 = vadd.f32 %v3295, %v3498
        %v3612 = vadd.f32 %v3296, %v3563
        %v3613 = vadd.f32 %v3297, %v3436
        %v3614 = vadd.f32 %v3298, %v3501
        %v3615 = vadd.f32 %v3299, %v3566
        %v3616 = vadd.f32 %v3300, %v3439
        %v3617 = vadd.f32 %v3301, %v3504
        %v3618 = vadd.f32 %v3302, %v3569
        %v3619 = vadd.f32 %v3303, %v3442
        %v3620 = vadd.f32 %v3304, %v3507
        %v3621 = vadd.f32 %v3305, %v3572
        %v3622 = vadd.f32 %v3306, %v3445
        %v3623 = vadd.f32 %v3307, %v3510
        %v3624 = vadd.f32 %v3308, %v3575
        %v3625 = vadd.f32 %v3309, %v3448
        %v3626 = vadd.f32 %v3310, %v3513
        %v3627 = vadd.f32 %v3311, %v3578
        %v3628 = vadd.f32 %v3312, %v3451
        %v3629 = vadd.f32 %v3313, %v3516
        %v3630 = vadd.f32 %v3314, %v3581
        %v3631 = vadd.f32 %v3315, %v3454
        %v3632 = vadd.f32 %v3316, %v3519
        %v3633 = vadd.f32 %v3317, %v3584
        %v3634 = vadd.f32 %v3318, %v3457
        %v3635 = vadd.f32 %v3319, %v3522
        %v3636 = vadd.f32 %v3320, %v3587
        %v3637 = vadd.f32 %v3321, %v3460
        %v3638 = vadd.f32 %v3322, %v3525
        %v3639 = vadd.f32 %v3323, %v3590
        %v3640 = vadd.f32 %v3324, %v3463
        %v3641 = vadd.f32 %v3325, %v3528
        %v3642 = vadd.f32 %v3326, %v3593
        %v3643 = vadd.f32 %v3327, %v3466
        %v3644 = vadd.f32 %v3328, %v3531
        %v3645 = vadd.f32 %v3329, %v3596
        %v3646 = vadd.f32 %v3330, %v3469
        %v3647 = vadd.f32 %v3331, %v3534
        %v3648 = vadd.f32 %v3332, %v3599
        %v3649 = vadd.f32 %v3333, %v3472
        %v3650 = vadd.f32 %v3334, %v3537
        %v3651 = vadd.f32 %v3335, %v3602
        %s3652 = scalar_lea.vmem %s2, 480
        %v3653 = vld [vmem:[%s3652] sm:$0xff]
        %v3654 = vld [vmem:[%s3652 + $0x8] sm:$0xff]
        %v3655 = vld [vmem:[%s3652 + $0x10] sm:$0xff]
        %v3656 = vld [vmem:[%s3652 + $0x18] sm:$0xff]
        %v3657 = vld [vmem:[%s3652 + $0x20] sm:$0xff]
        %v3658 = vld [vmem:[%s3652 + $0x28] sm:$0xff]
        %v3659 = vld [vmem:[%s3652 + $0x30] sm:$0xff]
        %v3660 = vld [vmem:[%s3652 + $0x38] sm:$0xff]
        %v3661 = vld [vmem:[%s3652 + $0x40] sm:$0xff]
        %v3662 = vld [vmem:[%s3652 + $0x48] sm:$0xff]
        %v3663 = vld [vmem:[%s3652 + $0x50] sm:$0xff]
        %v3664 = vld [vmem:[%s3652 + $0x58] sm:$0xff]
        %v3665 = vld [vmem:[%s3652 + $0x60] sm:$0xf]
        %v3666 = vld [vmem:[%s3652 + $0x68] sm:$0xf]
        %v3667 = vld [vmem:[%s3652 + $0x70] sm:$0xf]
        %v3669 = vsel %vm2514, %v2292, 0
        %v3672 = vsel %vm2514, %v2295, 0
        %v3675 = vsel %vm2514, %v2298, 0
        %v3678 = vsel %vm2514, %v2301, 0
        %v3681 = vsel %vm2514, %v2304, 0
        %v3684 = vsel %vm2514, %v2307, 0
        %v3687 = vsel %vm2514, %v2310, 0
        %v3690 = vsel %vm2514, %v2313, 0
        %v3693 = vsel %vm2514, %v2316, 0
        %v3696 = vsel %vm2514, %v2319, 0
        %v3699 = vsel %vm2514, %v2322, 0
        %v3702 = vsel %vm2514, %v2325, 0
        %v3705 = vsel %vm2514, %v2328, 0
        %v3708 = vsel %vm2514, %v2331, 0
        %v3711 = vsel %vm2514, %v2334, 0
        %v3714 = vsel %vm2514, %v2337, 0
        %v3717 = vsel %vm2563, %v3665, 0
        %v3720 = vsel %vm2563, %v3666, 0
        %v3723 = vsel %vm2563, %v3667, 0
        %3725 = vmatpush.msra.mxu0 0.0
        %3726 = vmatpush.msra.mxu0 0.0
        %3727 = vmatpush.msra.mxu0 0.0
        %3728 = vmatpush.msra.mxu0 0.0
        %3729 = vmatpush.msra.mxu0 0.0
        %3730 = vmatpush.msra.mxu0 0.0
        %3731 = vmatpush.msra.mxu0 0.0
        %3732 = vmatpush.msra.mxu0 0.0
        %3733 = vmatpush.msra.mxu0 0.0
        %3734 = vmatpush.msra.mxu0 0.0
        %3735 = vmatpush.msra.mxu0 0.0
        %3736 = vmatpush.msra.mxu0 %v3717
        %3737 = vmatpush.msra.mxu0 %v3662
        %3738 = vmatpush.msra.mxu0 %v3659
        %3739 = vmatpush.msra.mxu0 %v3656
        %3740 = vmatpush.msra.mxu0 %v3653
        %3741 = vmatmul.f32.gmra.mxu0 %v3669
        %v3742 = vpop.f32.mrf.mxu0
        %v3743 = vadd.f32 0.0, %v3742
        %3744 = vmatmul.f32.gmra.mxu0 %v3672
        %v3745 = vpop.f32.mrf.mxu0
        %v3746 = vadd.f32 0.0, %v3745
        %3747 = vmatmul.f32.gmra.mxu0 %v3675
        %v3748 = vpop.f32.mrf.mxu0
        %v3749 = vadd.f32 0.0, %v3748
        %3750 = vmatmul.f32.gmra.mxu0 %v3678
        %v3751 = vpop.f32.mrf.mxu0
        %v3752 = vadd.f32 0.0, %v3751
        %3753 = vmatmul.f32.gmra.mxu0 %v3681
        %v3754 = vpop.f32.mrf.mxu0
        %v3755 = vadd.f32 0.0, %v3754
        %3756 = vmatmul.f32.gmra.mxu0 %v3684
        %v3757 = vpop.f32.mrf.mxu0
        %v3758 = vadd.f32 0.0, %v3757
        %3759 = vmatmul.f32.gmra.mxu0 %v3687
        %v3760 = vpop.f32.mrf.mxu0
        %v3761 = vadd.f32 0.0, %v3760
        %3762 = vmatmul.f32.gmra.mxu0 %v3690
        %v3763 = vpop.f32.mrf.mxu0
        %v3764 = vadd.f32 0.0, %v3763
        %3765 = vmatmul.f32.gmra.mxu0 %v3693
        %v3766 = vpop.f32.mrf.mxu0
        %v3767 = vadd.f32 0.0, %v3766
        %3768 = vmatmul.f32.gmra.mxu0 %v3696
        %v3769 = vpop.f32.mrf.mxu0
        %v3770 = vadd.f32 0.0, %v3769
        %3771 = vmatmul.f32.gmra.mxu0 %v3699
        %v3772 = vpop.f32.mrf.mxu0
        %v3773 = vadd.f32 0.0, %v3772
        %3774 = vmatmul.f32.gmra.mxu0 %v3702
        %v3775 = vpop.f32.mrf.mxu0
        %v3776 = vadd.f32 0.0, %v3775
        %3777 = vmatmul.f32.gmra.mxu0 %v3705
        %v3778 = vpop.f32.mrf.mxu0
        %v3779 = vadd.f32 0.0, %v3778
        %3780 = vmatmul.f32.gmra.mxu0 %v3708
        %v3781 = vpop.f32.mrf.mxu0
        %v3782 = vadd.f32 0.0, %v3781
        %3783 = vmatmul.f32.gmra.mxu0 %v3711
        %v3784 = vpop.f32.mrf.mxu0
        %v3785 = vadd.f32 0.0, %v3784
        %3786 = vmatmul.f32.gmra.mxu0 %v3714
        %v3787 = vpop.f32.mrf.mxu0
        %v3788 = vadd.f32 0.0, %v3787
        %3789 = vdwg.mxu0
        %3790 = vmatpush.msra.mxu0 0.0
        %3791 = vmatpush.msra.mxu0 0.0
        %3792 = vmatpush.msra.mxu0 0.0
        %3793 = vmatpush.msra.mxu0 0.0
        %3794 = vmatpush.msra.mxu0 0.0
        %3795 = vmatpush.msra.mxu0 0.0
        %3796 = vmatpush.msra.mxu0 0.0
        %3797 = vmatpush.msra.mxu0 0.0
        %3798 = vmatpush.msra.mxu0 0.0
        %3799 = vmatpush.msra.mxu0 0.0
        %3800 = vmatpush.msra.mxu0 0.0
        %3801 = vmatpush.msra.mxu0 %v3720
        %3802 = vmatpush.msra.mxu0 %v3663
        %3803 = vmatpush.msra.mxu0 %v3660
        %3804 = vmatpush.msra.mxu0 %v3657
        %3805 = vmatpush.msra.mxu0 %v3654
        %3806 = vmatmul.f32.gmra.mxu0 %v3669
        %v3807 = vpop.f32.mrf.mxu0
        %v3808 = vadd.f32 0.0, %v3807
        %3809 = vmatmul.f32.gmra.mxu0 %v3672
        %v3810 = vpop.f32.mrf.mxu0
        %v3811 = vadd.f32 0.0, %v3810
        %3812 = vmatmul.f32.gmra.mxu0 %v3675
        %v3813 = vpop.f32.mrf.mxu0
        %v3814 = vadd.f32 0.0, %v3813
        %3815 = vmatmul.f32.gmra.mxu0 %v3678
        %v3816 = vpop.f32.mrf.mxu0
        %v3817 = vadd.f32 0.0, %v3816
        %3818 = vmatmul.f32.gmra.mxu0 %v3681
        %v3819 = vpop.f32.mrf.mxu0
        %v3820 = vadd.f32 0.0, %v3819
        %3821 = vmatmul.f32.gmra.mxu0 %v3684
        %v3822 = vpop.f32.mrf.mxu0
        %v3823 = vadd.f32 0.0, %v3822
        %3824 = vmatmul.f32.gmra.mxu0 %v3687
        %v3825 = vpop.f32.mrf.mxu0
        %v3826 = vadd.f32 0.0, %v3825
        %3827 = vmatmul.f32.gmra.mxu0 %v3690
        %v3828 = vpop.f32.mrf.mxu0
        %v3829 = vadd.f32 0.0, %v3828
        %3830 = vmatmul.f32.gmra.mxu0 %v3693
        %v3831 = vpop.f32.mrf.mxu0
        %v3832 = vadd.f32 0.0, %v3831
        %3833 = vmatmul.f32.gmra.mxu0 %v3696
        %v3834 = vpop.f32.mrf.mxu0
        %v3835 = vadd.f32 0.0, %v3834
        %3836 = vmatmul.f32.gmra.mxu0 %v3699
        %v3837 = vpop.f32.mrf.mxu0
        %v3838 = vadd.f32 0.0, %v3837
        %3839 = vmatmul.f32.gmra.mxu0 %v3702
        %v3840 = vpop.f32.mrf.mxu0
        %v3841 = vadd.f32 0.0, %v3840
        %3842 = vmatmul.f32.gmra.mxu0 %v3705
        %v3843 = vpop.f32.mrf.mxu0
        %v3844 = vadd.f32 0.0, %v3843
        %3845 = vmatmul.f32.gmra.mxu0 %v3708
        %v3846 = vpop.f32.mrf.mxu0
        %v3847 = vadd.f32 0.0, %v3846
        %3848 = vmatmul.f32.gmra.mxu0 %v3711
        %v3849 = vpop.f32.mrf.mxu0
        %v3850 = vadd.f32 0.0, %v3849
        %3851 = vmatmul.f32.gmra.mxu0 %v3714
        %v3852 = vpop.f32.mrf.mxu0
        %v3853 = vadd.f32 0.0, %v3852
        %3854 = vdwg.mxu0
        %3855 = vmatpush.msra.mxu0 0.0
        %3856 = vmatpush.msra.mxu0 0.0
        %3857 = vmatpush.msra.mxu0 0.0
        %3858 = vmatpush.msra.mxu0 0.0
        %3859 = vmatpush.msra.mxu0 0.0
        %3860 = vmatpush.msra.mxu0 0.0
        %3861 = vmatpush.msra.mxu0 0.0
        %3862 = vmatpush.msra.mxu0 0.0
        %3863 = vmatpush.msra.mxu0 0.0
        %3864 = vmatpush.msra.mxu0 0.0
        %3865 = vmatpush.msra.mxu0 0.0
        %3866 = vmatpush.msra.mxu0 %v3723
        %3867 = vmatpush.msra.mxu0 %v3664
        %3868 = vmatpush.msra.mxu0 %v3661
        %3869 = vmatpush.msra.mxu0 %v3658
        %3870 = vmatpush.msra.mxu0 %v3655
        %3871 = vmatmul.f32.gmra.mxu0 %v3669
        %v3872 = vpop.f32.mrf.mxu0
        %v3873 = vadd.f32 0.0, %v3872
        %3874 = vmatmul.f32.gmra.mxu0 %v3672
        %v3875 = vpop.f32.mrf.mxu0
        %v3876 = vadd.f32 0.0, %v3875
        %3877 = vmatmul.f32.gmra.mxu0 %v3675
        %v3878 = vpop.f32.mrf.mxu0
        %v3879 = vadd.f32 0.0, %v3878
        %3880 = vmatmul.f32.gmra.mxu0 %v3678
        %v3881 = vpop.f32.mrf.mxu0
        %v3882 = vadd.f32 0.0, %v3881
        %3883 = vmatmul.f32.gmra.mxu0 %v3681
        %v3884 = vpop.f32.mrf.mxu0
        %v3885 = vadd.f32 0.0, %v3884
        %3886 = vmatmul.f32.gmra.mxu0 %v3684
        %v3887 = vpop.f32.mrf.mxu0
        %v3888 = vadd.f32 0.0, %v3887
        %3889 = vmatmul.f32.gmra.mxu0 %v3687
        %v3890 = vpop.f32.mrf.mxu0
        %v3891 = vadd.f32 0.0, %v3890
        %3892 = vmatmul.f32.gmra.mxu0 %v3690
        %v3893 = vpop.f32.mrf.mxu0
        %v3894 = vadd.f32 0.0, %v3893
        %3895 = vmatmul.f32.gmra.mxu0 %v3693
        %v3896 = vpop.f32.mrf.mxu0
        %v3897 = vadd.f32 0.0, %v3896
        %3898 = vmatmul.f32.gmra.mxu0 %v3696
        %v3899 = vpop.f32.mrf.mxu0
        %v3900 = vadd.f32 0.0, %v3899
        %3901 = vmatmul.f32.gmra.mxu0 %v3699
        %v3902 = vpop.f32.mrf.mxu0
        %v3903 = vadd.f32 0.0, %v3902
        %3904 = vmatmul.f32.gmra.mxu0 %v3702
        %v3905 = vpop.f32.mrf.mxu0
        %v3906 = vadd.f32 0.0, %v3905
        %3907 = vmatmul.f32.gmra.mxu0 %v3705
        %v3908 = vpop.f32.mrf.mxu0
        %v3909 = vadd.f32 0.0, %v3908
        %3910 = vmatmul.f32.gmra.mxu0 %v3708
        %v3911 = vpop.f32.mrf.mxu0
        %v3912 = vadd.f32 0.0, %v3911
        %3913 = vmatmul.f32.gmra.mxu0 %v3711
        %v3914 = vpop.f32.mrf.mxu0
        %v3915 = vadd.f32 0.0, %v3914
        %3916 = vmatmul.f32.gmra.mxu0 %v3714
        %v3917 = vpop.f32.mrf.mxu0
        %v3918 = vadd.f32 0.0, %v3917
        %3919 = vdwg.mxu0
        %v3920 = vadd.f32 %v3604, %v3743
        %v3921 = vadd.f32 %v3605, %v3808
        %v3922 = vadd.f32 %v3606, %v3873
        %v3923 = vadd.f32 %v3607, %v3746
        %v3924 = vadd.f32 %v3608, %v3811
        %v3925 = vadd.f32 %v3609, %v3876
        %v3926 = vadd.f32 %v3610, %v3749
        %v3927 = vadd.f32 %v3611, %v3814
        %v3928 = vadd.f32 %v3612, %v3879
        %v3929 = vadd.f32 %v3613, %v3752
        %v3930 = vadd.f32 %v3614, %v3817
        %v3931 = vadd.f32 %v3615, %v3882
        %v3932 = vadd.f32 %v3616, %v3755
        %v3933 = vadd.f32 %v3617, %v3820
        %v3934 = vadd.f32 %v3618, %v3885
        %v3935 = vadd.f32 %v3619, %v3758
        %v3936 = vadd.f32 %v3620, %v3823
        %v3937 = vadd.f32 %v3621, %v3888
        %v3938 = vadd.f32 %v3622, %v3761
        %v3939 = vadd.f32 %v3623, %v3826
        %v3940 = vadd.f32 %v3624, %v3891
        %v3941 = vadd.f32 %v3625, %v3764
        %v3942 = vadd.f32 %v3626, %v3829
        %v3943 = vadd.f32 %v3627, %v3894
        %v3944 = vadd.f32 %v3628, %v3767
        %v3945 = vadd.f32 %v3629, %v3832
        %v3946 = vadd.f32 %v3630, %v3897
        %v3947 = vadd.f32 %v3631, %v3770
        %v3948 = vadd.f32 %v3632, %v3835
        %v3949 = vadd.f32 %v3633, %v3900
        %v3950 = vadd.f32 %v3634, %v3773
        %v3951 = vadd.f32 %v3635, %v3838
        %v3952 = vadd.f32 %v3636, %v3903
        %v3953 = vadd.f32 %v3637, %v3776
        %v3954 = vadd.f32 %v3638, %v3841
        %v3955 = vadd.f32 %v3639, %v3906
        %v3956 = vadd.f32 %v3640, %v3779
        %v3957 = vadd.f32 %v3641, %v3844
        %v3958 = vadd.f32 %v3642, %v3909
        %v3959 = vadd.f32 %v3643, %v3782
        %v3960 = vadd.f32 %v3644, %v3847
        %v3961 = vadd.f32 %v3645, %v3912
        %v3962 = vadd.f32 %v3646, %v3785
        %v3963 = vadd.f32 %v3647, %v3850
        %v3964 = vadd.f32 %v3648, %v3915
        %v3965 = vadd.f32 %v3649, %v3788
        %v3966 = vadd.f32 %v3650, %v3853
        %v3967 = vadd.f32 %v3651, %v3918
        %s3968 = scalar_lea.vmem %s2, 600
        %v3969 = vld [vmem:[%s3968] sm:$0xff]
        %v3970 = vld [vmem:[%s3968 + $0x8] sm:$0xff]
        %v3971 = vld [vmem:[%s3968 + $0x10] sm:$0xff]
        %v3972 = vld [vmem:[%s3968 + $0x18] sm:$0xff]
        %v3973 = vld [vmem:[%s3968 + $0x20] sm:$0xff]
        %v3974 = vld [vmem:[%s3968 + $0x28] sm:$0xff]
        %v3975 = vld [vmem:[%s3968 + $0x30] sm:$0xff]
        %v3976 = vld [vmem:[%s3968 + $0x38] sm:$0xff]
        %v3977 = vld [vmem:[%s3968 + $0x40] sm:$0xff]
        %v3978 = vld [vmem:[%s3968 + $0x48] sm:$0xff]
        %v3979 = vld [vmem:[%s3968 + $0x50] sm:$0xff]
        %v3980 = vld [vmem:[%s3968 + $0x58] sm:$0xff]
        %v3981 = vld [vmem:[%s3968 + $0x60] sm:$0xf]
        %v3982 = vld [vmem:[%s3968 + $0x68] sm:$0xf]
        %v3983 = vld [vmem:[%s3968 + $0x70] sm:$0xf]
        %v3985 = vsel %vm2514, %v2340, 0
        %v3988 = vsel %vm2514, %v2343, 0
        %v3991 = vsel %vm2514, %v2346, 0
        %v3994 = vsel %vm2514, %v2349, 0
        %v3997 = vsel %vm2514, %v2352, 0
        %v4000 = vsel %vm2514, %v2355, 0
        %v4003 = vsel %vm2514, %v2358, 0
        %v4006 = vsel %vm2514, %v2361, 0
        %v4009 = vsel %vm2514, %v2364, 0
        %v4012 = vsel %vm2514, %v2367, 0
        %v4015 = vsel %vm2514, %v2370, 0
        %v4018 = vsel %vm2514, %v2373, 0
        %v4021 = vsel %vm2514, %v2376, 0
        %v4024 = vsel %vm2514, %v2379, 0
        %v4027 = vsel %vm2514, %v2382, 0
        %v4030 = vsel %vm2514, %v2385, 0
        %v4033 = vsel %vm2563, %v3981, 0
        %v4036 = vsel %vm2563, %v3982, 0
        %v4039 = vsel %vm2563, %v3983, 0
        %4041 = vmatpush.msra.mxu0 0.0
        %4042 = vmatpush.msra.mxu0 0.0
        %4043 = vmatpush.msra.mxu0 0.0
        %4044 = vmatpush.msra.mxu0 0.0
        %4045 = vmatpush.msra.mxu0 0.0
        %4046 = vmatpush.msra.mxu0 0.0
        %4047 = vmatpush.msra.mxu0 0.0
        %4048 = vmatpush.msra.mxu0 0.0
        %4049 = vmatpush.msra.mxu0 0.0
        %4050 = vmatpush.msra.mxu0 0.0
        %4051 = vmatpush.msra.mxu0 0.0
        %4052 = vmatpush.msra.mxu0 %v4033
        %4053 = vmatpush.msra.mxu0 %v3978
        %4054 = vmatpush.msra.mxu0 %v3975
        %4055 = vmatpush.msra.mxu0 %v3972
        %4056 = vmatpush.msra.mxu0 %v3969
        %4057 = vmatmul.f32.gmra.mxu0 %v3985
        %v4058 = vpop.f32.mrf.mxu0
        %v4059 = vadd.f32 0.0, %v4058
        %4060 = vmatmul.f32.gmra.mxu0 %v3988
        %v4061 = vpop.f32.mrf.mxu0
        %v4062 = vadd.f32 0.0, %v4061
        %4063 = vmatmul.f32.gmra.mxu0 %v3991
        %v4064 = vpop.f32.mrf.mxu0
        %v4065 = vadd.f32 0.0, %v4064
        %4066 = vmatmul.f32.gmra.mxu0 %v3994
        %v4067 = vpop.f32.mrf.mxu0
        %v4068 = vadd.f32 0.0, %v4067
        %4069 = vmatmul.f32.gmra.mxu0 %v3997
        %v4070 = vpop.f32.mrf.mxu0
        %v4071 = vadd.f32 0.0, %v4070
        %4072 = vmatmul.f32.gmra.mxu0 %v4000
        %v4073 = vpop.f32.mrf.mxu0
        %v4074 = vadd.f32 0.0, %v4073
        %4075 = vmatmul.f32.gmra.mxu0 %v4003
        %v4076 = vpop.f32.mrf.mxu0
        %v4077 = vadd.f32 0.0, %v4076
        %4078 = vmatmul.f32.gmra.mxu0 %v4006
        %v4079 = vpop.f32.mrf.mxu0
        %v4080 = vadd.f32 0.0, %v4079
        %4081 = vmatmul.f32.gmra.mxu0 %v4009
        %v4082 = vpop.f32.mrf.mxu0
        %v4083 = vadd.f32 0.0, %v4082
        %4084 = vmatmul.f32.gmra.mxu0 %v4012
        %v4085 = vpop.f32.mrf.mxu0
        %v4086 = vadd.f32 0.0, %v4085
        %4087 = vmatmul.f32.gmra.mxu0 %v4015
        %v4088 = vpop.f32.mrf.mxu0
        %v4089 = vadd.f32 0.0, %v4088
        %4090 = vmatmul.f32.gmra.mxu0 %v4018
        %v4091 = vpop.f32.mrf.mxu0
        %v4092 = vadd.f32 0.0, %v4091
        %4093 = vmatmul.f32.gmra.mxu0 %v4021
        %v4094 = vpop.f32.mrf.mxu0
        %v4095 = vadd.f32 0.0, %v4094
        %4096 = vmatmul.f32.gmra.mxu0 %v4024
        %v4097 = vpop.f32.mrf.mxu0
        %v4098 = vadd.f32 0.0, %v4097
        %4099 = vmatmul.f32.gmra.mxu0 %v4027
        %v4100 = vpop.f32.mrf.mxu0
        %v4101 = vadd.f32 0.0, %v4100
        %4102 = vmatmul.f32.gmra.mxu0 %v4030
        %v4103 = vpop.f32.mrf.mxu0
        %v4104 = vadd.f32 0.0, %v4103
        %4105 = vdwg.mxu0
        %4106 = vmatpush.msra.mxu0 0.0
        %4107 = vmatpush.msra.mxu0 0.0
        %4108 = vmatpush.msra.mxu0 0.0
        %4109 = vmatpush.msra.mxu0 0.0
        %4110 = vmatpush.msra.mxu0 0.0
        %4111 = vmatpush.msra.mxu0 0.0
        %4112 = vmatpush.msra.mxu0 0.0
        %4113 = vmatpush.msra.mxu0 0.0
        %4114 = vmatpush.msra.mxu0 0.0
        %4115 = vmatpush.msra.mxu0 0.0
        %4116 = vmatpush.msra.mxu0 0.0
        %4117 = vmatpush.msra.mxu0 %v4036
        %4118 = vmatpush.msra.mxu0 %v3979
        %4119 = vmatpush.msra.mxu0 %v3976
        %4120 = vmatpush.msra.mxu0 %v3973
        %4121 = vmatpush.msra.mxu0 %v3970
        %4122 = vmatmul.f32.gmra.mxu0 %v3985
        %v4123 = vpop.f32.mrf.mxu0
        %v4124 = vadd.f32 0.0, %v4123
        %4125 = vmatmul.f32.gmra.mxu0 %v3988
        %v4126 = vpop.f32.mrf.mxu0
        %v4127 = vadd.f32 0.0, %v4126
        %4128 = vmatmul.f32.gmra.mxu0 %v3991
        %v4129 = vpop.f32.mrf.mxu0
        %v4130 = vadd.f32 0.0, %v4129
        %4131 = vmatmul.f32.gmra.mxu0 %v3994
        %v4132 = vpop.f32.mrf.mxu0
        %v4133 = vadd.f32 0.0, %v4132
        %4134 = vmatmul.f32.gmra.mxu0 %v3997
        %v4135 = vpop.f32.mrf.mxu0
        %v4136 = vadd.f32 0.0, %v4135
        %4137 = vmatmul.f32.gmra.mxu0 %v4000
        %v4138 = vpop.f32.mrf.mxu0
        %v4139 = vadd.f32 0.0, %v4138
        %4140 = vmatmul.f32.gmra.mxu0 %v4003
        %v4141 = vpop.f32.mrf.mxu0
        %v4142 = vadd.f32 0.0, %v4141
        %4143 = vmatmul.f32.gmra.mxu0 %v4006
        %v4144 = vpop.f32.mrf.mxu0
        %v4145 = vadd.f32 0.0, %v4144
        %4146 = vmatmul.f32.gmra.mxu0 %v4009
        %v4147 = vpop.f32.mrf.mxu0
        %v4148 = vadd.f32 0.0, %v4147
        %4149 = vmatmul.f32.gmra.mxu0 %v4012
        %v4150 = vpop.f32.mrf.mxu0
        %v4151 = vadd.f32 0.0, %v4150
        %4152 = vmatmul.f32.gmra.mxu0 %v4015
        %v4153 = vpop.f32.mrf.mxu0
        %v4154 = vadd.f32 0.0, %v4153
        %4155 = vmatmul.f32.gmra.mxu0 %v4018
        %v4156 = vpop.f32.mrf.mxu0
        %v4157 = vadd.f32 0.0, %v4156
        %4158 = vmatmul.f32.gmra.mxu0 %v4021
        %v4159 = vpop.f32.mrf.mxu0
        %v4160 = vadd.f32 0.0, %v4159
        %4161 = vmatmul.f32.gmra.mxu0 %v4024
        %v4162 = vpop.f32.mrf.mxu0
        %v4163 = vadd.f32 0.0, %v4162
        %4164 = vmatmul.f32.gmra.mxu0 %v4027
        %v4165 = vpop.f32.mrf.mxu0
        %v4166 = vadd.f32 0.0, %v4165
        %4167 = vmatmul.f32.gmra.mxu0 %v4030
        %v4168 = vpop.f32.mrf.mxu0
        %v4169 = vadd.f32 0.0, %v4168
        %4170 = vdwg.mxu0
        %4171 = vmatpush.msra.mxu0 0.0
        %4172 = vmatpush.msra.mxu0 0.0
        %4173 = vmatpush.msra.mxu0 0.0
        %4174 = vmatpush.msra.mxu0 0.0
        %4175 = vmatpush.msra.mxu0 0.0
        %4176 = vmatpush.msra.mxu0 0.0
        %4177 = vmatpush.msra.mxu0 0.0
        %4178 = vmatpush.msra.mxu0 0.0
        %4179 = vmatpush.msra.mxu0 0.0
        %4180 = vmatpush.msra.mxu0 0.0
        %4181 = vmatpush.msra.mxu0 0.0
        %4182 = vmatpush.msra.mxu0 %v4039
        %4183 = vmatpush.msra.mxu0 %v3980
        %4184 = vmatpush.msra.mxu0 %v3977
        %4185 = vmatpush.msra.mxu0 %v3974
        %4186 = vmatpush.msra.mxu0 %v3971
        %4187 = vmatmul.f32.gmra.mxu0 %v3985
        %v4188 = vpop.f32.mrf.mxu0
        %v4189 = vadd.f32 0.0, %v4188
        %4190 = vmatmul.f32.gmra.mxu0 %v3988
        %v4191 = vpop.f32.mrf.mxu0
        %v4192 = vadd.f32 0.0, %v4191
        %4193 = vmatmul.f32.gmra.mxu0 %v3991
        %v4194 = vpop.f32.mrf.mxu0
        %v4195 = vadd.f32 0.0, %v4194
        %4196 = vmatmul.f32.gmra.mxu0 %v3994
        %v4197 = vpop.f32.mrf.mxu0
        %v4198 = vadd.f32 0.0, %v4197
        %4199 = vmatmul.f32.gmra.mxu0 %v3997
        %v4200 = vpop.f32.mrf.mxu0
        %v4201 = vadd.f32 0.0, %v4200
        %4202 = vmatmul.f32.gmra.mxu0 %v4000
        %v4203 = vpop.f32.mrf.mxu0
        %v4204 = vadd.f32 0.0, %v4203
        %4205 = vmatmul.f32.gmra.mxu0 %v4003
        %v4206 = vpop.f32.mrf.mxu0
        %v4207 = vadd.f32 0.0, %v4206
        %4208 = vmatmul.f32.gmra.mxu0 %v4006
        %v4209 = vpop.f32.mrf.mxu0
        %v4210 = vadd.f32 0.0, %v4209
        %4211 = vmatmul.f32.gmra.mxu0 %v4009
        %v4212 = vpop.f32.mrf.mxu0
        %v4213 = vadd.f32 0.0, %v4212
        %4214 = vmatmul.f32.gmra.mxu0 %v4012
        %v4215 = vpop.f32.mrf.mxu0
        %v4216 = vadd.f32 0.0, %v4215
        %4217 = vmatmul.f32.gmra.mxu0 %v4015
        %v4218 = vpop.f32.mrf.mxu0
        %v4219 = vadd.f32 0.0, %v4218
        %4220 = vmatmul.f32.gmra.mxu0 %v4018
        %v4221 = vpop.f32.mrf.mxu0
        %v4222 = vadd.f32 0.0, %v4221
        %4223 = vmatmul.f32.gmra.mxu0 %v4021
        %v4224 = vpop.f32.mrf.mxu0
        %v4225 = vadd.f32 0.0, %v4224
        %4226 = vmatmul.f32.gmra.mxu0 %v4024
        %v4227 = vpop.f32.mrf.mxu0
        %v4228 = vadd.f32 0.0, %v4227
        %4229 = vmatmul.f32.gmra.mxu0 %v4027
        %v4230 = vpop.f32.mrf.mxu0
        %v4231 = vadd.f32 0.0, %v4230
        %4232 = vmatmul.f32.gmra.mxu0 %v4030
        %v4233 = vpop.f32.mrf.mxu0
        %v4234 = vadd.f32 0.0, %v4233
        %4235 = vdwg.mxu0
        %v4236 = vadd.f32 %v3920, %v4059
        %v4237 = vadd.f32 %v3921, %v4124
        %v4238 = vadd.f32 %v3922, %v4189
        %v4239 = vadd.f32 %v3923, %v4062
        %v4240 = vadd.f32 %v3924, %v4127
        %v4241 = vadd.f32 %v3925, %v4192
        %v4242 = vadd.f32 %v3926, %v4065
        %v4243 = vadd.f32 %v3927, %v4130
        %v4244 = vadd.f32 %v3928, %v4195
        %v4245 = vadd.f32 %v3929, %v4068
        %v4246 = vadd.f32 %v3930, %v4133
        %v4247 = vadd.f32 %v3931, %v4198
        %v4248 = vadd.f32 %v3932, %v4071
        %v4249 = vadd.f32 %v3933, %v4136
        %v4250 = vadd.f32 %v3934, %v4201
        %v4251 = vadd.f32 %v3935, %v4074
        %v4252 = vadd.f32 %v3936, %v4139
        %v4253 = vadd.f32 %v3937, %v4204
        %v4254 = vadd.f32 %v3938, %v4077
        %v4255 = vadd.f32 %v3939, %v4142
        %v4256 = vadd.f32 %v3940, %v4207
        %v4257 = vadd.f32 %v3941, %v4080
        %v4258 = vadd.f32 %v3942, %v4145
        %v4259 = vadd.f32 %v3943, %v4210
        %v4260 = vadd.f32 %v3944, %v4083
        %v4261 = vadd.f32 %v3945, %v4148
        %v4262 = vadd.f32 %v3946, %v4213
        %v4263 = vadd.f32 %v3947, %v4086
        %v4264 = vadd.f32 %v3948, %v4151
        %v4265 = vadd.f32 %v3949, %v4216
        %v4266 = vadd.f32 %v3950, %v4089
        %v4267 = vadd.f32 %v3951, %v4154
        %v4268 = vadd.f32 %v3952, %v4219
        %v4269 = vadd.f32 %v3953, %v4092
        %v4270 = vadd.f32 %v3954, %v4157
        %v4271 = vadd.f32 %v3955, %v4222
        %v4272 = vadd.f32 %v3956, %v4095
        %v4273 = vadd.f32 %v3957, %v4160
        %v4274 = vadd.f32 %v3958, %v4225
        %v4275 = vadd.f32 %v3959, %v4098
        %v4276 = vadd.f32 %v3960, %v4163
        %v4277 = vadd.f32 %v3961, %v4228
        %v4278 = vadd.f32 %v3962, %v4101
        %v4279 = vadd.f32 %v3963, %v4166
        %v4280 = vadd.f32 %v3964, %v4231
        %v4281 = vadd.f32 %v3965, %v4104
        %v4282 = vadd.f32 %v3966, %v4169
        %v4283 = vadd.f32 %v3967, %v4234
        %s4284 = scalar_lea.vmem %s2, 720
        %v4285 = vld [vmem:[%s4284] sm:$0xff]
        %v4286 = vld [vmem:[%s4284 + $0x8] sm:$0xff]
        %v4287 = vld [vmem:[%s4284 + $0x10] sm:$0xff]
        %v4288 = vld [vmem:[%s4284 + $0x18] sm:$0xff]
        %v4289 = vld [vmem:[%s4284 + $0x20] sm:$0xff]
        %v4290 = vld [vmem:[%s4284 + $0x28] sm:$0xff]
        %v4291 = vld [vmem:[%s4284 + $0x30] sm:$0xff]
        %v4292 = vld [vmem:[%s4284 + $0x38] sm:$0xff]
        %v4293 = vld [vmem:[%s4284 + $0x40] sm:$0xff]
        %v4294 = vld [vmem:[%s4284 + $0x48] sm:$0xff]
        %v4295 = vld [vmem:[%s4284 + $0x50] sm:$0xff]
        %v4296 = vld [vmem:[%s4284 + $0x58] sm:$0xff]
        %v4297 = vld [vmem:[%s4284 + $0x60] sm:$0xf]
        %v4298 = vld [vmem:[%s4284 + $0x68] sm:$0xf]
        %v4299 = vld [vmem:[%s4284 + $0x70] sm:$0xf]
        %v4301 = vsel %vm2514, %v2388, 0
        %v4304 = vsel %vm2514, %v2391, 0
        %v4307 = vsel %vm2514, %v2394, 0
        %v4310 = vsel %vm2514, %v2397, 0
        %v4313 = vsel %vm2514, %v2400, 0
        %v4316 = vsel %vm2514, %v2403, 0
        %v4319 = vsel %vm2514, %v2406, 0
        %v4322 = vsel %vm2514, %v2409, 0
        %v4325 = vsel %vm2514, %v2412, 0
        %v4328 = vsel %vm2514, %v2415, 0
        %v4331 = vsel %vm2514, %v2418, 0
        %v4334 = vsel %vm2514, %v2421, 0
        %v4337 = vsel %vm2514, %v2424, 0
        %v4340 = vsel %vm2514, %v2427, 0
        %v4343 = vsel %vm2514, %v2430, 0
        %v4346 = vsel %vm2514, %v2433, 0
        %v4349 = vsel %vm2563, %v4297, 0
        %v4352 = vsel %vm2563, %v4298, 0
        %v4355 = vsel %vm2563, %v4299, 0
        %4357 = vmatpush.msra.mxu0 0.0
        %4358 = vmatpush.msra.mxu0 0.0
        %4359 = vmatpush.msra.mxu0 0.0
        %4360 = vmatpush.msra.mxu0 0.0
        %4361 = vmatpush.msra.mxu0 0.0
        %4362 = vmatpush.msra.mxu0 0.0
        %4363 = vmatpush.msra.mxu0 0.0
        %4364 = vmatpush.msra.mxu0 0.0
        %4365 = vmatpush.msra.mxu0 0.0
        %4366 = vmatpush.msra.mxu0 0.0
        %4367 = vmatpush.msra.mxu0 0.0
        %4368 = vmatpush.msra.mxu0 %v4349
        %4369 = vmatpush.msra.mxu0 %v4294
        %4370 = vmatpush.msra.mxu0 %v4291
        %4371 = vmatpush.msra.mxu0 %v4288
        %4372 = vmatpush.msra.mxu0 %v4285
        %4373 = vmatmul.f32.gmra.mxu0 %v4301
        %v4374 = vpop.f32.mrf.mxu0
        %v4375 = vadd.f32 0.0, %v4374
        %4376 = vmatmul.f32.gmra.mxu0 %v4304
        %v4377 = vpop.f32.mrf.mxu0
        %v4378 = vadd.f32 0.0, %v4377
        %4379 = vmatmul.f32.gmra.mxu0 %v4307
        %v4380 = vpop.f32.mrf.mxu0
        %v4381 = vadd.f32 0.0, %v4380
        %4382 = vmatmul.f32.gmra.mxu0 %v4310
        %v4383 = vpop.f32.mrf.mxu0
        %v4384 = vadd.f32 0.0, %v4383
        %4385 = vmatmul.f32.gmra.mxu0 %v4313
        %v4386 = vpop.f32.mrf.mxu0
        %v4387 = vadd.f32 0.0, %v4386
        %4388 = vmatmul.f32.gmra.mxu0 %v4316
        %v4389 = vpop.f32.mrf.mxu0
        %v4390 = vadd.f32 0.0, %v4389
        %4391 = vmatmul.f32.gmra.mxu0 %v4319
        %v4392 = vpop.f32.mrf.mxu0
        %v4393 = vadd.f32 0.0, %v4392
        %4394 = vmatmul.f32.gmra.mxu0 %v4322
        %v4395 = vpop.f32.mrf.mxu0
        %v4396 = vadd.f32 0.0, %v4395
        %4397 = vmatmul.f32.gmra.mxu0 %v4325
        %v4398 = vpop.f32.mrf.mxu0
        %v4399 = vadd.f32 0.0, %v4398
        %4400 = vmatmul.f32.gmra.mxu0 %v4328
        %v4401 = vpop.f32.mrf.mxu0
        %v4402 = vadd.f32 0.0, %v4401
        %4403 = vmatmul.f32.gmra.mxu0 %v4331
        %v4404 = vpop.f32.mrf.mxu0
        %v4405 = vadd.f32 0.0, %v4404
        %4406 = vmatmul.f32.gmra.mxu0 %v4334
        %v4407 = vpop.f32.mrf.mxu0
        %v4408 = vadd.f32 0.0, %v4407
        %4409 = vmatmul.f32.gmra.mxu0 %v4337
        %v4410 = vpop.f32.mrf.mxu0
        %v4411 = vadd.f32 0.0, %v4410
        %4412 = vmatmul.f32.gmra.mxu0 %v4340
        %v4413 = vpop.f32.mrf.mxu0
        %v4414 = vadd.f32 0.0, %v4413
        %4415 = vmatmul.f32.gmra.mxu0 %v4343
        %v4416 = vpop.f32.mrf.mxu0
        %v4417 = vadd.f32 0.0, %v4416
        %4418 = vmatmul.f32.gmra.mxu0 %v4346
        %v4419 = vpop.f32.mrf.mxu0
        %v4420 = vadd.f32 0.0, %v4419
        %4421 = vdwg.mxu0
        %4422 = vmatpush.msra.mxu0 0.0
        %4423 = vmatpush.msra.mxu0 0.0
        %4424 = vmatpush.msra.mxu0 0.0
        %4425 = vmatpush.msra.mxu0 0.0
        %4426 = vmatpush.msra.mxu0 0.0
        %4427 = vmatpush.msra.mxu0 0.0
        %4428 = vmatpush.msra.mxu0 0.0
        %4429 = vmatpush.msra.mxu0 0.0
        %4430 = vmatpush.msra.mxu0 0.0
        %4431 = vmatpush.msra.mxu0 0.0
        %4432 = vmatpush.msra.mxu0 0.0
        %4433 = vmatpush.msra.mxu0 %v4352
        %4434 = vmatpush.msra.mxu0 %v4295
        %4435 = vmatpush.msra.mxu0 %v4292
        %4436 = vmatpush.msra.mxu0 %v4289
        %4437 = vmatpush.msra.mxu0 %v4286
        %4438 = vmatmul.f32.gmra.mxu0 %v4301
        %v4439 = vpop.f32.mrf.mxu0
        %v4440 = vadd.f32 0.0, %v4439
        %4441 = vmatmul.f32.gmra.mxu0 %v4304
        %v4442 = vpop.f32.mrf.mxu0
        %v4443 = vadd.f32 0.0, %v4442
        %4444 = vmatmul.f32.gmra.mxu0 %v4307
        %v4445 = vpop.f32.mrf.mxu0
        %v4446 = vadd.f32 0.0, %v4445
        %4447 = vmatmul.f32.gmra.mxu0 %v4310
        %v4448 = vpop.f32.mrf.mxu0
        %v4449 = vadd.f32 0.0, %v4448
        %4450 = vmatmul.f32.gmra.mxu0 %v4313
        %v4451 = vpop.f32.mrf.mxu0
        %v4452 = vadd.f32 0.0, %v4451
        %4453 = vmatmul.f32.gmra.mxu0 %v4316
        %v4454 = vpop.f32.mrf.mxu0
        %v4455 = vadd.f32 0.0, %v4454
        %4456 = vmatmul.f32.gmra.mxu0 %v4319
        %v4457 = vpop.f32.mrf.mxu0
        %v4458 = vadd.f32 0.0, %v4457
        %4459 = vmatmul.f32.gmra.mxu0 %v4322
        %v4460 = vpop.f32.mrf.mxu0
        %v4461 = vadd.f32 0.0, %v4460
        %4462 = vmatmul.f32.gmra.mxu0 %v4325
        %v4463 = vpop.f32.mrf.mxu0
        %v4464 = vadd.f32 0.0, %v4463
        %4465 = vmatmul.f32.gmra.mxu0 %v4328
        %v4466 = vpop.f32.mrf.mxu0
        %v4467 = vadd.f32 0.0, %v4466
        %4468 = vmatmul.f32.gmra.mxu0 %v4331
        %v4469 = vpop.f32.mrf.mxu0
        %v4470 = vadd.f32 0.0, %v4469
        %4471 = vmatmul.f32.gmra.mxu0 %v4334
        %v4472 = vpop.f32.mrf.mxu0
        %v4473 = vadd.f32 0.0, %v4472
        %4474 = vmatmul.f32.gmra.mxu0 %v4337
        %v4475 = vpop.f32.mrf.mxu0
        %v4476 = vadd.f32 0.0, %v4475
        %4477 = vmatmul.f32.gmra.mxu0 %v4340
        %v4478 = vpop.f32.mrf.mxu0
        %v4479 = vadd.f32 0.0, %v4478
        %4480 = vmatmul.f32.gmra.mxu0 %v4343
        %v4481 = vpop.f32.mrf.mxu0
        %v4482 = vadd.f32 0.0, %v4481
        %4483 = vmatmul.f32.gmra.mxu0 %v4346
        %v4484 = vpop.f32.mrf.mxu0
        %v4485 = vadd.f32 0.0, %v4484
        %4486 = vdwg.mxu0
        %4487 = vmatpush.msra.mxu0 0.0
        %4488 = vmatpush.msra.mxu0 0.0
        %4489 = vmatpush.msra.mxu0 0.0
        %4490 = vmatpush.msra.mxu0 0.0
        %4491 = vmatpush.msra.mxu0 0.0
        %4492 = vmatpush.msra.mxu0 0.0
        %4493 = vmatpush.msra.mxu0 0.0
        %4494 = vmatpush.msra.mxu0 0.0
        %4495 = vmatpush.msra.mxu0 0.0
        %4496 = vmatpush.msra.mxu0 0.0
        %4497 = vmatpush.msra.mxu0 0.0
        %4498 = vmatpush.msra.mxu0 %v4355
        %4499 = vmatpush.msra.mxu0 %v4296
        %4500 = vmatpush.msra.mxu0 %v4293
        %4501 = vmatpush.msra.mxu0 %v4290
        %4502 = vmatpush.msra.mxu0 %v4287
        %4503 = vmatmul.f32.gmra.mxu0 %v4301
        %v4504 = vpop.f32.mrf.mxu0
        %v4505 = vadd.f32 0.0, %v4504
        %4506 = vmatmul.f32.gmra.mxu0 %v4304
        %v4507 = vpop.f32.mrf.mxu0
        %v4508 = vadd.f32 0.0, %v4507
        %4509 = vmatmul.f32.gmra.mxu0 %v4307
        %v4510 = vpop.f32.mrf.mxu0
        %v4511 = vadd.f32 0.0, %v4510
        %4512 = vmatmul.f32.gmra.mxu0 %v4310
        %v4513 = vpop.f32.mrf.mxu0
        %v4514 = vadd.f32 0.0, %v4513
        %4515 = vmatmul.f32.gmra.mxu0 %v4313
        %v4516 = vpop.f32.mrf.mxu0
        %v4517 = vadd.f32 0.0, %v4516
        %4518 = vmatmul.f32.gmra.mxu0 %v4316
        %v4519 = vpop.f32.mrf.mxu0
        %v4520 = vadd.f32 0.0, %v4519
        %4521 = vmatmul.f32.gmra.mxu0 %v4319
        %v4522 = vpop.f32.mrf.mxu0
        %v4523 = vadd.f32 0.0, %v4522
        %4524 = vmatmul.f32.gmra.mxu0 %v4322
        %v4525 = vpop.f32.mrf.mxu0
        %v4526 = vadd.f32 0.0, %v4525
        %4527 = vmatmul.f32.gmra.mxu0 %v4325
        %v4528 = vpop.f32.mrf.mxu0
        %v4529 = vadd.f32 0.0, %v4528
        %4530 = vmatmul.f32.gmra.mxu0 %v4328
        %v4531 = vpop.f32.mrf.mxu0
        %v4532 = vadd.f32 0.0, %v4531
        %4533 = vmatmul.f32.gmra.mxu0 %v4331
        %v4534 = vpop.f32.mrf.mxu0
        %v4535 = vadd.f32 0.0, %v4534
        %4536 = vmatmul.f32.gmra.mxu0 %v4334
        %v4537 = vpop.f32.mrf.mxu0
        %v4538 = vadd.f32 0.0, %v4537
        %4539 = vmatmul.f32.gmra.mxu0 %v4337
        %v4540 = vpop.f32.mrf.mxu0
        %v4541 = vadd.f32 0.0, %v4540
        %4542 = vmatmul.f32.gmra.mxu0 %v4340
        %v4543 = vpop.f32.mrf.mxu0
        %v4544 = vadd.f32 0.0, %v4543
        %4545 = vmatmul.f32.gmra.mxu0 %v4343
        %v4546 = vpop.f32.mrf.mxu0
        %v4547 = vadd.f32 0.0, %v4546
        %4548 = vmatmul.f32.gmra.mxu0 %v4346
        %v4549 = vpop.f32.mrf.mxu0
        %v4550 = vadd.f32 0.0, %v4549
        %4551 = vdwg.mxu0
        %v4552 = vadd.f32 %v4236, %v4375
        %v4553 = vadd.f32 %v4237, %v4440
        %v4554 = vadd.f32 %v4238, %v4505
        %v4555 = vadd.f32 %v4239, %v4378
        %v4556 = vadd.f32 %v4240, %v4443
        %v4557 = vadd.f32 %v4241, %v4508
        %v4558 = vadd.f32 %v4242, %v4381
        %v4559 = vadd.f32 %v4243, %v4446
        %v4560 = vadd.f32 %v4244, %v4511
        %v4561 = vadd.f32 %v4245, %v4384
        %v4562 = vadd.f32 %v4246, %v4449
        %v4563 = vadd.f32 %v4247, %v4514
        %v4564 = vadd.f32 %v4248, %v4387
        %v4565 = vadd.f32 %v4249, %v4452
        %v4566 = vadd.f32 %v4250, %v4517
        %v4567 = vadd.f32 %v4251, %v4390
        %v4568 = vadd.f32 %v4252, %v4455
        %v4569 = vadd.f32 %v4253, %v4520
        %v4570 = vadd.f32 %v4254, %v4393
        %v4571 = vadd.f32 %v4255, %v4458
        %v4572 = vadd.f32 %v4256, %v4523
        %v4573 = vadd.f32 %v4257, %v4396
        %v4574 = vadd.f32 %v4258, %v4461
        %v4575 = vadd.f32 %v4259, %v4526
        %v4576 = vadd.f32 %v4260, %v4399
        %v4577 = vadd.f32 %v4261, %v4464
        %v4578 = vadd.f32 %v4262, %v4529
        %v4579 = vadd.f32 %v4263, %v4402
        %v4580 = vadd.f32 %v4264, %v4467
        %v4581 = vadd.f32 %v4265, %v4532
        %v4582 = vadd.f32 %v4266, %v4405
        %v4583 = vadd.f32 %v4267, %v4470
        %v4584 = vadd.f32 %v4268, %v4535
        %v4585 = vadd.f32 %v4269, %v4408
        %v4586 = vadd.f32 %v4270, %v4473
        %v4587 = vadd.f32 %v4271, %v4538
        %v4588 = vadd.f32 %v4272, %v4411
        %v4589 = vadd.f32 %v4273, %v4476
        %v4590 = vadd.f32 %v4274, %v4541
        %v4591 = vadd.f32 %v4275, %v4414
        %v4592 = vadd.f32 %v4276, %v4479
        %v4593 = vadd.f32 %v4277, %v4544
        %v4594 = vadd.f32 %v4278, %v4417
        %v4595 = vadd.f32 %v4279, %v4482
        %v4596 = vadd.f32 %v4280, %v4547
        %v4597 = vadd.f32 %v4281, %v4420
        %v4598 = vadd.f32 %v4282, %v4485
        %v4599 = vadd.f32 %v4283, %v4550
        %s4600 = scalar_lea.vmem %s2, 840
        %v4601 = vld [vmem:[%s4600] sm:$0xff]
        %v4602 = vld [vmem:[%s4600 + $0x8] sm:$0xff]
        %v4603 = vld [vmem:[%s4600 + $0x10] sm:$0xff]
        %v4604 = vld [vmem:[%s4600 + $0x18] sm:$0xff]
        %v4605 = vld [vmem:[%s4600 + $0x20] sm:$0xff]
        %v4606 = vld [vmem:[%s4600 + $0x28] sm:$0xff]
        %v4607 = vld [vmem:[%s4600 + $0x30] sm:$0xff]
        %v4608 = vld [vmem:[%s4600 + $0x38] sm:$0xff]
        %v4609 = vld [vmem:[%s4600 + $0x40] sm:$0xff]
        %v4610 = vld [vmem:[%s4600 + $0x48] sm:$0xff]
        %v4611 = vld [vmem:[%s4600 + $0x50] sm:$0xff]
        %v4612 = vld [vmem:[%s4600 + $0x58] sm:$0xff]
        %v4613 = vld [vmem:[%s4600 + $0x60] sm:$0xf]
        %v4614 = vld [vmem:[%s4600 + $0x68] sm:$0xf]
        %v4615 = vld [vmem:[%s4600 + $0x70] sm:$0xf]
        %v4617 = vsel %vm2514, %v2436, 0
        %v4620 = vsel %vm2514, %v2439, 0
        %v4623 = vsel %vm2514, %v2442, 0
        %v4626 = vsel %vm2514, %v2445, 0
        %v4629 = vsel %vm2514, %v2448, 0
        %v4632 = vsel %vm2514, %v2451, 0
        %v4635 = vsel %vm2514, %v2454, 0
        %v4638 = vsel %vm2514, %v2457, 0
        %v4641 = vsel %vm2514, %v2460, 0
        %v4644 = vsel %vm2514, %v2463, 0
        %v4647 = vsel %vm2514, %v2466, 0
        %v4650 = vsel %vm2514, %v2469, 0
        %v4653 = vsel %vm2514, %v2472, 0
        %v4656 = vsel %vm2514, %v2475, 0
        %v4659 = vsel %vm2514, %v2478, 0
        %v4662 = vsel %vm2514, %v2481, 0
        %v4665 = vsel %vm2563, %v4613, 0
        %v4668 = vsel %vm2563, %v4614, 0
        %v4671 = vsel %vm2563, %v4615, 0
        %4673 = vmatpush.msra.mxu0 0.0
        %4674 = vmatpush.msra.mxu0 0.0
        %4675 = vmatpush.msra.mxu0 0.0
        %4676 = vmatpush.msra.mxu0 0.0
        %4677 = vmatpush.msra.mxu0 0.0
        %4678 = vmatpush.msra.mxu0 0.0
        %4679 = vmatpush.msra.mxu0 0.0
        %4680 = vmatpush.msra.mxu0 0.0
        %4681 = vmatpush.msra.mxu0 0.0
        %4682 = vmatpush.msra.mxu0 0.0
        %4683 = vmatpush.msra.mxu0 0.0
        %4684 = vmatpush.msra.mxu0 %v4665
        %4685 = vmatpush.msra.mxu0 %v4610
        %4686 = vmatpush.msra.mxu0 %v4607
        %4687 = vmatpush.msra.mxu0 %v4604
        %4688 = vmatpush.msra.mxu0 %v4601
        %4689 = vmatmul.f32.gmra.mxu0 %v4617
        %v4690 = vpop.f32.mrf.mxu0
        %v4691 = vadd.f32 0.0, %v4690
        %4692 = vmatmul.f32.gmra.mxu0 %v4620
        %v4693 = vpop.f32.mrf.mxu0
        %v4694 = vadd.f32 0.0, %v4693
        %4695 = vmatmul.f32.gmra.mxu0 %v4623
        %v4696 = vpop.f32.mrf.mxu0
        %v4697 = vadd.f32 0.0, %v4696
        %4698 = vmatmul.f32.gmra.mxu0 %v4626
        %v4699 = vpop.f32.mrf.mxu0
        %v4700 = vadd.f32 0.0, %v4699
        %4701 = vmatmul.f32.gmra.mxu0 %v4629
        %v4702 = vpop.f32.mrf.mxu0
        %v4703 = vadd.f32 0.0, %v4702
        %4704 = vmatmul.f32.gmra.mxu0 %v4632
        %v4705 = vpop.f32.mrf.mxu0
        %v4706 = vadd.f32 0.0, %v4705
        %4707 = vmatmul.f32.gmra.mxu0 %v4635
        %v4708 = vpop.f32.mrf.mxu0
        %v4709 = vadd.f32 0.0, %v4708
        %4710 = vmatmul.f32.gmra.mxu0 %v4638
        %v4711 = vpop.f32.mrf.mxu0
        %v4712 = vadd.f32 0.0, %v4711
        %4713 = vmatmul.f32.gmra.mxu0 %v4641
        %v4714 = vpop.f32.mrf.mxu0
        %v4715 = vadd.f32 0.0, %v4714
        %4716 = vmatmul.f32.gmra.mxu0 %v4644
        %v4717 = vpop.f32.mrf.mxu0
        %v4718 = vadd.f32 0.0, %v4717
        %4719 = vmatmul.f32.gmra.mxu0 %v4647
        %v4720 = vpop.f32.mrf.mxu0
        %v4721 = vadd.f32 0.0, %v4720
        %4722 = vmatmul.f32.gmra.mxu0 %v4650
        %v4723 = vpop.f32.mrf.mxu0
        %v4724 = vadd.f32 0.0, %v4723
        %4725 = vmatmul.f32.gmra.mxu0 %v4653
        %v4726 = vpop.f32.mrf.mxu0
        %v4727 = vadd.f32 0.0, %v4726
        %4728 = vmatmul.f32.gmra.mxu0 %v4656
        %v4729 = vpop.f32.mrf.mxu0
        %v4730 = vadd.f32 0.0, %v4729
        %4731 = vmatmul.f32.gmra.mxu0 %v4659
        %v4732 = vpop.f32.mrf.mxu0
        %v4733 = vadd.f32 0.0, %v4732
        %4734 = vmatmul.f32.gmra.mxu0 %v4662
        %v4735 = vpop.f32.mrf.mxu0
        %v4736 = vadd.f32 0.0, %v4735
        %4737 = vdwg.mxu0
        %4738 = vmatpush.msra.mxu0 0.0
        %4739 = vmatpush.msra.mxu0 0.0
        %4740 = vmatpush.msra.mxu0 0.0
        %4741 = vmatpush.msra.mxu0 0.0
        %4742 = vmatpush.msra.mxu0 0.0
        %4743 = vmatpush.msra.mxu0 0.0
        %4744 = vmatpush.msra.mxu0 0.0
        %4745 = vmatpush.msra.mxu0 0.0
        %4746 = vmatpush.msra.mxu0 0.0
        %4747 = vmatpush.msra.mxu0 0.0
        %4748 = vmatpush.msra.mxu0 0.0
        %4749 = vmatpush.msra.mxu0 %v4668
        %4750 = vmatpush.msra.mxu0 %v4611
        %4751 = vmatpush.msra.mxu0 %v4608
        %4752 = vmatpush.msra.mxu0 %v4605
        %4753 = vmatpush.msra.mxu0 %v4602
        %4754 = vmatmul.f32.gmra.mxu0 %v4617
        %v4755 = vpop.f32.mrf.mxu0
        %v4756 = vadd.f32 0.0, %v4755
        %4757 = vmatmul.f32.gmra.mxu0 %v4620
        %v4758 = vpop.f32.mrf.mxu0
        %v4759 = vadd.f32 0.0, %v4758
        %4760 = vmatmul.f32.gmra.mxu0 %v4623
        %v4761 = vpop.f32.mrf.mxu0
        %v4762 = vadd.f32 0.0, %v4761
        %4763 = vmatmul.f32.gmra.mxu0 %v4626
        %v4764 = vpop.f32.mrf.mxu0
        %v4765 = vadd.f32 0.0, %v4764
        %4766 = vmatmul.f32.gmra.mxu0 %v4629
        %v4767 = vpop.f32.mrf.mxu0
        %v4768 = vadd.f32 0.0, %v4767
        %4769 = vmatmul.f32.gmra.mxu0 %v4632
        %v4770 = vpop.f32.mrf.mxu0
        %v4771 = vadd.f32 0.0, %v4770
        %4772 = vmatmul.f32.gmra.mxu0 %v4635
        %v4773 = vpop.f32.mrf.mxu0
        %v4774 = vadd.f32 0.0, %v4773
        %4775 = vmatmul.f32.gmra.mxu0 %v4638
        %v4776 = vpop.f32.mrf.mxu0
        %v4777 = vadd.f32 0.0, %v4776
        %4778 = vmatmul.f32.gmra.mxu0 %v4641
        %v4779 = vpop.f32.mrf.mxu0
        %v4780 = vadd.f32 0.0, %v4779
        %4781 = vmatmul.f32.gmra.mxu0 %v4644
        %v4782 = vpop.f32.mrf.mxu0
        %v4783 = vadd.f32 0.0, %v4782
        %4784 = vmatmul.f32.gmra.mxu0 %v4647
        %v4785 = vpop.f32.mrf.mxu0
        %v4786 = vadd.f32 0.0, %v4785
        %4787 = vmatmul.f32.gmra.mxu0 %v4650
        %v4788 = vpop.f32.mrf.mxu0
        %v4789 = vadd.f32 0.0, %v4788
        %4790 = vmatmul.f32.gmra.mxu0 %v4653
        %v4791 = vpop.f32.mrf.mxu0
        %v4792 = vadd.f32 0.0, %v4791
        %4793 = vmatmul.f32.gmra.mxu0 %v4656
        %v4794 = vpop.f32.mrf.mxu0
        %v4795 = vadd.f32 0.0, %v4794
        %4796 = vmatmul.f32.gmra.mxu0 %v4659
        %v4797 = vpop.f32.mrf.mxu0
        %v4798 = vadd.f32 0.0, %v4797
        %4799 = vmatmul.f32.gmra.mxu0 %v4662
        %v4800 = vpop.f32.mrf.mxu0
        %v4801 = vadd.f32 0.0, %v4800
        %4802 = vdwg.mxu0
        %4803 = vmatpush.msra.mxu0 0.0
        %4804 = vmatpush.msra.mxu0 0.0
        %4805 = vmatpush.msra.mxu0 0.0
        %4806 = vmatpush.msra.mxu0 0.0
        %4807 = vmatpush.msra.mxu0 0.0
        %4808 = vmatpush.msra.mxu0 0.0
        %4809 = vmatpush.msra.mxu0 0.0
        %4810 = vmatpush.msra.mxu0 0.0
        %4811 = vmatpush.msra.mxu0 0.0
        %4812 = vmatpush.msra.mxu0 0.0
        %4813 = vmatpush.msra.mxu0 0.0
        %4814 = vmatpush.msra.mxu0 %v4671
        %4815 = vmatpush.msra.mxu0 %v4612
        %4816 = vmatpush.msra.mxu0 %v4609
        %4817 = vmatpush.msra.mxu0 %v4606
        %4818 = vmatpush.msra.mxu0 %v4603
        %4819 = vmatmul.f32.gmra.mxu0 %v4617
        %v4820 = vpop.f32.mrf.mxu0
        %v4821 = vadd.f32 0.0, %v4820
        %4822 = vmatmul.f32.gmra.mxu0 %v4620
        %v4823 = vpop.f32.mrf.mxu0
        %v4824 = vadd.f32 0.0, %v4823
        %4825 = vmatmul.f32.gmra.mxu0 %v4623
        %v4826 = vpop.f32.mrf.mxu0
        %v4827 = vadd.f32 0.0, %v4826
        %4828 = vmatmul.f32.gmra.mxu0 %v4626
        %v4829 = vpop.f32.mrf.mxu0
        %v4830 = vadd.f32 0.0, %v4829
        %4831 = vmatmul.f32.gmra.mxu0 %v4629
        %v4832 = vpop.f32.mrf.mxu0
        %v4833 = vadd.f32 0.0, %v4832
        %4834 = vmatmul.f32.gmra.mxu0 %v4632
        %v4835 = vpop.f32.mrf.mxu0
        %v4836 = vadd.f32 0.0, %v4835
        %4837 = vmatmul.f32.gmra.mxu0 %v4635
        %v4838 = vpop.f32.mrf.mxu0
        %v4839 = vadd.f32 0.0, %v4838
        %4840 = vmatmul.f32.gmra.mxu0 %v4638
        %v4841 = vpop.f32.mrf.mxu0
        %v4842 = vadd.f32 0.0, %v4841
        %4843 = vmatmul.f32.gmra.mxu0 %v4641
        %v4844 = vpop.f32.mrf.mxu0
        %v4845 = vadd.f32 0.0, %v4844
        %4846 = vmatmul.f32.gmra.mxu0 %v4644
        %v4847 = vpop.f32.mrf.mxu0
        %v4848 = vadd.f32 0.0, %v4847
        %4849 = vmatmul.f32.gmra.mxu0 %v4647
        %v4850 = vpop.f32.mrf.mxu0
        %v4851 = vadd.f32 0.0, %v4850
        %4852 = vmatmul.f32.gmra.mxu0 %v4650
        %v4853 = vpop.f32.mrf.mxu0
        %v4854 = vadd.f32 0.0, %v4853
        %4855 = vmatmul.f32.gmra.mxu0 %v4653
        %v4856 = vpop.f32.mrf.mxu0
        %v4857 = vadd.f32 0.0, %v4856
        %4858 = vmatmul.f32.gmra.mxu0 %v4656
        %v4859 = vpop.f32.mrf.mxu0
        %v4860 = vadd.f32 0.0, %v4859
        %4861 = vmatmul.f32.gmra.mxu0 %v4659
        %v4862 = vpop.f32.mrf.mxu0
        %v4863 = vadd.f32 0.0, %v4862
        %4864 = vmatmul.f32.gmra.mxu0 %v4662
        %v4865 = vpop.f32.mrf.mxu0
        %v4866 = vadd.f32 0.0, %v4865
        %4867 = vdwg.mxu0
        %v4868 = vadd.f32 %v4552, %v4691
        %v4869 = vadd.f32 %v4553, %v4756
        %v4870 = vadd.f32 %v4554, %v4821
        %v4871 = vadd.f32 %v4555, %v4694
        %v4872 = vadd.f32 %v4556, %v4759
        %v4873 = vadd.f32 %v4557, %v4824
        %v4874 = vadd.f32 %v4558, %v4697
        %v4875 = vadd.f32 %v4559, %v4762
        %v4876 = vadd.f32 %v4560, %v4827
        %v4877 = vadd.f32 %v4561, %v4700
        %v4878 = vadd.f32 %v4562, %v4765
        %v4879 = vadd.f32 %v4563, %v4830
        %v4880 = vadd.f32 %v4564, %v4703
        %v4881 = vadd.f32 %v4565, %v4768
        %v4882 = vadd.f32 %v4566, %v4833
        %v4883 = vadd.f32 %v4567, %v4706
        %v4884 = vadd.f32 %v4568, %v4771
        %v4885 = vadd.f32 %v4569, %v4836
        %v4886 = vadd.f32 %v4570, %v4709
        %v4887 = vadd.f32 %v4571, %v4774
        %v4888 = vadd.f32 %v4572, %v4839
        %v4889 = vadd.f32 %v4573, %v4712
        %v4890 = vadd.f32 %v4574, %v4777
        %v4891 = vadd.f32 %v4575, %v4842
        %v4892 = vadd.f32 %v4576, %v4715
        %v4893 = vadd.f32 %v4577, %v4780
        %v4894 = vadd.f32 %v4578, %v4845
        %v4895 = vadd.f32 %v4579, %v4718
        %v4896 = vadd.f32 %v4580, %v4783
        %v4897 = vadd.f32 %v4581, %v4848
        %v4898 = vadd.f32 %v4582, %v4721
        %v4899 = vadd.f32 %v4583, %v4786
        %v4900 = vadd.f32 %v4584, %v4851
        %v4901 = vadd.f32 %v4585, %v4724
        %v4902 = vadd.f32 %v4586, %v4789
        %v4903 = vadd.f32 %v4587, %v4854
        %v4904 = vadd.f32 %v4588, %v4727
        %v4905 = vadd.f32 %v4589, %v4792
        %v4906 = vadd.f32 %v4590, %v4857
        %v4907 = vadd.f32 %v4591, %v4730
        %v4908 = vadd.f32 %v4592, %v4795
        %v4909 = vadd.f32 %v4593, %v4860
        %v4910 = vadd.f32 %v4594, %v4733
        %v4911 = vadd.f32 %v4595, %v4798
        %v4912 = vadd.f32 %v4596, %v4863
        %v4913 = vadd.f32 %v4597, %v4736
        %v4914 = vadd.f32 %v4598, %v4801
        %v4915 = vadd.f32 %v4599, %v4866
        %v4916 = vld [vmem:[%s3] sm:$0x7]
        %v4918 = vperm.slane %v4916, 0
        %v4919 = vperm.slane %v4916, 1
        %v4920 = vperm.slane %v4916, 2
        %v4924 = vadd.f32 %v4868, %v4918
        %v4925 = vadd.f32 %v4869, %v4919
        %v4926 = vadd.f32 %v4870, %v4920
        %v4927 = vadd.f32 %v4871, %v4918
        %v4928 = vadd.f32 %v4872, %v4919
        %v4929 = vadd.f32 %v4873, %v4920
        %v4930 = vadd.f32 %v4874, %v4918
        %v4931 = vadd.f32 %v4875, %v4919
        %v4932 = vadd.f32 %v4876, %v4920
        %v4933 = vadd.f32 %v4877, %v4918
        %v4934 = vadd.f32 %v4878, %v4919
        %v4935 = vadd.f32 %v4879, %v4920
        %v4936 = vadd.f32 %v4880, %v4918
        %v4937 = vadd.f32 %v4881, %v4919
        %v4938 = vadd.f32 %v4882, %v4920
        %v4939 = vadd.f32 %v4883, %v4918
        %v4940 = vadd.f32 %v4884, %v4919
        %v4941 = vadd.f32 %v4885, %v4920
        %v4942 = vadd.f32 %v4886, %v4918
        %v4943 = vadd.f32 %v4887, %v4919
        %v4944 = vadd.f32 %v4888, %v4920
        %v4945 = vadd.f32 %v4889, %v4918
        %v4946 = vadd.f32 %v4890, %v4919
        %v4947 = vadd.f32 %v4891, %v4920
        %v4948 = vadd.f32 %v4892, %v4918
        %v4949 = vadd.f32 %v4893, %v4919
        %v4950 = vadd.f32 %v4894, %v4920
        %v4951 = vadd.f32 %v4895, %v4918
        %v4952 = vadd.f32 %v4896, %v4919
        %v4953 = vadd.f32 %v4897, %v4920
        %v4954 = vadd.f32 %v4898, %v4918
        %v4955 = vadd.f32 %v4899, %v4919
        %v4956 = vadd.f32 %v4900, %v4920
        %v4957 = vadd.f32 %v4901, %v4918
        %v4958 = vadd.f32 %v4902, %v4919
        %v4959 = vadd.f32 %v4903, %v4920
        %v4960 = vadd.f32 %v4904, %v4918
        %v4961 = vadd.f32 %v4905, %v4919
        %v4962 = vadd.f32 %v4906, %v4920
        %v4963 = vadd.f32 %v4907, %v4918
        %v4964 = vadd.f32 %v4908, %v4919
        %v4965 = vadd.f32 %v4909, %v4920
        %v4966 = vadd.f32 %v4910, %v4918
        %v4967 = vadd.f32 %v4911, %v4919
        %v4968 = vadd.f32 %v4912, %v4920
        %v4969 = vadd.f32 %v4913, %v4918
        %v4970 = vadd.f32 %v4914, %v4919
        %v4971 = vadd.f32 %v4915, %v4920
        %v4972 = vxor.u32 %v4924, 2147483648
        %v4973 = vxor.u32 %v4925, 2147483648
        %v4974 = vxor.u32 %v4926, 2147483648
        %v4975 = vxor.u32 %v4927, 2147483648
        %v4976 = vxor.u32 %v4928, 2147483648
        %v4977 = vxor.u32 %v4929, 2147483648
        %v4978 = vxor.u32 %v4930, 2147483648
        %v4979 = vxor.u32 %v4931, 2147483648
        %v4980 = vxor.u32 %v4932, 2147483648
        %v4981 = vxor.u32 %v4933, 2147483648
        %v4982 = vxor.u32 %v4934, 2147483648
        %v4983 = vxor.u32 %v4935, 2147483648
        %v4984 = vxor.u32 %v4936, 2147483648
        %v4985 = vxor.u32 %v4937, 2147483648
        %v4986 = vxor.u32 %v4938, 2147483648
        %v4987 = vxor.u32 %v4939, 2147483648
        %v4988 = vxor.u32 %v4940, 2147483648
        %v4989 = vxor.u32 %v4941, 2147483648
        %v4990 = vxor.u32 %v4942, 2147483648
        %v4991 = vxor.u32 %v4943, 2147483648
        %v4992 = vxor.u32 %v4944, 2147483648
        %v4993 = vxor.u32 %v4945, 2147483648
        %v4994 = vxor.u32 %v4946, 2147483648
        %v4995 = vxor.u32 %v4947, 2147483648
        %v4996 = vxor.u32 %v4948, 2147483648
        %v4997 = vxor.u32 %v4949, 2147483648
        %v4998 = vxor.u32 %v4950, 2147483648
        %v4999 = vxor.u32 %v4951, 2147483648
        %v5000 = vxor.u32 %v4952, 2147483648
        %v5001 = vxor.u32 %v4953, 2147483648
        %v5002 = vxor.u32 %v4954, 2147483648
        %v5003 = vxor.u32 %v4955, 2147483648
        %v5004 = vxor.u32 %v4956, 2147483648
        %v5005 = vxor.u32 %v4957, 2147483648
        %v5006 = vxor.u32 %v4958, 2147483648
        %v5007 = vxor.u32 %v4959, 2147483648
        %v5008 = vxor.u32 %v4960, 2147483648
        %v5009 = vxor.u32 %v4961, 2147483648
        %v5010 = vxor.u32 %v4962, 2147483648
        %v5011 = vxor.u32 %v4963, 2147483648
        %v5012 = vxor.u32 %v4964, 2147483648
        %v5013 = vxor.u32 %v4965, 2147483648
        %v5014 = vxor.u32 %v4966, 2147483648
        %v5015 = vxor.u32 %v4967, 2147483648
        %v5016 = vxor.u32 %v4968, 2147483648
        %v5017 = vxor.u32 %v4969, 2147483648
        %v5018 = vxor.u32 %v4970, 2147483648
        %v5019 = vxor.u32 %v4971, 2147483648
        %v5020 = vmul.f32 %v4972, 1.442695
        %v5021 = vpow.pop %v5020
        %v5022 = vmul.f32 %v4973, 1.442695
        %v5023 = vpow.pop %v5022
        %v5024 = vmul.f32 %v4974, 1.442695
        %v5025 = vpow.pop %v5024
        %v5026 = vmul.f32 %v4975, 1.442695
        %v5027 = vpow.pop %v5026
        %v5028 = vmul.f32 %v4976, 1.442695
        %v5029 = vpow.pop %v5028
        %v5030 = vmul.f32 %v4977, 1.442695
        %v5031 = vpow.pop %v5030
        %v5032 = vmul.f32 %v4978, 1.442695
        %v5033 = vpow.pop %v5032
        %v5034 = vmul.f32 %v4979, 1.442695
        %v5035 = vpow.pop %v5034
        %v5036 = vmul.f32 %v4980, 1.442695
        %v5037 = vpow.pop %v5036
        %v5038 = vmul.f32 %v4981, 1.442695
        %v5039 = vpow.pop %v5038
        %v5040 = vmul.f32 %v4982, 1.442695
        %v5041 = vpow.pop %v5040
        %v5042 = vmul.f32 %v4983, 1.442695
        %v5043 = vpow.pop %v5042
        %v5044 = vmul.f32 %v4984, 1.442695
        %v5045 = vpow.pop %v5044
        %v5046 = vmul.f32 %v4985, 1.442695
        %v5047 = vpow.pop %v5046
        %v5048 = vmul.f32 %v4986, 1.442695
        %v5049 = vpow.pop %v5048
        %v5050 = vmul.f32 %v4987, 1.442695
        %v5051 = vpow.pop %v5050
        %v5052 = vmul.f32 %v4988, 1.442695
        %v5053 = vpow.pop %v5052
        %v5054 = vmul.f32 %v4989, 1.442695
        %v5055 = vpow.pop %v5054
        %v5056 = vmul.f32 %v4990, 1.442695
        %v5057 = vpow.pop %v5056
        %v5058 = vmul.f32 %v4991, 1.442695
        %v5059 = vpow.pop %v5058
        %v5060 = vmul.f32 %v4992, 1.442695
        %v5061 = vpow.pop %v5060
        %v5062 = vmul.f32 %v4993, 1.442695
        %v5063 = vpow.pop %v5062
        %v5064 = vmul.f32 %v4994, 1.442695
        %v5065 = vpow.pop %v5064
        %v5066 = vmul.f32 %v4995, 1.442695
        %v5067 = vpow.pop %v5066
        %v5068 = vmul.f32 %v4996, 1.442695
        %v5069 = vpow.pop %v5068
        %v5070 = vmul.f32 %v4997, 1.442695
        %v5071 = vpow.pop %v5070
        %v5072 = vmul.f32 %v4998, 1.442695
        %v5073 = vpow.pop %v5072
        %v5074 = vmul.f32 %v4999, 1.442695
        %v5075 = vpow.pop %v5074
        %v5076 = vmul.f32 %v5000, 1.442695
        %v5077 = vpow.pop %v5076
        %v5078 = vmul.f32 %v5001, 1.442695
        %v5079 = vpow.pop %v5078
        %v5080 = vmul.f32 %v5002, 1.442695
        %v5081 = vpow.pop %v5080
        %v5082 = vmul.f32 %v5003, 1.442695
        %v5083 = vpow.pop %v5082
        %v5084 = vmul.f32 %v5004, 1.442695
        %v5085 = vpow.pop %v5084
        %v5086 = vmul.f32 %v5005, 1.442695
        %v5087 = vpow.pop %v5086
        %v5088 = vmul.f32 %v5006, 1.442695
        %v5089 = vpow.pop %v5088
        %v5090 = vmul.f32 %v5007, 1.442695
        %v5091 = vpow.pop %v5090
        %v5092 = vmul.f32 %v5008, 1.442695
        %v5093 = vpow.pop %v5092
        %v5094 = vmul.f32 %v5009, 1.442695
        %v5095 = vpow.pop %v5094
        %v5096 = vmul.f32 %v5010, 1.442695
        %v5097 = vpow.pop %v5096
        %v5098 = vmul.f32 %v5011, 1.442695
        %v5099 = vpow.pop %v5098
        %v5100 = vmul.f32 %v5012, 1.442695
        %v5101 = vpow.pop %v5100
        %v5102 = vmul.f32 %v5013, 1.442695
        %v5103 = vpow.pop %v5102
        %v5104 = vmul.f32 %v5014, 1.442695
        %v5105 = vpow.pop %v5104
        %v5106 = vmul.f32 %v5015, 1.442695
        %v5107 = vpow.pop %v5106
        %v5108 = vmul.f32 %v5016, 1.442695
        %v5109 = vpow.pop %v5108
        %v5110 = vmul.f32 %v5017, 1.442695
        %v5111 = vpow.pop %v5110
        %v5112 = vmul.f32 %v5018, 1.442695
        %v5113 = vpow.pop %v5112
        %v5114 = vmul.f32 %v5019, 1.442695
        %v5115 = vpow.pop %v5114
        %v5116 = vadd.f32 %v5021, 1.0
        %v5117 = vadd.f32 %v5023, 1.0
        %v5118 = vadd.f32 %v5025, 1.0
        %v5119 = vadd.f32 %v5027, 1.0
        %v5120 = vadd.f32 %v5029, 1.0
        %v5121 = vadd.f32 %v5031, 1.0
        %v5122 = vadd.f32 %v5033, 1.0
        %v5123 = vadd.f32 %v5035, 1.0
        %v5124 = vadd.f32 %v5037, 1.0
        %v5125 = vadd.f32 %v5039, 1.0
        %v5126 = vadd.f32 %v5041, 1.0
        %v5127 = vadd.f32 %v5043, 1.0
        %v5128 = vadd.f32 %v5045, 1.0
        %v5129 = vadd.f32 %v5047, 1.0
        %v5130 = vadd.f32 %v5049, 1.0
        %v5131 = vadd.f32 %v5051, 1.0
        %v5132 = vadd.f32 %v5053, 1.0
        %v5133 = vadd.f32 %v5055, 1.0
        %v5134 = vadd.f32 %v5057, 1.0
        %v5135 = vadd.f32 %v5059, 1.0
        %v5136 = vadd.f32 %v5061, 1.0
        %v5137 = vadd.f32 %v5063, 1.0
        %v5138 = vadd.f32 %v5065, 1.0
        %v5139 = vadd.f32 %v5067, 1.0
        %v5140 = vadd.f32 %v5069, 1.0
        %v5141 = vadd.f32 %v5071, 1.0
        %v5142 = vadd.f32 %v5073, 1.0
        %v5143 = vadd.f32 %v5075, 1.0
        %v5144 = vadd.f32 %v5077, 1.0
        %v5145 = vadd.f32 %v5079, 1.0
        %v5146 = vadd.f32 %v5081, 1.0
        %v5147 = vadd.f32 %v5083, 1.0
        %v5148 = vadd.f32 %v5085, 1.0
        %v5149 = vadd.f32 %v5087, 1.0
        %v5150 = vadd.f32 %v5089, 1.0
        %v5151 = vadd.f32 %v5091, 1.0
        %v5152 = vadd.f32 %v5093, 1.0
        %v5153 = vadd.f32 %v5095, 1.0
        %v5154 = vadd.f32 %v5097, 1.0
        %v5155 = vadd.f32 %v5099, 1.0
        %v5156 = vadd.f32 %v5101, 1.0
        %v5157 = vadd.f32 %v5103, 1.0
        %v5158 = vadd.f32 %v5105, 1.0
        %v5159 = vadd.f32 %v5107, 1.0
        %v5160 = vadd.f32 %v5109, 1.0
        %v5161 = vadd.f32 %v5111, 1.0
        %v5162 = vadd.f32 %v5113, 1.0
        %v5163 = vadd.f32 %v5115, 1.0
        %v5164 = vrcp.pop %v5116
        %v5165 = vmul.f32 %v5116, %v5164
        %v5166 = vsub.f32 1.0, %v5165
        %v5167 = vmul.f32 %v5164, %v5166
        %v5168 = vadd.f32 %v5164, %v5167
        %vm5169 = vweird.f32 %v5116
        %vm5170 = vweird.f32 %v5164
        %vm5171 = vmor %vm5169, %vm5170
        %v5172 = vsel %vm5171, %v5164, %v5168
        %v5173 = vand.u32 2147483647, %v5116
        %vm5174 = vcmp.eq.f32.partialorder %v5173, 8.507059e+37
        %v5175 = vand.u32 %v5116, 2147483648
        %v5176 = vor.u32 1.1754944e-38, %v5175
        %v5177 = vsel %vm5174, %v5176, %v5172
        %v5178 = vmul.f32 1.0, %v5177
        %v5179 = vrcp.pop %v5117
        %v5180 = vmul.f32 %v5117, %v5179
        %v5181 = vsub.f32 1.0, %v5180
        %v5182 = vmul.f32 %v5179, %v5181
        %v5183 = vadd.f32 %v5179, %v5182
        %vm5184 = vweird.f32 %v5117
        %vm5185 = vweird.f32 %v5179
        %vm5186 = vmor %vm5184, %vm5185
        %v5187 = vsel %vm5186, %v5179, %v5183
        %v5188 = vand.u32 2147483647, %v5117
        %vm5189 = vcmp.eq.f32.partialorder %v5188, 8.507059e+37
        %v5190 = vand.u32 %v5117, 2147483648
        %v5191 = vor.u32 1.1754944e-38, %v5190
        %v5192 = vsel %vm5189, %v5191, %v5187
        %v5193 = vmul.f32 1.0, %v5192
        %v5194 = vrcp.pop %v5118
        %v5195 = vmul.f32 %v5118, %v5194
        %v5196 = vsub.f32 1.0, %v5195
        %v5197 = vmul.f32 %v5194, %v5196
        %v5198 = vadd.f32 %v5194, %v5197
        %vm5199 = vweird.f32 %v5118
        %vm5200 = vweird.f32 %v5194
        %vm5201 = vmor %vm5199, %vm5200
        %v5202 = vsel %vm5201, %v5194, %v5198
        %v5203 = vand.u32 2147483647, %v5118
        %vm5204 = vcmp.eq.f32.partialorder %v5203, 8.507059e+37
        %v5205 = vand.u32 %v5118, 2147483648
        %v5206 = vor.u32 1.1754944e-38, %v5205
        %v5207 = vsel %vm5204, %v5206, %v5202
        %v5208 = vmul.f32 1.0, %v5207
        %v5209 = vrcp.pop %v5119
        %v5210 = vmul.f32 %v5119, %v5209
        %v5211 = vsub.f32 1.0, %v5210
        %v5212 = vmul.f32 %v5209, %v5211
        %v5213 = vadd.f32 %v5209, %v5212
        %vm5214 = vweird.f32 %v5119
        %vm5215 = vweird.f32 %v5209
        %vm5216 = vmor %vm5214, %vm5215
        %v5217 = vsel %vm5216, %v5209, %v5213
        %v5218 = vand.u32 2147483647, %v5119
        %vm5219 = vcmp.eq.f32.partialorder %v5218, 8.507059e+37
        %v5220 = vand.u32 %v5119, 2147483648
        %v5221 = vor.u32 1.1754944e-38, %v5220
        %v5222 = vsel %vm5219, %v5221, %v5217
        %v5223 = vmul.f32 1.0, %v5222
        %v5224 = vrcp.pop %v5120
        %v5225 = vmul.f32 %v5120, %v5224
        %v5226 = vsub.f32 1.0, %v5225
        %v5227 = vmul.f32 %v5224, %v5226
        %v5228 = vadd.f32 %v5224, %v5227
        %vm5229 = vweird.f32 %v5120
        %vm5230 = vweird.f32 %v5224
        %vm5231 = vmor %vm5229, %vm5230
        %v5232 = vsel %vm5231, %v5224, %v5228
        %v5233 = vand.u32 2147483647, %v5120
        %vm5234 = vcmp.eq.f32.partialorder %v5233, 8.507059e+37
        %v5235 = vand.u32 %v5120, 2147483648
        %v5236 = vor.u32 1.1754944e-38, %v5235
        %v5237 = vsel %vm5234, %v5236, %v5232
        %v5238 = vmul.f32 1.0, %v5237
        %v5239 = vrcp.pop %v5121
        %v5240 = vmul.f32 %v5121, %v5239
        %v5241 = vsub.f32 1.0, %v5240
        %v5242 = vmul.f32 %v5239, %v5241
        %v5243 = vadd.f32 %v5239, %v5242
        %vm5244 = vweird.f32 %v5121
        %vm5245 = vweird.f32 %v5239
        %vm5246 = vmor %vm5244, %vm5245
        %v5247 = vsel %vm5246, %v5239, %v5243
        %v5248 = vand.u32 2147483647, %v5121
        %vm5249 = vcmp.eq.f32.partialorder %v5248, 8.507059e+37
        %v5250 = vand.u32 %v5121, 2147483648
        %v5251 = vor.u32 1.1754944e-38, %v5250
        %v5252 = vsel %vm5249, %v5251, %v5247
        %v5253 = vmul.f32 1.0, %v5252
        %v5254 = vrcp.pop %v5122
        %v5255 = vmul.f32 %v5122, %v5254
        %v5256 = vsub.f32 1.0, %v5255
        %v5257 = vmul.f32 %v5254, %v5256
        %v5258 = vadd.f32 %v5254, %v5257
        %vm5259 = vweird.f32 %v5122
        %vm5260 = vweird.f32 %v5254
        %vm5261 = vmor %vm5259, %vm5260
        %v5262 = vsel %vm5261, %v5254, %v5258
        %v5263 = vand.u32 2147483647, %v5122
        %vm5264 = vcmp.eq.f32.partialorder %v5263, 8.507059e+37
        %v5265 = vand.u32 %v5122, 2147483648
        %v5266 = vor.u32 1.1754944e-38, %v5265
        %v5267 = vsel %vm5264, %v5266, %v5262
        %v5268 = vmul.f32 1.0, %v5267
        %v5269 = vrcp.pop %v5123
        %v5270 = vmul.f32 %v5123, %v5269
        %v5271 = vsub.f32 1.0, %v5270
        %v5272 = vmul.f32 %v5269, %v5271
        %v5273 = vadd.f32 %v5269, %v5272
        %vm5274 = vweird.f32 %v5123
        %vm5275 = vweird.f32 %v5269
        %vm5276 = vmor %vm5274, %vm5275
        %v5277 = vsel %vm5276, %v5269, %v5273
        %v5278 = vand.u32 2147483647, %v5123
        %vm5279 = vcmp.eq.f32.partialorder %v5278, 8.507059e+37
        %v5280 = vand.u32 %v5123, 2147483648
        %v5281 = vor.u32 1.1754944e-38, %v5280
        %v5282 = vsel %vm5279, %v5281, %v5277
        %v5283 = vmul.f32 1.0, %v5282
        %v5284 = vrcp.pop %v5124
        %v5285 = vmul.f32 %v5124, %v5284
        %v5286 = vsub.f32 1.0, %v5285
        %v5287 = vmul.f32 %v5284, %v5286
        %v5288 = vadd.f32 %v5284, %v5287
        %vm5289 = vweird.f32 %v5124
        %vm5290 = vweird.f32 %v5284
        %vm5291 = vmor %vm5289, %vm5290
        %v5292 = vsel %vm5291, %v5284, %v5288
        %v5293 = vand.u32 2147483647, %v5124
        %vm5294 = vcmp.eq.f32.partialorder %v5293, 8.507059e+37
        %v5295 = vand.u32 %v5124, 2147483648
        %v5296 = vor.u32 1.1754944e-38, %v5295
        %v5297 = vsel %vm5294, %v5296, %v5292
        %v5298 = vmul.f32 1.0, %v5297
        %v5299 = vrcp.pop %v5125
        %v5300 = vmul.f32 %v5125, %v5299
        %v5301 = vsub.f32 1.0, %v5300
        %v5302 = vmul.f32 %v5299, %v5301
        %v5303 = vadd.f32 %v5299, %v5302
        %vm5304 = vweird.f32 %v5125
        %vm5305 = vweird.f32 %v5299
        %vm5306 = vmor %vm5304, %vm5305
        %v5307 = vsel %vm5306, %v5299, %v5303
        %v5308 = vand.u32 2147483647, %v5125
        %vm5309 = vcmp.eq.f32.partialorder %v5308, 8.507059e+37
        %v5310 = vand.u32 %v5125, 2147483648
        %v5311 = vor.u32 1.1754944e-38, %v5310
        %v5312 = vsel %vm5309, %v5311, %v5307
        %v5313 = vmul.f32 1.0, %v5312
        %v5314 = vrcp.pop %v5126
        %v5315 = vmul.f32 %v5126, %v5314
        %v5316 = vsub.f32 1.0, %v5315
        %v5317 = vmul.f32 %v5314, %v5316
        %v5318 = vadd.f32 %v5314, %v5317
        %vm5319 = vweird.f32 %v5126
        %vm5320 = vweird.f32 %v5314
        %vm5321 = vmor %vm5319, %vm5320
        %v5322 = vsel %vm5321, %v5314, %v5318
        %v5323 = vand.u32 2147483647, %v5126
        %vm5324 = vcmp.eq.f32.partialorder %v5323, 8.507059e+37
        %v5325 = vand.u32 %v5126, 2147483648
        %v5326 = vor.u32 1.1754944e-38, %v5325
        %v5327 = vsel %vm5324, %v5326, %v5322
        %v5328 = vmul.f32 1.0, %v5327
        %v5329 = vrcp.pop %v5127
        %v5330 = vmul.f32 %v5127, %v5329
        %v5331 = vsub.f32 1.0, %v5330
        %v5332 = vmul.f32 %v5329, %v5331
        %v5333 = vadd.f32 %v5329, %v5332
        %vm5334 = vweird.f32 %v5127
        %vm5335 = vweird.f32 %v5329
        %vm5336 = vmor %vm5334, %vm5335
        %v5337 = vsel %vm5336, %v5329, %v5333
        %v5338 = vand.u32 2147483647, %v5127
        %vm5339 = vcmp.eq.f32.partialorder %v5338, 8.507059e+37
        %v5340 = vand.u32 %v5127, 2147483648
        %v5341 = vor.u32 1.1754944e-38, %v5340
        %v5342 = vsel %vm5339, %v5341, %v5337
        %v5343 = vmul.f32 1.0, %v5342
        %v5344 = vrcp.pop %v5128
        %v5345 = vmul.f32 %v5128, %v5344
        %v5346 = vsub.f32 1.0, %v5345
        %v5347 = vmul.f32 %v5344, %v5346
        %v5348 = vadd.f32 %v5344, %v5347
        %vm5349 = vweird.f32 %v5128
        %vm5350 = vweird.f32 %v5344
        %vm5351 = vmor %vm5349, %vm5350
        %v5352 = vsel %vm5351, %v5344, %v5348
        %v5353 = vand.u32 2147483647, %v5128
        %vm5354 = vcmp.eq.f32.partialorder %v5353, 8.507059e+37
        %v5355 = vand.u32 %v5128, 2147483648
        %v5356 = vor.u32 1.1754944e-38, %v5355
        %v5357 = vsel %vm5354, %v5356, %v5352
        %v5358 = vmul.f32 1.0, %v5357
        %v5359 = vrcp.pop %v5129
        %v5360 = vmul.f32 %v5129, %v5359
        %v5361 = vsub.f32 1.0, %v5360
        %v5362 = vmul.f32 %v5359, %v5361
        %v5363 = vadd.f32 %v5359, %v5362
        %vm5364 = vweird.f32 %v5129
        %vm5365 = vweird.f32 %v5359
        %vm5366 = vmor %vm5364, %vm5365
        %v5367 = vsel %vm5366, %v5359, %v5363
        %v5368 = vand.u32 2147483647, %v5129
        %vm5369 = vcmp.eq.f32.partialorder %v5368, 8.507059e+37
        %v5370 = vand.u32 %v5129, 2147483648
        %v5371 = vor.u32 1.1754944e-38, %v5370
        %v5372 = vsel %vm5369, %v5371, %v5367
        %v5373 = vmul.f32 1.0, %v5372
        %v5374 = vrcp.pop %v5130
        %v5375 = vmul.f32 %v5130, %v5374
        %v5376 = vsub.f32 1.0, %v5375
        %v5377 = vmul.f32 %v5374, %v5376
        %v5378 = vadd.f32 %v5374, %v5377
        %vm5379 = vweird.f32 %v5130
        %vm5380 = vweird.f32 %v5374
        %vm5381 = vmor %vm5379, %vm5380
        %v5382 = vsel %vm5381, %v5374, %v5378
        %v5383 = vand.u32 2147483647, %v5130
        %vm5384 = vcmp.eq.f32.partialorder %v5383, 8.507059e+37
        %v5385 = vand.u32 %v5130, 2147483648
        %v5386 = vor.u32 1.1754944e-38, %v5385
        %v5387 = vsel %vm5384, %v5386, %v5382
        %v5388 = vmul.f32 1.0, %v5387
        %v5389 = vrcp.pop %v5131
        %v5390 = vmul.f32 %v5131, %v5389
        %v5391 = vsub.f32 1.0, %v5390
        %v5392 = vmul.f32 %v5389, %v5391
        %v5393 = vadd.f32 %v5389, %v5392
        %vm5394 = vweird.f32 %v5131
        %vm5395 = vweird.f32 %v5389
        %vm5396 = vmor %vm5394, %vm5395
        %v5397 = vsel %vm5396, %v5389, %v5393
        %v5398 = vand.u32 2147483647, %v5131
        %vm5399 = vcmp.eq.f32.partialorder %v5398, 8.507059e+37
        %v5400 = vand.u32 %v5131, 2147483648
        %v5401 = vor.u32 1.1754944e-38, %v5400
        %v5402 = vsel %vm5399, %v5401, %v5397
        %v5403 = vmul.f32 1.0, %v5402
        %v5404 = vrcp.pop %v5132
        %v5405 = vmul.f32 %v5132, %v5404
        %v5406 = vsub.f32 1.0, %v5405
        %v5407 = vmul.f32 %v5404, %v5406
        %v5408 = vadd.f32 %v5404, %v5407
        %vm5409 = vweird.f32 %v5132
        %vm5410 = vweird.f32 %v5404
        %vm5411 = vmor %vm5409, %vm5410
        %v5412 = vsel %vm5411, %v5404, %v5408
        %v5413 = vand.u32 2147483647, %v5132
        %vm5414 = vcmp.eq.f32.partialorder %v5413, 8.507059e+37
        %v5415 = vand.u32 %v5132, 2147483648
        %v5416 = vor.u32 1.1754944e-38, %v5415
        %v5417 = vsel %vm5414, %v5416, %v5412
        %v5418 = vmul.f32 1.0, %v5417
        %v5419 = vrcp.pop %v5133
        %v5420 = vmul.f32 %v5133, %v5419
        %v5421 = vsub.f32 1.0, %v5420
        %v5422 = vmul.f32 %v5419, %v5421
        %v5423 = vadd.f32 %v5419, %v5422
        %vm5424 = vweird.f32 %v5133
        %vm5425 = vweird.f32 %v5419
        %vm5426 = vmor %vm5424, %vm5425
        %v5427 = vsel %vm5426, %v5419, %v5423
        %v5428 = vand.u32 2147483647, %v5133
        %vm5429 = vcmp.eq.f32.partialorder %v5428, 8.507059e+37
        %v5430 = vand.u32 %v5133, 2147483648
        %v5431 = vor.u32 1.1754944e-38, %v5430
        %v5432 = vsel %vm5429, %v5431, %v5427
        %v5433 = vmul.f32 1.0, %v5432
        %v5434 = vrcp.pop %v5134
        %v5435 = vmul.f32 %v5134, %v5434
        %v5436 = vsub.f32 1.0, %v5435
        %v5437 = vmul.f32 %v5434, %v5436
        %v5438 = vadd.f32 %v5434, %v5437
        %vm5439 = vweird.f32 %v5134
        %vm5440 = vweird.f32 %v5434
        %vm5441 = vmor %vm5439, %vm5440
        %v5442 = vsel %vm5441, %v5434, %v5438
        %v5443 = vand.u32 2147483647, %v5134
        %vm5444 = vcmp.eq.f32.partialorder %v5443, 8.507059e+37
        %v5445 = vand.u32 %v5134, 2147483648
        %v5446 = vor.u32 1.1754944e-38, %v5445
        %v5447 = vsel %vm5444, %v5446, %v5442
        %v5448 = vmul.f32 1.0, %v5447
        %v5449 = vrcp.pop %v5135
        %v5450 = vmul.f32 %v5135, %v5449
        %v5451 = vsub.f32 1.0, %v5450
        %v5452 = vmul.f32 %v5449, %v5451
        %v5453 = vadd.f32 %v5449, %v5452
        %vm5454 = vweird.f32 %v5135
        %vm5455 = vweird.f32 %v5449
        %vm5456 = vmor %vm5454, %vm5455
        %v5457 = vsel %vm5456, %v5449, %v5453
        %v5458 = vand.u32 2147483647, %v5135
        %vm5459 = vcmp.eq.f32.partialorder %v5458, 8.507059e+37
        %v5460 = vand.u32 %v5135, 2147483648
        %v5461 = vor.u32 1.1754944e-38, %v5460
        %v5462 = vsel %vm5459, %v5461, %v5457
        %v5463 = vmul.f32 1.0, %v5462
        %v5464 = vrcp.pop %v5136
        %v5465 = vmul.f32 %v5136, %v5464
        %v5466 = vsub.f32 1.0, %v5465
        %v5467 = vmul.f32 %v5464, %v5466
        %v5468 = vadd.f32 %v5464, %v5467
        %vm5469 = vweird.f32 %v5136
        %vm5470 = vweird.f32 %v5464
        %vm5471 = vmor %vm5469, %vm5470
        %v5472 = vsel %vm5471, %v5464, %v5468
        %v5473 = vand.u32 2147483647, %v5136
        %vm5474 = vcmp.eq.f32.partialorder %v5473, 8.507059e+37
        %v5475 = vand.u32 %v5136, 2147483648
        %v5476 = vor.u32 1.1754944e-38, %v5475
        %v5477 = vsel %vm5474, %v5476, %v5472
        %v5478 = vmul.f32 1.0, %v5477
        %v5479 = vrcp.pop %v5137
        %v5480 = vmul.f32 %v5137, %v5479
        %v5481 = vsub.f32 1.0, %v5480
        %v5482 = vmul.f32 %v5479, %v5481
        %v5483 = vadd.f32 %v5479, %v5482
        %vm5484 = vweird.f32 %v5137
        %vm5485 = vweird.f32 %v5479
        %vm5486 = vmor %vm5484, %vm5485
        %v5487 = vsel %vm5486, %v5479, %v5483
        %v5488 = vand.u32 2147483647, %v5137
        %vm5489 = vcmp.eq.f32.partialorder %v5488, 8.507059e+37
        %v5490 = vand.u32 %v5137, 2147483648
        %v5491 = vor.u32 1.1754944e-38, %v5490
        %v5492 = vsel %vm5489, %v5491, %v5487
        %v5493 = vmul.f32 1.0, %v5492
        %v5494 = vrcp.pop %v5138
        %v5495 = vmul.f32 %v5138, %v5494
        %v5496 = vsub.f32 1.0, %v5495
        %v5497 = vmul.f32 %v5494, %v5496
        %v5498 = vadd.f32 %v5494, %v5497
        %vm5499 = vweird.f32 %v5138
        %vm5500 = vweird.f32 %v5494
        %vm5501 = vmor %vm5499, %vm5500
        %v5502 = vsel %vm5501, %v5494, %v5498
        %v5503 = vand.u32 2147483647, %v5138
        %vm5504 = vcmp.eq.f32.partialorder %v5503, 8.507059e+37
        %v5505 = vand.u32 %v5138, 2147483648
        %v5506 = vor.u32 1.1754944e-38, %v5505
        %v5507 = vsel %vm5504, %v5506, %v5502
        %v5508 = vmul.f32 1.0, %v5507
        %v5509 = vrcp.pop %v5139
        %v5510 = vmul.f32 %v5139, %v5509
        %v5511 = vsub.f32 1.0, %v5510
        %v5512 = vmul.f32 %v5509, %v5511
        %v5513 = vadd.f32 %v5509, %v5512
        %vm5514 = vweird.f32 %v5139
        %vm5515 = vweird.f32 %v5509
        %vm5516 = vmor %vm5514, %vm5515
        %v5517 = vsel %vm5516, %v5509, %v5513
        %v5518 = vand.u32 2147483647, %v5139
        %vm5519 = vcmp.eq.f32.partialorder %v5518, 8.507059e+37
        %v5520 = vand.u32 %v5139, 2147483648
        %v5521 = vor.u32 1.1754944e-38, %v5520
        %v5522 = vsel %vm5519, %v5521, %v5517
        %v5523 = vmul.f32 1.0, %v5522
        %v5524 = vrcp.pop %v5140
        %v5525 = vmul.f32 %v5140, %v5524
        %v5526 = vsub.f32 1.0, %v5525
        %v5527 = vmul.f32 %v5524, %v5526
        %v5528 = vadd.f32 %v5524, %v5527
        %vm5529 = vweird.f32 %v5140
        %vm5530 = vweird.f32 %v5524
        %vm5531 = vmor %vm5529, %vm5530
        %v5532 = vsel %vm5531, %v5524, %v5528
        %v5533 = vand.u32 2147483647, %v5140
        %vm5534 = vcmp.eq.f32.partialorder %v5533, 8.507059e+37
        %v5535 = vand.u32 %v5140, 2147483648
        %v5536 = vor.u32 1.1754944e-38, %v5535
        %v5537 = vsel %vm5534, %v5536, %v5532
        %v5538 = vmul.f32 1.0, %v5537
        %v5539 = vrcp.pop %v5141
        %v5540 = vmul.f32 %v5141, %v5539
        %v5541 = vsub.f32 1.0, %v5540
        %v5542 = vmul.f32 %v5539, %v5541
        %v5543 = vadd.f32 %v5539, %v5542
        %vm5544 = vweird.f32 %v5141
        %vm5545 = vweird.f32 %v5539
        %vm5546 = vmor %vm5544, %vm5545
        %v5547 = vsel %vm5546, %v5539, %v5543
        %v5548 = vand.u32 2147483647, %v5141
        %vm5549 = vcmp.eq.f32.partialorder %v5548, 8.507059e+37
        %v5550 = vand.u32 %v5141, 2147483648
        %v5551 = vor.u32 1.1754944e-38, %v5550
        %v5552 = vsel %vm5549, %v5551, %v5547
        %v5553 = vmul.f32 1.0, %v5552
        %v5554 = vrcp.pop %v5142
        %v5555 = vmul.f32 %v5142, %v5554
        %v5556 = vsub.f32 1.0, %v5555
        %v5557 = vmul.f32 %v5554, %v5556
        %v5558 = vadd.f32 %v5554, %v5557
        %vm5559 = vweird.f32 %v5142
        %vm5560 = vweird.f32 %v5554
        %vm5561 = vmor %vm5559, %vm5560
        %v5562 = vsel %vm5561, %v5554, %v5558
        %v5563 = vand.u32 2147483647, %v5142
        %vm5564 = vcmp.eq.f32.partialorder %v5563, 8.507059e+37
        %v5565 = vand.u32 %v5142, 2147483648
        %v5566 = vor.u32 1.1754944e-38, %v5565
        %v5567 = vsel %vm5564, %v5566, %v5562
        %v5568 = vmul.f32 1.0, %v5567
        %v5569 = vrcp.pop %v5143
        %v5570 = vmul.f32 %v5143, %v5569
        %v5571 = vsub.f32 1.0, %v5570
        %v5572 = vmul.f32 %v5569, %v5571
        %v5573 = vadd.f32 %v5569, %v5572
        %vm5574 = vweird.f32 %v5143
        %vm5575 = vweird.f32 %v5569
        %vm5576 = vmor %vm5574, %vm5575
        %v5577 = vsel %vm5576, %v5569, %v5573
        %v5578 = vand.u32 2147483647, %v5143
        %vm5579 = vcmp.eq.f32.partialorder %v5578, 8.507059e+37
        %v5580 = vand.u32 %v5143, 2147483648
        %v5581 = vor.u32 1.1754944e-38, %v5580
        %v5582 = vsel %vm5579, %v5581, %v5577
        %v5583 = vmul.f32 1.0, %v5582
        %v5584 = vrcp.pop %v5144
        %v5585 = vmul.f32 %v5144, %v5584
        %v5586 = vsub.f32 1.0, %v5585
        %v5587 = vmul.f32 %v5584, %v5586
        %v5588 = vadd.f32 %v5584, %v5587
        %vm5589 = vweird.f32 %v5144
        %vm5590 = vweird.f32 %v5584
        %vm5591 = vmor %vm5589, %vm5590
        %v5592 = vsel %vm5591, %v5584, %v5588
        %v5593 = vand.u32 2147483647, %v5144
        %vm5594 = vcmp.eq.f32.partialorder %v5593, 8.507059e+37
        %v5595 = vand.u32 %v5144, 2147483648
        %v5596 = vor.u32 1.1754944e-38, %v5595
        %v5597 = vsel %vm5594, %v5596, %v5592
        %v5598 = vmul.f32 1.0, %v5597
        %v5599 = vrcp.pop %v5145
        %v5600 = vmul.f32 %v5145, %v5599
        %v5601 = vsub.f32 1.0, %v5600
        %v5602 = vmul.f32 %v5599, %v5601
        %v5603 = vadd.f32 %v5599, %v5602
        %vm5604 = vweird.f32 %v5145
        %vm5605 = vweird.f32 %v5599
        %vm5606 = vmor %vm5604, %vm5605
        %v5607 = vsel %vm5606, %v5599, %v5603
        %v5608 = vand.u32 2147483647, %v5145
        %vm5609 = vcmp.eq.f32.partialorder %v5608, 8.507059e+37
        %v5610 = vand.u32 %v5145, 2147483648
        %v5611 = vor.u32 1.1754944e-38, %v5610
        %v5612 = vsel %vm5609, %v5611, %v5607
        %v5613 = vmul.f32 1.0, %v5612
        %v5614 = vrcp.pop %v5146
        %v5615 = vmul.f32 %v5146, %v5614
        %v5616 = vsub.f32 1.0, %v5615
        %v5617 = vmul.f32 %v5614, %v5616
        %v5618 = vadd.f32 %v5614, %v5617
        %vm5619 = vweird.f32 %v5146
        %vm5620 = vweird.f32 %v5614
        %vm5621 = vmor %vm5619, %vm5620
        %v5622 = vsel %vm5621, %v5614, %v5618
        %v5623 = vand.u32 2147483647, %v5146
        %vm5624 = vcmp.eq.f32.partialorder %v5623, 8.507059e+37
        %v5625 = vand.u32 %v5146, 2147483648
        %v5626 = vor.u32 1.1754944e-38, %v5625
        %v5627 = vsel %vm5624, %v5626, %v5622
        %v5628 = vmul.f32 1.0, %v5627
        %v5629 = vrcp.pop %v5147
        %v5630 = vmul.f32 %v5147, %v5629
        %v5631 = vsub.f32 1.0, %v5630
        %v5632 = vmul.f32 %v5629, %v5631
        %v5633 = vadd.f32 %v5629, %v5632
        %vm5634 = vweird.f32 %v5147
        %vm5635 = vweird.f32 %v5629
        %vm5636 = vmor %vm5634, %vm5635
        %v5637 = vsel %vm5636, %v5629, %v5633
        %v5638 = vand.u32 2147483647, %v5147
        %vm5639 = vcmp.eq.f32.partialorder %v5638, 8.507059e+37
        %v5640 = vand.u32 %v5147, 2147483648
        %v5641 = vor.u32 1.1754944e-38, %v5640
        %v5642 = vsel %vm5639, %v5641, %v5637
        %v5643 = vmul.f32 1.0, %v5642
        %v5644 = vrcp.pop %v5148
        %v5645 = vmul.f32 %v5148, %v5644
        %v5646 = vsub.f32 1.0, %v5645
        %v5647 = vmul.f32 %v5644, %v5646
        %v5648 = vadd.f32 %v5644, %v5647
        %vm5649 = vweird.f32 %v5148
        %vm5650 = vweird.f32 %v5644
        %vm5651 = vmor %vm5649, %vm5650
        %v5652 = vsel %vm5651, %v5644, %v5648
        %v5653 = vand.u32 2147483647, %v5148
        %vm5654 = vcmp.eq.f32.partialorder %v5653, 8.507059e+37
        %v5655 = vand.u32 %v5148, 2147483648
        %v5656 = vor.u32 1.1754944e-38, %v5655
        %v5657 = vsel %vm5654, %v5656, %v5652
        %v5658 = vmul.f32 1.0, %v5657
        %v5659 = vrcp.pop %v5149
        %v5660 = vmul.f32 %v5149, %v5659
        %v5661 = vsub.f32 1.0, %v5660
        %v5662 = vmul.f32 %v5659, %v5661
        %v5663 = vadd.f32 %v5659, %v5662
        %vm5664 = vweird.f32 %v5149
        %vm5665 = vweird.f32 %v5659
        %vm5666 = vmor %vm5664, %vm5665
        %v5667 = vsel %vm5666, %v5659, %v5663
        %v5668 = vand.u32 2147483647, %v5149
        %vm5669 = vcmp.eq.f32.partialorder %v5668, 8.507059e+37
        %v5670 = vand.u32 %v5149, 2147483648
        %v5671 = vor.u32 1.1754944e-38, %v5670
        %v5672 = vsel %vm5669, %v5671, %v5667
        %v5673 = vmul.f32 1.0, %v5672
        %v5674 = vrcp.pop %v5150
        %v5675 = vmul.f32 %v5150, %v5674
        %v5676 = vsub.f32 1.0, %v5675
        %v5677 = vmul.f32 %v5674, %v5676
        %v5678 = vadd.f32 %v5674, %v5677
        %vm5679 = vweird.f32 %v5150
        %vm5680 = vweird.f32 %v5674
        %vm5681 = vmor %vm5679, %vm5680
        %v5682 = vsel %vm5681, %v5674, %v5678
        %v5683 = vand.u32 2147483647, %v5150
        %vm5684 = vcmp.eq.f32.partialorder %v5683, 8.507059e+37
        %v5685 = vand.u32 %v5150, 2147483648
        %v5686 = vor.u32 1.1754944e-38, %v5685
        %v5687 = vsel %vm5684, %v5686, %v5682
        %v5688 = vmul.f32 1.0, %v5687
        %v5689 = vrcp.pop %v5151
        %v5690 = vmul.f32 %v5151, %v5689
        %v5691 = vsub.f32 1.0, %v5690
        %v5692 = vmul.f32 %v5689, %v5691
        %v5693 = vadd.f32 %v5689, %v5692
        %vm5694 = vweird.f32 %v5151
        %vm5695 = vweird.f32 %v5689
        %vm5696 = vmor %vm5694, %vm5695
        %v5697 = vsel %vm5696, %v5689, %v5693
        %v5698 = vand.u32 2147483647, %v5151
        %vm5699 = vcmp.eq.f32.partialorder %v5698, 8.507059e+37
        %v5700 = vand.u32 %v5151, 2147483648
        %v5701 = vor.u32 1.1754944e-38, %v5700
        %v5702 = vsel %vm5699, %v5701, %v5697
        %v5703 = vmul.f32 1.0, %v5702
        %v5704 = vrcp.pop %v5152
        %v5705 = vmul.f32 %v5152, %v5704
        %v5706 = vsub.f32 1.0, %v5705
        %v5707 = vmul.f32 %v5704, %v5706
        %v5708 = vadd.f32 %v5704, %v5707
        %vm5709 = vweird.f32 %v5152
        %vm5710 = vweird.f32 %v5704
        %vm5711 = vmor %vm5709, %vm5710
        %v5712 = vsel %vm5711, %v5704, %v5708
        %v5713 = vand.u32 2147483647, %v5152
        %vm5714 = vcmp.eq.f32.partialorder %v5713, 8.507059e+37
        %v5715 = vand.u32 %v5152, 2147483648
        %v5716 = vor.u32 1.1754944e-38, %v5715
        %v5717 = vsel %vm5714, %v5716, %v5712
        %v5718 = vmul.f32 1.0, %v5717
        %v5719 = vrcp.pop %v5153
        %v5720 = vmul.f32 %v5153, %v5719
        %v5721 = vsub.f32 1.0, %v5720
        %v5722 = vmul.f32 %v5719, %v5721
        %v5723 = vadd.f32 %v5719, %v5722
        %vm5724 = vweird.f32 %v5153
        %vm5725 = vweird.f32 %v5719
        %vm5726 = vmor %vm5724, %vm5725
        %v5727 = vsel %vm5726, %v5719, %v5723
        %v5728 = vand.u32 2147483647, %v5153
        %vm5729 = vcmp.eq.f32.partialorder %v5728, 8.507059e+37
        %v5730 = vand.u32 %v5153, 2147483648
        %v5731 = vor.u32 1.1754944e-38, %v5730
        %v5732 = vsel %vm5729, %v5731, %v5727
        %v5733 = vmul.f32 1.0, %v5732
        %v5734 = vrcp.pop %v5154
        %v5735 = vmul.f32 %v5154, %v5734
        %v5736 = vsub.f32 1.0, %v5735
        %v5737 = vmul.f32 %v5734, %v5736
        %v5738 = vadd.f32 %v5734, %v5737
        %vm5739 = vweird.f32 %v5154
        %vm5740 = vweird.f32 %v5734
        %vm5741 = vmor %vm5739, %vm5740
        %v5742 = vsel %vm5741, %v5734, %v5738
        %v5743 = vand.u32 2147483647, %v5154
        %vm5744 = vcmp.eq.f32.partialorder %v5743, 8.507059e+37
        %v5745 = vand.u32 %v5154, 2147483648
        %v5746 = vor.u32 1.1754944e-38, %v5745
        %v5747 = vsel %vm5744, %v5746, %v5742
        %v5748 = vmul.f32 1.0, %v5747
        %v5749 = vrcp.pop %v5155
        %v5750 = vmul.f32 %v5155, %v5749
        %v5751 = vsub.f32 1.0, %v5750
        %v5752 = vmul.f32 %v5749, %v5751
        %v5753 = vadd.f32 %v5749, %v5752
        %vm5754 = vweird.f32 %v5155
        %vm5755 = vweird.f32 %v5749
        %vm5756 = vmor %vm5754, %vm5755
        %v5757 = vsel %vm5756, %v5749, %v5753
        %v5758 = vand.u32 2147483647, %v5155
        %vm5759 = vcmp.eq.f32.partialorder %v5758, 8.507059e+37
        %v5760 = vand.u32 %v5155, 2147483648
        %v5761 = vor.u32 1.1754944e-38, %v5760
        %v5762 = vsel %vm5759, %v5761, %v5757
        %v5763 = vmul.f32 1.0, %v5762
        %v5764 = vrcp.pop %v5156
        %v5765 = vmul.f32 %v5156, %v5764
        %v5766 = vsub.f32 1.0, %v5765
        %v5767 = vmul.f32 %v5764, %v5766
        %v5768 = vadd.f32 %v5764, %v5767
        %vm5769 = vweird.f32 %v5156
        %vm5770 = vweird.f32 %v5764
        %vm5771 = vmor %vm5769, %vm5770
        %v5772 = vsel %vm5771, %v5764, %v5768
        %v5773 = vand.u32 2147483647, %v5156
        %vm5774 = vcmp.eq.f32.partialorder %v5773, 8.507059e+37
        %v5775 = vand.u32 %v5156, 2147483648
        %v5776 = vor.u32 1.1754944e-38, %v5775
        %v5777 = vsel %vm5774, %v5776, %v5772
        %v5778 = vmul.f32 1.0, %v5777
        %v5779 = vrcp.pop %v5157
        %v5780 = vmul.f32 %v5157, %v5779
        %v5781 = vsub.f32 1.0, %v5780
        %v5782 = vmul.f32 %v5779, %v5781
        %v5783 = vadd.f32 %v5779, %v5782
        %vm5784 = vweird.f32 %v5157
        %vm5785 = vweird.f32 %v5779
        %vm5786 = vmor %vm5784, %vm5785
        %v5787 = vsel %vm5786, %v5779, %v5783
        %v5788 = vand.u32 2147483647, %v5157
        %vm5789 = vcmp.eq.f32.partialorder %v5788, 8.507059e+37
        %v5790 = vand.u32 %v5157, 2147483648
        %v5791 = vor.u32 1.1754944e-38, %v5790
        %v5792 = vsel %vm5789, %v5791, %v5787
        %v5793 = vmul.f32 1.0, %v5792
        %v5794 = vrcp.pop %v5158
        %v5795 = vmul.f32 %v5158, %v5794
        %v5796 = vsub.f32 1.0, %v5795
        %v5797 = vmul.f32 %v5794, %v5796
        %v5798 = vadd.f32 %v5794, %v5797
        %vm5799 = vweird.f32 %v5158
        %vm5800 = vweird.f32 %v5794
        %vm5801 = vmor %vm5799, %vm5800
        %v5802 = vsel %vm5801, %v5794, %v5798
        %v5803 = vand.u32 2147483647, %v5158
        %vm5804 = vcmp.eq.f32.partialorder %v5803, 8.507059e+37
        %v5805 = vand.u32 %v5158, 2147483648
        %v5806 = vor.u32 1.1754944e-38, %v5805
        %v5807 = vsel %vm5804, %v5806, %v5802
        %v5808 = vmul.f32 1.0, %v5807
        %v5809 = vrcp.pop %v5159
        %v5810 = vmul.f32 %v5159, %v5809
        %v5811 = vsub.f32 1.0, %v5810
        %v5812 = vmul.f32 %v5809, %v5811
        %v5813 = vadd.f32 %v5809, %v5812
        %vm5814 = vweird.f32 %v5159
        %vm5815 = vweird.f32 %v5809
        %vm5816 = vmor %vm5814, %vm5815
        %v5817 = vsel %vm5816, %v5809, %v5813
        %v5818 = vand.u32 2147483647, %v5159
        %vm5819 = vcmp.eq.f32.partialorder %v5818, 8.507059e+37
        %v5820 = vand.u32 %v5159, 2147483648
        %v5821 = vor.u32 1.1754944e-38, %v5820
        %v5822 = vsel %vm5819, %v5821, %v5817
        %v5823 = vmul.f32 1.0, %v5822
        %v5824 = vrcp.pop %v5160
        %v5825 = vmul.f32 %v5160, %v5824
        %v5826 = vsub.f32 1.0, %v5825
        %v5827 = vmul.f32 %v5824, %v5826
        %v5828 = vadd.f32 %v5824, %v5827
        %vm5829 = vweird.f32 %v5160
        %vm5830 = vweird.f32 %v5824
        %vm5831 = vmor %vm5829, %vm5830
        %v5832 = vsel %vm5831, %v5824, %v5828
        %v5833 = vand.u32 2147483647, %v5160
        %vm5834 = vcmp.eq.f32.partialorder %v5833, 8.507059e+37
        %v5835 = vand.u32 %v5160, 2147483648
        %v5836 = vor.u32 1.1754944e-38, %v5835
        %v5837 = vsel %vm5834, %v5836, %v5832
        %v5838 = vmul.f32 1.0, %v5837
        %v5839 = vrcp.pop %v5161
        %v5840 = vmul.f32 %v5161, %v5839
        %v5841 = vsub.f32 1.0, %v5840
        %v5842 = vmul.f32 %v5839, %v5841
        %v5843 = vadd.f32 %v5839, %v5842
        %vm5844 = vweird.f32 %v5161
        %vm5845 = vweird.f32 %v5839
        %vm5846 = vmor %vm5844, %vm5845
        %v5847 = vsel %vm5846, %v5839, %v5843
        %v5848 = vand.u32 2147483647, %v5161
        %vm5849 = vcmp.eq.f32.partialorder %v5848, 8.507059e+37
        %v5850 = vand.u32 %v5161, 2147483648
        %v5851 = vor.u32 1.1754944e-38, %v5850
        %v5852 = vsel %vm5849, %v5851, %v5847
        %v5853 = vmul.f32 1.0, %v5852
        %v5854 = vrcp.pop %v5162
        %v5855 = vmul.f32 %v5162, %v5854
        %v5856 = vsub.f32 1.0, %v5855
        %v5857 = vmul.f32 %v5854, %v5856
        %v5858 = vadd.f32 %v5854, %v5857
        %vm5859 = vweird.f32 %v5162
        %vm5860 = vweird.f32 %v5854
        %vm5861 = vmor %vm5859, %vm5860
        %v5862 = vsel %vm5861, %v5854, %v5858
        %v5863 = vand.u32 2147483647, %v5162
        %vm5864 = vcmp.eq.f32.partialorder %v5863, 8.507059e+37
        %v5865 = vand.u32 %v5162, 2147483648
        %v5866 = vor.u32 1.1754944e-38, %v5865
        %v5867 = vsel %vm5864, %v5866, %v5862
        %v5868 = vmul.f32 1.0, %v5867
        %v5869 = vrcp.pop %v5163
        %v5870 = vmul.f32 %v5163, %v5869
        %v5871 = vsub.f32 1.0, %v5870
        %v5872 = vmul.f32 %v5869, %v5871
        %v5873 = vadd.f32 %v5869, %v5872
        %vm5874 = vweird.f32 %v5163
        %vm5875 = vweird.f32 %v5869
        %vm5876 = vmor %vm5874, %vm5875
        %v5877 = vsel %vm5876, %v5869, %v5873
        %v5878 = vand.u32 2147483647, %v5163
        %vm5879 = vcmp.eq.f32.partialorder %v5878, 8.507059e+37
        %v5880 = vand.u32 %v5163, 2147483648
        %v5881 = vor.u32 1.1754944e-38, %v5880
        %v5882 = vsel %vm5879, %v5881, %v5877
        %v5883 = vmul.f32 1.0, %v5882
        %v5884 = vmul.f32 %v4924, %v5178
        %v5885 = vmul.f32 %v4925, %v5193
        %v5886 = vmul.f32 %v4926, %v5208
        %v5887 = vmul.f32 %v4927, %v5223
        %v5888 = vmul.f32 %v4928, %v5238
        %v5889 = vmul.f32 %v4929, %v5253
        %v5890 = vmul.f32 %v4930, %v5268
        %v5891 = vmul.f32 %v4931, %v5283
        %v5892 = vmul.f32 %v4932, %v5298
        %v5893 = vmul.f32 %v4933, %v5313
        %v5894 = vmul.f32 %v4934, %v5328
        %v5895 = vmul.f32 %v4935, %v5343
        %v5896 = vmul.f32 %v4936, %v5358
        %v5897 = vmul.f32 %v4937, %v5373
        %v5898 = vmul.f32 %v4938, %v5388
        %v5899 = vmul.f32 %v4939, %v5403
        %v5900 = vmul.f32 %v4940, %v5418
        %v5901 = vmul.f32 %v4941, %v5433
        %v5902 = vmul.f32 %v4942, %v5448
        %v5903 = vmul.f32 %v4943, %v5463
        %v5904 = vmul.f32 %v4944, %v5478
        %v5905 = vmul.f32 %v4945, %v5493
        %v5906 = vmul.f32 %v4946, %v5508
        %v5907 = vmul.f32 %v4947, %v5523
        %v5908 = vmul.f32 %v4948, %v5538
        %v5909 = vmul.f32 %v4949, %v5553
        %v5910 = vmul.f32 %v4950, %v5568
        %v5911 = vmul.f32 %v4951, %v5583
        %v5912 = vmul.f32 %v4952, %v5598
        %v5913 = vmul.f32 %v4953, %v5613
        %v5914 = vmul.f32 %v4954, %v5628
        %v5915 = vmul.f32 %v4955, %v5643
        %v5916 = vmul.f32 %v4956, %v5658
        %v5917 = vmul.f32 %v4957, %v5673
        %v5918 = vmul.f32 %v4958, %v5688
        %v5919 = vmul.f32 %v4959, %v5703
        %v5920 = vmul.f32 %v4960, %v5718
        %v5921 = vmul.f32 %v4961, %v5733
        %v5922 = vmul.f32 %v4962, %v5748
        %v5923 = vmul.f32 %v4963, %v5763
        %v5924 = vmul.f32 %v4964, %v5778
        %v5925 = vmul.f32 %v4965, %v5793
        %v5926 = vmul.f32 %v4966, %v5808
        %v5927 = vmul.f32 %v4967, %v5823
        %v5928 = vmul.f32 %v4968, %v5838
        %v5929 = vmul.f32 %v4969, %v5853
        %v5930 = vmul.f32 %v4970, %v5868
        %v5931 = vmul.f32 %v4971, %v5883
        %v5932 = vld [vmem:[%s4] sm:$0xff]
        %v5933 = vld [vmem:[%s4 + $0x8] sm:$0xff]
        %v5934 = vld [vmem:[%s4 + $0x10] sm:$0xff]
        %v5935 = vld [vmem:[%s4 + $0x18] sm:$0xff]
        %v5936 = vld [vmem:[%s4 + $0x20] sm:$0xff]
        %v5937 = vld [vmem:[%s4 + $0x28] sm:$0xff]
        %v5938 = vld [vmem:[%s4 + $0x30] sm:$0xff]
        %v5939 = vld [vmem:[%s4 + $0x38] sm:$0xff]
        %v5940 = vld [vmem:[%s4 + $0x40] sm:$0xff]
        %v5941 = vld [vmem:[%s4 + $0x48] sm:$0xff]
        %v5942 = vld [vmem:[%s4 + $0x50] sm:$0xff]
        %v5943 = vld [vmem:[%s4 + $0x58] sm:$0xff]
        %v5944 = vld [vmem:[%s4 + $0x60] sm:$0xff]
        %v5945 = vld [vmem:[%s4 + $0x68] sm:$0xff]
        %v5946 = vld [vmem:[%s4 + $0x70] sm:$0xff]
        %v5947 = vld [vmem:[%s4 + $0x78] sm:$0xff]
        %5948 = vmatpush.msra.mxu0 %v5929
        %5949 = vmatpush.msra.mxu0 %v5926
        %5950 = vmatpush.msra.mxu0 %v5923
        %5951 = vmatpush.msra.mxu0 %v5920
        %5952 = vmatpush.msra.mxu0 %v5917
        %5953 = vmatpush.msra.mxu0 %v5914
        %5954 = vmatpush.msra.mxu0 %v5911
        %5955 = vmatpush.msra.mxu0 %v5908
        %5956 = vmatpush.msra.mxu0 %v5905
        %5957 = vmatpush.msra.mxu0 %v5902
        %5958 = vmatpush.msra.mxu0 %v5899
        %5959 = vmatpush.msra.mxu0 %v5896
        %5960 = vmatpush.msra.mxu0 %v5893
        %5961 = vmatpush.msra.mxu0 %v5890
        %5962 = vmatpush.msra.mxu0 %v5887
        %5963 = vmatpush.msra.mxu0 %v5884
        %5964 = vmatmul.f32.gmra.mxu0 %v5932
        %v5965 = vpop.f32.mrf.mxu0
        %v5966 = vadd.f32 0.0, %v5965
        %5967 = vmatmul.f32.gmra.mxu0 %v5933
        %v5968 = vpop.f32.mrf.mxu0
        %v5969 = vadd.f32 0.0, %v5968
        %5970 = vmatmul.f32.gmra.mxu0 %v5934
        %v5971 = vpop.f32.mrf.mxu0
        %v5972 = vadd.f32 0.0, %v5971
        %5973 = vmatmul.f32.gmra.mxu0 %v5935
        %v5974 = vpop.f32.mrf.mxu0
        %v5975 = vadd.f32 0.0, %v5974
        %5976 = vmatmul.f32.gmra.mxu0 %v5936
        %v5977 = vpop.f32.mrf.mxu0
        %v5978 = vadd.f32 0.0, %v5977
        %5979 = vmatmul.f32.gmra.mxu0 %v5937
        %v5980 = vpop.f32.mrf.mxu0
        %v5981 = vadd.f32 0.0, %v5980
        %5982 = vmatmul.f32.gmra.mxu0 %v5938
        %v5983 = vpop.f32.mrf.mxu0
        %v5984 = vadd.f32 0.0, %v5983
        %5985 = vmatmul.f32.gmra.mxu0 %v5939
        %v5986 = vpop.f32.mrf.mxu0
        %v5987 = vadd.f32 0.0, %v5986
        %5988 = vmatmul.f32.gmra.mxu0 %v5940
        %v5989 = vpop.f32.mrf.mxu0
        %v5990 = vadd.f32 0.0, %v5989
        %5991 = vmatmul.f32.gmra.mxu0 %v5941
        %v5992 = vpop.f32.mrf.mxu0
        %v5993 = vadd.f32 0.0, %v5992
        %5994 = vmatmul.f32.gmra.mxu0 %v5942
        %v5995 = vpop.f32.mrf.mxu0
        %v5996 = vadd.f32 0.0, %v5995
        %5997 = vmatmul.f32.gmra.mxu0 %v5943
        %v5998 = vpop.f32.mrf.mxu0
        %v5999 = vadd.f32 0.0, %v5998
        %6000 = vmatmul.f32.gmra.mxu0 %v5944
        %v6001 = vpop.f32.mrf.mxu0
        %v6002 = vadd.f32 0.0, %v6001
        %6003 = vmatmul.f32.gmra.mxu0 %v5945
        %v6004 = vpop.f32.mrf.mxu0
        %v6005 = vadd.f32 0.0, %v6004
        %6006 = vmatmul.f32.gmra.mxu0 %v5946
        %v6007 = vpop.f32.mrf.mxu0
        %v6008 = vadd.f32 0.0, %v6007
        %6009 = vmatmul.f32.gmra.mxu0 %v5947
        %v6010 = vpop.f32.mrf.mxu0
        %v6011 = vadd.f32 0.0, %v6010
        %6012 = vdwg.mxu0
        %6013 = vmatpush.msra.mxu0 %v5930
        %6014 = vmatpush.msra.mxu0 %v5927
        %6015 = vmatpush.msra.mxu0 %v5924
        %6016 = vmatpush.msra.mxu0 %v5921
        %6017 = vmatpush.msra.mxu0 %v5918
        %6018 = vmatpush.msra.mxu0 %v5915
        %6019 = vmatpush.msra.mxu0 %v5912
        %6020 = vmatpush.msra.mxu0 %v5909
        %6021 = vmatpush.msra.mxu0 %v5906
        %6022 = vmatpush.msra.mxu0 %v5903
        %6023 = vmatpush.msra.mxu0 %v5900
        %6024 = vmatpush.msra.mxu0 %v5897
        %6025 = vmatpush.msra.mxu0 %v5894
        %6026 = vmatpush.msra.mxu0 %v5891
        %6027 = vmatpush.msra.mxu0 %v5888
        %6028 = vmatpush.msra.mxu0 %v5885
        %6029 = vmatmul.f32.gmra.mxu0 %v5932
        %v6030 = vpop.f32.mrf.mxu0
        %v6031 = vadd.f32 0.0, %v6030
        %6032 = vmatmul.f32.gmra.mxu0 %v5933
        %v6033 = vpop.f32.mrf.mxu0
        %v6034 = vadd.f32 0.0, %v6033
        %6035 = vmatmul.f32.gmra.mxu0 %v5934
        %v6036 = vpop.f32.mrf.mxu0
        %v6037 = vadd.f32 0.0, %v6036
        %6038 = vmatmul.f32.gmra.mxu0 %v5935
        %v6039 = vpop.f32.mrf.mxu0
        %v6040 = vadd.f32 0.0, %v6039
        %6041 = vmatmul.f32.gmra.mxu0 %v5936
        %v6042 = vpop.f32.mrf.mxu0
        %v6043 = vadd.f32 0.0, %v6042
        %6044 = vmatmul.f32.gmra.mxu0 %v5937
        %v6045 = vpop.f32.mrf.mxu0
        %v6046 = vadd.f32 0.0, %v6045
        %6047 = vmatmul.f32.gmra.mxu0 %v5938
        %v6048 = vpop.f32.mrf.mxu0
        %v6049 = vadd.f32 0.0, %v6048
        %6050 = vmatmul.f32.gmra.mxu0 %v5939
        %v6051 = vpop.f32.mrf.mxu0
        %v6052 = vadd.f32 0.0, %v6051
        %6053 = vmatmul.f32.gmra.mxu0 %v5940
        %v6054 = vpop.f32.mrf.mxu0
        %v6055 = vadd.f32 0.0, %v6054
        %6056 = vmatmul.f32.gmra.mxu0 %v5941
        %v6057 = vpop.f32.mrf.mxu0
        %v6058 = vadd.f32 0.0, %v6057
        %6059 = vmatmul.f32.gmra.mxu0 %v5942
        %v6060 = vpop.f32.mrf.mxu0
        %v6061 = vadd.f32 0.0, %v6060
        %6062 = vmatmul.f32.gmra.mxu0 %v5943
        %v6063 = vpop.f32.mrf.mxu0
        %v6064 = vadd.f32 0.0, %v6063
        %6065 = vmatmul.f32.gmra.mxu0 %v5944
        %v6066 = vpop.f32.mrf.mxu0
        %v6067 = vadd.f32 0.0, %v6066
        %6068 = vmatmul.f32.gmra.mxu0 %v5945
        %v6069 = vpop.f32.mrf.mxu0
        %v6070 = vadd.f32 0.0, %v6069
        %6071 = vmatmul.f32.gmra.mxu0 %v5946
        %v6072 = vpop.f32.mrf.mxu0
        %v6073 = vadd.f32 0.0, %v6072
        %6074 = vmatmul.f32.gmra.mxu0 %v5947
        %v6075 = vpop.f32.mrf.mxu0
        %v6076 = vadd.f32 0.0, %v6075
        %6077 = vdwg.mxu0
        %6078 = vmatpush.msra.mxu0 %v5931
        %6079 = vmatpush.msra.mxu0 %v5928
        %6080 = vmatpush.msra.mxu0 %v5925
        %6081 = vmatpush.msra.mxu0 %v5922
        %6082 = vmatpush.msra.mxu0 %v5919
        %6083 = vmatpush.msra.mxu0 %v5916
        %6084 = vmatpush.msra.mxu0 %v5913
        %6085 = vmatpush.msra.mxu0 %v5910
        %6086 = vmatpush.msra.mxu0 %v5907
        %6087 = vmatpush.msra.mxu0 %v5904
        %6088 = vmatpush.msra.mxu0 %v5901
        %6089 = vmatpush.msra.mxu0 %v5898
        %6090 = vmatpush.msra.mxu0 %v5895
        %6091 = vmatpush.msra.mxu0 %v5892
        %6092 = vmatpush.msra.mxu0 %v5889
        %6093 = vmatpush.msra.mxu0 %v5886
        %6094 = vmatmul.f32.gmra.mxu0 %v5932
        %v6095 = vpop.f32.mrf.mxu0
        %v6096 = vadd.f32 0.0, %v6095
        %6097 = vmatmul.f32.gmra.mxu0 %v5933
        %v6098 = vpop.f32.mrf.mxu0
        %v6099 = vadd.f32 0.0, %v6098
        %6100 = vmatmul.f32.gmra.mxu0 %v5934
        %v6101 = vpop.f32.mrf.mxu0
        %v6102 = vadd.f32 0.0, %v6101
        %6103 = vmatmul.f32.gmra.mxu0 %v5935
        %v6104 = vpop.f32.mrf.mxu0
        %v6105 = vadd.f32 0.0, %v6104
        %6106 = vmatmul.f32.gmra.mxu0 %v5936
        %v6107 = vpop.f32.mrf.mxu0
        %v6108 = vadd.f32 0.0, %v6107
        %6109 = vmatmul.f32.gmra.mxu0 %v5937
        %v6110 = vpop.f32.mrf.mxu0
        %v6111 = vadd.f32 0.0, %v6110
        %6112 = vmatmul.f32.gmra.mxu0 %v5938
        %v6113 = vpop.f32.mrf.mxu0
        %v6114 = vadd.f32 0.0, %v6113
        %6115 = vmatmul.f32.gmra.mxu0 %v5939
        %v6116 = vpop.f32.mrf.mxu0
        %v6117 = vadd.f32 0.0, %v6116
        %6118 = vmatmul.f32.gmra.mxu0 %v5940
        %v6119 = vpop.f32.mrf.mxu0
        %v6120 = vadd.f32 0.0, %v6119
        %6121 = vmatmul.f32.gmra.mxu0 %v5941
        %v6122 = vpop.f32.mrf.mxu0
        %v6123 = vadd.f32 0.0, %v6122
        %6124 = vmatmul.f32.gmra.mxu0 %v5942
        %v6125 = vpop.f32.mrf.mxu0
        %v6126 = vadd.f32 0.0, %v6125
        %6127 = vmatmul.f32.gmra.mxu0 %v5943
        %v6128 = vpop.f32.mrf.mxu0
        %v6129 = vadd.f32 0.0, %v6128
        %6130 = vmatmul.f32.gmra.mxu0 %v5944
        %v6131 = vpop.f32.mrf.mxu0
        %v6132 = vadd.f32 0.0, %v6131
        %6133 = vmatmul.f32.gmra.mxu0 %v5945
        %v6134 = vpop.f32.mrf.mxu0
        %v6135 = vadd.f32 0.0, %v6134
        %6136 = vmatmul.f32.gmra.mxu0 %v5946
        %v6137 = vpop.f32.mrf.mxu0
        %v6138 = vadd.f32 0.0, %v6137
        %6139 = vmatmul.f32.gmra.mxu0 %v5947
        %v6140 = vpop.f32.mrf.mxu0
        %v6141 = vadd.f32 0.0, %v6140
        %6142 = vdwg.mxu0
        %v6143 = vsub.f32 %v5884, %v5966
        %v6144 = vsub.f32 %v5885, %v6031
        %v6145 = vsub.f32 %v5886, %v6096
        %v6146 = vsub.f32 %v5887, %v5969
        %v6147 = vsub.f32 %v5888, %v6034
        %v6148 = vsub.f32 %v5889, %v6099
        %v6149 = vsub.f32 %v5890, %v5972
        %v6150 = vsub.f32 %v5891, %v6037
        %v6151 = vsub.f32 %v5892, %v6102
        %v6152 = vsub.f32 %v5893, %v5975
        %v6153 = vsub.f32 %v5894, %v6040
        %v6154 = vsub.f32 %v5895, %v6105
        %v6155 = vsub.f32 %v5896, %v5978
        %v6156 = vsub.f32 %v5897, %v6043
        %v6157 = vsub.f32 %v5898, %v6108
        %v6158 = vsub.f32 %v5899, %v5981
        %v6159 = vsub.f32 %v5900, %v6046
        %v6160 = vsub.f32 %v5901, %v6111
        %v6161 = vsub.f32 %v5902, %v5984
        %v6162 = vsub.f32 %v5903, %v6049
        %v6163 = vsub.f32 %v5904, %v6114
        %v6164 = vsub.f32 %v5905, %v5987
        %v6165 = vsub.f32 %v5906, %v6052
        %v6166 = vsub.f32 %v5907, %v6117
        %v6167 = vsub.f32 %v5908, %v5990
        %v6168 = vsub.f32 %v5909, %v6055
        %v6169 = vsub.f32 %v5910, %v6120
        %v6170 = vsub.f32 %v5911, %v5993
        %v6171 = vsub.f32 %v5912, %v6058
        %v6172 = vsub.f32 %v5913, %v6123
        %v6173 = vsub.f32 %v5914, %v5996
        %v6174 = vsub.f32 %v5915, %v6061
        %v6175 = vsub.f32 %v5916, %v6126
        %v6176 = vsub.f32 %v5917, %v5999
        %v6177 = vsub.f32 %v5918, %v6064
        %v6178 = vsub.f32 %v5919, %v6129
        %v6179 = vsub.f32 %v5920, %v6002
        %v6180 = vsub.f32 %v5921, %v6067
        %v6181 = vsub.f32 %v5922, %v6132
        %v6182 = vsub.f32 %v5923, %v6005
        %v6183 = vsub.f32 %v5924, %v6070
        %v6184 = vsub.f32 %v5925, %v6135
        %v6185 = vsub.f32 %v5926, %v6008
        %v6186 = vsub.f32 %v5927, %v6073
        %v6187 = vsub.f32 %v5928, %v6138
        %v6188 = vsub.f32 %v5929, %v6011
        %v6189 = vsub.f32 %v5930, %v6076
        %v6190 = vsub.f32 %v5931, %v6141
        %v6191 = vld [vmem:[%s5] sm:$0xf]
        %v6192 = vmul.f32 %v6143, %v6143
        %v6193 = vmul.f32 %v6144, %v6144
        %v6194 = vmul.f32 %v6145, %v6145
        %v6195 = vmul.f32 %v6146, %v6146
        %v6196 = vmul.f32 %v6147, %v6147
        %v6197 = vmul.f32 %v6148, %v6148
        %v6198 = vmul.f32 %v6149, %v6149
        %v6199 = vmul.f32 %v6150, %v6150
        %v6200 = vmul.f32 %v6151, %v6151
        %v6201 = vmul.f32 %v6152, %v6152
        %v6202 = vmul.f32 %v6153, %v6153
        %v6203 = vmul.f32 %v6154, %v6154
        %v6204 = vmul.f32 %v6155, %v6155
        %v6205 = vmul.f32 %v6156, %v6156
        %v6206 = vmul.f32 %v6157, %v6157
        %v6207 = vmul.f32 %v6158, %v6158
        %v6208 = vmul.f32 %v6159, %v6159
        %v6209 = vmul.f32 %v6160, %v6160
        %v6210 = vmul.f32 %v6161, %v6161
        %v6211 = vmul.f32 %v6162, %v6162
        %v6212 = vmul.f32 %v6163, %v6163
        %v6213 = vmul.f32 %v6164, %v6164
        %v6214 = vmul.f32 %v6165, %v6165
        %v6215 = vmul.f32 %v6166, %v6166
        %v6216 = vmul.f32 %v6167, %v6167
        %v6217 = vmul.f32 %v6168, %v6168
        %v6218 = vmul.f32 %v6169, %v6169
        %v6219 = vmul.f32 %v6170, %v6170
        %v6220 = vmul.f32 %v6171, %v6171
        %v6221 = vmul.f32 %v6172, %v6172
        %v6222 = vmul.f32 %v6173, %v6173
        %v6223 = vmul.f32 %v6174, %v6174
        %v6224 = vmul.f32 %v6175, %v6175
        %v6225 = vmul.f32 %v6176, %v6176
        %v6226 = vmul.f32 %v6177, %v6177
        %v6227 = vmul.f32 %v6178, %v6178
        %v6228 = vmul.f32 %v6179, %v6179
        %v6229 = vmul.f32 %v6180, %v6180
        %v6230 = vmul.f32 %v6181, %v6181
        %v6231 = vmul.f32 %v6182, %v6182
        %v6232 = vmul.f32 %v6183, %v6183
        %v6233 = vmul.f32 %v6184, %v6184
        %v6234 = vmul.f32 %v6185, %v6185
        %v6235 = vmul.f32 %v6186, %v6186
        %v6236 = vmul.f32 %v6187, %v6187
        %v6237 = vmul.f32 %v6188, %v6188
        %v6238 = vmul.f32 %v6189, %v6189
        %v6239 = vmul.f32 %v6190, %v6190
        %6240 = vmatpush.msra.mxu0 %v6237
        %6241 = vmatpush.msra.mxu0 %v6234
        %6242 = vmatpush.msra.mxu0 %v6231
        %6243 = vmatpush.msra.mxu0 %v6228
        %6244 = vmatpush.msra.mxu0 %v6225
        %6245 = vmatpush.msra.mxu0 %v6222
        %6246 = vmatpush.msra.mxu0 %v6219
        %6247 = vmatpush.msra.mxu0 %v6216
        %6248 = vmatpush.msra.mxu0 %v6213
        %6249 = vmatpush.msra.mxu0 %v6210
        %6250 = vmatpush.msra.mxu0 %v6207
        %6251 = vmatpush.msra.mxu0 %v6204
        %6252 = vmatpush.msra.mxu0 %v6201
        %6253 = vmatpush.msra.mxu0 %v6198
        %6254 = vmatpush.msra.mxu0 %v6195
        %6255 = vmatpush.msra.mxu0 %v6192
        %6256 = vmatmul.f32.gmra.mxu0 %v6191
        %v6257 = vpop.f32.mrf.mxu0
        %v6258 = vadd.f32 0.0, %v6257
        %6259 = vdwg.mxu0
        %6260 = vmatpush.msra.mxu0 %v6238
        %6261 = vmatpush.msra.mxu0 %v6235
        %6262 = vmatpush.msra.mxu0 %v6232
        %6263 = vmatpush.msra.mxu0 %v6229
        %6264 = vmatpush.msra.mxu0 %v6226
        %6265 = vmatpush.msra.mxu0 %v6223
        %6266 = vmatpush.msra.mxu0 %v6220
        %6267 = vmatpush.msra.mxu0 %v6217
        %6268 = vmatpush.msra.mxu0 %v6214
        %6269 = vmatpush.msra.mxu0 %v6211
        %6270 = vmatpush.msra.mxu0 %v6208
        %6271 = vmatpush.msra.mxu0 %v6205
        %6272 = vmatpush.msra.mxu0 %v6202
        %6273 = vmatpush.msra.mxu0 %v6199
        %6274 = vmatpush.msra.mxu0 %v6196
        %6275 = vmatpush.msra.mxu0 %v6193
        %6276 = vmatmul.f32.gmra.mxu0 %v6191
        %v6277 = vpop.f32.mrf.mxu0
        %v6278 = vadd.f32 0.0, %v6277
        %6279 = vdwg.mxu0
        %6280 = vmatpush.msra.mxu0 %v6239
        %6281 = vmatpush.msra.mxu0 %v6236
        %6282 = vmatpush.msra.mxu0 %v6233
        %6283 = vmatpush.msra.mxu0 %v6230
        %6284 = vmatpush.msra.mxu0 %v6227
        %6285 = vmatpush.msra.mxu0 %v6224
        %6286 = vmatpush.msra.mxu0 %v6221
        %6287 = vmatpush.msra.mxu0 %v6218
        %6288 = vmatpush.msra.mxu0 %v6215
        %6289 = vmatpush.msra.mxu0 %v6212
        %6290 = vmatpush.msra.mxu0 %v6209
        %6291 = vmatpush.msra.mxu0 %v6206
        %6292 = vmatpush.msra.mxu0 %v6203
        %6293 = vmatpush.msra.mxu0 %v6200
        %6294 = vmatpush.msra.mxu0 %v6197
        %6295 = vmatpush.msra.mxu0 %v6194
        %6296 = vmatmul.f32.gmra.mxu0 %v6191
        %v6297 = vpop.f32.mrf.mxu0
        %v6298 = vadd.f32 0.0, %v6297
        %6299 = vdwg.mxu0
        %v6300 = vmax.f32 %v6258, 1e-06
        %v6301 = vmax.f32 %v6278, 1e-06
        %v6302 = vmax.f32 %v6298, 1e-06
        %v6303 = vmin.f32 %v6300, 1000000.0
        %v6304 = vmin.f32 %v6301, 1000000.0
        %v6305 = vmin.f32 %v6302, 1000000.0
        %v6306 = vlog2.pop %v6303
        %v6307 = vmul.f32 %v6306, 0.6931472
        %v6308 = vlog2.pop %v6304
        %v6309 = vmul.f32 %v6308, 0.6931472
        %v6310 = vlog2.pop %v6305
        %v6311 = vmul.f32 %v6310, 0.6931472
        %v6312 = vld [vmem:[%s7] sm:$0x1]
        %v6313 = vld [vmem:[%s6] sm:$0xff]
        %v6314 = vld [vmem:[%s6 + $0x8] sm:$0xff]
        %v6315 = vld [vmem:[%s6 + $0x10] sm:$0xff]
        %v6316 = vld [vmem:[%s6 + $0x18] sm:$0xff]
        %v6317 = vld [vmem:[%s6 + $0x20] sm:$0xff]
        %v6318 = vld [vmem:[%s6 + $0x28] sm:$0xff]
        %v6319 = vld [vmem:[%s6 + $0x30] sm:$0xff]
        %v6320 = vld [vmem:[%s6 + $0x38] sm:$0xff]
        %v6321 = vld [vmem:[%s6 + $0x40] sm:$0xff]
        %v6322 = vld [vmem:[%s6 + $0x48] sm:$0xff]
        %v6323 = vld [vmem:[%s6 + $0x50] sm:$0xff]
        %v6324 = vld [vmem:[%s6 + $0x58] sm:$0xff]
        %v6325 = vld [vmem:[%s6 + $0x60] sm:$0xff]
        %v6326 = vld [vmem:[%s6 + $0x68] sm:$0xff]
        %v6327 = vld [vmem:[%s6 + $0x70] sm:$0xff]
        %v6328 = vld [vmem:[%s6 + $0x78] sm:$0xff]
        %v6329 = vld [vmem:[%s6 + $0x80] sm:$0xff]
        %v6330 = vld [vmem:[%s6 + $0x88] sm:$0xff]
        %v6331 = vld [vmem:[%s6 + $0x90] sm:$0xff]
        %v6332 = vld [vmem:[%s6 + $0x98] sm:$0xff]
        %v6333 = vld [vmem:[%s6 + $0xa0] sm:$0xff]
        %v6334 = vld [vmem:[%s6 + $0xa8] sm:$0xff]
        %v6335 = vld [vmem:[%s6 + $0xb0] sm:$0xff]
        %v6336 = vld [vmem:[%s6 + $0xb8] sm:$0xff]
        %v6337 = vld [vmem:[%s6 + $0xc0] sm:$0xff]
        %v6338 = vld [vmem:[%s6 + $0xc8] sm:$0xff]
        %v6339 = vld [vmem:[%s6 + $0xd0] sm:$0xff]
        %v6340 = vld [vmem:[%s6 + $0xd8] sm:$0xff]
        %v6341 = vld [vmem:[%s6 + $0xe0] sm:$0xff]
        %v6342 = vld [vmem:[%s6 + $0xe8] sm:$0xff]
        %v6343 = vld [vmem:[%s6 + $0xf0] sm:$0xff]
        %v6344 = vld [vmem:[%s6 + $0xf8] sm:$0xff]
        %v6345 = vld [vmem:[%s6 + $0x100] sm:$0xff]
        %v6346 = vld [vmem:[%s6 + $0x108] sm:$0xff]
        %v6347 = vld [vmem:[%s6 + $0x110] sm:$0xff]
        %v6348 = vld [vmem:[%s6 + $0x118] sm:$0xff]
        %vm6349 = vcmask 261120
        %v6351 = vsel %vm6349, %v6311, 0
        %6353 = vmatpush.msra.mxu0 %v6328
        %6354 = vmatpush.msra.mxu0 %v6327
        %6355 = vmatpush.msra.mxu0 %v6326
        %6356 = vmatpush.msra.mxu0 %v6325
        %6357 = vmatpush.msra.mxu0 %v6324
        %6358 = vmatpush.msra.mxu0 %v6323
        %6359 = vmatpush.msra.mxu0 %v6322
        %6360 = vmatpush.msra.mxu0 %v6321
        %6361 = vmatpush.msra.mxu0 %v6320
        %6362 = vmatpush.msra.mxu0 %v6319
        %6363 = vmatpush.msra.mxu0 %v6318
        %6364 = vmatpush.msra.mxu0 %v6317
        %6365 = vmatpush.msra.mxu0 %v6316
        %6366 = vmatpush.msra.mxu0 %v6315
        %6367 = vmatpush.msra.mxu0 %v6314
        %6368 = vmatpush.msra.mxu0 %v6313
        %6369 = vmatmul.f32.gmra.mxu0 %v6307
        %v6370 = vpop.f32.mrf.mxu0
        %v6371 = vadd.f32 0.0, %v6370
        %6372 = vdwg.mxu0
        %6373 = vmatpush.msra.mxu0 %v6344
        %6374 = vmatpush.msra.mxu0 %v6343
        %6375 = vmatpush.msra.mxu0 %v6342
        %6376 = vmatpush.msra.mxu0 %v6341
        %6377 = vmatpush.msra.mxu0 %v6340
        %6378 = vmatpush.msra.mxu0 %v6339
        %6379 = vmatpush.msra.mxu0 %v6338
        %6380 = vmatpush.msra.mxu0 %v6337
        %6381 = vmatpush.msra.mxu0 %v6336
        %6382 = vmatpush.msra.mxu0 %v6335
        %6383 = vmatpush.msra.mxu0 %v6334
        %6384 = vmatpush.msra.mxu0 %v6333
        %6385 = vmatpush.msra.mxu0 %v6332
        %6386 = vmatpush.msra.mxu0 %v6331
        %6387 = vmatpush.msra.mxu0 %v6330
        %6388 = vmatpush.msra.mxu0 %v6329
        %6389 = vmatmul.f32.gmra.mxu0 %v6309
        %v6390 = vpop.f32.mrf.mxu0
        %v6391 = vadd.f32 %v6371, %v6390
        %6392 = vdwg.mxu0
        %6393 = vmatpush.msra.mxu0 0.0
        %6394 = vmatpush.msra.mxu0 0.0
        %6395 = vmatpush.msra.mxu0 0.0
        %6396 = vmatpush.msra.mxu0 0.0
        %6397 = vmatpush.msra.mxu0 0.0
        %6398 = vmatpush.msra.mxu0 0.0
        %6399 = vmatpush.msra.mxu0 0.0
        %6400 = vmatpush.msra.mxu0 0.0
        %6401 = vmatpush.msra.mxu0 0.0
        %6402 = vmatpush.msra.mxu0 0.0
        %6403 = vmatpush.msra.mxu0 0.0
        %6404 = vmatpush.msra.mxu0 0.0
        %6405 = vmatpush.msra.mxu0 %v6348
        %6406 = vmatpush.msra.mxu0 %v6347
        %6407 = vmatpush.msra.mxu0 %v6346
        %6408 = vmatpush.msra.mxu0 %v6345
        %6409 = vmatmul.f32.gmra.mxu0 %v6351
        %v6410 = vpop.f32.mrf.mxu0
        %v6411 = vadd.f32 %v6391, %v6410
        %6412 = vdwg.mxu0
        %v6413 = vadd.f32 %v6312, %v6411
        %s6414 = scalar_lea.vmem %s6, 288
        %v6415 = vld [vmem:[%s6414] sm:$0xff]
        %v6416 = vld [vmem:[%s6414 + $0x8] sm:$0xff]
        %v6417 = vld [vmem:[%s6414 + $0x10] sm:$0xff]
        %v6418 = vld [vmem:[%s6414 + $0x18] sm:$0xff]
        %v6419 = vld [vmem:[%s6414 + $0x20] sm:$0xff]
        %v6420 = vld [vmem:[%s6414 + $0x28] sm:$0xff]
        %v6421 = vld [vmem:[%s6414 + $0x30] sm:$0xff]
        %v6422 = vld [vmem:[%s6414 + $0x38] sm:$0xff]
        %v6423 = vld [vmem:[%s6414 + $0x40] sm:$0xff]
        %v6424 = vld [vmem:[%s6414 + $0x48] sm:$0xff]
        %v6425 = vld [vmem:[%s6414 + $0x50] sm:$0xff]
        %v6426 = vld [vmem:[%s6414 + $0x58] sm:$0xff]
        %v6427 = vld [vmem:[%s6414 + $0x60] sm:$0xff]
        %v6428 = vld [vmem:[%s6414 + $0x68] sm:$0xff]
        %v6429 = vld [vmem:[%s6414 + $0x70] sm:$0xff]
        %v6430 = vld [vmem:[%s6414 + $0x78] sm:$0xff]
        %v6431 = vld [vmem:[%s6414 + $0x80] sm:$0xff]
        %v6432 = vld [vmem:[%s6414 + $0x88] sm:$0xff]
        %v6433 = vld [vmem:[%s6414 + $0x90] sm:$0xff]
        %v6434 = vld [vmem:[%s6414 + $0x98] sm:$0xff]
        %v6435 = vld [vmem:[%s6414 + $0xa0] sm:$0xff]
        %v6436 = vld [vmem:[%s6414 + $0xa8] sm:$0xff]
        %v6437 = vld [vmem:[%s6414 + $0xb0] sm:$0xff]
        %v6438 = vld [vmem:[%s6414 + $0xb8] sm:$0xff]
        %v6439 = vld [vmem:[%s6414 + $0xc0] sm:$0xff]
        %v6440 = vld [vmem:[%s6414 + $0xc8] sm:$0xff]
        %v6441 = vld [vmem:[%s6414 + $0xd0] sm:$0xff]
        %v6442 = vld [vmem:[%s6414 + $0xd8] sm:$0xff]
        %v6443 = vld [vmem:[%s6414 + $0xe0] sm:$0xff]
        %v6444 = vld [vmem:[%s6414 + $0xe8] sm:$0xff]
        %v6445 = vld [vmem:[%s6414 + $0xf0] sm:$0xff]
        %v6446 = vld [vmem:[%s6414 + $0xf8] sm:$0xff]
        %v6447 = vld [vmem:[%s6414 + $0x100] sm:$0xff]
        %v6448 = vld [vmem:[%s6414 + $0x108] sm:$0xff]
        %v6449 = vld [vmem:[%s6414 + $0x110] sm:$0xff]
        %v6450 = vld [vmem:[%s6414 + $0x118] sm:$0xff]
        %v6453 = vrot.slane %v6307, 1
        %v6454 = vrot.slane %v6309, 1
        %v6455 = vrot.slane %v6311, 1
        %v6458 = vsel %vm6349, %v6455, 0
        %6460 = vmatpush.msra.mxu0 %v6430
        %6461 = vmatpush.msra.mxu0 %v6429
        %6462 = vmatpush.msra.mxu0 %v6428
        %6463 = vmatpush.msra.mxu0 %v6427
        %6464 = vmatpush.msra.mxu0 %v6426
        %6465 = vmatpush.msra.mxu0 %v6425
        %6466 = vmatpush.msra.mxu0 %v6424
        %6467 = vmatpush.msra.mxu0 %v6423
        %6468 = vmatpush.msra.mxu0 %v6422
        %6469 = vmatpush.msra.mxu0 %v6421
        %6470 = vmatpush.msra.mxu0 %v6420
        %6471 = vmatpush.msra.mxu0 %v6419
        %6472 = vmatpush.msra.mxu0 %v6418
        %6473 = vmatpush.msra.mxu0 %v6417
        %6474 = vmatpush.msra.mxu0 %v6416
        %6475 = vmatpush.msra.mxu0 %v6415
        %6476 = vmatmul.f32.gmra.mxu0 %v6453
        %v6477 = vpop.f32.mrf.mxu0
        %v6478 = vadd.f32 0.0, %v6477
        %6479 = vdwg.mxu0
        %6480 = vmatpush.msra.mxu0 %v6446
        %6481 = vmatpush.msra.mxu0 %v6445
        %6482 = vmatpush.msra.mxu0 %v6444
        %6483 = vmatpush.msra.mxu0 %v6443
        %6484 = vmatpush.msra.mxu0 %v6442
        %6485 = vmatpush.msra.mxu0 %v6441
        %6486 = vmatpush.msra.mxu0 %v6440
        %6487 = vmatpush.msra.mxu0 %v6439
        %6488 = vmatpush.msra.mxu0 %v6438
        %6489 = vmatpush.msra.mxu0 %v6437
        %6490 = vmatpush.msra.mxu0 %v6436
        %6491 = vmatpush.msra.mxu0 %v6435
        %6492 = vmatpush.msra.mxu0 %v6434
        %6493 = vmatpush.msra.mxu0 %v6433
        %6494 = vmatpush.msra.mxu0 %v6432
        %6495 = vmatpush.msra.mxu0 %v6431
        %6496 = vmatmul.f32.gmra.mxu0 %v6454
        %v6497 = vpop.f32.mrf.mxu0
        %v6498 = vadd.f32 %v6478, %v6497
        %6499 = vdwg.mxu0
        %6500 = vmatpush.msra.mxu0 0.0
        %6501 = vmatpush.msra.mxu0 0.0
        %6502 = vmatpush.msra.mxu0 0.0
        %6503 = vmatpush.msra.mxu0 0.0
        %6504 = vmatpush.msra.mxu0 0.0
        %6505 = vmatpush.msra.mxu0 0.0
        %6506 = vmatpush.msra.mxu0 0.0
        %6507 = vmatpush.msra.mxu0 0.0
        %6508 = vmatpush.msra.mxu0 0.0
        %6509 = vmatpush.msra.mxu0 0.0
        %6510 = vmatpush.msra.mxu0 0.0
        %6511 = vmatpush.msra.mxu0 0.0
        %6512 = vmatpush.msra.mxu0 %v6450
        %6513 = vmatpush.msra.mxu0 %v6449
        %6514 = vmatpush.msra.mxu0 %v6448
        %6515 = vmatpush.msra.mxu0 %v6447
        %6516 = vmatmul.f32.gmra.mxu0 %v6458
        %v6517 = vpop.f32.mrf.mxu0
        %v6518 = vadd.f32 %v6498, %v6517
        %6519 = vdwg.mxu0
        %v6520 = vadd.f32 %v6413, %v6518
        %s6521 = scalar_lea.vmem %s6, 576
        %v6522 = vld [vmem:[%s6521] sm:$0xff]
        %v6523 = vld [vmem:[%s6521 + $0x8] sm:$0xff]
        %v6524 = vld [vmem:[%s6521 + $0x10] sm:$0xff]
        %v6525 = vld [vmem:[%s6521 + $0x18] sm:$0xff]
        %v6526 = vld [vmem:[%s6521 + $0x20] sm:$0xff]
        %v6527 = vld [vmem:[%s6521 + $0x28] sm:$0xff]
        %v6528 = vld [vmem:[%s6521 + $0x30] sm:$0xff]
        %v6529 = vld [vmem:[%s6521 + $0x38] sm:$0xff]
        %v6530 = vld [vmem:[%s6521 + $0x40] sm:$0xff]
        %v6531 = vld [vmem:[%s6521 + $0x48] sm:$0xff]
        %v6532 = vld [vmem:[%s6521 + $0x50] sm:$0xff]
        %v6533 = vld [vmem:[%s6521 + $0x58] sm:$0xff]
        %v6534 = vld [vmem:[%s6521 + $0x60] sm:$0xff]
        %v6535 = vld [vmem:[%s6521 + $0x68] sm:$0xff]
        %v6536 = vld [vmem:[%s6521 + $0x70] sm:$0xff]
        %v6537 = vld [vmem:[%s6521 + $0x78] sm:$0xff]
        %v6538 = vld [vmem:[%s6521 + $0x80] sm:$0xff]
        %v6539 = vld [vmem:[%s6521 + $0x88] sm:$0xff]
        %v6540 = vld [vmem:[%s6521 + $0x90] sm:$0xff]
        %v6541 = vld [vmem:[%s6521 + $0x98] sm:$0xff]
        %v6542 = vld [vmem:[%s6521 + $0xa0] sm:$0xff]
        %v6543 = vld [vmem:[%s6521 + $0xa8] sm:$0xff]
        %v6544 = vld [vmem:[%s6521 + $0xb0] sm:$0xff]
        %v6545 = vld [vmem:[%s6521 + $0xb8] sm:$0xff]
        %v6546 = vld [vmem:[%s6521 + $0xc0] sm:$0xff]
        %v6547 = vld [vmem:[%s6521 + $0xc8] sm:$0xff]
        %v6548 = vld [vmem:[%s6521 + $0xd0] sm:$0xff]
        %v6549 = vld [vmem:[%s6521 + $0xd8] sm:$0xff]
        %v6550 = vld [vmem:[%s6521 + $0xe0] sm:$0xff]
        %v6551 = vld [vmem:[%s6521 + $0xe8] sm:$0xff]
        %v6552 = vld [vmem:[%s6521 + $0xf0] sm:$0xff]
        %v6553 = vld [vmem:[%s6521 + $0xf8] sm:$0xff]
        %v6554 = vld [vmem:[%s6521 + $0x100] sm:$0xff]
        %v6555 = vld [vmem:[%s6521 + $0x108] sm:$0xff]
        %v6556 = vld [vmem:[%s6521 + $0x110] sm:$0xff]
        %v6557 = vld [vmem:[%s6521 + $0x118] sm:$0xff]
        %v6558 = vrot.slane %v6307, 2
        %v6559 = vrot.slane %v6309, 2
        %v6560 = vrot.slane %v6311, 2
        %v6563 = vsel %vm6349, %v6560, 0
        %6565 = vmatpush.msra.mxu0 %v6537
        %6566 = vmatpush.msra.mxu0 %v6536
        %6567 = vmatpush.msra.mxu0 %v6535
        %6568 = vmatpush.msra.mxu0 %v6534
        %6569 = vmatpush.msra.mxu0 %v6533
        %6570 = vmatpush.msra.mxu0 %v6532
        %6571 = vmatpush.msra.mxu0 %v6531
        %6572 = vmatpush.msra.mxu0 %v6530
        %6573 = vmatpush.msra.mxu0 %v6529
        %6574 = vmatpush.msra.mxu0 %v6528
        %6575 = vmatpush.msra.mxu0 %v6527
        %6576 = vmatpush.msra.mxu0 %v6526
        %6577 = vmatpush.msra.mxu0 %v6525
        %6578 = vmatpush.msra.mxu0 %v6524
        %6579 = vmatpush.msra.mxu0 %v6523
        %6580 = vmatpush.msra.mxu0 %v6522
        %6581 = vmatmul.f32.gmra.mxu0 %v6558
        %v6582 = vpop.f32.mrf.mxu0
        %v6583 = vadd.f32 0.0, %v6582
        %6584 = vdwg.mxu0
        %6585 = vmatpush.msra.mxu0 %v6553
        %6586 = vmatpush.msra.mxu0 %v6552
        %6587 = vmatpush.msra.mxu0 %v6551
        %6588 = vmatpush.msra.mxu0 %v6550
        %6589 = vmatpush.msra.mxu0 %v6549
        %6590 = vmatpush.msra.mxu0 %v6548
        %6591 = vmatpush.msra.mxu0 %v6547
        %6592 = vmatpush.msra.mxu0 %v6546
        %6593 = vmatpush.msra.mxu0 %v6545
        %6594 = vmatpush.msra.mxu0 %v6544
        %6595 = vmatpush.msra.mxu0 %v6543
        %6596 = vmatpush.msra.mxu0 %v6542
        %6597 = vmatpush.msra.mxu0 %v6541
        %6598 = vmatpush.msra.mxu0 %v6540
        %6599 = vmatpush.msra.mxu0 %v6539
        %6600 = vmatpush.msra.mxu0 %v6538
        %6601 = vmatmul.f32.gmra.mxu0 %v6559
        %v6602 = vpop.f32.mrf.mxu0
        %v6603 = vadd.f32 %v6583, %v6602
        %6604 = vdwg.mxu0
        %6605 = vmatpush.msra.mxu0 0.0
        %6606 = vmatpush.msra.mxu0 0.0
        %6607 = vmatpush.msra.mxu0 0.0
        %6608 = vmatpush.msra.mxu0 0.0
        %6609 = vmatpush.msra.mxu0 0.0
        %6610 = vmatpush.msra.mxu0 0.0
        %6611 = vmatpush.msra.mxu0 0.0
        %6612 = vmatpush.msra.mxu0 0.0
        %6613 = vmatpush.msra.mxu0 0.0
        %6614 = vmatpush.msra.mxu0 0.0
        %6615 = vmatpush.msra.mxu0 0.0
        %6616 = vmatpush.msra.mxu0 0.0
        %6617 = vmatpush.msra.mxu0 %v6557
        %6618 = vmatpush.msra.mxu0 %v6556
        %6619 = vmatpush.msra.mxu0 %v6555
        %6620 = vmatpush.msra.mxu0 %v6554
        %6621 = vmatmul.f32.gmra.mxu0 %v6563
        %v6622 = vpop.f32.mrf.mxu0
        %v6623 = vadd.f32 %v6603, %v6622
        %6624 = vdwg.mxu0
        %v6625 = vadd.f32 %v6520, %v6623
        %s6626 = scalar_lea.vmem %s6, 864
        %v6627 = vld [vmem:[%s6626] sm:$0xff]
        %v6628 = vld [vmem:[%s6626 + $0x8] sm:$0xff]
        %v6629 = vld [vmem:[%s6626 + $0x10] sm:$0xff]
        %v6630 = vld [vmem:[%s6626 + $0x18] sm:$0xff]
        %v6631 = vld [vmem:[%s6626 + $0x20] sm:$0xff]
        %v6632 = vld [vmem:[%s6626 + $0x28] sm:$0xff]
        %v6633 = vld [vmem:[%s6626 + $0x30] sm:$0xff]
        %v6634 = vld [vmem:[%s6626 + $0x38] sm:$0xff]
        %v6635 = vld [vmem:[%s6626 + $0x40] sm:$0xff]
        %v6636 = vld [vmem:[%s6626 + $0x48] sm:$0xff]
        %v6637 = vld [vmem:[%s6626 + $0x50] sm:$0xff]
        %v6638 = vld [vmem:[%s6626 + $0x58] sm:$0xff]
        %v6639 = vld [vmem:[%s6626 + $0x60] sm:$0xff]
        %v6640 = vld [vmem:[%s6626 + $0x68] sm:$0xff]
        %v6641 = vld [vmem:[%s6626 + $0x70] sm:$0xff]
        %v6642 = vld [vmem:[%s6626 + $0x78] sm:$0xff]
        %v6643 = vld [vmem:[%s6626 + $0x80] sm:$0xff]
        %v6644 = vld [vmem:[%s6626 + $0x88] sm:$0xff]
        %v6645 = vld [vmem:[%s6626 + $0x90] sm:$0xff]
        %v6646 = vld [vmem:[%s6626 + $0x98] sm:$0xff]
        %v6647 = vld [vmem:[%s6626 + $0xa0] sm:$0xff]
        %v6648 = vld [vmem:[%s6626 + $0xa8] sm:$0xff]
        %v6649 = vld [vmem:[%s6626 + $0xb0] sm:$0xff]
        %v6650 = vld [vmem:[%s6626 + $0xb8] sm:$0xff]
        %v6651 = vld [vmem:[%s6626 + $0xc0] sm:$0xff]
        %v6652 = vld [vmem:[%s6626 + $0xc8] sm:$0xff]
        %v6653 = vld [vmem:[%s6626 + $0xd0] sm:$0xff]
        %v6654 = vld [vmem:[%s6626 + $0xd8] sm:$0xff]
        %v6655 = vld [vmem:[%s6626 + $0xe0] sm:$0xff]
        %v6656 = vld [vmem:[%s6626 + $0xe8] sm:$0xff]
        %v6657 = vld [vmem:[%s6626 + $0xf0] sm:$0xff]
        %v6658 = vld [vmem:[%s6626 + $0xf8] sm:$0xff]
        %v6659 = vld [vmem:[%s6626 + $0x100] sm:$0xff]
        %v6660 = vld [vmem:[%s6626 + $0x108] sm:$0xff]
        %v6661 = vld [vmem:[%s6626 + $0x110] sm:$0xff]
        %v6662 = vld [vmem:[%s6626 + $0x118] sm:$0xff]
        %v6663 = vrot.slane %v6307, 3
        %v6664 = vrot.slane %v6309, 3
        %v6665 = vrot.slane %v6311, 3
        %v6668 = vsel %vm6349, %v6665, 0
        %6670 = vmatpush.msra.mxu0 %v6642
        %6671 = vmatpush.msra.mxu0 %v6641
        %6672 = vmatpush.msra.mxu0 %v6640
        %6673 = vmatpush.msra.mxu0 %v6639
        %6674 = vmatpush.msra.mxu0 %v6638
        %6675 = vmatpush.msra.mxu0 %v6637
        %6676 = vmatpush.msra.mxu0 %v6636
        %6677 = vmatpush.msra.mxu0 %v6635
        %6678 = vmatpush.msra.mxu0 %v6634
        %6679 = vmatpush.msra.mxu0 %v6633
        %6680 = vmatpush.msra.mxu0 %v6632
        %6681 = vmatpush.msra.mxu0 %v6631
        %6682 = vmatpush.msra.mxu0 %v6630
        %6683 = vmatpush.msra.mxu0 %v6629
        %6684 = vmatpush.msra.mxu0 %v6628
        %6685 = vmatpush.msra.mxu0 %v6627
        %6686 = vmatmul.f32.gmra.mxu0 %v6663
        %v6687 = vpop.f32.mrf.mxu0
        %v6688 = vadd.f32 0.0, %v6687
        %6689 = vdwg.mxu0
        %6690 = vmatpush.msra.mxu0 %v6658
        %6691 = vmatpush.msra.mxu0 %v6657
        %6692 = vmatpush.msra.mxu0 %v6656
        %6693 = vmatpush.msra.mxu0 %v6655
        %6694 = vmatpush.msra.mxu0 %v6654
        %6695 = vmatpush.msra.mxu0 %v6653
        %6696 = vmatpush.msra.mxu0 %v6652
        %6697 = vmatpush.msra.mxu0 %v6651
        %6698 = vmatpush.msra.mxu0 %v6650
        %6699 = vmatpush.msra.mxu0 %v6649
        %6700 = vmatpush.msra.mxu0 %v6648
        %6701 = vmatpush.msra.mxu0 %v6647
        %6702 = vmatpush.msra.mxu0 %v6646
        %6703 = vmatpush.msra.mxu0 %v6645
        %6704 = vmatpush.msra.mxu0 %v6644
        %6705 = vmatpush.msra.mxu0 %v6643
        %6706 = vmatmul.f32.gmra.mxu0 %v6664
        %v6707 = vpop.f32.mrf.mxu0
        %v6708 = vadd.f32 %v6688, %v6707
        %6709 = vdwg.mxu0
        %6710 = vmatpush.msra.mxu0 0.0
        %6711 = vmatpush.msra.mxu0 0.0
        %6712 = vmatpush.msra.mxu0 0.0
        %6713 = vmatpush.msra.mxu0 0.0
        %6714 = vmatpush.msra.mxu0 0.0
        %6715 = vmatpush.msra.mxu0 0.0
        %6716 = vmatpush.msra.mxu0 0.0
        %6717 = vmatpush.msra.mxu0 0.0
        %6718 = vmatpush.msra.mxu0 0.0
        %6719 = vmatpush.msra.mxu0 0.0
        %6720 = vmatpush.msra.mxu0 0.0
        %6721 = vmatpush.msra.mxu0 0.0
        %6722 = vmatpush.msra.mxu0 %v6662
        %6723 = vmatpush.msra.mxu0 %v6661
        %6724 = vmatpush.msra.mxu0 %v6660
        %6725 = vmatpush.msra.mxu0 %v6659
        %6726 = vmatmul.f32.gmra.mxu0 %v6668
        %v6727 = vpop.f32.mrf.mxu0
        %v6728 = vadd.f32 %v6708, %v6727
        %6729 = vdwg.mxu0
        %v6730 = vadd.f32 %v6625, %v6728
        %vm6731 = vcmask 24576
        %v6732 = vsel %vm6731, %v6730, -inf
        %6733 = vmax.xlane.f32.xlu0 %v6732
        %v6734 = vpop.xlane.xlu0 %6733
        %v6735 = vsub.f32 %v6730, %v6734
        %v6736 = vmul.f32 %v6735, 1.442695
        %v6737 = vpow.pop %v6736
        %v6738 = vsel %vm6731, %v6737, 0.0
        %6739 = vadd.xlane.f32.xlu0 %v6738
        %v6740 = vpop.xlane.xlu0 %6739
        %v6741 = vlog2.pop %v6740
        %v6742 = vmul.f32 %v6741, 0.6931472
        %v6743 = vadd.f32 %v6742, %v6734
        %v6744 = vsub.f32 %v6730, %v6743
        %6745 = vst.msk [vmem:[%s297] sm:$0x1] %vm6731, %v6744
        %s6746 = sand.u32 %s203, 1
        %s6747 = scalar_lea.sflag [#allocation3], %s6746
        %s6748 = sand.u32 %s203, 1
        %s6749 = scalar_lea.vmem [#allocation2], %s6748
        // Predicated region
        $region53: #{fbmsnet_forward.1} parent=51 // pred_check
          %p6750 = pneg %p213
        $region54: #{fbmsnet_forward.1} parent=51 // pred_check_branch
          %6752 = sbr.rel (%p6750) target = $region56
        $region55: #{fbmsnet_forward.1} parent=51 // pred_region
          %6754 = vsyncadd %s6747, 0
          %s6755 = scalar_lea.hbm %s8, %s22
          %s6757 = sshll.u32 %s6749, 4
          %s6758 = int_to_ptr.vmem [resolvable:$true] %s6757
          %s6759 = sshll.u32 %s6755, 4
          %s6760 = int_to_ptr.hbm [resolvable:$true] %s6759
          %6762 = dma.vmem_to_hbm [thread:$0]  %s6758, 16, %s6760, %s6747
        $region56: #{fbmsnet_forward.1} parent=51 // pred_fallthru
          _
      $region52: #{fbmsnet_forward.1} parent=5 // pred_fallthru
        _
      %p6763 = scmp.le.s32.totalorder 2, %s17
      // Predicated region
      $region57: #{fbmsnet_forward.1} parent=5 // pred_check
        %p6764 = pneg %p6763
      $region58: #{fbmsnet_forward.1} parent=5 // pred_check_branch
        %6766 = sbr.rel (%p6764) target = $region60
      $region59: #{fbmsnet_forward.1} parent=5 // pred_region
        %s6767 = ssub.s32 %s17, 2
        // Predicated region
        $region61: #{fbmsnet_forward.1} parent=59 // pred_check
          %p6768 = pneg %p219
        $region62: #{fbmsnet_forward.1} parent=59 // pred_check_branch
          %6770 = sbr.rel (%p6768) target = $region64
        $region63: #{fbmsnet_forward.1} parent=59 // pred_region
          %s6771 = sand.u32 %s204, 1
          %s6772 = scalar_lea.sflag [#allocation3], %s6771
          %s6773 = sand.u32 %s204, 1
          %s6774 = scalar_lea.vmem [#allocation2], %s6773
          %6776 = dma.done %s6772, 16
        $region64: #{fbmsnet_forward.1} parent=59 // pred_fallthru
          _
      $region60: #{fbmsnet_forward.1} parent=5 // pred_fallthru
        _
    $region6: #{fbmsnet_forward.1} parent=1 // loop_footer
      %s21 = sadd.s32 1, %s17
    $region7: #{fbmsnet_forward.1} parent=1 // loop_footer_branch
      %16 = sbr.rel target = $region3
    $region8: #{fbmsnet_forward.1} parent=1 // loop_exit
      _
    %6777 = vsyncpa [#allocation3], 1
    %s6778 = scalar_lea.sflag [#allocation3], 1
    %6779 = vsyncpa %s6778, 1

</llo_original>
